<compile_context>
chip_gen: v6e
topology: v6e:2x2x1
jax: 0.10.0
libtpu: 0.0.40
codegen_flags: <defaults>
</compile_context>

<pallas_src>
import functools
import math

import jax
import jax.numpy as jnp
import numpy as np
from jax.experimental import pallas as pl
from jax.experimental.pallas import tpu as pltpu


# -----------------------------------------------------------------------------
# Fused kernel.
# -----------------------------------------------------------------------------
def dcnet_kernel(x_ref, b1_ref, brest_ref, bias_ref, gamma_ref, beta_ref,
                 mask_ref, gmat_ref, gmatt_ref, poolb_ref, wlin_ref, blin_ref,
                 o_ref, slab0, slab1, wbuf, wsem,
                 *, num_layers, kernel_size, batch, height, width, filters,
                 hp, wp, guard, batchnorm):
    L = num_layers
    K = kernel_size
    p = (K - 1) // 2
    F = filters
    Hp, Wp, G = hp, wp, guard
    Wc = Wp * F
    Rcore = batch * Hp
    R = Rcore + 2 * G
    inv_cnt = 1.0 / float(batch * height * width)
    nbuf = wbuf.shape[0]

    # ---- stream banded weights of layers >= 2 from HBM (double-buffered) ----
    copies = {}

    def _prefetch(layer):                        # layer >= 1 uses brest[layer-1]
        slot = (layer - 1) % nbuf
        cp = pltpu.make_async_copy(brest_ref.at[layer - 1], wbuf.at[slot],
                                   wsem.at[slot])
        cp.start()
        copies[layer] = cp

    if L > 1:
        _prefetch(1)                             # prime before layer-0 compute

    # Zero only the guard rows; interior rows are fully overwritten each layer
    # (masked border columns land as zeros there).
    zrow = jnp.zeros((G, Wc), jnp.float32)
    slab0[0:G, :] = zrow
    slab0[G + Rcore:R, :] = zrow
    slab1[0:G, :] = zrow
    slab1[G + Rcore:R, :] = zrow

    slabs = (slab0, slab1)
    src = x_ref                                  # layer-1 input slab (R, Wp0*Cin)
    for l in range(L):
        if l >= 1:
            if l + 1 < L:
                _prefetch(l + 1)                 # overlap with this layer's work
            copies[l].wait()
        dst = slabs[l % 2]

        # -- conv: K row-shifted banded matmuls, bf16 operands, f32 accumulate
        def tap(kh, l=l, src=src):
            lhs = src[G - p + kh:G - p + kh + Rcore, :].astype(jnp.bfloat16)
            rhs = b1_ref[kh] if l == 0 else wbuf[(l - 1) % nbuf, kh]
            return jnp.dot(lhs, rhs, preferred_element_type=jnp.float32)

        acc = tap(0)                             # init from first tap
        for kh in range(1, K):
            acc = acc + tap(kh)

        z = jnp.maximum(acc + bias_ref[l], 0.0)  # conv bias + ReLU
        zm = z * mask_ref[...]                   # zero border/pad cols & rows

        if batchnorm:
            # One-pass batch stats in f32; merged tiny matmuls:
            #   (2, Wc) @ (Wc, F)  for [sum, sumsq]   ->   per-channel stats
            #   (2, F)  @ (F, Wc)  for [scale, shift] ->   lane-broadcast
            stats = jnp.concatenate(
                [jnp.sum(zm, axis=0, keepdims=True),
                 jnp.sum(zm * zm, axis=0, keepdims=True)], axis=0)
            sg = jnp.dot(stats, gmat_ref[...],
                         preferred_element_type=jnp.float32)          # (2, F)
            mean = sg[0:1, :] * inv_cnt
            var = jnp.maximum(sg[1:2, :] * inv_cnt - mean * mean, 0.0)
            scale = gamma_ref[l] * jax.lax.rsqrt(var + 1e-5)
            shift = beta_ref[l] - mean * scale
            sst = jnp.dot(jnp.concatenate([scale, shift], axis=0),
                          gmatt_ref[...],
                          preferred_element_type=jnp.float32)         # (2, Wc)
            zm = zm * sst[0:1, :] + sst[1:2, :] * mask_ref[...]

        dst[G:G + Rcore, :] = zm                 # sublane-aligned, lane-dense
        src = dst

    # ---- batched global max pool + Linear head -------------------------------
    final = slabs[(L - 1) % 2]
    colmax = jnp.concatenate(
        [jnp.max(final[G + n * Hp + p:G + n * Hp + p + height, :],
                 axis=0, keepdims=True) for n in range(batch)], axis=0)
    # Push non-interior column groups to -1e30, then a circular roll/max tree
    # (ceil(log2(Wp)) XLU steps) leaves every group holding the per-channel max.
    y = colmax + poolb_ref[...]
    span = 1
    while span < Wp:
        y = jnp.maximum(y, pltpu.roll(y, shift=span * F, axis=1))
        span *= 2
    pooled = y[:, 0:F]                           # (N, F) f32
    o_ref[...] = (jnp.dot(pooled, wlin_ref[...],
                          preferred_element_type=jnp.float32) + blin_ref[...])


# -----------------------------------------------------------------------------
# One-time weight / layout preprocessing (kept OUT of the per-call jit path).
# -----------------------------------------------------------------------------
def _round_up_cols(wmin, c):
    """Smallest Wp >= wmin with Wp*c a multiple of 128 (lane-dense layout)."""
    step = 128 // math.gcd(c, 128)
    return ((wmin + step - 1) // step) * step


def _banded_matrix(w_hwio, wp_src, wp_dst, width, p):
    """(K,K,Cin,Cout) HWIO conv weights -> (K, wp_src*Cin, wp_dst*Cout)."""
    K, _, cin, cout = w_hwio.shape
    sel = np.zeros((K, wp_src, wp_dst), np.float32)   # sel[kw, w_src, w_dst]
    for kw in range(K):
        for wd in range(p, p + width):               # interior output columns
            sel[kw, wd + kw - p, wd] = 1.0
    b = jnp.einsum('ksd,hkio->hsido', jnp.asarray(sel), w_hwio)
    return b.reshape(K, wp_src * cin, wp_dst * cout)


def dcnet_prepare(params, input_size, batch, *, batchnorm=True):
    convs = params["convs"]
    bns = params["bns"]
    lw, lb = params["linear"]
    L = len(convs)
    K, _, cin0, F = convs[0][0].shape
    assert K % 2 == 1, "fused kernel assumes an odd kernel size"
    H = W = input_size
    N = batch
    p = (K - 1) // 2

    # Lane/sublane-clean layout constants.
    Wp = _round_up_cols(W + 2 * p, F)            # output/interior slabs
    Wp0 = _round_up_cols(W + 2 * p, cin0)        # layer-1 input slab
    Hp = H + 2 * p
    while (N * Hp) % 8:
        Hp += 1
    G = max(8, ((p + 7) // 8) * 8)
    Rcore = N * Hp
    Wc = Wp * F

    # Banded conv matrices in bf16 (halves the dominant weight DMA / VMEM).
    b1 = _banded_matrix(convs[0][0], Wp0, Wp, W, p).astype(jnp.bfloat16)
    if L > 1:
        brest = jnp.stack([_banded_matrix(convs[l][0], Wp, Wp, W, p)
                           for l in range(1, L)], axis=0).astype(jnp.bfloat16)
    else:
        brest = jnp.zeros((1, 1, 8, 128), jnp.bfloat16)          # unused dummy

    bias_t = jnp.stack([jnp.tile(convs[l][1].reshape(1, F), (1, Wp))
                        for l in range(L)], axis=0)              # (L, 1, Wc)
    gamma = jnp.stack([bns[l][0].reshape(1, F) for l in range(L)], axis=0)
    beta = jnp.stack([bns[l][1].reshape(1, F) for l in range(L)], axis=0)

    # Interior mask over (row = n*Hp + hp, lane = wp*F + ch).
    mask = np.zeros((Rcore, Wc), np.float32)
    for n in range(N):
        mask[n * Hp + p:n * Hp + p + H, p * F:(p + W) * F] = 1.0
    # Channel-group indicator matrices (f32 so BN stats stay accurate).
    gmat = np.zeros((Wc, F), np.float32)
    for wpi in range(Wp):
        gmat[wpi * F:(wpi + 1) * F, :] = np.eye(F, dtype=np.float32)
    gmatt = gmat.T.copy()
    # Pooling bias: 0 on interior column groups, -1e30 on border/pad groups.
    poolb = np.full((1, Wc), -1e30, np.float32)
    poolb[0, p * F:(p + W) * F] = 0.0

    buffers = dict(b1=b1, brest=brest, bias=bias_t, gamma=gamma, beta=beta,
                   mask=jnp.asarray(mask), gmat=jnp.asarray(gmat),
                   gmatt=jnp.asarray(gmatt), poolb=jnp.asarray(poolb),
                   wlin=lw, blin=lb)
    cfg = dict(num_layers=L, kernel_size=K, batch=N, height=H, width=W,
               filters=F, cin=cin0, hp=Hp, wp=Wp, wp0=Wp0, guard=G,
               classes=lw.shape[1], batchnorm=batchnorm)
    return buffers, cfg


# -----------------------------------------------------------------------------
# Per-call forward: builds the input slab and runs the single pallas_call.
# -----------------------------------------------------------------------------
def dcnet_apply(buffers, x_nchw, *, cfg):
    L, K = cfg["num_layers"], cfg["kernel_size"]
    N, H, W = cfg["batch"], cfg["height"], cfg["width"]
    F, C = cfg["filters"], cfg["cin"]
    Hp, Wp, Wp0, G = cfg["hp"], cfg["wp"], cfg["wp0"], cfg["guard"]
    classes = cfg["classes"]
    p = (K - 1) // 2
    Rcore = N * Hp
    R = Rcore + 2 * G
    Wc = Wp * F
    Wc0 = Wp0 * C

    # Layer-1 input slab: NCHW -> NHWC -> pad to (Hp, Wp0) -> (R, Wp0*C).
    xs = jnp.transpose(x_nchw.astype(jnp.float32), (0, 2, 3, 1))
    xs = jnp.pad(xs, ((0, 0), (p, Hp - H - p), (p, Wp0 - W - p), (0, 0)))
    xs = xs.reshape(Rcore, Wc0)
    xs = jnp.pad(xs, ((G, G), (0, 0)))           # zero guard rows

    nbuf = min(2, max(L - 1, 1))
    wbuf_shape = (nbuf, K, Wc, Wc) if L > 1 else (1, 1, 8, 128)

    kern = functools.partial(
        dcnet_kernel, num_layers=L, kernel_size=K, batch=N, height=H, width=W,
        filters=F, hp=Hp, wp=Wp, guard=G, batchnorm=cfg["batchnorm"])

    vmem = pl.BlockSpec(memory_space=pltpu.MemorySpace.VMEM)
    hbm = pl.BlockSpec(memory_space=pl.ANY)      # streamed inside the kernel

    return pl.pallas_call(
        kern,
        out_shape=jax.ShapeDtypeStruct((N, classes), jnp.float32),
        in_specs=[vmem, vmem, hbm, vmem, vmem, vmem, vmem, vmem, vmem, vmem,
                  vmem, vmem],
        out_specs=vmem,
        scratch_shapes=[pltpu.VMEM((R, Wc), jnp.float32),
                        pltpu.VMEM((R, Wc), jnp.float32),
                        pltpu.VMEM(wbuf_shape, jnp.bfloat16),
                        pltpu.SemaphoreType.DMA((nbuf,))],
        compiler_params=pltpu.CompilerParams(
            vmem_limit_bytes=32 * 1024 * 1024),
    )(xs, buffers["b1"], buffers["brest"], buffers["bias"], buffers["gamma"],
      buffers["beta"], buffers["mask"], buffers["gmat"], buffers["gmatt"],
      buffers["poolb"], buffers["wlin"], buffers["blin"])


# -----------------------------------------------------------------------------
# Pure-JAX (XLA, f32) reference used to validate the fused kernel.
# -----------------------------------------------------------------------------
def dcnet_reference(params, x_nchw, *, batchnorm=True):
    x = x_nchw.astype(jnp.float32)
    K = params["convs"][0][0].shape[0]
    p = (K - 1) // 2
    for (w, b), (g, be) in zip(params["convs"], params["bns"]):
        y = jax.lax.conv_general_dilated(
            x, w, window_strides=(1, 1), padding=((p, p), (p, p)),
            dimension_numbers=("NCHW", "HWIO", "NCHW"))
        y = y + b.reshape(1, -1, 1, 1)
        y = jnp.maximum(y, 0.0)
        if batchnorm:
            mean = jnp.mean(y, axis=(0, 2, 3), keepdims=True)
            var = jnp.mean((y - mean) ** 2, axis=(0, 2, 3), keepdims=True)
            y = ((y - mean) * jax.lax.rsqrt(var + 1e-5) * g.reshape(1, -1, 1, 1)
                 + be.reshape(1, -1, 1, 1))
        x = y
    pooled = jnp.max(x, axis=(2, 3))
    lw, lb = params["linear"]
    return pooled @ lw + lb


# -----------------------------------------------------------------------------
# Parameter init (PyTorch-style uniform init; HWIO conv weights).
# -----------------------------------------------------------------------------
def init_dcnet_params(key, channels, num_layers, num_filters, kernel_size,
                      classes):
    params = {"convs": [], "bns": []}
    c_in = channels
    for _ in range(num_layers):
        key, k1, k2 = jax.random.split(key, 3)
        fan_in = c_in * kernel_size * kernel_size
        bound = 1.0 / float(np.sqrt(fan_in))
        w = jax.random.uniform(
            k1, (kernel_size, kernel_size, c_in, num_filters),
            minval=-bound, maxval=bound, dtype=jnp.float32)          # HWIO
        b = jax.random.uniform(k2, (1, num_filters),
                               minval=-bound, maxval=bound, dtype=jnp.float32)
        params["convs"].append((w, b))
        params["bns"].append((jnp.ones((1, num_filters), jnp.float32),
                              jnp.zeros((1, num_filters), jnp.float32)))
        c_in = num_filters
    key, k1, k2 = jax.random.split(key, 3)
    bound = 1.0 / float(np.sqrt(c_in))
    lw = jax.random.uniform(k1, (c_in, classes),
                            minval=-bound, maxval=bound, dtype=jnp.float32)
    lb = jax.random.uniform(k2, (1, classes),
                            minval=-bound, maxval=bound, dtype=jnp.float32)
    params["linear"] = (lw, lb)
    return params


# -----------------------------------------------------------------------------
if __name__ == "__main__":
    # Config consistent with the module: input_size=16, channels=4,
    # num_layers=2, num_filters=32, kernel_size=3, classes=10, batchnorm=True.
    batch, channels, spatial = 2, 4, 16
    num_layers, num_filters, kernel_size, classes = 2, 32, 3, 10

    key = jax.random.PRNGKey(0)
    key, xkey, pkey = jax.random.split(key, 3)
    x = jax.random.normal(xkey, (batch, channels, spatial, spatial), jnp.float32)
    params = init_dcnet_params(pkey, channels, num_layers, num_filters,
                               kernel_size, classes)

    # Weight preprocessing happens ONCE per parameter set, outside the jitted
    # per-call forward (no repeated banded-matrix rebuild / HBM writeback).
    buffers, cfg = dcnet_prepare(params, spatial, batch, batchnorm=True)
    fwd = jax.jit(functools.partial(dcnet_apply, cfg=cfg))

    out = jax.block_until_ready(fwd(buffers, x))
    assert out.shape == (batch, classes), out.shape

    ref = jax.block_until_ready(dcnet_reference(params, x, batchnorm=True))
    err = float(jnp.max(jnp.abs(out - ref)))
    # Conv weights / MXU operands are bf16 in the kernel (f32 accumulation),
    # so allow a small absolute slack vs the all-f32 reference.
    assert err < 5e-2, f"kernel/reference mismatch: max |diff| = {err}"
    print("KERNEL_OK")
</pallas_src>

<mosaic_0001>
module attributes {stable_mosaic.version = 11 : i64} {
  func.func @dcnet_kernel(%arg0: memref<56x128xf32, #tpu.memory_space<vmem>>, %arg1: memref<3x128x640xbf16, #tpu.memory_space<vmem>>, %arg2: memref<1x3x640x640xbf16, #tpu.memory_space<any>>, %arg3: memref<2x1x640xf32, #tpu.memory_space<vmem>>, %arg4: memref<2x1x32xf32, #tpu.memory_space<vmem>>, %arg5: memref<2x1x32xf32, #tpu.memory_space<vmem>>, %arg6: memref<40x640xf32, #tpu.memory_space<vmem>>, %arg7: memref<640x32xf32, #tpu.memory_space<vmem>>, %arg8: memref<32x640xf32, #tpu.memory_space<vmem>>, %arg9: memref<1x640xf32, #tpu.memory_space<vmem>>, %arg10: memref<32x10xf32, #tpu.memory_space<vmem>>, %arg11: memref<1x10xf32, #tpu.memory_space<vmem>>, %arg12: memref<2x10xf32, #tpu.memory_space<vmem>>, %arg13: memref<56x640xf32, #tpu.memory_space<vmem>>, %arg14: memref<56x640xf32, #tpu.memory_space<vmem>>, %arg15: memref<1x3x640x640xbf16, #tpu.memory_space<vmem>>, %arg16: memref<1x!tpu.dma_semaphore, #tpu.memory_space<semaphore_mem>>) attributes {dimension_semantics = [], scalar_prefetch = 0 : i64, scratch_operands = 4 : i64, tpu.core_type = #tpu.core_type<tc>} {
    %c0_i32 = arith.constant 0 : i32
    %c0_i32_0 = arith.constant 0 : i32
    %c0_i32_1 = arith.constant 0 : i32
    %c0_i32_2 = arith.constant 0 : i32
    %c0_i32_3 = arith.constant 0 : i32
    %c0_i32_4 = arith.constant 0 : i32
    %0 = tpu.memref_slice %arg2[%c0_i32, %c0_i32_2, %c0_i32_3, %c0_i32_4] : memref<1x3x640x640xbf16, #tpu.memory_space<any>> -> memref<1x3x640x640xbf16, #tpu.memory_space<any>>
    %1 = tpu.memref_squeeze %0 : memref<1x3x640x640xbf16, #tpu.memory_space<any>> -> memref<3x640x640xbf16, #tpu.memory_space<any>>
    %c0_i32_5 = arith.constant 0 : i32
    %c0_i32_6 = arith.constant 0 : i32
    %c0_i32_7 = arith.constant 0 : i32
    %2 = tpu.memref_slice %arg15[%c0_i32_0, %c0_i32_5, %c0_i32_6, %c0_i32_7] : memref<1x3x640x640xbf16, #tpu.memory_space<vmem>> -> memref<1x3x640x640xbf16, #tpu.memory_space<vmem>>
    %3 = tpu.memref_squeeze %2 : memref<1x3x640x640xbf16, #tpu.memory_space<vmem>> -> memref<3x640x640xbf16, #tpu.memory_space<vmem>>
    %4 = tpu.memref_slice %arg16[%c0_i32_1] : memref<1x!tpu.dma_semaphore, #tpu.memory_space<semaphore_mem>> -> memref<1x!tpu.dma_semaphore, #tpu.memory_space<semaphore_mem>>
    %5 = tpu.memref_squeeze %4 : memref<1x!tpu.dma_semaphore, #tpu.memory_space<semaphore_mem>> -> memref<!tpu.dma_semaphore, #tpu.memory_space<semaphore_mem>>
    tpu.enqueue_dma source(%1 : memref<3x640x640xbf16, #tpu.memory_space<any>>) target(%3 : memref<3x640x640xbf16, #tpu.memory_space<vmem>>) target_semaphore(%5 : memref<!tpu.dma_semaphore, #tpu.memory_space<semaphore_mem>>)
    %cst = arith.constant 0.000000e+00 : f32
    %6 = vector.broadcast %cst : f32 to vector<8x640xf32>
    %c0 = arith.constant 0 : index
    %c0_8 = arith.constant 0 : index
    %7 = vector.load %arg13[%c0, %c0_8] : memref<56x640xf32, #tpu.memory_space<vmem>>, vector<8x640xf32>
    tpu.vector_store %arg13[%c0, %c0_8], %6 {strides = array<i32>} : memref<56x640xf32, #tpu.memory_space<vmem>>, vector<8x640xf32>,
    %c48 = arith.constant 48 : index
    %c0_9 = arith.constant 0 : index
    %8 = vector.load %arg13[%c48, %c0_9] : memref<56x640xf32, #tpu.memory_space<vmem>>, vector<8x640xf32>
    tpu.vector_store %arg13[%c48, %c0_9], %6 {strides = array<i32>} : memref<56x640xf32, #tpu.memory_space<vmem>>, vector<8x640xf32>,
    %c0_10 = arith.constant 0 : index
    %c0_11 = arith.constant 0 : index
    %9 = vector.load %arg14[%c0_10, %c0_11] : memref<56x640xf32, #tpu.memory_space<vmem>>, vector<8x640xf32>
    tpu.vector_store %arg14[%c0_10, %c0_11], %6 {strides = array<i32>} : memref<56x640xf32, #tpu.memory_space<vmem>>, vector<8x640xf32>,
    %c48_12 = arith.constant 48 : index
    %c0_13 = arith.constant 0 : index
    %10 = vector.load %arg14[%c48_12, %c0_13] : memref<56x640xf32, #tpu.memory_space<vmem>>, vector<8x640xf32>
    tpu.vector_store %arg14[%c48_12, %c0_13], %6 {strides = array<i32>} : memref<56x640xf32, #tpu.memory_space<vmem>>, vector<8x640xf32>,
    %c7 = arith.constant 7 : index
    %c0_14 = arith.constant 0 : index
    %11 = vector.load %arg0[%c7, %c0_14] : memref<56x128xf32, #tpu.memory_space<vmem>>, vector<40x128xf32>
    %12 = arith.truncf %11 : vector<40x128xf32> to vector<40x128xbf16>
    %c0_15 = arith.constant 0 : index
    %c0_16 = arith.constant 0 : index
    %c0_17 = arith.constant 0 : index
    %13 = vector.load %arg1[%c0_15, %c0_16, %c0_17] : memref<3x128x640xbf16, #tpu.memory_space<vmem>>, vector<1x128x640xbf16>
    %14 = vector.shape_cast %13 : vector<1x128x640xbf16> to vector<128x640xbf16>
    %cst_18 = arith.constant dense<0.000000e+00> : vector<40x640xf32>
    %15 = tpu.matmul %12, %14, %cst_18 {dimension_numbers = #tpu.dot_dimension_numbers<[1], [0], [0], [1], [0, 0, 1, 1], [], []>} : vector<40x128xbf16>, vector<128x640xbf16>, vector<40x640xf32> -> vector<40x640xf32>
    %c8 = arith.constant 8 : index
    %c0_19 = arith.constant 0 : index
    %16 = vector.load %arg0[%c8, %c0_19] : memref<56x128xf32, #tpu.memory_space<vmem>>, vector<40x128xf32>
    %17 = arith.truncf %16 : vector<40x128xf32> to vector<40x128xbf16>
    %c1 = arith.constant 1 : index
    %c0_20 = arith.constant 0 : index
    %c0_21 = arith.constant 0 : index
    %18 = vector.load %arg1[%c1, %c0_20, %c0_21] : memref<3x128x640xbf16, #tpu.memory_space<vmem>>, vector<1x128x640xbf16>
    %19 = vector.shape_cast %18 : vector<1x128x640xbf16> to vector<128x640xbf16>
    %cst_22 = arith.constant dense<0.000000e+00> : vector<40x640xf32>
    %20 = tpu.matmul %17, %19, %cst_22 {dimension_numbers = #tpu.dot_dimension_numbers<[1], [0], [0], [1], [0, 0, 1, 1], [], []>} : vector<40x128xbf16>, vector<128x640xbf16>, vector<40x640xf32> -> vector<40x640xf32>
    %21 = arith.addf %15, %20 : vector<40x640xf32>
    %c9 = arith.constant 9 : index
    %c0_23 = arith.constant 0 : index
    %22 = vector.load %arg0[%c9, %c0_23] : memref<56x128xf32, #tpu.memory_space<vmem>>, vector<40x128xf32>
    %23 = arith.truncf %22 : vector<40x128xf32> to vector<40x128xbf16>
    %c2 = arith.constant 2 : index
    %c0_24 = arith.constant 0 : index
    %c0_25 = arith.constant 0 : index
    %24 = vector.load %arg1[%c2, %c0_24, %c0_25] : memref<3x128x640xbf16, #tpu.memory_space<vmem>>, vector<1x128x640xbf16>
    %25 = vector.shape_cast %24 : vector<1x128x640xbf16> to vector<128x640xbf16>
    %cst_26 = arith.constant dense<0.000000e+00> : vector<40x640xf32>
    %26 = tpu.matmul %23, %25, %cst_26 {dimension_numbers = #tpu.dot_dimension_numbers<[1], [0], [0], [1], [0, 0, 1, 1], [], []>} : vector<40x128xbf16>, vector<128x640xbf16>, vector<40x640xf32> -> vector<40x640xf32>
    %27 = arith.addf %21, %26 : vector<40x640xf32>
    %c0_27 = arith.constant 0 : index
    %c0_28 = arith.constant 0 : index
    %c0_29 = arith.constant 0 : index
    %28 = vector.load %arg3[%c0_27, %c0_28, %c0_29] : memref<2x1x640xf32, #tpu.memory_space<vmem>>, vector<1x1x640xf32>
    %29 = vector.shape_cast %28 : vector<1x1x640xf32> to vector<1x640xf32>
    %30 = vector.broadcast %29 : vector<1x640xf32> to vector<40x640xf32>
    %31 = arith.addf %27, %30 : vector<40x640xf32>
    %cst_30 = arith.constant 0.000000e+00 : f32
    %32 = vector.broadcast %cst_30 : f32 to vector<40x640xf32>
    %33 = arith.maximumf %31, %32 : vector<40x640xf32>
    %c0_31 = arith.constant 0 : index
    %c0_32 = arith.constant 0 : index
    %34 = vector.load %arg6[%c0_31, %c0_32] : memref<40x640xf32, #tpu.memory_space<vmem>>, vector<40x640xf32>
    %35 = arith.mulf %33, %34 : vector<40x640xf32>
    %cst_33 = arith.constant dense<0.000000e+00> : vector<640xf32>
    %36 = vector.multi_reduction <add>, %35, %cst_33 [0] : vector<40x640xf32> to vector<640xf32>
    %37 = vector.shape_cast %36 : vector<640xf32> to vector<1x640xf32>
    %38 = arith.mulf %35, %35 : vector<40x640xf32>
    %cst_34 = arith.constant dense<0.000000e+00> : vector<640xf32>
    %39 = vector.multi_reduction <add>, %38, %cst_34 [0] : vector<40x640xf32> to vector<640xf32>
    %40 = vector.shape_cast %39 : vector<640xf32> to vector<1x640xf32>
    %41 = tpu.concatenate %37, %40 in 0 : vector<1x640xf32>, vector<1x640xf32> -> vector<2x640xf32>
    %c0_35 = arith.constant 0 : index
    %c0_36 = arith.constant 0 : index
    %42 = vector.load %arg7[%c0_35, %c0_36] : memref<640x32xf32, #tpu.memory_space<vmem>>, vector<640x32xf32>
    %cst_37 = arith.constant dense<0.000000e+00> : vector<2x32xf32>
    %43 = tpu.matmul %41, %42, %cst_37 {dimension_numbers = #tpu.dot_dimension_numbers<[1], [0], [0], [1], [0, 0, 1, 1], [], []>} : vector<2x640xf32>, vector<640x32xf32>, vector<2x32xf32> -> vector<2x32xf32>
    %44 = vector.extract_strided_slice %43 {offsets = [0, 0], sizes = [1, 32], strides = [1, 1]} : vector<2x32xf32> to vector<1x32xf32>
    %cst_38 = arith.constant 0.001953125 : f32
    %45 = vector.broadcast %cst_38 : f32 to vector<1x32xf32>
    %46 = arith.mulf %44, %45 : vector<1x32xf32>
    %47 = vector.extract_strided_slice %43 {offsets = [1, 0], sizes = [1, 32], strides = [1, 1]} : vector<2x32xf32> to vector<1x32xf32>
    %cst_39 = arith.constant 0.001953125 : f32
    %48 = vector.broadcast %cst_39 : f32 to vector<1x32xf32>
    %49 = arith.mulf %47, %48 : vector<1x32xf32>
    %50 = arith.mulf %46, %46 : vector<1x32xf32>
    %51 = arith.subf %49, %50 : vector<1x32xf32>
    %cst_40 = arith.constant 0.000000e+00 : f32
    %52 = vector.broadcast %cst_40 : f32 to vector<1x32xf32>
    %53 = arith.maximumf %51, %52 : vector<1x32xf32>
    %c0_41 = arith.constant 0 : index
    %c0_42 = arith.constant 0 : index
    %c0_43 = arith.constant 0 : index
    %54 = vector.load %arg4[%c0_41, %c0_42, %c0_43] : memref<2x1x32xf32, #tpu.memory_space<vmem>>, vector<1x1x32xf32>
    %55 = vector.shape_cast %54 : vector<1x1x32xf32> to vector<1x32xf32>
    %cst_44 = arith.constant 9.99999974E-6 : f32
    %56 = vector.broadcast %cst_44 : f32 to vector<1x32xf32>
    %57 = arith.addf %53, %56 : vector<1x32xf32>
    %58 = math.rsqrt %57 : vector<1x32xf32>
    %59 = arith.mulf %55, %58 : vector<1x32xf32>
    %c0_45 = arith.constant 0 : index
    %c0_46 = arith.constant 0 : index
    %c0_47 = arith.constant 0 : index
    %60 = vector.load %arg5[%c0_45, %c0_46, %c0_47] : memref<2x1x32xf32, #tpu.memory_space<vmem>>, vector<1x1x32xf32>
    %61 = vector.shape_cast %60 : vector<1x1x32xf32> to vector<1x32xf32>
    %62 = arith.mulf %46, %59 : vector<1x32xf32>
    %63 = arith.subf %61, %62 : vector<1x32xf32>
    %64 = tpu.concatenate %59, %63 in 0 : vector<1x32xf32>, vector<1x32xf32> -> vector<2x32xf32>
    %c0_48 = arith.constant 0 : index
    %c0_49 = arith.constant 0 : index
    %65 = vector.load %arg8[%c0_48, %c0_49] : memref<32x640xf32, #tpu.memory_space<vmem>>, vector<32x640xf32>
    %cst_50 = arith.constant dense<0.000000e+00> : vector<2x640xf32>
    %66 = tpu.matmul %64, %65, %cst_50 {dimension_numbers = #tpu.dot_dimension_numbers<[1], [0], [0], [1], [0, 0, 1, 1], [], []>} : vector<2x32xf32>, vector<32x640xf32>, vector<2x640xf32> -> vector<2x640xf32>
    %67 = vector.extract_strided_slice %66 {offsets = [0, 0], sizes = [1, 640], strides = [1, 1]} : vector<2x640xf32> to vector<1x640xf32>
    %68 = vector.broadcast %67 : vector<1x640xf32> to vector<40x640xf32>
    %69 = arith.mulf %35, %68 : vector<40x640xf32>
    %70 = vector.extract_strided_slice %66 {offsets = [1, 0], sizes = [1, 640], strides = [1, 1]} : vector<2x640xf32> to vector<1x640xf32>
    %c0_51 = arith.constant 0 : index
    %c0_52 = arith.constant 0 : index
    %71 = vector.load %arg6[%c0_51, %c0_52] : memref<40x640xf32, #tpu.memory_space<vmem>>, vector<40x640xf32>
    %72 = vector.broadcast %70 : vector<1x640xf32> to vector<40x640xf32>
    %73 = arith.mulf %72, %71 : vector<40x640xf32>
    %74 = arith.addf %69, %73 : vector<40x640xf32>
    %c8_53 = arith.constant 8 : index
    %c0_54 = arith.constant 0 : index
    %75 = vector.load %arg13[%c8_53, %c0_54] : memref<56x640xf32, #tpu.memory_space<vmem>>, vector<40x640xf32>
    tpu.vector_store %arg13[%c8_53, %c0_54], %74 {strides = array<i32>} : memref<56x640xf32, #tpu.memory_space<vmem>>, vector<40x640xf32>,
    %c0_i32_55 = arith.constant 0 : i32
    %c0_i32_56 = arith.constant 0 : i32
    %c0_i32_57 = arith.constant 0 : i32
    %c0_i32_58 = arith.constant 0 : i32
    %c0_i32_59 = arith.constant 0 : i32
    %c0_i32_60 = arith.constant 0 : i32
    %76 = tpu.memref_slice %arg2[%c0_i32_55, %c0_i32_58, %c0_i32_59, %c0_i32_60] : memref<1x3x640x640xbf16, #tpu.memory_space<any>> -> memref<1x3x640x640xbf16, #tpu.memory_space<any>>
    %77 = tpu.memref_squeeze %76 : memref<1x3x640x640xbf16, #tpu.memory_space<any>> -> memref<3x640x640xbf16, #tpu.memory_space<any>>
    %c0_i32_61 = arith.constant 0 : i32
    %c0_i32_62 = arith.constant 0 : i32
    %c0_i32_63 = arith.constant 0 : i32
    %78 = tpu.memref_slice %arg15[%c0_i32_56, %c0_i32_61, %c0_i32_62, %c0_i32_63] : memref<1x3x640x640xbf16, #tpu.memory_space<vmem>> -> memref<1x3x640x640xbf16, #tpu.memory_space<vmem>>
    %79 = tpu.memref_squeeze %78 : memref<1x3x640x640xbf16, #tpu.memory_space<vmem>> -> memref<3x640x640xbf16, #tpu.memory_space<vmem>>
    %80 = tpu.memref_slice %arg16[%c0_i32_57] : memref<1x!tpu.dma_semaphore, #tpu.memory_space<semaphore_mem>> -> memref<1x!tpu.dma_semaphore, #tpu.memory_space<semaphore_mem>>
    %81 = tpu.memref_squeeze %80 : memref<1x!tpu.dma_semaphore, #tpu.memory_space<semaphore_mem>> -> memref<!tpu.dma_semaphore, #tpu.memory_space<semaphore_mem>>
    tpu.wait_dma2 semaphore(%81 : memref<!tpu.dma_semaphore, #tpu.memory_space<semaphore_mem>>) src(%77 : memref<3x640x640xbf16, #tpu.memory_space<any>>) dst(%79 : memref<3x640x640xbf16, #tpu.memory_space<vmem>>)
    %c7_64 = arith.constant 7 : index
    %c0_65 = arith.constant 0 : index
    %82 = vector.load %arg13[%c7_64, %c0_65] : memref<56x640xf32, #tpu.memory_space<vmem>>, vector<40x640xf32>
    %83 = arith.truncf %82 : vector<40x640xf32> to vector<40x640xbf16>
    %c0_66 = arith.constant 0 : index
    %c0_67 = arith.constant 0 : index
    %c0_68 = arith.constant 0 : index
    %c0_69 = arith.constant 0 : index
    %84 = vector.load %arg15[%c0_66, %c0_67, %c0_68, %c0_69] : memref<1x3x640x640xbf16, #tpu.memory_space<vmem>>, vector<1x1x640x640xbf16>
    %85 = vector.shape_cast %84 : vector<1x1x640x640xbf16> to vector<640x640xbf16>
    %cst_70 = arith.constant dense<0.000000e+00> : vector<40x640xf32>
    %86 = tpu.matmul %83, %85, %cst_70 {dimension_numbers = #tpu.dot_dimension_numbers<[1], [0], [0], [1], [0, 0, 1, 1], [], []>} : vector<40x640xbf16>, vector<640x640xbf16>, vector<40x640xf32> -> vector<40x640xf32>
    %c8_71 = arith.constant 8 : index
    %c0_72 = arith.constant 0 : index
    %87 = vector.load %arg13[%c8_71, %c0_72] : memref<56x640xf32, #tpu.memory_space<vmem>>, vector<40x640xf32>
    %88 = arith.truncf %87 : vector<40x640xf32> to vector<40x640xbf16>
    %c0_73 = arith.constant 0 : index
    %c1_74 = arith.constant 1 : index
    %c0_75 = arith.constant 0 : index
    %c0_76 = arith.constant 0 : index
    %89 = vector.load %arg15[%c0_73, %c1_74, %c0_75, %c0_76] : memref<1x3x640x640xbf16, #tpu.memory_space<vmem>>, vector<1x1x640x640xbf16>
    %90 = vector.shape_cast %89 : vector<1x1x640x640xbf16> to vector<640x640xbf16>
    %cst_77 = arith.constant dense<0.000000e+00> : vector<40x640xf32>
    %91 = tpu.matmul %88, %90, %cst_77 {dimension_numbers = #tpu.dot_dimension_numbers<[1], [0], [0], [1], [0, 0, 1, 1], [], []>} : vector<40x640xbf16>, vector<640x640xbf16>, vector<40x640xf32> -> vector<40x640xf32>
    %92 = arith.addf %86, %91 : vector<40x640xf32>
    %c9_78 = arith.constant 9 : index
    %c0_79 = arith.constant 0 : index
    %93 = vector.load %arg13[%c9_78, %c0_79] : memref<56x640xf32, #tpu.memory_space<vmem>>, vector<40x640xf32>
    %94 = arith.truncf %93 : vector<40x640xf32> to vector<40x640xbf16>
    %c0_80 = arith.constant 0 : index
    %c2_81 = arith.constant 2 : index
    %c0_82 = arith.constant 0 : index
    %c0_83 = arith.constant 0 : index
    %95 = vector.load %arg15[%c0_80, %c2_81, %c0_82, %c0_83] : memref<1x3x640x640xbf16, #tpu.memory_space<vmem>>, vector<1x1x640x640xbf16>
    %96 = vector.shape_cast %95 : vector<1x1x640x640xbf16> to vector<640x640xbf16>
    %cst_84 = arith.constant dense<0.000000e+00> : vector<40x640xf32>
    %97 = tpu.matmul %94, %96, %cst_84 {dimension_numbers = #tpu.dot_dimension_numbers<[1], [0], [0], [1], [0, 0, 1, 1], [], []>} : vector<40x640xbf16>, vector<640x640xbf16>, vector<40x640xf32> -> vector<40x640xf32>
    %98 = arith.addf %92, %97 : vector<40x640xf32>
    %c1_85 = arith.constant 1 : index
    %c0_86 = arith.constant 0 : index
    %c0_87 = arith.constant 0 : index
    %99 = vector.load %arg3[%c1_85, %c0_86, %c0_87] : memref<2x1x640xf32, #tpu.memory_space<vmem>>, vector<1x1x640xf32>
    %100 = vector.shape_cast %99 : vector<1x1x640xf32> to vector<1x640xf32>
    %101 = vector.broadcast %100 : vector<1x640xf32> to vector<40x640xf32>
    %102 = arith.addf %98, %101 : vector<40x640xf32>
    %cst_88 = arith.constant 0.000000e+00 : f32
    %103 = vector.broadcast %cst_88 : f32 to vector<40x640xf32>
    %104 = arith.maximumf %102, %103 : vector<40x640xf32>
    %c0_89 = arith.constant 0 : index
    %c0_90 = arith.constant 0 : index
    %105 = vector.load %arg6[%c0_89, %c0_90] : memref<40x640xf32, #tpu.memory_space<vmem>>, vector<40x640xf32>
    %106 = arith.mulf %104, %105 : vector<40x640xf32>
    %cst_91 = arith.constant dense<0.000000e+00> : vector<640xf32>
    %107 = vector.multi_reduction <add>, %106, %cst_91 [0] : vector<40x640xf32> to vector<640xf32>
    %108 = vector.shape_cast %107 : vector<640xf32> to vector<1x640xf32>
    %109 = arith.mulf %106, %106 : vector<40x640xf32>
    %cst_92 = arith.constant dense<0.000000e+00> : vector<640xf32>
    %110 = vector.multi_reduction <add>, %109, %cst_92 [0] : vector<40x640xf32> to vector<640xf32>
    %111 = vector.shape_cast %110 : vector<640xf32> to vector<1x640xf32>
    %112 = tpu.concatenate %108, %111 in 0 : vector<1x640xf32>, vector<1x640xf32> -> vector<2x640xf32>
    %c0_93 = arith.constant 0 : index
    %c0_94 = arith.constant 0 : index
    %113 = vector.load %arg7[%c0_93, %c0_94] : memref<640x32xf32, #tpu.memory_space<vmem>>, vector<640x32xf32>
    %cst_95 = arith.constant dense<0.000000e+00> : vector<2x32xf32>
    %114 = tpu.matmul %112, %113, %cst_95 {dimension_numbers = #tpu.dot_dimension_numbers<[1], [0], [0], [1], [0, 0, 1, 1], [], []>} : vector<2x640xf32>, vector<640x32xf32>, vector<2x32xf32> -> vector<2x32xf32>
    %115 = vector.extract_strided_slice %114 {offsets = [0, 0], sizes = [1, 32], strides = [1, 1]} : vector<2x32xf32> to vector<1x32xf32>
    %cst_96 = arith.constant 0.001953125 : f32
    %116 = vector.broadcast %cst_96 : f32 to vector<1x32xf32>
    %117 = arith.mulf %115, %116 : vector<1x32xf32>
    %118 = vector.extract_strided_slice %114 {offsets = [1, 0], sizes = [1, 32], strides = [1, 1]} : vector<2x32xf32> to vector<1x32xf32>
    %cst_97 = arith.constant 0.001953125 : f32
    %119 = vector.broadcast %cst_97 : f32 to vector<1x32xf32>
    %120 = arith.mulf %118, %119 : vector<1x32xf32>
    %121 = arith.mulf %117, %117 : vector<1x32xf32>
    %122 = arith.subf %120, %121 : vector<1x32xf32>
    %cst_98 = arith.constant 0.000000e+00 : f32
    %123 = vector.broadcast %cst_98 : f32 to vector<1x32xf32>
    %124 = arith.maximumf %122, %123 : vector<1x32xf32>
    %c1_99 = arith.constant 1 : index
    %c0_100 = arith.constant 0 : index
    %c0_101 = arith.constant 0 : index
    %125 = vector.load %arg4[%c1_99, %c0_100, %c0_101] : memref<2x1x32xf32, #tpu.memory_space<vmem>>, vector<1x1x32xf32>
    %126 = vector.shape_cast %125 : vector<1x1x32xf32> to vector<1x32xf32>
    %cst_102 = arith.constant 9.99999974E-6 : f32
    %127 = vector.broadcast %cst_102 : f32 to vector<1x32xf32>
    %128 = arith.addf %124, %127 : vector<1x32xf32>
    %129 = math.rsqrt %128 : vector<1x32xf32>
    %130 = arith.mulf %126, %129 : vector<1x32xf32>
    %c1_103 = arith.constant 1 : index
    %c0_104 = arith.constant 0 : index
    %c0_105 = arith.constant 0 : index
    %131 = vector.load %arg5[%c1_103, %c0_104, %c0_105] : memref<2x1x32xf32, #tpu.memory_space<vmem>>, vector<1x1x32xf32>
    %132 = vector.shape_cast %131 : vector<1x1x32xf32> to vector<1x32xf32>
    %133 = arith.mulf %117, %130 : vector<1x32xf32>
    %134 = arith.subf %132, %133 : vector<1x32xf32>
    %135 = tpu.concatenate %130, %134 in 0 : vector<1x32xf32>, vector<1x32xf32> -> vector<2x32xf32>
    %c0_106 = arith.constant 0 : index
    %c0_107 = arith.constant 0 : index
    %136 = vector.load %arg8[%c0_106, %c0_107] : memref<32x640xf32, #tpu.memory_space<vmem>>, vector<32x640xf32>
    %cst_108 = arith.constant dense<0.000000e+00> : vector<2x640xf32>
    %137 = tpu.matmul %135, %136, %cst_108 {dimension_numbers = #tpu.dot_dimension_numbers<[1], [0], [0], [1], [0, 0, 1, 1], [], []>} : vector<2x32xf32>, vector<32x640xf32>, vector<2x640xf32> -> vector<2x640xf32>
    %138 = vector.extract_strided_slice %137 {offsets = [0, 0], sizes = [1, 640], strides = [1, 1]} : vector<2x640xf32> to vector<1x640xf32>
    %139 = vector.broadcast %138 : vector<1x640xf32> to vector<40x640xf32>
    %140 = arith.mulf %106, %139 : vector<40x640xf32>
    %141 = vector.extract_strided_slice %137 {offsets = [1, 0], sizes = [1, 640], strides = [1, 1]} : vector<2x640xf32> to vector<1x640xf32>
    %c0_109 = arith.constant 0 : index
    %c0_110 = arith.constant 0 : index
    %142 = vector.load %arg6[%c0_109, %c0_110] : memref<40x640xf32, #tpu.memory_space<vmem>>, vector<40x640xf32>
    %143 = vector.broadcast %141 : vector<1x640xf32> to vector<40x640xf32>
    %144 = arith.mulf %143, %142 : vector<40x640xf32>
    %145 = arith.addf %140, %144 : vector<40x640xf32>
    %c8_111 = arith.constant 8 : index
    %c0_112 = arith.constant 0 : index
    %146 = vector.load %arg14[%c8_111, %c0_112] : memref<56x640xf32, #tpu.memory_space<vmem>>, vector<40x640xf32>
    tpu.vector_store %arg14[%c8_111, %c0_112], %145 {strides = array<i32>} : memref<56x640xf32, #tpu.memory_space<vmem>>, vector<40x640xf32>,
    %c9_113 = arith.constant 9 : index
    %c0_114 = arith.constant 0 : index
    %147 = vector.load %arg14[%c9_113, %c0_114] : memref<56x640xf32, #tpu.memory_space<vmem>>, vector<16x640xf32>
    %cst_115 = arith.constant dense<0xFF800000> : vector<640xf32>
    %148 = vector.multi_reduction <maximumf>, %147, %cst_115 [0] : vector<16x640xf32> to vector<640xf32>
    %149 = vector.shape_cast %148 : vector<640xf32> to vector<1x640xf32>
    %c29 = arith.constant 29 : index
    %c0_116 = arith.constant 0 : index
    %150 = vector.load %arg14[%c29, %c0_116] : memref<56x640xf32, #tpu.memory_space<vmem>>, vector<16x640xf32>
    %cst_117 = arith.constant dense<0xFF800000> : vector<640xf32>
    %151 = vector.multi_reduction <maximumf>, %150, %cst_117 [0] : vector<16x640xf32> to vector<640xf32>
    %152 = vector.shape_cast %151 : vector<640xf32> to vector<1x640xf32>
    %153 = tpu.concatenate %149, %152 in 0 : vector<1x640xf32>, vector<1x640xf32> -> vector<2x640xf32>
    %c0_118 = arith.constant 0 : index
    %c0_119 = arith.constant 0 : index
    %154 = vector.load %arg9[%c0_118, %c0_119] : memref<1x640xf32, #tpu.memory_space<vmem>>, vector<1x640xf32>
    %155 = vector.broadcast %154 : vector<1x640xf32> to vector<2x640xf32>
    %156 = arith.addf %153, %155 : vector<2x640xf32>
    %c32_i32 = arith.constant 32 : i32
    %157 = tpu.dynamic_rotate %156 by %c32_i32 dim 1 : vector<2x640xf32>, i32 -> vector<2x640xf32>
    %158 = arith.maximumf %156, %157 : vector<2x640xf32>
    %c64_i32 = arith.constant 64 : i32
    %159 = tpu.dynamic_rotate %158 by %c64_i32 dim 1 : vector<2x640xf32>, i32 -> vector<2x640xf32>
    %160 = arith.maximumf %158, %159 : vector<2x640xf32>
    %c128_i32 = arith.constant 128 : i32
    %161 = tpu.dynamic_rotate %160 by %c128_i32 dim 1 : vector<2x640xf32>, i32 -> vector<2x640xf32>
    %162 = arith.maximumf %160, %161 : vector<2x640xf32>
    %c256_i32 = arith.constant 256 : i32
    %163 = tpu.dynamic_rotate %162 by %c256_i32 dim 1 : vector<2x640xf32>, i32 -> vector<2x640xf32>
    %164 = arith.maximumf %162, %163 : vector<2x640xf32>
    %c512_i32 = arith.constant 512 : i32
    %165 = tpu.dynamic_rotate %164 by %c512_i32 dim 1 : vector<2x640xf32>, i32 -> vector<2x640xf32>
    %166 = arith.maximumf %164, %165 : vector<2x640xf32>
    %167 = vector.extract_strided_slice %166 {offsets = [0, 0], sizes = [2, 32], strides = [1, 1]} : vector<2x640xf32> to vector<2x32xf32>
    %c0_120 = arith.constant 0 : index
    %c0_121 = arith.constant 0 : index
    %168 = vector.load %arg10[%c0_120, %c0_121] : memref<32x10xf32, #tpu.memory_space<vmem>>, vector<32x10xf32>
    %cst_122 = arith.constant dense<0.000000e+00> : vector<2x10xf32>
    %169 = tpu.matmul %167, %168, %cst_122 {dimension_numbers = #tpu.dot_dimension_numbers<[1], [0], [0], [1], [0, 0, 1, 1], [], []>} : vector<2x32xf32>, vector<32x10xf32>, vector<2x10xf32> -> vector<2x10xf32>
    %c0_123 = arith.constant 0 : index
    %c0_124 = arith.constant 0 : index
    %170 = vector.load %arg11[%c0_123, %c0_124] : memref<1x10xf32, #tpu.memory_space<vmem>>, vector<1x10xf32>
    %171 = vector.broadcast %170 : vector<1x10xf32> to vector<2x10xf32>
    %172 = arith.addf %169, %171 : vector<2x10xf32>
    %c0_125 = arith.constant 0 : index
    %c0_126 = arith.constant 0 : index
    %173 = vector.load %arg12[%c0_125, %c0_126] : memref<2x10xf32, #tpu.memory_space<vmem>>, vector<2x10xf32>
    tpu.vector_store %arg12[%c0_125, %c0_126], %172 {strides = array<i32>} : memref<2x10xf32, #tpu.memory_space<vmem>>, vector<2x10xf32>,
    return
  }
}

</mosaic_0001>

<llo_original>
// kernel: dcnet_apply.1
$region0: #{dcnet_apply.1}
  #allocation0 [shape = 'u32[]', space=smem, size = 0x4, offset = 0x4, fixed_abs, tag = 'smem constant byte address 0x4 - core index']
  #allocation1 [shape = 'u32[144,128]{1,0:T(1,128)}', space=vmem, size = 0x12000, scoped, tag = 'internal scratch']
  #allocation2 [shape = 'f32[56,640]{1,0:T(8,128)}', space=vmem, size = 0x23000, scoped, tag = 'scratch operand']
  #allocation3 [shape = 'f32[56,640]{1,0:T(8,128)}', space=vmem, size = 0x23000, scoped, tag = 'scratch operand']
  #allocation4 [shape = 'bf16[1,3,640,640]{3,2,1,0:T(8,128)(2,1)}', space=vmem, size = 0x258000, scoped, tag = 'scratch operand']
  #allocation5 [shape = 's32[1]{0}', space=sflag, size = 0x4, scoped, tag = 'scratch operand']
  #allocation21 [shape = 's32[]', space=sflag, size = 0x4, offset = 0, fixed_abs, tag = 'sflag constant byte address 0x0 - dummy sync flag']
  #allocation22 [shape = 's32[]', space=sflag, size = 0x4, offset = 0, fixed_abs, tag = 'sflag constant byte address 0x0 - dummy sync flag']
  #allocation23 [shape = 'u32[]', space=smem, size = 0x4, offset = 0x44, fixed_abs, tag = 'smem constant byte address 0x44 - assertion arg 0']
  #allocation24 [shape = 'u32[]', space=smem, size = 0x4, offset = 0x48, fixed_abs, tag = 'smem constant byte address 0x48 - assertion arg 1']
  %s0 = inlined_call_operand.vmem [shape: f32[56,128], index: 0, kind: input, shape index: {}]
  %s1 = inlined_call_operand.hbm [shape: bf16[3,128,640], index: 1, kind: input, shape index: {}]
  %s2 = inlined_call_operand.hbm [shape: bf16[1,3,640,640], index: 2, kind: input, shape index: {}]
  %s3 = inlined_call_operand.hbm [shape: f32[2,1,640], index: 3, kind: input, shape index: {}]
  %s4 = inlined_call_operand.hbm [shape: f32[2,1,32], index: 4, kind: input, shape index: {}]
  %s5 = inlined_call_operand.hbm [shape: f32[2,1,32], index: 5, kind: input, shape index: {}]
  %s6 = inlined_call_operand.hbm [shape: f32[40,640], index: 6, kind: input, shape index: {}]
  %s7 = inlined_call_operand.vmem [shape: f32[640,32], index: 7, kind: input, shape index: {}]
  %s8 = inlined_call_operand.hbm [shape: f32[32,640], index: 8, kind: input, shape index: {}]
  %s9 = inlined_call_operand.hbm [shape: f32[1,640], index: 9, kind: input, shape index: {}]
  %s10 = inlined_call_operand.vmem [shape: f32[32,10], index: 10, kind: input, shape index: {}]
  %s11 = inlined_call_operand.hbm [shape: f32[1,10], index: 11, kind: input, shape index: {}]
  %s12 = inlined_call_operand.hbm [shape: f32[2,10], index: 12, kind: output, shape index: {}]
  %s13 = sld [smem:[#allocation0]]
  $region90: #{dcnet_apply.1} parent=0
    _
  %s15 = ssub.s32 1, %s13
  %s16 = scalar_select 0, %s15, %s13
  $region1: #{dcnet_apply.1} parent=0
    #allocation6 [shape = 'u8[491520]{0}', space=vmem, size = 0x78000, scoped, tag = 'input window, operand 1, single buffered']
    #allocation7 [shape = 's32[1]{0}', space=sflag, size = 0x4, scoped, tag = 'scoped memory for dcnet_apply.1']
    #allocation8 [shape = 's32[1]{0}', space=sflag, size = 0x4, scoped, tag = 'scoped memory for dcnet_apply.1']
    #allocation9 [shape = 'u8[5120]{0}', space=vmem, size = 0x1400, scoped, tag = 'input window, operand 3, single buffered']
    #allocation10 [shape = 's32[1]{0}', space=sflag, size = 0x4, scoped, tag = 'scoped memory for dcnet_apply.1']
    #allocation11 [shape = 'u8[1024]{0}', space=vmem, size = 0x400, scoped, tag = 'input window, operand 4, single buffered']
    #allocation12 [shape = 'u8[1024]{0}', space=vmem, size = 0x400, scoped, tag = 'input window, operand 5, single buffered']
    #allocation13 [shape = 's32[1]{0}', space=sflag, size = 0x4, scoped, tag = 'scoped memory for dcnet_apply.1']
    #allocation14 [shape = 'u8[102400]{0}', space=vmem, size = 0x19000, scoped, tag = 'input window, operand 6, single buffered']
    #allocation15 [shape = 'u8[81920]{0}', space=vmem, size = 0x14000, scoped, tag = 'input window, operand 8, single buffered']
    #allocation16 [shape = 's32[1]{0}', space=sflag, size = 0x4, scoped, tag = 'scoped memory for dcnet_apply.1']
    #allocation17 [shape = 'u8[2560]{0}', space=vmem, size = 0xc00, scoped, tag = 'input window, operand 9, single buffered']
    #allocation18 [shape = 'u8[512]{0}', space=vmem, size = 0x400, scoped, tag = 'input window, operand 11, single buffered']
    #allocation19 [shape = 's32[1]{0}', space=sflag, size = 0x4, scoped, tag = 'scoped memory for dcnet_apply.1']
    #allocation20 [shape = 'u8[1024]{0}', space=vmem, size = 0x400, scoped, tag = 'output window, operand 0, single buffered']
    %17 = vsyncpa [#allocation7], 0
    %18 = vsyncpa [#allocation10], 0
    %19 = vsyncpa [#allocation13], 0
    %20 = vsyncpa [#allocation16], 0
    %21 = vsyncpa [#allocation19], 0
    %22 = vsyncpa [#allocation8], 0
    // Predicated region
    $region2: #{dcnet_apply.1} parent=1 // pred_check
      _
    $region3: #{dcnet_apply.1} parent=1 // pred_check_branch
      %24 = sbr.rel (0) target = $region5
    $region4: #{dcnet_apply.1} parent=1 // pred_region
      _
    $region5: #{dcnet_apply.1} parent=1 // pred_fallthru
      _
    // Predicated region
    $region6: #{dcnet_apply.1} parent=1 // pred_check
      _
    $region7: #{dcnet_apply.1} parent=1 // pred_check_branch
      %26 = sbr.rel (0) target = $region9
    $region8: #{dcnet_apply.1} parent=1 // pred_region
      %s28 = ssub.s32 15360, 15360
      %29 = vsyncadd [#allocation7], %s28
      %s30 = sshll.u32 [#allocation6], 4
      %s31 = int_to_ptr.vmem [resolvable:$true] %s30
      %36 = dma.hbm_to_vmem [thread:$0]  %s1, 15360, %s31, [#allocation7], 320, 320, 20
    $region9: #{dcnet_apply.1} parent=1 // pred_fallthru
      _
    // Predicated region
    $region10: #{dcnet_apply.1} parent=1 // pred_check
      _
    $region11: #{dcnet_apply.1} parent=1 // pred_check_branch
      %38 = sbr.rel (0) target = $region13
    $region12: #{dcnet_apply.1} parent=1 // pred_region
      %s40 = ssub.s32 160, 160
      %41 = vsyncadd [#allocation10], %s40
      %s42 = sshll.u32 [#allocation9], 4
      %s43 = int_to_ptr.vmem [resolvable:$true] %s42
      %48 = dma.hbm_to_vmem [thread:$0]  %s3, 160, %s43, [#allocation10], 80, 80, 5
    $region13: #{dcnet_apply.1} parent=1 // pred_fallthru
      _
    // Predicated region
    $region14: #{dcnet_apply.1} parent=1 // pred_check
      _
    $region15: #{dcnet_apply.1} parent=1 // pred_check_branch
      %50 = sbr.rel (0) target = $region17
    $region16: #{dcnet_apply.1} parent=1 // pred_region
      %s52 = ssub.s32 32, 32
      %53 = vsyncadd [#allocation10], %s52
      %s54 = sshll.u32 [#allocation11], 4
      %s55 = int_to_ptr.vmem [resolvable:$true] %s54
      %60 = dma.hbm_to_vmem [thread:$0]  %s4, 32, %s55, [#allocation10], 16, 16, 1
    $region17: #{dcnet_apply.1} parent=1 // pred_fallthru
      _
    // Predicated region
    $region18: #{dcnet_apply.1} parent=1 // pred_check
      _
    $region19: #{dcnet_apply.1} parent=1 // pred_check_branch
      %62 = sbr.rel (0) target = $region21
    $region20: #{dcnet_apply.1} parent=1 // pred_region
      %s64 = ssub.s32 32, 32
      %65 = vsyncadd [#allocation13], %s64
      %s66 = sshll.u32 [#allocation12], 4
      %s67 = int_to_ptr.vmem [resolvable:$true] %s66
      %72 = dma.hbm_to_vmem [thread:$0]  %s5, 32, %s67, [#allocation13], 16, 16, 1
    $region21: #{dcnet_apply.1} parent=1 // pred_fallthru
      _
    // Predicated region
    $region22: #{dcnet_apply.1} parent=1 // pred_check
      _
    $region23: #{dcnet_apply.1} parent=1 // pred_check_branch
      %74 = sbr.rel (0) target = $region25
    $region24: #{dcnet_apply.1} parent=1 // pred_region
      %s76 = ssub.s32 3200, 3200
      %77 = vsyncadd [#allocation13], %s76
      %s78 = sshll.u32 [#allocation14], 4
      %s79 = int_to_ptr.vmem [resolvable:$true] %s78
      %84 = dma.hbm_to_vmem [thread:$0]  %s6, 3200, %s79, [#allocation13], 640, 640, 40
    $region25: #{dcnet_apply.1} parent=1 // pred_fallthru
      _
    // Predicated region
    $region26: #{dcnet_apply.1} parent=1 // pred_check
      _
    $region27: #{dcnet_apply.1} parent=1 // pred_check_branch
      %86 = sbr.rel (0) target = $region29
    $region28: #{dcnet_apply.1} parent=1 // pred_region
      _
    $region29: #{dcnet_apply.1} parent=1 // pred_fallthru
      _
    // Predicated region
    $region30: #{dcnet_apply.1} parent=1 // pred_check
      _
    $region31: #{dcnet_apply.1} parent=1 // pred_check_branch
      %88 = sbr.rel (0) target = $region33
    $region32: #{dcnet_apply.1} parent=1 // pred_region
      %s90 = ssub.s32 2560, 2560
      %91 = vsyncadd [#allocation16], %s90
      %s92 = sshll.u32 [#allocation15], 4
      %s93 = int_to_ptr.vmem [resolvable:$true] %s92
      %98 = dma.hbm_to_vmem [thread:$0]  %s8, 2560, %s93, [#allocation16], 640, 640, 40
    $region33: #{dcnet_apply.1} parent=1 // pred_fallthru
      _
    // Predicated region
    $region34: #{dcnet_apply.1} parent=1 // pred_check
      _
    $region35: #{dcnet_apply.1} parent=1 // pred_check_branch
      %100 = sbr.rel (0) target = $region37
    $region36: #{dcnet_apply.1} parent=1 // pred_region
      %s102 = ssub.s32 80, 80
      %103 = vsyncadd [#allocation16], %s102
      %s105 = sshll.u32 [#allocation17], 4
      %s106 = int_to_ptr.vmem [resolvable:$true] %s105
      %108 = dma.hbm_to_vmem [thread:$0]  %s9, 80, %s106, [#allocation16]
    $region37: #{dcnet_apply.1} parent=1 // pred_fallthru
      _
    // Predicated region
    $region38: #{dcnet_apply.1} parent=1 // pred_check
      _
    $region39: #{dcnet_apply.1} parent=1 // pred_check_branch
      %110 = sbr.rel (0) target = $region41
    $region40: #{dcnet_apply.1} parent=1 // pred_region
      _
    $region41: #{dcnet_apply.1} parent=1 // pred_fallthru
      _
    // Predicated region
    $region42: #{dcnet_apply.1} parent=1 // pred_check
      _
    $region43: #{dcnet_apply.1} parent=1 // pred_check_branch
      %112 = sbr.rel (0) target = $region45
    $region44: #{dcnet_apply.1} parent=1 // pred_region
      %s114 = ssub.s32 16, 16
      %115 = vsyncadd [#allocation19], %s114
      %s117 = sshll.u32 [#allocation18], 4
      %s118 = int_to_ptr.vmem [resolvable:$true] %s117
      %120 = dma.hbm_to_vmem [thread:$0]  %s11, 16, %s118, [#allocation19]
    $region45: #{dcnet_apply.1} parent=1 // pred_fallthru
      _
    // Predicated region
    $region46: #{dcnet_apply.1} parent=1 // pred_check
      _
    $region47: #{dcnet_apply.1} parent=1 // pred_check_branch
      %122 = sbr.rel (0) target = $region49
    $region48: #{dcnet_apply.1} parent=1 // pred_region
      %123 = dma.done [#allocation7], 15360
    $region49: #{dcnet_apply.1} parent=1 // pred_fallthru
      _
    // Predicated region
    $region50: #{dcnet_apply.1} parent=1 // pred_check
      _
    $region51: #{dcnet_apply.1} parent=1 // pred_check_branch
      %125 = sbr.rel (0) target = $region53
    $region52: #{dcnet_apply.1} parent=1 // pred_region
      %126 = dma.done [#allocation10], 160
    $region53: #{dcnet_apply.1} parent=1 // pred_fallthru
      _
    // Predicated region
    $region54: #{dcnet_apply.1} parent=1 // pred_check
      _
    $region55: #{dcnet_apply.1} parent=1 // pred_check_branch
      %128 = sbr.rel (0) target = $region57
    $region56: #{dcnet_apply.1} parent=1 // pred_region
      %129 = dma.done [#allocation10], 32
    $region57: #{dcnet_apply.1} parent=1 // pred_fallthru
      _
    // Predicated region
    $region58: #{dcnet_apply.1} parent=1 // pred_check
      _
    $region59: #{dcnet_apply.1} parent=1 // pred_check_branch
      %131 = sbr.rel (0) target = $region61
    $region60: #{dcnet_apply.1} parent=1 // pred_region
      %132 = dma.done [#allocation13], 32
    $region61: #{dcnet_apply.1} parent=1 // pred_fallthru
      _
    // Predicated region
    $region62: #{dcnet_apply.1} parent=1 // pred_check
      _
    $region63: #{dcnet_apply.1} parent=1 // pred_check_branch
      %134 = sbr.rel (0) target = $region65
    $region64: #{dcnet_apply.1} parent=1 // pred_region
      %135 = dma.done [#allocation13], 3200
    $region65: #{dcnet_apply.1} parent=1 // pred_fallthru
      _
    // Predicated region
    $region66: #{dcnet_apply.1} parent=1 // pred_check
      _
    $region67: #{dcnet_apply.1} parent=1 // pred_check_branch
      %137 = sbr.rel (0) target = $region69
    $region68: #{dcnet_apply.1} parent=1 // pred_region
      %138 = dma.done [#allocation16], 2560
    $region69: #{dcnet_apply.1} parent=1 // pred_fallthru
      _
    // Predicated region
    $region70: #{dcnet_apply.1} parent=1 // pred_check
      _
    $region71: #{dcnet_apply.1} parent=1 // pred_check_branch
      %140 = sbr.rel (0) target = $region73
    $region72: #{dcnet_apply.1} parent=1 // pred_region
      %141 = dma.done [#allocation16], 80
    $region73: #{dcnet_apply.1} parent=1 // pred_fallthru
      _
    // Predicated region
    $region74: #{dcnet_apply.1} parent=1 // pred_check
      _
    $region75: #{dcnet_apply.1} parent=1 // pred_check_branch
      %143 = sbr.rel (0) target = $region77
    $region76: #{dcnet_apply.1} parent=1 // pred_region
      %144 = dma.done [#allocation19], 16
    $region77: #{dcnet_apply.1} parent=1 // pred_fallthru
      _
    // Predicated region
    $region78: #{dcnet_apply.1} parent=1 // pred_check
      _
    $region79: #{dcnet_apply.1} parent=1 // pred_check_branch
      %147 = sbr.rel target = $region81
    $region80: #{dcnet_apply.1} parent=1 // pred_region
      %148 = sst [smem:[#allocation23]] [#allocation22]
      %149 = sst [smem:[#allocation24]] [#allocation21]
    $region81: #{dcnet_apply.1} parent=1 // pred_fallthru
      _
    %151 = shalt.err (0)
    %s153 = sshll.u32 [#allocation4], 4
    %s154 = int_to_ptr.vmem [resolvable:$true] %s153
    %156 = dma.hbm_to_vmem [thread:$0]  %s2, 76800, %s154, [#allocation5]
    %157 = vst [vmem:[#allocation2] sm:$0xff] 0.0
    %158 = vst [vmem:[#allocation2 + $0x8] sm:$0xff] 0.0
    %159 = vst [vmem:[#allocation2 + $0x10] sm:$0xff] 0.0
    %160 = vst [vmem:[#allocation2 + $0x18] sm:$0xff] 0.0
    %161 = vst [vmem:[#allocation2 + $0x20] sm:$0xff] 0.0
    %162 = vst [vmem:[#allocation2 + $0xf0] sm:$0xff] 0.0
    %163 = vst [vmem:[#allocation2 + $0xf8] sm:$0xff] 0.0
    %164 = vst [vmem:[#allocation2 + $0x100] sm:$0xff] 0.0
    %165 = vst [vmem:[#allocation2 + $0x108] sm:$0xff] 0.0
    %166 = vst [vmem:[#allocation2 + $0x110] sm:$0xff] 0.0
    %167 = vst [vmem:[#allocation3] sm:$0xff] 0.0
    %168 = vst [vmem:[#allocation3 + $0x8] sm:$0xff] 0.0
    %169 = vst [vmem:[#allocation3 + $0x10] sm:$0xff] 0.0
    %170 = vst [vmem:[#allocation3 + $0x18] sm:$0xff] 0.0
    %171 = vst [vmem:[#allocation3 + $0x20] sm:$0xff] 0.0
    %172 = vst [vmem:[#allocation3 + $0xf0] sm:$0xff] 0.0
    %173 = vst [vmem:[#allocation3 + $0xf8] sm:$0xff] 0.0
    %174 = vst [vmem:[#allocation3 + $0x100] sm:$0xff] 0.0
    %175 = vst [vmem:[#allocation3 + $0x108] sm:$0xff] 0.0
    %176 = vst [vmem:[#allocation3 + $0x110] sm:$0xff] 0.0
    %v177 = vld [vmem:[%s0 + $0x7] sm:$0xff]
    %v178 = vld [vmem:[%s0 + $0xf] sm:$0xff]
    %v179 = vld [vmem:[%s0 + $0x17] sm:$0xff]
    %v180 = vld [vmem:[%s0 + $0x1f] sm:$0xff]
    %v181 = vld [vmem:[%s0 + $0x27] sm:$0xff]
    %v182 = vpack.c.bf16 %v178, %v177
    %v183 = vpack.c.bf16 %v180, %v179
    %v184 = vpack.c.bf16 %v181, %v181
    %v185 = vld [vmem:[#allocation6] sm:$0xff]
    %v186 = vld [vmem:[#allocation6 + $0x8] sm:$0xff]
    %v187 = vld [vmem:[#allocation6 + $0x10] sm:$0xf]
    %v188 = vld [vmem:[#allocation6 + $0x14] sm:$0xff]
    %v189 = vld [vmem:[#allocation6 + $0x1c] sm:$0xff]
    %v190 = vld [vmem:[#allocation6 + $0x24] sm:$0xf]
    %v191 = vld [vmem:[#allocation6 + $0x28] sm:$0xff]
    %v192 = vld [vmem:[#allocation6 + $0x30] sm:$0xff]
    %v193 = vld [vmem:[#allocation6 + $0x38] sm:$0xf]
    %v194 = vld [vmem:[#allocation6 + $0x3c] sm:$0xff]
    %v195 = vld [vmem:[#allocation6 + $0x44] sm:$0xff]
    %v196 = vld [vmem:[#allocation6 + $0x4c] sm:$0xf]
    %v197 = vld [vmem:[#allocation6 + $0x50] sm:$0xff]
    %v198 = vld [vmem:[#allocation6 + $0x58] sm:$0xff]
    %v199 = vld [vmem:[#allocation6 + $0x60] sm:$0xf]
    %v200 = vld [vmem:[#allocation6 + $0x64] sm:$0xff]
    %v201 = vld [vmem:[#allocation6 + $0x6c] sm:$0xff]
    %v202 = vld [vmem:[#allocation6 + $0x74] sm:$0xf]
    %v203 = vld [vmem:[#allocation6 + $0x78] sm:$0xff]
    %v204 = vld [vmem:[#allocation6 + $0x80] sm:$0xff]
    %v205 = vld [vmem:[#allocation6 + $0x88] sm:$0xf]
    %v206 = vld [vmem:[#allocation6 + $0x8c] sm:$0xff]
    %v207 = vld [vmem:[#allocation6 + $0x94] sm:$0xff]
    %v208 = vld [vmem:[#allocation6 + $0x9c] sm:$0xf]
    %v209 = vld [vmem:[#allocation6 + $0xa0] sm:$0xff]
    %v210 = vld [vmem:[#allocation6 + $0xa8] sm:$0xff]
    %v211 = vld [vmem:[#allocation6 + $0xb0] sm:$0xf]
    %v212 = vld [vmem:[#allocation6 + $0xb4] sm:$0xff]
    %v213 = vld [vmem:[#allocation6 + $0xbc] sm:$0xff]
    %v214 = vld [vmem:[#allocation6 + $0xc4] sm:$0xf]
    %v215 = vld [vmem:[#allocation6 + $0xc8] sm:$0xff]
    %v216 = vld [vmem:[#allocation6 + $0xd0] sm:$0xff]
    %v217 = vld [vmem:[#allocation6 + $0xd8] sm:$0xf]
    %v218 = vld [vmem:[#allocation6 + $0xdc] sm:$0xff]
    %v219 = vld [vmem:[#allocation6 + $0xe4] sm:$0xff]
    %v220 = vld [vmem:[#allocation6 + $0xec] sm:$0xf]
    %v221 = vld [vmem:[#allocation6 + $0xf0] sm:$0xff]
    %v222 = vld [vmem:[#allocation6 + $0xf8] sm:$0xff]
    %v223 = vld [vmem:[#allocation6 + $0x100] sm:$0xf]
    %v224 = vld [vmem:[#allocation6 + $0x104] sm:$0xff]
    %v225 = vld [vmem:[#allocation6 + $0x10c] sm:$0xff]
    %v226 = vld [vmem:[#allocation6 + $0x114] sm:$0xf]
    %v227 = vld [vmem:[#allocation6 + $0x118] sm:$0xff]
    %v228 = vld [vmem:[#allocation6 + $0x120] sm:$0xff]
    %v229 = vld [vmem:[#allocation6 + $0x128] sm:$0xf]
    %v230 = vld [vmem:[#allocation6 + $0x12c] sm:$0xff]
    %v231 = vld [vmem:[#allocation6 + $0x134] sm:$0xff]
    %v232 = vld [vmem:[#allocation6 + $0x13c] sm:$0xf]
    %v233 = vld [vmem:[%s0 + $0x8] sm:$0xff]
    %v234 = vld [vmem:[%s0 + $0x10] sm:$0xff]
    %v235 = vld [vmem:[%s0 + $0x18] sm:$0xff]
    %v236 = vld [vmem:[%s0 + $0x20] sm:$0xff]
    %v237 = vld [vmem:[%s0 + $0x28] sm:$0xff]
    %v238 = vpack.c.bf16 %v234, %v233
    %v239 = vpack.c.bf16 %v236, %v235
    %v240 = vpack.c.bf16 %v237, %v237
    %s241 = scalar_lea.vmem [#allocation6], 320
    %v242 = vld [vmem:[%s241] sm:$0xff]
    %v243 = vld [vmem:[%s241 + $0x8] sm:$0xff]
    %v244 = vld [vmem:[%s241 + $0x10] sm:$0xf]
    %v245 = vld [vmem:[%s241 + $0x14] sm:$0xff]
    %v246 = vld [vmem:[%s241 + $0x1c] sm:$0xff]
    %v247 = vld [vmem:[%s241 + $0x24] sm:$0xf]
    %v248 = vld [vmem:[%s241 + $0x28] sm:$0xff]
    %v249 = vld [vmem:[%s241 + $0x30] sm:$0xff]
    %v250 = vld [vmem:[%s241 + $0x38] sm:$0xf]
    %v251 = vld [vmem:[%s241 + $0x3c] sm:$0xff]
    %v252 = vld [vmem:[%s241 + $0x44] sm:$0xff]
    %v253 = vld [vmem:[%s241 + $0x4c] sm:$0xf]
    %v254 = vld [vmem:[%s241 + $0x50] sm:$0xff]
    %v255 = vld [vmem:[%s241 + $0x58] sm:$0xff]
    %v256 = vld [vmem:[%s241 + $0x60] sm:$0xf]
    %v257 = vld [vmem:[%s241 + $0x64] sm:$0xff]
    %v258 = vld [vmem:[%s241 + $0x6c] sm:$0xff]
    %v259 = vld [vmem:[%s241 + $0x74] sm:$0xf]
    %v260 = vld [vmem:[%s241 + $0x78] sm:$0xff]
    %v261 = vld [vmem:[%s241 + $0x80] sm:$0xff]
    %v262 = vld [vmem:[%s241 + $0x88] sm:$0xf]
    %v263 = vld [vmem:[%s241 + $0x8c] sm:$0xff]
    %v264 = vld [vmem:[%s241 + $0x94] sm:$0xff]
    %v265 = vld [vmem:[%s241 + $0x9c] sm:$0xf]
    %v266 = vld [vmem:[%s241 + $0xa0] sm:$0xff]
    %v267 = vld [vmem:[%s241 + $0xa8] sm:$0xff]
    %v268 = vld [vmem:[%s241 + $0xb0] sm:$0xf]
    %v269 = vld [vmem:[%s241 + $0xb4] sm:$0xff]
    %v270 = vld [vmem:[%s241 + $0xbc] sm:$0xff]
    %v271 = vld [vmem:[%s241 + $0xc4] sm:$0xf]
    %v272 = vld [vmem:[%s241 + $0xc8] sm:$0xff]
    %v273 = vld [vmem:[%s241 + $0xd0] sm:$0xff]
    %v274 = vld [vmem:[%s241 + $0xd8] sm:$0xf]
    %v275 = vld [vmem:[%s241 + $0xdc] sm:$0xff]
    %v276 = vld [vmem:[%s241 + $0xe4] sm:$0xff]
    %v277 = vld [vmem:[%s241 + $0xec] sm:$0xf]
    %v278 = vld [vmem:[%s241 + $0xf0] sm:$0xff]
    %v279 = vld [vmem:[%s241 + $0xf8] sm:$0xff]
    %v280 = vld [vmem:[%s241 + $0x100] sm:$0xf]
    %v281 = vld [vmem:[%s241 + $0x104] sm:$0xff]
    %v282 = vld [vmem:[%s241 + $0x10c] sm:$0xff]
    %v283 = vld [vmem:[%s241 + $0x114] sm:$0xf]
    %v284 = vld [vmem:[%s241 + $0x118] sm:$0xff]
    %v285 = vld [vmem:[%s241 + $0x120] sm:$0xff]
    %v286 = vld [vmem:[%s241 + $0x128] sm:$0xf]
    %v287 = vld [vmem:[%s241 + $0x12c] sm:$0xff]
    %v288 = vld [vmem:[%s241 + $0x134] sm:$0xff]
    %v289 = vld [vmem:[%s241 + $0x13c] sm:$0xf]
    %v338 = vunpack.c.l.b16 %v242
    %v339 = vunpack.c.h.b16 %v242
    %v340 = vunpack.c.l.b16 %v243
    %v341 = vunpack.c.h.b16 %v243
    %v342 = vunpack.c.l.b16 %v244
    %v343 = vunpack.c.l.b16 %v245
    %v344 = vunpack.c.h.b16 %v245
    %v345 = vunpack.c.l.b16 %v246
    %v346 = vunpack.c.h.b16 %v246
    %v347 = vunpack.c.l.b16 %v247
    %v348 = vunpack.c.l.b16 %v248
    %v349 = vunpack.c.h.b16 %v248
    %v350 = vunpack.c.l.b16 %v249
    %v351 = vunpack.c.h.b16 %v249
    %v352 = vunpack.c.l.b16 %v250
    %v353 = vunpack.c.l.b16 %v251
    %v354 = vunpack.c.h.b16 %v251
    %v355 = vunpack.c.l.b16 %v252
    %v356 = vunpack.c.h.b16 %v252
    %v357 = vunpack.c.l.b16 %v253
    %v358 = vunpack.c.l.b16 %v254
    %v359 = vunpack.c.h.b16 %v254
    %v360 = vunpack.c.l.b16 %v255
    %v361 = vunpack.c.h.b16 %v255
    %v362 = vunpack.c.l.b16 %v256
    %v363 = vunpack.c.l.b16 %v257
    %v364 = vunpack.c.h.b16 %v257
    %v365 = vunpack.c.l.b16 %v258
    %v366 = vunpack.c.h.b16 %v258
    %v367 = vunpack.c.l.b16 %v259
    %v368 = vunpack.c.l.b16 %v260
    %v369 = vunpack.c.h.b16 %v260
    %v370 = vunpack.c.l.b16 %v261
    %v371 = vunpack.c.h.b16 %v261
    %v372 = vunpack.c.l.b16 %v262
    %v373 = vunpack.c.l.b16 %v263
    %v374 = vunpack.c.h.b16 %v263
    %v375 = vunpack.c.l.b16 %v264
    %v376 = vunpack.c.h.b16 %v264
    %v377 = vunpack.c.l.b16 %v265
    %v378 = vunpack.c.l.b16 %v266
    %v379 = vunpack.c.h.b16 %v266
    %v380 = vunpack.c.l.b16 %v267
    %v381 = vunpack.c.h.b16 %v267
    %v382 = vunpack.c.l.b16 %v268
    %v383 = vunpack.c.l.b16 %v269
    %v384 = vunpack.c.h.b16 %v269
    %v385 = vunpack.c.l.b16 %v270
    %v386 = vunpack.c.h.b16 %v270
    %v387 = vunpack.c.l.b16 %v271
    %v388 = vunpack.c.l.b16 %v272
    %v389 = vunpack.c.h.b16 %v272
    %v390 = vunpack.c.l.b16 %v273
    %v391 = vunpack.c.h.b16 %v273
    %v392 = vunpack.c.l.b16 %v274
    %v393 = vunpack.c.l.b16 %v275
    %v394 = vunpack.c.h.b16 %v275
    %v395 = vunpack.c.l.b16 %v276
    %v396 = vunpack.c.h.b16 %v276
    %v397 = vunpack.c.l.b16 %v277
    %v398 = vunpack.c.l.b16 %v278
    %v399 = vunpack.c.h.b16 %v278
    %v400 = vunpack.c.l.b16 %v279
    %v401 = vunpack.c.h.b16 %v279
    %v402 = vunpack.c.l.b16 %v280
    %v403 = vunpack.c.l.b16 %v281
    %v404 = vunpack.c.h.b16 %v281
    %v405 = vunpack.c.l.b16 %v282
    %v406 = vunpack.c.h.b16 %v282
    %v407 = vunpack.c.l.b16 %v283
    %v408 = vunpack.c.l.b16 %v284
    %v409 = vunpack.c.h.b16 %v284
    %v410 = vunpack.c.l.b16 %v285
    %v411 = vunpack.c.h.b16 %v285
    %v412 = vunpack.c.l.b16 %v286
    %v413 = vunpack.c.l.b16 %v287
    %v414 = vunpack.c.h.b16 %v287
    %v415 = vunpack.c.l.b16 %v288
    %v416 = vunpack.c.h.b16 %v288
    %v417 = vunpack.c.l.b16 %v289
    %v418 = vpack.c.b16 %v343, %v338
    %v419 = vpack.c.b16 %v344, %v339
    %v420 = vpack.c.b16 %v345, %v340
    %v421 = vpack.c.b16 %v346, %v341
    %v422 = vpack.c.b16 %v347, %v342
    %v423 = vpack.c.b16 %v353, %v348
    %v424 = vpack.c.b16 %v354, %v349
    %v425 = vpack.c.b16 %v355, %v350
    %v426 = vpack.c.b16 %v356, %v351
    %v427 = vpack.c.b16 %v357, %v352
    %v428 = vpack.c.b16 %v363, %v358
    %v429 = vpack.c.b16 %v364, %v359
    %v430 = vpack.c.b16 %v365, %v360
    %v431 = vpack.c.b16 %v366, %v361
    %v432 = vpack.c.b16 %v367, %v362
    %v433 = vpack.c.b16 %v373, %v368
    %v434 = vpack.c.b16 %v374, %v369
    %v435 = vpack.c.b16 %v375, %v370
    %v436 = vpack.c.b16 %v376, %v371
    %v437 = vpack.c.b16 %v377, %v372
    %v438 = vpack.c.b16 %v383, %v378
    %v439 = vpack.c.b16 %v384, %v379
    %v440 = vpack.c.b16 %v385, %v380
    %v441 = vpack.c.b16 %v386, %v381
    %v442 = vpack.c.b16 %v387, %v382
    %v443 = vpack.c.b16 %v393, %v388
    %v444 = vpack.c.b16 %v394, %v389
    %v445 = vpack.c.b16 %v395, %v390
    %v446 = vpack.c.b16 %v396, %v391
    %v447 = vpack.c.b16 %v397, %v392
    %v448 = vpack.c.b16 %v403, %v398
    %v449 = vpack.c.b16 %v404, %v399
    %v450 = vpack.c.b16 %v405, %v400
    %v451 = vpack.c.b16 %v406, %v401
    %v452 = vpack.c.b16 %v407, %v402
    %v453 = vpack.c.b16 %v413, %v408
    %v454 = vpack.c.b16 %v414, %v409
    %v455 = vpack.c.b16 %v415, %v410
    %v456 = vpack.c.b16 %v416, %v411
    %v457 = vpack.c.b16 %v417, %v412
    %498 = vmatprep.subr.bf16.mxu0 %v454
    %499 = vmatpush1.bf16.msra.mxu0 %v453
    %500 = vmatprep.subr.bf16.mxu0 %v449
    %501 = vmatpush1.bf16.msra.mxu0 %v448
    %502 = vmatprep.subr.bf16.mxu0 %v444
    %503 = vmatpush1.bf16.msra.mxu0 %v443
    %504 = vmatprep.subr.bf16.mxu0 %v439
    %505 = vmatpush1.bf16.msra.mxu0 %v438
    %506 = vmatprep.subr.bf16.mxu0 %v434
    %507 = vmatpush1.bf16.msra.mxu0 %v433
    %508 = vmatprep.subr.bf16.mxu0 %v429
    %509 = vmatpush1.bf16.msra.mxu0 %v428
    %510 = vmatprep.subr.bf16.mxu0 %v424
    %511 = vmatpush1.bf16.msra.mxu0 %v423
    %512 = vmatprep.subr.bf16.mxu0 %v419
    %513 = vmatpush1.bf16.msra.mxu0 %v418
    %514 = vmatprep.subr.bf16.mxu0 0
    %515 = vmatpush2.bf16.msra.mxu0 0
    %516 = vmatprep.subr.bf16.mxu0 0
    %517 = vmatpush2.bf16.msra.mxu0 0
    %518 = vmatprep.subr.bf16.mxu0 0
    %519 = vmatpush2.bf16.msra.mxu0 0
    %520 = vmatprep.subr.bf16.mxu0 0
    %521 = vmatpush2.bf16.msra.mxu0 0
    %522 = vmatprep.subr.bf16.mxu0 0
    %523 = vmatpush2.bf16.msra.mxu0 0
    %524 = vmatprep.subr.bf16.mxu0 0
    %525 = vmatpush2.bf16.msra.mxu0 0
    %526 = vmatprep.subr.bf16.mxu0 0
    %527 = vmatpush2.bf16.msra.mxu0 0
    %528 = vmatprep.subr.bf16.mxu0 0
    %529 = vmatpush2.bf16.msra.mxu0 0
    %530 = vmatprep.mubr.bf16.mxu0 0
    %531 = vmatmul.mubr.bf16.gmra.mxu0 %v238
    %v532 = vpop.f32.mrf.mxu0
    %v533 = vadd.f32 0.0, %v532
    %v534 = vpop.f32.mrf.mxu0
    %v535 = vadd.f32 0.0, %v534
    %v536 = vpop.f32.mrf.mxu0
    %v537 = vadd.f32 0.0, %v536
    %v538 = vpop.f32.mrf.mxu0
    %v539 = vadd.f32 0.0, %v538
    %540 = vmatprep.mubr.bf16.mxu0 0
    %541 = vmatmul.mubr.bf16.gmra.mxu0 %v239
    %v542 = vpop.f32.mrf.mxu0
    %v543 = vadd.f32 0.0, %v542
    %v544 = vpop.f32.mrf.mxu0
    %v545 = vadd.f32 0.0, %v544
    %v546 = vpop.f32.mrf.mxu0
    %v547 = vadd.f32 0.0, %v546
    %v548 = vpop.f32.mrf.mxu0
    %v549 = vadd.f32 0.0, %v548
    %550 = vmatprep.mubr.bf16.mxu0 0
    %551 = vmatmul.mubr.bf16.gmra.mxu0 %v240
    %v552 = vpop.f32.mrf.mxu0
    %v553 = vadd.f32 0.0, %v552
    %v554 = vpop.f32.mrf.mxu0
    %v555 = vadd.f32 0.0, %v554
    %v556 = vpop.f32.mrf.mxu0
    %v557 = vpop.f32.mrf.mxu0
    %558 = vdwg.mxu0
    %559 = vmatprep.subr.bf16.mxu0 %v456
    %560 = vmatpush1.bf16.msra.mxu0 %v455
    %561 = vmatprep.subr.bf16.mxu0 %v451
    %562 = vmatpush1.bf16.msra.mxu0 %v450
    %563 = vmatprep.subr.bf16.mxu0 %v446
    %564 = vmatpush1.bf16.msra.mxu0 %v445
    %565 = vmatprep.subr.bf16.mxu0 %v441
    %566 = vmatpush1.bf16.msra.mxu0 %v440
    %567 = vmatprep.subr.bf16.mxu0 %v436
    %568 = vmatpush1.bf16.msra.mxu0 %v435
    %569 = vmatprep.subr.bf16.mxu0 %v431
    %570 = vmatpush1.bf16.msra.mxu0 %v430
    %571 = vmatprep.subr.bf16.mxu0 %v426
    %572 = vmatpush1.bf16.msra.mxu0 %v425
    %573 = vmatprep.subr.bf16.mxu0 %v421
    %574 = vmatpush1.bf16.msra.mxu0 %v420
    %575 = vmatprep.subr.bf16.mxu0 0
    %576 = vmatpush2.bf16.msra.mxu0 0
    %577 = vmatprep.subr.bf16.mxu0 0
    %578 = vmatpush2.bf16.msra.mxu0 0
    %579 = vmatprep.subr.bf16.mxu0 0
    %580 = vmatpush2.bf16.msra.mxu0 0
    %581 = vmatprep.subr.bf16.mxu0 0
    %582 = vmatpush2.bf16.msra.mxu0 0
    %583 = vmatprep.subr.bf16.mxu0 0
    %584 = vmatpush2.bf16.msra.mxu0 0
    %585 = vmatprep.subr.bf16.mxu0 0
    %586 = vmatpush2.bf16.msra.mxu0 0
    %587 = vmatprep.subr.bf16.mxu0 0
    %588 = vmatpush2.bf16.msra.mxu0 0
    %589 = vmatprep.subr.bf16.mxu0 0
    %590 = vmatpush2.bf16.msra.mxu0 0
    %591 = vmatprep.mubr.bf16.mxu0 0
    %592 = vmatmul.mubr.bf16.gmra.mxu0 %v238
    %v593 = vpop.f32.mrf.mxu0
    %v594 = vadd.f32 0.0, %v593
    %v595 = vpop.f32.mrf.mxu0
    %v596 = vadd.f32 0.0, %v595
    %v597 = vpop.f32.mrf.mxu0
    %v598 = vadd.f32 0.0, %v597
    %v599 = vpop.f32.mrf.mxu0
    %v600 = vadd.f32 0.0, %v599
    %601 = vmatprep.mubr.bf16.mxu0 0
    %602 = vmatmul.mubr.bf16.gmra.mxu0 %v239
    %v603 = vpop.f32.mrf.mxu0
    %v604 = vadd.f32 0.0, %v603
    %v605 = vpop.f32.mrf.mxu0
    %v606 = vadd.f32 0.0, %v605
    %v607 = vpop.f32.mrf.mxu0
    %v608 = vadd.f32 0.0, %v607
    %v609 = vpop.f32.mrf.mxu0
    %v610 = vadd.f32 0.0, %v609
    %611 = vmatprep.mubr.bf16.mxu0 0
    %612 = vmatmul.mubr.bf16.gmra.mxu0 %v240
    %v613 = vpop.f32.mrf.mxu0
    %v614 = vadd.f32 0.0, %v613
    %v615 = vpop.f32.mrf.mxu0
    %v616 = vadd.f32 0.0, %v615
    %v617 = vpop.f32.mrf.mxu0
    %v618 = vpop.f32.mrf.mxu0
    %619 = vdwg.mxu0
    %620 = vmatprep.subr.bf16.mxu0 0
    %621 = vmatpush1.bf16.msra.mxu0 %v457
    %622 = vmatprep.subr.bf16.mxu0 0
    %623 = vmatpush1.bf16.msra.mxu0 %v452
    %624 = vmatprep.subr.bf16.mxu0 0
    %625 = vmatpush1.bf16.msra.mxu0 %v447
    %626 = vmatprep.subr.bf16.mxu0 0
    %627 = vmatpush1.bf16.msra.mxu0 %v442
    %628 = vmatprep.subr.bf16.mxu0 0
    %629 = vmatpush1.bf16.msra.mxu0 %v437
    %630 = vmatprep.subr.bf16.mxu0 0
    %631 = vmatpush1.bf16.msra.mxu0 %v432
    %632 = vmatprep.subr.bf16.mxu0 0
    %633 = vmatpush1.bf16.msra.mxu0 %v427
    %634 = vmatprep.subr.bf16.mxu0 0
    %635 = vmatpush1.bf16.msra.mxu0 %v422
    %636 = vmatprep.subr.bf16.mxu0 0
    %637 = vmatpush2.bf16.msra.mxu0 0
    %638 = vmatprep.subr.bf16.mxu0 0
    %639 = vmatpush2.bf16.msra.mxu0 0
    %640 = vmatprep.subr.bf16.mxu0 0
    %641 = vmatpush2.bf16.msra.mxu0 0
    %642 = vmatprep.subr.bf16.mxu0 0
    %643 = vmatpush2.bf16.msra.mxu0 0
    %644 = vmatprep.subr.bf16.mxu0 0
    %645 = vmatpush2.bf16.msra.mxu0 0
    %646 = vmatprep.subr.bf16.mxu0 0
    %647 = vmatpush2.bf16.msra.mxu0 0
    %648 = vmatprep.subr.bf16.mxu0 0
    %649 = vmatpush2.bf16.msra.mxu0 0
    %650 = vmatprep.subr.bf16.mxu0 0
    %651 = vmatpush2.bf16.msra.mxu0 0
    %652 = vmatprep.mubr.bf16.mxu0 0
    %653 = vmatmul.mubr.bf16.gmra.mxu0 %v238
    %v654 = vpop.f32.mrf.mxu0
    %v655 = vadd.f32 0.0, %v654
    %v656 = vpop.f32.mrf.mxu0
    %v657 = vpop.f32.mrf.mxu0
    %v658 = vadd.f32 0.0, %v657
    %v659 = vpop.f32.mrf.mxu0
    %660 = vmatprep.mubr.bf16.mxu0 0
    %661 = vmatmul.mubr.bf16.gmra.mxu0 %v239
    %v662 = vpop.f32.mrf.mxu0
    %v663 = vadd.f32 0.0, %v662
    %v664 = vpop.f32.mrf.mxu0
    %v665 = vpop.f32.mrf.mxu0
    %v666 = vadd.f32 0.0, %v665
    %v667 = vpop.f32.mrf.mxu0
    %668 = vmatprep.mubr.bf16.mxu0 0
    %669 = vmatmul.mubr.bf16.gmra.mxu0 %v240
    %v670 = vpop.f32.mrf.mxu0
    %v671 = vadd.f32 0.0, %v670
    %v672 = vpop.f32.mrf.mxu0
    %v673 = vpop.f32.mrf.mxu0
    %v674 = vpop.f32.mrf.mxu0
    %675 = vdwg.mxu0
    %v724 = vunpack.c.l.b16 %v185
    %v725 = vunpack.c.h.b16 %v185
    %v726 = vunpack.c.l.b16 %v186
    %v727 = vunpack.c.h.b16 %v186
    %v728 = vunpack.c.l.b16 %v187
    %v729 = vunpack.c.l.b16 %v188
    %v730 = vunpack.c.h.b16 %v188
    %v731 = vunpack.c.l.b16 %v189
    %v732 = vunpack.c.h.b16 %v189
    %v733 = vunpack.c.l.b16 %v190
    %v734 = vunpack.c.l.b16 %v191
    %v735 = vunpack.c.h.b16 %v191
    %v736 = vunpack.c.l.b16 %v192
    %v737 = vunpack.c.h.b16 %v192
    %v738 = vunpack.c.l.b16 %v193
    %v739 = vunpack.c.l.b16 %v194
    %v740 = vunpack.c.h.b16 %v194
    %v741 = vunpack.c.l.b16 %v195
    %v742 = vunpack.c.h.b16 %v195
    %v743 = vunpack.c.l.b16 %v196
    %v744 = vunpack.c.l.b16 %v197
    %v745 = vunpack.c.h.b16 %v197
    %v746 = vunpack.c.l.b16 %v198
    %v747 = vunpack.c.h.b16 %v198
    %v748 = vunpack.c.l.b16 %v199
    %v749 = vunpack.c.l.b16 %v200
    %v750 = vunpack.c.h.b16 %v200
    %v751 = vunpack.c.l.b16 %v201
    %v752 = vunpack.c.h.b16 %v201
    %v753 = vunpack.c.l.b16 %v202
    %v754 = vunpack.c.l.b16 %v203
    %v755 = vunpack.c.h.b16 %v203
    %v756 = vunpack.c.l.b16 %v204
    %v757 = vunpack.c.h.b16 %v204
    %v758 = vunpack.c.l.b16 %v205
    %v759 = vunpack.c.l.b16 %v206
    %v760 = vunpack.c.h.b16 %v206
    %v761 = vunpack.c.l.b16 %v207
    %v762 = vunpack.c.h.b16 %v207
    %v763 = vunpack.c.l.b16 %v208
    %v764 = vunpack.c.l.b16 %v209
    %v765 = vunpack.c.h.b16 %v209
    %v766 = vunpack.c.l.b16 %v210
    %v767 = vunpack.c.h.b16 %v210
    %v768 = vunpack.c.l.b16 %v211
    %v769 = vunpack.c.l.b16 %v212
    %v770 = vunpack.c.h.b16 %v212
    %v771 = vunpack.c.l.b16 %v213
    %v772 = vunpack.c.h.b16 %v213
    %v773 = vunpack.c.l.b16 %v214
    %v774 = vunpack.c.l.b16 %v215
    %v775 = vunpack.c.h.b16 %v215
    %v776 = vunpack.c.l.b16 %v216
    %v777 = vunpack.c.h.b16 %v216
    %v778 = vunpack.c.l.b16 %v217
    %v779 = vunpack.c.l.b16 %v218
    %v780 = vunpack.c.h.b16 %v218
    %v781 = vunpack.c.l.b16 %v219
    %v782 = vunpack.c.h.b16 %v219
    %v783 = vunpack.c.l.b16 %v220
    %v784 = vunpack.c.l.b16 %v221
    %v785 = vunpack.c.h.b16 %v221
    %v786 = vunpack.c.l.b16 %v222
    %v787 = vunpack.c.h.b16 %v222
    %v788 = vunpack.c.l.b16 %v223
    %v789 = vunpack.c.l.b16 %v224
    %v790 = vunpack.c.h.b16 %v224
    %v791 = vunpack.c.l.b16 %v225
    %v792 = vunpack.c.h.b16 %v225
    %v793 = vunpack.c.l.b16 %v226
    %v794 = vunpack.c.l.b16 %v227
    %v795 = vunpack.c.h.b16 %v227
    %v796 = vunpack.c.l.b16 %v228
    %v797 = vunpack.c.h.b16 %v228
    %v798 = vunpack.c.l.b16 %v229
    %v799 = vunpack.c.l.b16 %v230
    %v800 = vunpack.c.h.b16 %v230
    %v801 = vunpack.c.l.b16 %v231
    %v802 = vunpack.c.h.b16 %v231
    %v803 = vunpack.c.l.b16 %v232
    %v804 = vpack.c.b16 %v729, %v724
    %v805 = vpack.c.b16 %v730, %v725
    %v806 = vpack.c.b16 %v731, %v726
    %v807 = vpack.c.b16 %v732, %v727
    %v808 = vpack.c.b16 %v733, %v728
    %v809 = vpack.c.b16 %v739, %v734
    %v810 = vpack.c.b16 %v740, %v735
    %v811 = vpack.c.b16 %v741, %v736
    %v812 = vpack.c.b16 %v742, %v737
    %v813 = vpack.c.b16 %v743, %v738
    %v814 = vpack.c.b16 %v749, %v744
    %v815 = vpack.c.b16 %v750, %v745
    %v816 = vpack.c.b16 %v751, %v746
    %v817 = vpack.c.b16 %v752, %v747
    %v818 = vpack.c.b16 %v753, %v748
    %v819 = vpack.c.b16 %v759, %v754
    %v820 = vpack.c.b16 %v760, %v755
    %v821 = vpack.c.b16 %v761, %v756
    %v822 = vpack.c.b16 %v762, %v757
    %v823 = vpack.c.b16 %v763, %v758
    %v824 = vpack.c.b16 %v769, %v764
    %v825 = vpack.c.b16 %v770, %v765
    %v826 = vpack.c.b16 %v771, %v766
    %v827 = vpack.c.b16 %v772, %v767
    %v828 = vpack.c.b16 %v773, %v768
    %v829 = vpack.c.b16 %v779, %v774
    %v830 = vpack.c.b16 %v780, %v775
    %v831 = vpack.c.b16 %v781, %v776
    %v832 = vpack.c.b16 %v782, %v777
    %v833 = vpack.c.b16 %v783, %v778
    %v834 = vpack.c.b16 %v789, %v784
    %v835 = vpack.c.b16 %v790, %v785
    %v836 = vpack.c.b16 %v791, %v786
    %v837 = vpack.c.b16 %v792, %v787
    %v838 = vpack.c.b16 %v793, %v788
    %v839 = vpack.c.b16 %v799, %v794
    %v840 = vpack.c.b16 %v800, %v795
    %v841 = vpack.c.b16 %v801, %v796
    %v842 = vpack.c.b16 %v802, %v797
    %v843 = vpack.c.b16 %v803, %v798
    %884 = vmatprep.subr.bf16.mxu0 %v840
    %885 = vmatpush1.bf16.msra.mxu0 %v839
    %886 = vmatprep.subr.bf16.mxu0 %v835
    %887 = vmatpush1.bf16.msra.mxu0 %v834
    %888 = vmatprep.subr.bf16.mxu0 %v830
    %889 = vmatpush1.bf16.msra.mxu0 %v829
    %890 = vmatprep.subr.bf16.mxu0 %v825
    %891 = vmatpush1.bf16.msra.mxu0 %v824
    %892 = vmatprep.subr.bf16.mxu0 %v820
    %893 = vmatpush1.bf16.msra.mxu0 %v819
    %894 = vmatprep.subr.bf16.mxu0 %v815
    %895 = vmatpush1.bf16.msra.mxu0 %v814
    %896 = vmatprep.subr.bf16.mxu0 %v810
    %897 = vmatpush1.bf16.msra.mxu0 %v809
    %898 = vmatprep.subr.bf16.mxu0 %v805
    %899 = vmatpush1.bf16.msra.mxu0 %v804
    %900 = vmatprep.subr.bf16.mxu0 0
    %901 = vmatpush2.bf16.msra.mxu0 0
    %902 = vmatprep.subr.bf16.mxu0 0
    %903 = vmatpush2.bf16.msra.mxu0 0
    %904 = vmatprep.subr.bf16.mxu0 0
    %905 = vmatpush2.bf16.msra.mxu0 0
    %906 = vmatprep.subr.bf16.mxu0 0
    %907 = vmatpush2.bf16.msra.mxu0 0
    %908 = vmatprep.subr.bf16.mxu0 0
    %909 = vmatpush2.bf16.msra.mxu0 0
    %910 = vmatprep.subr.bf16.mxu0 0
    %911 = vmatpush2.bf16.msra.mxu0 0
    %912 = vmatprep.subr.bf16.mxu0 0
    %913 = vmatpush2.bf16.msra.mxu0 0
    %914 = vmatprep.subr.bf16.mxu0 0
    %915 = vmatpush2.bf16.msra.mxu0 0
    %916 = vmatprep.mubr.bf16.mxu0 0
    %917 = vmatmul.mubr.bf16.gmra.mxu0 %v182
    %v918 = vpop.f32.mrf.mxu0
    %v919 = vadd.f32 %v533, %v918
    %v920 = vpop.f32.mrf.mxu0
    %v921 = vadd.f32 %v535, %v920
    %v922 = vpop.f32.mrf.mxu0
    %v923 = vadd.f32 %v537, %v922
    %v924 = vpop.f32.mrf.mxu0
    %v925 = vadd.f32 %v539, %v924
    %926 = vmatprep.mubr.bf16.mxu0 0
    %927 = vmatmul.mubr.bf16.gmra.mxu0 %v183
    %v928 = vpop.f32.mrf.mxu0
    %v929 = vadd.f32 %v543, %v928
    %v930 = vpop.f32.mrf.mxu0
    %v931 = vadd.f32 %v545, %v930
    %v932 = vpop.f32.mrf.mxu0
    %v933 = vadd.f32 %v547, %v932
    %v934 = vpop.f32.mrf.mxu0
    %v935 = vadd.f32 %v549, %v934
    %936 = vmatprep.mubr.bf16.mxu0 0
    %937 = vmatmul.mubr.bf16.gmra.mxu0 %v184
    %v938 = vpop.f32.mrf.mxu0
    %v939 = vadd.f32 %v553, %v938
    %v940 = vpop.f32.mrf.mxu0
    %v941 = vadd.f32 %v555, %v940
    %v942 = vpop.f32.mrf.mxu0
    %v943 = vpop.f32.mrf.mxu0
    %944 = vdwg.mxu0
    %945 = vmatprep.subr.bf16.mxu0 %v842
    %946 = vmatpush1.bf16.msra.mxu0 %v841
    %947 = vmatprep.subr.bf16.mxu0 %v837
    %948 = vmatpush1.bf16.msra.mxu0 %v836
    %949 = vmatprep.subr.bf16.mxu0 %v832
    %950 = vmatpush1.bf16.msra.mxu0 %v831
    %951 = vmatprep.subr.bf16.mxu0 %v827
    %952 = vmatpush1.bf16.msra.mxu0 %v826
    %953 = vmatprep.subr.bf16.mxu0 %v822
    %954 = vmatpush1.bf16.msra.mxu0 %v821
    %955 = vmatprep.subr.bf16.mxu0 %v817
    %956 = vmatpush1.bf16.msra.mxu0 %v816
    %957 = vmatprep.subr.bf16.mxu0 %v812
    %958 = vmatpush1.bf16.msra.mxu0 %v811
    %959 = vmatprep.subr.bf16.mxu0 %v807
    %960 = vmatpush1.bf16.msra.mxu0 %v806
    %961 = vmatprep.subr.bf16.mxu0 0
    %962 = vmatpush2.bf16.msra.mxu0 0
    %963 = vmatprep.subr.bf16.mxu0 0
    %964 = vmatpush2.bf16.msra.mxu0 0
    %965 = vmatprep.subr.bf16.mxu0 0
    %966 = vmatpush2.bf16.msra.mxu0 0
    %967 = vmatprep.subr.bf16.mxu0 0
    %968 = vmatpush2.bf16.msra.mxu0 0
    %969 = vmatprep.subr.bf16.mxu0 0
    %970 = vmatpush2.bf16.msra.mxu0 0
    %971 = vmatprep.subr.bf16.mxu0 0
    %972 = vmatpush2.bf16.msra.mxu0 0
    %973 = vmatprep.subr.bf16.mxu0 0
    %974 = vmatpush2.bf16.msra.mxu0 0
    %975 = vmatprep.subr.bf16.mxu0 0
    %976 = vmatpush2.bf16.msra.mxu0 0
    %977 = vmatprep.mubr.bf16.mxu0 0
    %978 = vmatmul.mubr.bf16.gmra.mxu0 %v182
    %v979 = vpop.f32.mrf.mxu0
    %v980 = vadd.f32 %v594, %v979
    %v981 = vpop.f32.mrf.mxu0
    %v982 = vadd.f32 %v596, %v981
    %v983 = vpop.f32.mrf.mxu0
    %v984 = vadd.f32 %v598, %v983
    %v985 = vpop.f32.mrf.mxu0
    %v986 = vadd.f32 %v600, %v985
    %987 = vmatprep.mubr.bf16.mxu0 0
    %988 = vmatmul.mubr.bf16.gmra.mxu0 %v183
    %v989 = vpop.f32.mrf.mxu0
    %v990 = vadd.f32 %v604, %v989
    %v991 = vpop.f32.mrf.mxu0
    %v992 = vadd.f32 %v606, %v991
    %v993 = vpop.f32.mrf.mxu0
    %v994 = vadd.f32 %v608, %v993
    %v995 = vpop.f32.mrf.mxu0
    %v996 = vadd.f32 %v610, %v995
    %997 = vmatprep.mubr.bf16.mxu0 0
    %998 = vmatmul.mubr.bf16.gmra.mxu0 %v184
    %v999 = vpop.f32.mrf.mxu0
    %v1000 = vadd.f32 %v614, %v999
    %v1001 = vpop.f32.mrf.mxu0
    %v1002 = vadd.f32 %v616, %v1001
    %v1003 = vpop.f32.mrf.mxu0
    %v1004 = vpop.f32.mrf.mxu0
    %1005 = vdwg.mxu0
    %1006 = vmatprep.subr.bf16.mxu0 0
    %1007 = vmatpush1.bf16.msra.mxu0 %v843
    %1008 = vmatprep.subr.bf16.mxu0 0
    %1009 = vmatpush1.bf16.msra.mxu0 %v838
    %1010 = vmatprep.subr.bf16.mxu0 0
    %1011 = vmatpush1.bf16.msra.mxu0 %v833
    %1012 = vmatprep.subr.bf16.mxu0 0
    %1013 = vmatpush1.bf16.msra.mxu0 %v828
    %1014 = vmatprep.subr.bf16.mxu0 0
    %1015 = vmatpush1.bf16.msra.mxu0 %v823
    %1016 = vmatprep.subr.bf16.mxu0 0
    %1017 = vmatpush1.bf16.msra.mxu0 %v818
    %1018 = vmatprep.subr.bf16.mxu0 0
    %1019 = vmatpush1.bf16.msra.mxu0 %v813
    %1020 = vmatprep.subr.bf16.mxu0 0
    %1021 = vmatpush1.bf16.msra.mxu0 %v808
    %1022 = vmatprep.subr.bf16.mxu0 0
    %1023 = vmatpush2.bf16.msra.mxu0 0
    %1024 = vmatprep.subr.bf16.mxu0 0
    %1025 = vmatpush2.bf16.msra.mxu0 0
    %1026 = vmatprep.subr.bf16.mxu0 0
    %1027 = vmatpush2.bf16.msra.mxu0 0
    %1028 = vmatprep.subr.bf16.mxu0 0
    %1029 = vmatpush2.bf16.msra.mxu0 0
    %1030 = vmatprep.subr.bf16.mxu0 0
    %1031 = vmatpush2.bf16.msra.mxu0 0
    %1032 = vmatprep.subr.bf16.mxu0 0
    %1033 = vmatpush2.bf16.msra.mxu0 0
    %1034 = vmatprep.subr.bf16.mxu0 0
    %1035 = vmatpush2.bf16.msra.mxu0 0
    %1036 = vmatprep.subr.bf16.mxu0 0
    %1037 = vmatpush2.bf16.msra.mxu0 0
    %1038 = vmatprep.mubr.bf16.mxu0 0
    %1039 = vmatmul.mubr.bf16.gmra.mxu0 %v182
    %v1040 = vpop.f32.mrf.mxu0
    %v1041 = vadd.f32 %v655, %v1040
    %v1042 = vpop.f32.mrf.mxu0
    %v1043 = vpop.f32.mrf.mxu0
    %v1044 = vadd.f32 %v658, %v1043
    %v1045 = vpop.f32.mrf.mxu0
    %1046 = vmatprep.mubr.bf16.mxu0 0
    %1047 = vmatmul.mubr.bf16.gmra.mxu0 %v183
    %v1048 = vpop.f32.mrf.mxu0
    %v1049 = vadd.f32 %v663, %v1048
    %v1050 = vpop.f32.mrf.mxu0
    %v1051 = vpop.f32.mrf.mxu0
    %v1052 = vadd.f32 %v666, %v1051
    %v1053 = vpop.f32.mrf.mxu0
    %1054 = vmatprep.mubr.bf16.mxu0 0
    %1055 = vmatmul.mubr.bf16.gmra.mxu0 %v184
    %v1056 = vpop.f32.mrf.mxu0
    %v1057 = vadd.f32 %v671, %v1056
    %v1058 = vpop.f32.mrf.mxu0
    %v1059 = vpop.f32.mrf.mxu0
    %v1060 = vpop.f32.mrf.mxu0
    %1061 = vdwg.mxu0
    %v1062 = vld [vmem:[%s0 + $0x9] sm:$0xff]
    %v1063 = vld [vmem:[%s0 + $0x11] sm:$0xff]
    %v1064 = vld [vmem:[%s0 + $0x19] sm:$0xff]
    %v1065 = vld [vmem:[%s0 + $0x21] sm:$0xff]
    %v1066 = vld [vmem:[%s0 + $0x29] sm:$0xff]
    %v1067 = vpack.c.bf16 %v1063, %v1062
    %v1068 = vpack.c.bf16 %v1065, %v1064
    %v1069 = vpack.c.bf16 %v1066, %v1066
    %s1070 = scalar_lea.vmem [#allocation6], 640
    %v1071 = vld [vmem:[%s1070] sm:$0xff]
    %v1072 = vld [vmem:[%s1070 + $0x8] sm:$0xff]
    %v1073 = vld [vmem:[%s1070 + $0x10] sm:$0xf]
    %v1074 = vld [vmem:[%s1070 + $0x14] sm:$0xff]
    %v1075 = vld [vmem:[%s1070 + $0x1c] sm:$0xff]
    %v1076 = vld [vmem:[%s1070 + $0x24] sm:$0xf]
    %v1077 = vld [vmem:[%s1070 + $0x28] sm:$0xff]
    %v1078 = vld [vmem:[%s1070 + $0x30] sm:$0xff]
    %v1079 = vld [vmem:[%s1070 + $0x38] sm:$0xf]
    %v1080 = vld [vmem:[%s1070 + $0x3c] sm:$0xff]
    %v1081 = vld [vmem:[%s1070 + $0x44] sm:$0xff]
    %v1082 = vld [vmem:[%s1070 + $0x4c] sm:$0xf]
    %v1083 = vld [vmem:[%s1070 + $0x50] sm:$0xff]
    %v1084 = vld [vmem:[%s1070 + $0x58] sm:$0xff]
    %v1085 = vld [vmem:[%s1070 + $0x60] sm:$0xf]
    %v1086 = vld [vmem:[%s1070 + $0x64] sm:$0xff]
    %v1087 = vld [vmem:[%s1070 + $0x6c] sm:$0xff]
    %v1088 = vld [vmem:[%s1070 + $0x74] sm:$0xf]
    %v1089 = vld [vmem:[%s1070 + $0x78] sm:$0xff]
    %v1090 = vld [vmem:[%s1070 + $0x80] sm:$0xff]
    %v1091 = vld [vmem:[%s1070 + $0x88] sm:$0xf]
    %v1092 = vld [vmem:[%s1070 + $0x8c] sm:$0xff]
    %v1093 = vld [vmem:[%s1070 + $0x94] sm:$0xff]
    %v1094 = vld [vmem:[%s1070 + $0x9c] sm:$0xf]
    %v1095 = vld [vmem:[%s1070 + $0xa0] sm:$0xff]
    %v1096 = vld [vmem:[%s1070 + $0xa8] sm:$0xff]
    %v1097 = vld [vmem:[%s1070 + $0xb0] sm:$0xf]
    %v1098 = vld [vmem:[%s1070 + $0xb4] sm:$0xff]
    %v1099 = vld [vmem:[%s1070 + $0xbc] sm:$0xff]
    %v1100 = vld [vmem:[%s1070 + $0xc4] sm:$0xf]
    %v1101 = vld [vmem:[%s1070 + $0xc8] sm:$0xff]
    %v1102 = vld [vmem:[%s1070 + $0xd0] sm:$0xff]
    %v1103 = vld [vmem:[%s1070 + $0xd8] sm:$0xf]
    %v1104 = vld [vmem:[%s1070 + $0xdc] sm:$0xff]
    %v1105 = vld [vmem:[%s1070 + $0xe4] sm:$0xff]
    %v1106 = vld [vmem:[%s1070 + $0xec] sm:$0xf]
    %v1107 = vld [vmem:[%s1070 + $0xf0] sm:$0xff]
    %v1108 = vld [vmem:[%s1070 + $0xf8] sm:$0xff]
    %v1109 = vld [vmem:[%s1070 + $0x100] sm:$0xf]
    %v1110 = vld [vmem:[%s1070 + $0x104] sm:$0xff]
    %v1111 = vld [vmem:[%s1070 + $0x10c] sm:$0xff]
    %v1112 = vld [vmem:[%s1070 + $0x114] sm:$0xf]
    %v1113 = vld [vmem:[%s1070 + $0x118] sm:$0xff]
    %v1114 = vld [vmem:[%s1070 + $0x120] sm:$0xff]
    %v1115 = vld [vmem:[%s1070 + $0x128] sm:$0xf]
    %v1116 = vld [vmem:[%s1070 + $0x12c] sm:$0xff]
    %v1117 = vld [vmem:[%s1070 + $0x134] sm:$0xff]
    %v1118 = vld [vmem:[%s1070 + $0x13c] sm:$0xf]
    %v1167 = vunpack.c.l.b16 %v1071
    %v1168 = vunpack.c.h.b16 %v1071
    %v1169 = vunpack.c.l.b16 %v1072
    %v1170 = vunpack.c.h.b16 %v1072
    %v1171 = vunpack.c.l.b16 %v1073
    %v1172 = vunpack.c.l.b16 %v1074
    %v1173 = vunpack.c.h.b16 %v1074
    %v1174 = vunpack.c.l.b16 %v1075
    %v1175 = vunpack.c.h.b16 %v1075
    %v1176 = vunpack.c.l.b16 %v1076
    %v1177 = vunpack.c.l.b16 %v1077
    %v1178 = vunpack.c.h.b16 %v1077
    %v1179 = vunpack.c.l.b16 %v1078
    %v1180 = vunpack.c.h.b16 %v1078
    %v1181 = vunpack.c.l.b16 %v1079
    %v1182 = vunpack.c.l.b16 %v1080
    %v1183 = vunpack.c.h.b16 %v1080
    %v1184 = vunpack.c.l.b16 %v1081
    %v1185 = vunpack.c.h.b16 %v1081
    %v1186 = vunpack.c.l.b16 %v1082
    %v1187 = vunpack.c.l.b16 %v1083
    %v1188 = vunpack.c.h.b16 %v1083
    %v1189 = vunpack.c.l.b16 %v1084
    %v1190 = vunpack.c.h.b16 %v1084
    %v1191 = vunpack.c.l.b16 %v1085
    %v1192 = vunpack.c.l.b16 %v1086
    %v1193 = vunpack.c.h.b16 %v1086
    %v1194 = vunpack.c.l.b16 %v1087
    %v1195 = vunpack.c.h.b16 %v1087
    %v1196 = vunpack.c.l.b16 %v1088
    %v1197 = vunpack.c.l.b16 %v1089
    %v1198 = vunpack.c.h.b16 %v1089
    %v1199 = vunpack.c.l.b16 %v1090
    %v1200 = vunpack.c.h.b16 %v1090
    %v1201 = vunpack.c.l.b16 %v1091
    %v1202 = vunpack.c.l.b16 %v1092
    %v1203 = vunpack.c.h.b16 %v1092
    %v1204 = vunpack.c.l.b16 %v1093
    %v1205 = vunpack.c.h.b16 %v1093
    %v1206 = vunpack.c.l.b16 %v1094
    %v1207 = vunpack.c.l.b16 %v1095
    %v1208 = vunpack.c.h.b16 %v1095
    %v1209 = vunpack.c.l.b16 %v1096
    %v1210 = vunpack.c.h.b16 %v1096
    %v1211 = vunpack.c.l.b16 %v1097
    %v1212 = vunpack.c.l.b16 %v1098
    %v1213 = vunpack.c.h.b16 %v1098
    %v1214 = vunpack.c.l.b16 %v1099
    %v1215 = vunpack.c.h.b16 %v1099
    %v1216 = vunpack.c.l.b16 %v1100
    %v1217 = vunpack.c.l.b16 %v1101
    %v1218 = vunpack.c.h.b16 %v1101
    %v1219 = vunpack.c.l.b16 %v1102
    %v1220 = vunpack.c.h.b16 %v1102
    %v1221 = vunpack.c.l.b16 %v1103
    %v1222 = vunpack.c.l.b16 %v1104
    %v1223 = vunpack.c.h.b16 %v1104
    %v1224 = vunpack.c.l.b16 %v1105
    %v1225 = vunpack.c.h.b16 %v1105
    %v1226 = vunpack.c.l.b16 %v1106
    %v1227 = vunpack.c.l.b16 %v1107
    %v1228 = vunpack.c.h.b16 %v1107
    %v1229 = vunpack.c.l.b16 %v1108
    %v1230 = vunpack.c.h.b16 %v1108
    %v1231 = vunpack.c.l.b16 %v1109
    %v1232 = vunpack.c.l.b16 %v1110
    %v1233 = vunpack.c.h.b16 %v1110
    %v1234 = vunpack.c.l.b16 %v1111
    %v1235 = vunpack.c.h.b16 %v1111
    %v1236 = vunpack.c.l.b16 %v1112
    %v1237 = vunpack.c.l.b16 %v1113
    %v1238 = vunpack.c.h.b16 %v1113
    %v1239 = vunpack.c.l.b16 %v1114
    %v1240 = vunpack.c.h.b16 %v1114
    %v1241 = vunpack.c.l.b16 %v1115
    %v1242 = vunpack.c.l.b16 %v1116
    %v1243 = vunpack.c.h.b16 %v1116
    %v1244 = vunpack.c.l.b16 %v1117
    %v1245 = vunpack.c.h.b16 %v1117
    %v1246 = vunpack.c.l.b16 %v1118
    %v1247 = vpack.c.b16 %v1172, %v1167
    %v1248 = vpack.c.b16 %v1173, %v1168
    %v1249 = vpack.c.b16 %v1174, %v1169
    %v1250 = vpack.c.b16 %v1175, %v1170
    %v1251 = vpack.c.b16 %v1176, %v1171
    %v1252 = vpack.c.b16 %v1182, %v1177
    %v1253 = vpack.c.b16 %v1183, %v1178
    %v1254 = vpack.c.b16 %v1184, %v1179
    %v1255 = vpack.c.b16 %v1185, %v1180
    %v1256 = vpack.c.b16 %v1186, %v1181
    %v1257 = vpack.c.b16 %v1192, %v1187
    %v1258 = vpack.c.b16 %v1193, %v1188
    %v1259 = vpack.c.b16 %v1194, %v1189
    %v1260 = vpack.c.b16 %v1195, %v1190
    %v1261 = vpack.c.b16 %v1196, %v1191
    %v1262 = vpack.c.b16 %v1202, %v1197
    %v1263 = vpack.c.b16 %v1203, %v1198
    %v1264 = vpack.c.b16 %v1204, %v1199
    %v1265 = vpack.c.b16 %v1205, %v1200
    %v1266 = vpack.c.b16 %v1206, %v1201
    %v1267 = vpack.c.b16 %v1212, %v1207
    %v1268 = vpack.c.b16 %v1213, %v1208
    %v1269 = vpack.c.b16 %v1214, %v1209
    %v1270 = vpack.c.b16 %v1215, %v1210
    %v1271 = vpack.c.b16 %v1216, %v1211
    %v1272 = vpack.c.b16 %v1222, %v1217
    %v1273 = vpack.c.b16 %v1223, %v1218
    %v1274 = vpack.c.b16 %v1224, %v1219
    %v1275 = vpack.c.b16 %v1225, %v1220
    %v1276 = vpack.c.b16 %v1226, %v1221
    %v1277 = vpack.c.b16 %v1232, %v1227
    %v1278 = vpack.c.b16 %v1233, %v1228
    %v1279 = vpack.c.b16 %v1234, %v1229
    %v1280 = vpack.c.b16 %v1235, %v1230
    %v1281 = vpack.c.b16 %v1236, %v1231
    %v1282 = vpack.c.b16 %v1242, %v1237
    %v1283 = vpack.c.b16 %v1243, %v1238
    %v1284 = vpack.c.b16 %v1244, %v1239
    %v1285 = vpack.c.b16 %v1245, %v1240
    %v1286 = vpack.c.b16 %v1246, %v1241
    %1327 = vmatprep.subr.bf16.mxu0 %v1283
    %1328 = vmatpush1.bf16.msra.mxu0 %v1282
    %1329 = vmatprep.subr.bf16.mxu0 %v1278
    %1330 = vmatpush1.bf16.msra.mxu0 %v1277
    %1331 = vmatprep.subr.bf16.mxu0 %v1273
    %1332 = vmatpush1.bf16.msra.mxu0 %v1272
    %1333 = vmatprep.subr.bf16.mxu0 %v1268
    %1334 = vmatpush1.bf16.msra.mxu0 %v1267
    %1335 = vmatprep.subr.bf16.mxu0 %v1263
    %1336 = vmatpush1.bf16.msra.mxu0 %v1262
    %1337 = vmatprep.subr.bf16.mxu0 %v1258
    %1338 = vmatpush1.bf16.msra.mxu0 %v1257
    %1339 = vmatprep.subr.bf16.mxu0 %v1253
    %1340 = vmatpush1.bf16.msra.mxu0 %v1252
    %1341 = vmatprep.subr.bf16.mxu0 %v1248
    %1342 = vmatpush1.bf16.msra.mxu0 %v1247
    %1343 = vmatprep.subr.bf16.mxu0 0
    %1344 = vmatpush2.bf16.msra.mxu0 0
    %1345 = vmatprep.subr.bf16.mxu0 0
    %1346 = vmatpush2.bf16.msra.mxu0 0
    %1347 = vmatprep.subr.bf16.mxu0 0
    %1348 = vmatpush2.bf16.msra.mxu0 0
    %1349 = vmatprep.subr.bf16.mxu0 0
    %1350 = vmatpush2.bf16.msra.mxu0 0
    %1351 = vmatprep.subr.bf16.mxu0 0
    %1352 = vmatpush2.bf16.msra.mxu0 0
    %1353 = vmatprep.subr.bf16.mxu0 0
    %1354 = vmatpush2.bf16.msra.mxu0 0
    %1355 = vmatprep.subr.bf16.mxu0 0
    %1356 = vmatpush2.bf16.msra.mxu0 0
    %1357 = vmatprep.subr.bf16.mxu0 0
    %1358 = vmatpush2.bf16.msra.mxu0 0
    %1359 = vmatprep.mubr.bf16.mxu0 0
    %1360 = vmatmul.mubr.bf16.gmra.mxu0 %v1067
    %v1361 = vpop.f32.mrf.mxu0
    %v1362 = vadd.f32 0.0, %v1361
    %v1363 = vpop.f32.mrf.mxu0
    %v1364 = vadd.f32 0.0, %v1363
    %v1365 = vpop.f32.mrf.mxu0
    %v1366 = vadd.f32 0.0, %v1365
    %v1367 = vpop.f32.mrf.mxu0
    %v1368 = vadd.f32 0.0, %v1367
    %1369 = vmatprep.mubr.bf16.mxu0 0
    %1370 = vmatmul.mubr.bf16.gmra.mxu0 %v1068
    %v1371 = vpop.f32.mrf.mxu0
    %v1372 = vadd.f32 0.0, %v1371
    %v1373 = vpop.f32.mrf.mxu0
    %v1374 = vadd.f32 0.0, %v1373
    %v1375 = vpop.f32.mrf.mxu0
    %v1376 = vadd.f32 0.0, %v1375
    %v1377 = vpop.f32.mrf.mxu0
    %v1378 = vadd.f32 0.0, %v1377
    %1379 = vmatprep.mubr.bf16.mxu0 0
    %1380 = vmatmul.mubr.bf16.gmra.mxu0 %v1069
    %v1381 = vpop.f32.mrf.mxu0
    %v1382 = vadd.f32 0.0, %v1381
    %v1383 = vpop.f32.mrf.mxu0
    %v1384 = vadd.f32 0.0, %v1383
    %v1385 = vpop.f32.mrf.mxu0
    %v1386 = vpop.f32.mrf.mxu0
    %1387 = vdwg.mxu0
    %1388 = vmatprep.subr.bf16.mxu0 %v1285
    %1389 = vmatpush1.bf16.msra.mxu0 %v1284
    %1390 = vmatprep.subr.bf16.mxu0 %v1280
    %1391 = vmatpush1.bf16.msra.mxu0 %v1279
    %1392 = vmatprep.subr.bf16.mxu0 %v1275
    %1393 = vmatpush1.bf16.msra.mxu0 %v1274
    %1394 = vmatprep.subr.bf16.mxu0 %v1270
    %1395 = vmatpush1.bf16.msra.mxu0 %v1269
    %1396 = vmatprep.subr.bf16.mxu0 %v1265
    %1397 = vmatpush1.bf16.msra.mxu0 %v1264
    %1398 = vmatprep.subr.bf16.mxu0 %v1260
    %1399 = vmatpush1.bf16.msra.mxu0 %v1259
    %1400 = vmatprep.subr.bf16.mxu0 %v1255
    %1401 = vmatpush1.bf16.msra.mxu0 %v1254
    %1402 = vmatprep.subr.bf16.mxu0 %v1250
    %1403 = vmatpush1.bf16.msra.mxu0 %v1249
    %1404 = vmatprep.subr.bf16.mxu0 0
    %1405 = vmatpush2.bf16.msra.mxu0 0
    %1406 = vmatprep.subr.bf16.mxu0 0
    %1407 = vmatpush2.bf16.msra.mxu0 0
    %1408 = vmatprep.subr.bf16.mxu0 0
    %1409 = vmatpush2.bf16.msra.mxu0 0
    %1410 = vmatprep.subr.bf16.mxu0 0
    %1411 = vmatpush2.bf16.msra.mxu0 0
    %1412 = vmatprep.subr.bf16.mxu0 0
    %1413 = vmatpush2.bf16.msra.mxu0 0
    %1414 = vmatprep.subr.bf16.mxu0 0
    %1415 = vmatpush2.bf16.msra.mxu0 0
    %1416 = vmatprep.subr.bf16.mxu0 0
    %1417 = vmatpush2.bf16.msra.mxu0 0
    %1418 = vmatprep.subr.bf16.mxu0 0
    %1419 = vmatpush2.bf16.msra.mxu0 0
    %1420 = vmatprep.mubr.bf16.mxu0 0
    %1421 = vmatmul.mubr.bf16.gmra.mxu0 %v1067
    %v1422 = vpop.f32.mrf.mxu0
    %v1423 = vadd.f32 0.0, %v1422
    %v1424 = vpop.f32.mrf.mxu0
    %v1425 = vadd.f32 0.0, %v1424
    %v1426 = vpop.f32.mrf.mxu0
    %v1427 = vadd.f32 0.0, %v1426
    %v1428 = vpop.f32.mrf.mxu0
    %v1429 = vadd.f32 0.0, %v1428
    %1430 = vmatprep.mubr.bf16.mxu0 0
    %1431 = vmatmul.mubr.bf16.gmra.mxu0 %v1068
    %v1432 = vpop.f32.mrf.mxu0
    %v1433 = vadd.f32 0.0, %v1432
    %v1434 = vpop.f32.mrf.mxu0
    %v1435 = vadd.f32 0.0, %v1434
    %v1436 = vpop.f32.mrf.mxu0
    %v1437 = vadd.f32 0.0, %v1436
    %v1438 = vpop.f32.mrf.mxu0
    %v1439 = vadd.f32 0.0, %v1438
    %1440 = vmatprep.mubr.bf16.mxu0 0
    %1441 = vmatmul.mubr.bf16.gmra.mxu0 %v1069
    %v1442 = vpop.f32.mrf.mxu0
    %v1443 = vadd.f32 0.0, %v1442
    %v1444 = vpop.f32.mrf.mxu0
    %v1445 = vadd.f32 0.0, %v1444
    %v1446 = vpop.f32.mrf.mxu0
    %v1447 = vpop.f32.mrf.mxu0
    %1448 = vdwg.mxu0
    %1449 = vmatprep.subr.bf16.mxu0 0
    %1450 = vmatpush1.bf16.msra.mxu0 %v1286
    %1451 = vmatprep.subr.bf16.mxu0 0
    %1452 = vmatpush1.bf16.msra.mxu0 %v1281
    %1453 = vmatprep.subr.bf16.mxu0 0
    %1454 = vmatpush1.bf16.msra.mxu0 %v1276
    %1455 = vmatprep.subr.bf16.mxu0 0
    %1456 = vmatpush1.bf16.msra.mxu0 %v1271
    %1457 = vmatprep.subr.bf16.mxu0 0
    %1458 = vmatpush1.bf16.msra.mxu0 %v1266
    %1459 = vmatprep.subr.bf16.mxu0 0
    %1460 = vmatpush1.bf16.msra.mxu0 %v1261
    %1461 = vmatprep.subr.bf16.mxu0 0
    %1462 = vmatpush1.bf16.msra.mxu0 %v1256
    %1463 = vmatprep.subr.bf16.mxu0 0
    %1464 = vmatpush1.bf16.msra.mxu0 %v1251
    %1465 = vmatprep.subr.bf16.mxu0 0
    %1466 = vmatpush2.bf16.msra.mxu0 0
    %1467 = vmatprep.subr.bf16.mxu0 0
    %1468 = vmatpush2.bf16.msra.mxu0 0
    %1469 = vmatprep.subr.bf16.mxu0 0
    %1470 = vmatpush2.bf16.msra.mxu0 0
    %1471 = vmatprep.subr.bf16.mxu0 0
    %1472 = vmatpush2.bf16.msra.mxu0 0
    %1473 = vmatprep.subr.bf16.mxu0 0
    %1474 = vmatpush2.bf16.msra.mxu0 0
    %1475 = vmatprep.subr.bf16.mxu0 0
    %1476 = vmatpush2.bf16.msra.mxu0 0
    %1477 = vmatprep.subr.bf16.mxu0 0
    %1478 = vmatpush2.bf16.msra.mxu0 0
    %1479 = vmatprep.subr.bf16.mxu0 0
    %1480 = vmatpush2.bf16.msra.mxu0 0
    %1481 = vmatprep.mubr.bf16.mxu0 0
    %1482 = vmatmul.mubr.bf16.gmra.mxu0 %v1067
    %v1483 = vpop.f32.mrf.mxu0
    %v1484 = vadd.f32 0.0, %v1483
    %v1485 = vpop.f32.mrf.mxu0
    %v1486 = vpop.f32.mrf.mxu0
    %v1487 = vadd.f32 0.0, %v1486
    %v1488 = vpop.f32.mrf.mxu0
    %1489 = vmatprep.mubr.bf16.mxu0 0
    %1490 = vmatmul.mubr.bf16.gmra.mxu0 %v1068
    %v1491 = vpop.f32.mrf.mxu0
    %v1492 = vadd.f32 0.0, %v1491
    %v1493 = vpop.f32.mrf.mxu0
    %v1494 = vpop.f32.mrf.mxu0
    %v1495 = vadd.f32 0.0, %v1494
    %v1496 = vpop.f32.mrf.mxu0
    %1497 = vmatprep.mubr.bf16.mxu0 0
    %1498 = vmatmul.mubr.bf16.gmra.mxu0 %v1069
    %v1499 = vpop.f32.mrf.mxu0
    %v1500 = vadd.f32 0.0, %v1499
    %v1501 = vpop.f32.mrf.mxu0
    %v1502 = vpop.f32.mrf.mxu0
    %v1503 = vpop.f32.mrf.mxu0
    %1504 = vdwg.mxu0
    %v1505 = vadd.f32 %v919, %v1362
    %v1506 = vadd.f32 %v921, %v1364
    %v1507 = vadd.f32 %v980, %v1423
    %v1508 = vadd.f32 %v982, %v1425
    %v1509 = vadd.f32 %v1041, %v1484
    %v1510 = vadd.f32 %v923, %v1366
    %v1511 = vadd.f32 %v925, %v1368
    %v1512 = vadd.f32 %v984, %v1427
    %v1513 = vadd.f32 %v986, %v1429
    %v1514 = vadd.f32 %v1044, %v1487
    %v1515 = vadd.f32 %v929, %v1372
    %v1516 = vadd.f32 %v931, %v1374
    %v1517 = vadd.f32 %v990, %v1433
    %v1518 = vadd.f32 %v992, %v1435
    %v1519 = vadd.f32 %v1049, %v1492
    %v1520 = vadd.f32 %v933, %v1376
    %v1521 = vadd.f32 %v935, %v1378
    %v1522 = vadd.f32 %v994, %v1437
    %v1523 = vadd.f32 %v996, %v1439
    %v1524 = vadd.f32 %v1052, %v1495
    %v1525 = vadd.f32 %v939, %v1382
    %v1526 = vadd.f32 %v941, %v1384
    %v1527 = vadd.f32 %v1000, %v1443
    %v1528 = vadd.f32 %v1002, %v1445
    %v1529 = vadd.f32 %v1057, %v1500
    %v1530 = vld [vmem:[#allocation9] sm:$0x1f]
    %v1532 = vlaneseq
    %v1533 = vshrl.u32 %v1532, 7
    %v1534 = vsub.s32 0, %v1533
    %v1535 = vrot.slane %v1530, %v1534
    %v1536 = vlaneseq
    %v1537 = vshrl.u32 %v1536, 7
    %v1538 = vsub.s32 1, %v1537
    %v1539 = vrot.slane %v1530, %v1538
    %v1540 = vlaneseq
    %v1541 = vshrl.u32 %v1540, 7
    %v1542 = vsub.s32 2, %v1541
    %v1543 = vrot.slane %v1530, %v1542
    %v1544 = vlaneseq
    %v1545 = vshrl.u32 %v1544, 7
    %v1546 = vsub.s32 3, %v1545
    %v1547 = vrot.slane %v1530, %v1546
    %v1548 = vlaneseq
    %v1549 = vshrl.u32 %v1548, 7
    %v1550 = vsub.s32 4, %v1549
    %v1551 = vrot.slane %v1530, %v1550
    %v1557 = vadd.f32 %v1505, %v1535
    %v1558 = vadd.f32 %v1506, %v1539
    %v1559 = vadd.f32 %v1507, %v1543
    %v1560 = vadd.f32 %v1508, %v1547
    %v1561 = vadd.f32 %v1509, %v1551
    %v1562 = vadd.f32 %v1510, %v1535
    %v1563 = vadd.f32 %v1511, %v1539
    %v1564 = vadd.f32 %v1512, %v1543
    %v1565 = vadd.f32 %v1513, %v1547
    %v1566 = vadd.f32 %v1514, %v1551
    %v1567 = vadd.f32 %v1515, %v1535
    %v1568 = vadd.f32 %v1516, %v1539
    %v1569 = vadd.f32 %v1517, %v1543
    %v1570 = vadd.f32 %v1518, %v1547
    %v1571 = vadd.f32 %v1519, %v1551
    %v1572 = vadd.f32 %v1520, %v1535
    %v1573 = vadd.f32 %v1521, %v1539
    %v1574 = vadd.f32 %v1522, %v1543
    %v1575 = vadd.f32 %v1523, %v1547
    %v1576 = vadd.f32 %v1524, %v1551
    %v1577 = vadd.f32 %v1525, %v1535
    %v1578 = vadd.f32 %v1526, %v1539
    %v1579 = vadd.f32 %v1527, %v1543
    %v1580 = vadd.f32 %v1528, %v1547
    %v1581 = vadd.f32 %v1529, %v1551
    %v1582 = vmax.f32 %v1557, 0.0
    %v1583 = vmax.f32 %v1558, 0.0
    %v1584 = vmax.f32 %v1559, 0.0
    %v1585 = vmax.f32 %v1560, 0.0
    %v1586 = vmax.f32 %v1561, 0.0
    %v1587 = vmax.f32 %v1562, 0.0
    %v1588 = vmax.f32 %v1563, 0.0
    %v1589 = vmax.f32 %v1564, 0.0
    %v1590 = vmax.f32 %v1565, 0.0
    %v1591 = vmax.f32 %v1566, 0.0
    %v1592 = vmax.f32 %v1567, 0.0
    %v1593 = vmax.f32 %v1568, 0.0
    %v1594 = vmax.f32 %v1569, 0.0
    %v1595 = vmax.f32 %v1570, 0.0
    %v1596 = vmax.f32 %v1571, 0.0
    %v1597 = vmax.f32 %v1572, 0.0
    %v1598 = vmax.f32 %v1573, 0.0
    %v1599 = vmax.f32 %v1574, 0.0
    %v1600 = vmax.f32 %v1575, 0.0
    %v1601 = vmax.f32 %v1576, 0.0
    %v1602 = vmax.f32 %v1577, 0.0
    %v1603 = vmax.f32 %v1578, 0.0
    %v1604 = vmax.f32 %v1579, 0.0
    %v1605 = vmax.f32 %v1580, 0.0
    %v1606 = vmax.f32 %v1581, 0.0
    %v1607 = vld [vmem:[#allocation14] sm:$0xff]
    %v1608 = vld [vmem:[#allocation14 + $0x8] sm:$0xff]
    %v1609 = vld [vmem:[#allocation14 + $0x10] sm:$0xff]
    %v1610 = vld [vmem:[#allocation14 + $0x18] sm:$0xff]
    %v1611 = vld [vmem:[#allocation14 + $0x20] sm:$0xff]
    %v1612 = vld [vmem:[#allocation14 + $0x28] sm:$0xff]
    %v1613 = vld [vmem:[#allocation14 + $0x30] sm:$0xff]
    %v1614 = vld [vmem:[#allocation14 + $0x38] sm:$0xff]
    %v1615 = vld [vmem:[#allocation14 + $0x40] sm:$0xff]
    %v1616 = vld [vmem:[#allocation14 + $0x48] sm:$0xff]
    %v1617 = vld [vmem:[#allocation14 + $0x50] sm:$0xff]
    %v1618 = vld [vmem:[#allocation14 + $0x58] sm:$0xff]
    %v1619 = vld [vmem:[#allocation14 + $0x60] sm:$0xff]
    %v1620 = vld [vmem:[#allocation14 + $0x68] sm:$0xff]
    %v1621 = vld [vmem:[#allocation14 + $0x70] sm:$0xff]
    %v1622 = vld [vmem:[#allocation14 + $0x78] sm:$0xff]
    %v1623 = vld [vmem:[#allocation14 + $0x80] sm:$0xff]
    %v1624 = vld [vmem:[#allocation14 + $0x88] sm:$0xff]
    %v1625 = vld [vmem:[#allocation14 + $0x90] sm:$0xff]
    %v1626 = vld [vmem:[#allocation14 + $0x98] sm:$0xff]
    %v1627 = vld [vmem:[#allocation14 + $0xa0] sm:$0xff]
    %v1628 = vld [vmem:[#allocation14 + $0xa8] sm:$0xff]
    %v1629 = vld [vmem:[#allocation14 + $0xb0] sm:$0xff]
    %v1630 = vld [vmem:[#allocation14 + $0xb8] sm:$0xff]
    %v1631 = vld [vmem:[#allocation14 + $0xc0] sm:$0xff]
    %v1632 = vmul.f32 %v1582, %v1607
    %v1633 = vmul.f32 %v1583, %v1608
    %v1634 = vmul.f32 %v1584, %v1609
    %v1635 = vmul.f32 %v1585, %v1610
    %v1636 = vmul.f32 %v1586, %v1611
    %v1637 = vmul.f32 %v1587, %v1612
    %v1638 = vmul.f32 %v1588, %v1613
    %v1639 = vmul.f32 %v1589, %v1614
    %v1640 = vmul.f32 %v1590, %v1615
    %v1641 = vmul.f32 %v1591, %v1616
    %v1642 = vmul.f32 %v1592, %v1617
    %v1643 = vmul.f32 %v1593, %v1618
    %v1644 = vmul.f32 %v1594, %v1619
    %v1645 = vmul.f32 %v1595, %v1620
    %v1646 = vmul.f32 %v1596, %v1621
    %v1647 = vmul.f32 %v1597, %v1622
    %v1648 = vmul.f32 %v1598, %v1623
    %v1649 = vmul.f32 %v1599, %v1624
    %v1650 = vmul.f32 %v1600, %v1625
    %v1651 = vmul.f32 %v1601, %v1626
    %v1652 = vmul.f32 %v1602, %v1627
    %v1653 = vmul.f32 %v1603, %v1628
    %v1654 = vmul.f32 %v1604, %v1629
    %v1655 = vmul.f32 %v1605, %v1630
    %v1656 = vmul.f32 %v1606, %v1631
    %v1657 = vadd.f32 %v1632, %v1637
    %v1658 = vadd.f32 %v1657, %v1642
    %v1659 = vadd.f32 %v1658, %v1647
    %v1660 = vadd.f32 %v1659, %v1652
    %v1661 = vrot.slane %v1660, 4
    %v1662 = vadd.f32 %v1660, %v1661
    %v1663 = vrot.slane %v1662, 2
    %v1664 = vadd.f32 %v1662, %v1663
    %v1665 = vrot.slane %v1664, 1
    %v1666 = vadd.f32 %v1664, %v1665
    %v1667 = vadd.f32 %v1633, %v1638
    %v1668 = vadd.f32 %v1667, %v1643
    %v1669 = vadd.f32 %v1668, %v1648
    %v1670 = vadd.f32 %v1669, %v1653
    %v1671 = vrot.slane %v1670, 4
    %v1672 = vadd.f32 %v1670, %v1671
    %v1673 = vrot.slane %v1672, 2
    %v1674 = vadd.f32 %v1672, %v1673
    %v1675 = vrot.slane %v1674, 1
    %v1676 = vadd.f32 %v1674, %v1675
    %v1677 = vadd.f32 %v1634, %v1639
    %v1678 = vadd.f32 %v1677, %v1644
    %v1679 = vadd.f32 %v1678, %v1649
    %v1680 = vadd.f32 %v1679, %v1654
    %v1681 = vrot.slane %v1680, 4
    %v1682 = vadd.f32 %v1680, %v1681
    %v1683 = vrot.slane %v1682, 2
    %v1684 = vadd.f32 %v1682, %v1683
    %v1685 = vrot.slane %v1684, 1
    %v1686 = vadd.f32 %v1684, %v1685
    %v1687 = vadd.f32 %v1635, %v1640
    %v1688 = vadd.f32 %v1687, %v1645
    %v1689 = vadd.f32 %v1688, %v1650
    %v1690 = vadd.f32 %v1689, %v1655
    %v1691 = vrot.slane %v1690, 4
    %v1692 = vadd.f32 %v1690, %v1691
    %v1693 = vrot.slane %v1692, 2
    %v1694 = vadd.f32 %v1692, %v1693
    %v1695 = vrot.slane %v1694, 1
    %v1696 = vadd.f32 %v1694, %v1695
    %v1697 = vadd.f32 %v1636, %v1641
    %v1698 = vadd.f32 %v1697, %v1646
    %v1699 = vadd.f32 %v1698, %v1651
    %v1700 = vadd.f32 %v1699, %v1656
    %v1701 = vrot.slane %v1700, 4
    %v1702 = vadd.f32 %v1700, %v1701
    %v1703 = vrot.slane %v1702, 2
    %v1704 = vadd.f32 %v1702, %v1703
    %v1705 = vrot.slane %v1704, 1
    %v1706 = vadd.f32 %v1704, %v1705
    %v1707 = vmul.f32 %v1632, %v1632
    %v1708 = vmul.f32 %v1633, %v1633
    %v1709 = vmul.f32 %v1634, %v1634
    %v1710 = vmul.f32 %v1635, %v1635
    %v1711 = vmul.f32 %v1636, %v1636
    %v1712 = vmul.f32 %v1637, %v1637
    %v1713 = vmul.f32 %v1638, %v1638
    %v1714 = vmul.f32 %v1639, %v1639
    %v1715 = vmul.f32 %v1640, %v1640
    %v1716 = vmul.f32 %v1641, %v1641
    %v1717 = vmul.f32 %v1642, %v1642
    %v1718 = vmul.f32 %v1643, %v1643
    %v1719 = vmul.f32 %v1644, %v1644
    %v1720 = vmul.f32 %v1645, %v1645
    %v1721 = vmul.f32 %v1646, %v1646
    %v1722 = vmul.f32 %v1647, %v1647
    %v1723 = vmul.f32 %v1648, %v1648
    %v1724 = vmul.f32 %v1649, %v1649
    %v1725 = vmul.f32 %v1650, %v1650
    %v1726 = vmul.f32 %v1651, %v1651
    %v1727 = vmul.f32 %v1652, %v1652
    %v1728 = vmul.f32 %v1653, %v1653
    %v1729 = vmul.f32 %v1654, %v1654
    %v1730 = vmul.f32 %v1655, %v1655
    %v1731 = vmul.f32 %v1656, %v1656
    %v1732 = vadd.f32 %v1707, %v1712
    %v1733 = vadd.f32 %v1732, %v1717
    %v1734 = vadd.f32 %v1733, %v1722
    %v1735 = vadd.f32 %v1734, %v1727
    %v1736 = vrot.slane %v1735, 4
    %v1737 = vadd.f32 %v1735, %v1736
    %v1738 = vrot.slane %v1737, 2
    %v1739 = vadd.f32 %v1737, %v1738
    %v1740 = vrot.slane %v1739, 1
    %v1741 = vadd.f32 %v1739, %v1740
    %v1742 = vadd.f32 %v1708, %v1713
    %v1743 = vadd.f32 %v1742, %v1718
    %v1744 = vadd.f32 %v1743, %v1723
    %v1745 = vadd.f32 %v1744, %v1728
    %v1746 = vrot.slane %v1745, 4
    %v1747 = vadd.f32 %v1745, %v1746
    %v1748 = vrot.slane %v1747, 2
    %v1749 = vadd.f32 %v1747, %v1748
    %v1750 = vrot.slane %v1749, 1
    %v1751 = vadd.f32 %v1749, %v1750
    %v1752 = vadd.f32 %v1709, %v1714
    %v1753 = vadd.f32 %v1752, %v1719
    %v1754 = vadd.f32 %v1753, %v1724
    %v1755 = vadd.f32 %v1754, %v1729
    %v1756 = vrot.slane %v1755, 4
    %v1757 = vadd.f32 %v1755, %v1756
    %v1758 = vrot.slane %v1757, 2
    %v1759 = vadd.f32 %v1757, %v1758
    %v1760 = vrot.slane %v1759, 1
    %v1761 = vadd.f32 %v1759, %v1760
    %v1762 = vadd.f32 %v1710, %v1715
    %v1763 = vadd.f32 %v1762, %v1720
    %v1764 = vadd.f32 %v1763, %v1725
    %v1765 = vadd.f32 %v1764, %v1730
    %v1766 = vrot.slane %v1765, 4
    %v1767 = vadd.f32 %v1765, %v1766
    %v1768 = vrot.slane %v1767, 2
    %v1769 = vadd.f32 %v1767, %v1768
    %v1770 = vrot.slane %v1769, 1
    %v1771 = vadd.f32 %v1769, %v1770
    %v1772 = vadd.f32 %v1711, %v1716
    %v1773 = vadd.f32 %v1772, %v1721
    %v1774 = vadd.f32 %v1773, %v1726
    %v1775 = vadd.f32 %v1774, %v1731
    %v1776 = vrot.slane %v1775, 4
    %v1777 = vadd.f32 %v1775, %v1776
    %v1778 = vrot.slane %v1777, 2
    %v1779 = vadd.f32 %v1777, %v1778
    %v1780 = vrot.slane %v1779, 1
    %v1781 = vadd.f32 %v1779, %v1780
    %vm1782 = vcmask 1040384
    %v1783 = vsel %vm1782, %v1666, %v1741
    %v1784 = vsel %vm1782, %v1676, %v1751
    %v1785 = vsel %vm1782, %v1686, %v1761
    %v1786 = vsel %vm1782, %v1696, %v1771
    %v1787 = vsel %vm1782, %v1706, %v1781
    %v1788 = vld [vmem:[%s7] sm:$0xff]
    %v1789 = vld [vmem:[%s7 + $0x8] sm:$0xff]
    %v1790 = vld [vmem:[%s7 + $0x10] sm:$0xff]
    %v1791 = vld [vmem:[%s7 + $0x18] sm:$0xff]
    %v1792 = vld [vmem:[%s7 + $0x20] sm:$0xff]
    %v1793 = vld [vmem:[%s7 + $0x28] sm:$0xff]
    %v1794 = vld [vmem:[%s7 + $0x30] sm:$0xff]
    %v1795 = vld [vmem:[%s7 + $0x38] sm:$0xff]
    %v1796 = vld [vmem:[%s7 + $0x40] sm:$0xff]
    %v1797 = vld [vmem:[%s7 + $0x48] sm:$0xff]
    %v1798 = vld [vmem:[%s7 + $0x50] sm:$0xff]
    %v1799 = vld [vmem:[%s7 + $0x58] sm:$0xff]
    %v1800 = vld [vmem:[%s7 + $0x60] sm:$0xff]
    %v1801 = vld [vmem:[%s7 + $0x68] sm:$0xff]
    %v1802 = vld [vmem:[%s7 + $0x70] sm:$0xff]
    %v1803 = vld [vmem:[%s7 + $0x78] sm:$0xff]
    %v1804 = vld [vmem:[%s7 + $0x80] sm:$0xff]
    %v1805 = vld [vmem:[%s7 + $0x88] sm:$0xff]
    %v1806 = vld [vmem:[%s7 + $0x90] sm:$0xff]
    %v1807 = vld [vmem:[%s7 + $0x98] sm:$0xff]
    %v1808 = vld [vmem:[%s7 + $0xa0] sm:$0xff]
    %v1809 = vld [vmem:[%s7 + $0xa8] sm:$0xff]
    %v1810 = vld [vmem:[%s7 + $0xb0] sm:$0xff]
    %v1811 = vld [vmem:[%s7 + $0xb8] sm:$0xff]
    %v1812 = vld [vmem:[%s7 + $0xc0] sm:$0xff]
    %v1813 = vld [vmem:[%s7 + $0xc8] sm:$0xff]
    %v1814 = vld [vmem:[%s7 + $0xd0] sm:$0xff]
    %v1815 = vld [vmem:[%s7 + $0xd8] sm:$0xff]
    %v1816 = vld [vmem:[%s7 + $0xe0] sm:$0xff]
    %v1817 = vld [vmem:[%s7 + $0xe8] sm:$0xff]
    %v1818 = vld [vmem:[%s7 + $0xf0] sm:$0xff]
    %v1819 = vld [vmem:[%s7 + $0xf8] sm:$0xff]
    %v1820 = vld [vmem:[%s7 + $0x100] sm:$0xff]
    %v1821 = vld [vmem:[%s7 + $0x108] sm:$0xff]
    %v1822 = vld [vmem:[%s7 + $0x110] sm:$0xff]
    %v1823 = vld [vmem:[%s7 + $0x118] sm:$0xff]
    %v1824 = vld [vmem:[%s7 + $0x120] sm:$0xff]
    %v1825 = vld [vmem:[%s7 + $0x128] sm:$0xff]
    %v1826 = vld [vmem:[%s7 + $0x130] sm:$0xff]
    %v1827 = vld [vmem:[%s7 + $0x138] sm:$0xff]
    %v1828 = vld [vmem:[%s7 + $0x140] sm:$0xff]
    %v1829 = vld [vmem:[%s7 + $0x148] sm:$0xff]
    %v1830 = vld [vmem:[%s7 + $0x150] sm:$0xff]
    %v1831 = vld [vmem:[%s7 + $0x158] sm:$0xff]
    %v1832 = vld [vmem:[%s7 + $0x160] sm:$0xff]
    %v1833 = vld [vmem:[%s7 + $0x168] sm:$0xff]
    %v1834 = vld [vmem:[%s7 + $0x170] sm:$0xff]
    %v1835 = vld [vmem:[%s7 + $0x178] sm:$0xff]
    %v1836 = vld [vmem:[%s7 + $0x180] sm:$0xff]
    %v1837 = vld [vmem:[%s7 + $0x188] sm:$0xff]
    %v1838 = vld [vmem:[%s7 + $0x190] sm:$0xff]
    %v1839 = vld [vmem:[%s7 + $0x198] sm:$0xff]
    %v1840 = vld [vmem:[%s7 + $0x1a0] sm:$0xff]
    %v1841 = vld [vmem:[%s7 + $0x1a8] sm:$0xff]
    %v1842 = vld [vmem:[%s7 + $0x1b0] sm:$0xff]
    %v1843 = vld [vmem:[%s7 + $0x1b8] sm:$0xff]
    %v1844 = vld [vmem:[%s7 + $0x1c0] sm:$0xff]
    %v1845 = vld [vmem:[%s7 + $0x1c8] sm:$0xff]
    %v1846 = vld [vmem:[%s7 + $0x1d0] sm:$0xff]
    %v1847 = vld [vmem:[%s7 + $0x1d8] sm:$0xff]
    %v1848 = vld [vmem:[%s7 + $0x1e0] sm:$0xff]
    %v1849 = vld [vmem:[%s7 + $0x1e8] sm:$0xff]
    %v1850 = vld [vmem:[%s7 + $0x1f0] sm:$0xff]
    %v1851 = vld [vmem:[%s7 + $0x1f8] sm:$0xff]
    %v1852 = vld [vmem:[%s7 + $0x200] sm:$0xff]
    %v1853 = vld [vmem:[%s7 + $0x208] sm:$0xff]
    %v1854 = vld [vmem:[%s7 + $0x210] sm:$0xff]
    %v1855 = vld [vmem:[%s7 + $0x218] sm:$0xff]
    %v1856 = vld [vmem:[%s7 + $0x220] sm:$0xff]
    %v1857 = vld [vmem:[%s7 + $0x228] sm:$0xff]
    %v1858 = vld [vmem:[%s7 + $0x230] sm:$0xff]
    %v1859 = vld [vmem:[%s7 + $0x238] sm:$0xff]
    %v1860 = vld [vmem:[%s7 + $0x240] sm:$0xff]
    %v1861 = vld [vmem:[%s7 + $0x248] sm:$0xff]
    %v1862 = vld [vmem:[%s7 + $0x250] sm:$0xff]
    %v1863 = vld [vmem:[%s7 + $0x258] sm:$0xff]
    %v1864 = vld [vmem:[%s7 + $0x260] sm:$0xff]
    %v1865 = vld [vmem:[%s7 + $0x268] sm:$0xff]
    %v1866 = vld [vmem:[%s7 + $0x270] sm:$0xff]
    %v1867 = vld [vmem:[%s7 + $0x278] sm:$0xff]
    %1868 = vmatprep.subr.mxu0 0.0
    %1869 = vmatpush1.msra.mxu0 %v1803
    %1870 = vmatprep.subr.mxu0 0.0
    %1871 = vmatpush1.msra.mxu0 %v1802
    %1872 = vmatprep.subr.mxu0 0.0
    %1873 = vmatpush1.msra.mxu0 %v1801
    %1874 = vmatprep.subr.mxu0 0.0
    %1875 = vmatpush1.msra.mxu0 %v1800
    %1876 = vmatprep.subr.mxu0 0.0
    %1877 = vmatpush1.msra.mxu0 %v1799
    %1878 = vmatprep.subr.mxu0 0.0
    %1879 = vmatpush1.msra.mxu0 %v1798
    %1880 = vmatprep.subr.mxu0 0.0
    %1881 = vmatpush1.msra.mxu0 %v1797
    %1882 = vmatprep.subr.mxu0 0.0
    %1883 = vmatpush1.msra.mxu0 %v1796
    %1884 = vmatprep.subr.mxu0 0.0
    %1885 = vmatpush1.msra.mxu0 %v1795
    %1886 = vmatprep.subr.mxu0 0.0
    %1887 = vmatpush1.msra.mxu0 %v1794
    %1888 = vmatprep.subr.mxu0 0.0
    %1889 = vmatpush1.msra.mxu0 %v1793
    %1890 = vmatprep.subr.mxu0 0.0
    %1891 = vmatpush1.msra.mxu0 %v1792
    %1892 = vmatprep.subr.mxu0 0.0
    %1893 = vmatpush1.msra.mxu0 %v1791
    %1894 = vmatprep.subr.mxu0 0.0
    %1895 = vmatpush1.msra.mxu0 %v1790
    %1896 = vmatprep.subr.mxu0 0.0
    %1897 = vmatpush1.msra.mxu0 %v1789
    %1898 = vmatprep.subr.mxu0 0.0
    %1899 = vmatpush1.msra.mxu0 %v1788
    %1900 = vmatprep.subr.mxu0 0.0
    %1901 = vmatpush2.msra.mxu0 %v1819
    %1902 = vmatprep.subr.mxu0 0.0
    %1903 = vmatpush2.msra.mxu0 %v1818
    %1904 = vmatprep.subr.mxu0 0.0
    %1905 = vmatpush2.msra.mxu0 %v1817
    %1906 = vmatprep.subr.mxu0 0.0
    %1907 = vmatpush2.msra.mxu0 %v1816
    %1908 = vmatprep.subr.mxu0 0.0
    %1909 = vmatpush2.msra.mxu0 %v1815
    %1910 = vmatprep.subr.mxu0 0.0
    %1911 = vmatpush2.msra.mxu0 %v1814
    %1912 = vmatprep.subr.mxu0 0.0
    %1913 = vmatpush2.msra.mxu0 %v1813
    %1914 = vmatprep.subr.mxu0 0.0
    %1915 = vmatpush2.msra.mxu0 %v1812
    %1916 = vmatprep.subr.mxu0 0.0
    %1917 = vmatpush2.msra.mxu0 %v1811
    %1918 = vmatprep.subr.mxu0 0.0
    %1919 = vmatpush2.msra.mxu0 %v1810
    %1920 = vmatprep.subr.mxu0 0.0
    %1921 = vmatpush2.msra.mxu0 %v1809
    %1922 = vmatprep.subr.mxu0 0.0
    %1923 = vmatpush2.msra.mxu0 %v1808
    %1924 = vmatprep.subr.mxu0 0.0
    %1925 = vmatpush2.msra.mxu0 %v1807
    %1926 = vmatprep.subr.mxu0 0.0
    %1927 = vmatpush2.msra.mxu0 %v1806
    %1928 = vmatprep.subr.mxu0 0.0
    %1929 = vmatpush2.msra.mxu0 %v1805
    %1930 = vmatprep.subr.mxu0 0.0
    %1931 = vmatpush2.msra.mxu0 %v1804
    %1932 = vmatprep.mubr.f32.mxu0 %v1784
    %1933 = vmatmul.mubr.f32.gmra.mxu0 %v1783
    %v1934 = vpop.f32.mrf.mxu0
    %v1935 = vadd.f32 0.0, %v1934
    %v1936 = vpop.f32.mrf.mxu0
    %1937 = vdwg.mxu0
    %1938 = vmatprep.subr.mxu0 0.0
    %1939 = vmatpush1.msra.mxu0 %v1835
    %1940 = vmatprep.subr.mxu0 0.0
    %1941 = vmatpush1.msra.mxu0 %v1834
    %1942 = vmatprep.subr.mxu0 0.0
    %1943 = vmatpush1.msra.mxu0 %v1833
    %1944 = vmatprep.subr.mxu0 0.0
    %1945 = vmatpush1.msra.mxu0 %v1832
    %1946 = vmatprep.subr.mxu0 0.0
    %1947 = vmatpush1.msra.mxu0 %v1831
    %1948 = vmatprep.subr.mxu0 0.0
    %1949 = vmatpush1.msra.mxu0 %v1830
    %1950 = vmatprep.subr.mxu0 0.0
    %1951 = vmatpush1.msra.mxu0 %v1829
    %1952 = vmatprep.subr.mxu0 0.0
    %1953 = vmatpush1.msra.mxu0 %v1828
    %1954 = vmatprep.subr.mxu0 0.0
    %1955 = vmatpush1.msra.mxu0 %v1827
    %1956 = vmatprep.subr.mxu0 0.0
    %1957 = vmatpush1.msra.mxu0 %v1826
    %1958 = vmatprep.subr.mxu0 0.0
    %1959 = vmatpush1.msra.mxu0 %v1825
    %1960 = vmatprep.subr.mxu0 0.0
    %1961 = vmatpush1.msra.mxu0 %v1824
    %1962 = vmatprep.subr.mxu0 0.0
    %1963 = vmatpush1.msra.mxu0 %v1823
    %1964 = vmatprep.subr.mxu0 0.0
    %1965 = vmatpush1.msra.mxu0 %v1822
    %1966 = vmatprep.subr.mxu0 0.0
    %1967 = vmatpush1.msra.mxu0 %v1821
    %1968 = vmatprep.subr.mxu0 0.0
    %1969 = vmatpush1.msra.mxu0 %v1820
    %1970 = vmatprep.subr.mxu0 0.0
    %1971 = vmatpush2.msra.mxu0 %v1851
    %1972 = vmatprep.subr.mxu0 0.0
    %1973 = vmatpush2.msra.mxu0 %v1850
    %1974 = vmatprep.subr.mxu0 0.0
    %1975 = vmatpush2.msra.mxu0 %v1849
    %1976 = vmatprep.subr.mxu0 0.0
    %1977 = vmatpush2.msra.mxu0 %v1848
    %1978 = vmatprep.subr.mxu0 0.0
    %1979 = vmatpush2.msra.mxu0 %v1847
    %1980 = vmatprep.subr.mxu0 0.0
    %1981 = vmatpush2.msra.mxu0 %v1846
    %1982 = vmatprep.subr.mxu0 0.0
    %1983 = vmatpush2.msra.mxu0 %v1845
    %1984 = vmatprep.subr.mxu0 0.0
    %1985 = vmatpush2.msra.mxu0 %v1844
    %1986 = vmatprep.subr.mxu0 0.0
    %1987 = vmatpush2.msra.mxu0 %v1843
    %1988 = vmatprep.subr.mxu0 0.0
    %1989 = vmatpush2.msra.mxu0 %v1842
    %1990 = vmatprep.subr.mxu0 0.0
    %1991 = vmatpush2.msra.mxu0 %v1841
    %1992 = vmatprep.subr.mxu0 0.0
    %1993 = vmatpush2.msra.mxu0 %v1840
    %1994 = vmatprep.subr.mxu0 0.0
    %1995 = vmatpush2.msra.mxu0 %v1839
    %1996 = vmatprep.subr.mxu0 0.0
    %1997 = vmatpush2.msra.mxu0 %v1838
    %1998 = vmatprep.subr.mxu0 0.0
    %1999 = vmatpush2.msra.mxu0 %v1837
    %2000 = vmatprep.subr.mxu0 0.0
    %2001 = vmatpush2.msra.mxu0 %v1836
    %2002 = vmatprep.mubr.f32.mxu0 %v1786
    %2003 = vmatmul.mubr.f32.gmra.mxu0 %v1785
    %v2004 = vpop.f32.mrf.mxu0
    %v2005 = vadd.f32 %v1935, %v2004
    %v2006 = vpop.f32.mrf.mxu0
    %2007 = vdwg.mxu0
    %2008 = vmatprep.subr.mxu0 0.0
    %2009 = vmatpush1.msra.mxu0 %v1867
    %2010 = vmatprep.subr.mxu0 0.0
    %2011 = vmatpush1.msra.mxu0 %v1866
    %2012 = vmatprep.subr.mxu0 0.0
    %2013 = vmatpush1.msra.mxu0 %v1865
    %2014 = vmatprep.subr.mxu0 0.0
    %2015 = vmatpush1.msra.mxu0 %v1864
    %2016 = vmatprep.subr.mxu0 0.0
    %2017 = vmatpush1.msra.mxu0 %v1863
    %2018 = vmatprep.subr.mxu0 0.0
    %2019 = vmatpush1.msra.mxu0 %v1862
    %2020 = vmatprep.subr.mxu0 0.0
    %2021 = vmatpush1.msra.mxu0 %v1861
    %2022 = vmatprep.subr.mxu0 0.0
    %2023 = vmatpush1.msra.mxu0 %v1860
    %2024 = vmatprep.subr.mxu0 0.0
    %2025 = vmatpush1.msra.mxu0 %v1859
    %2026 = vmatprep.subr.mxu0 0.0
    %2027 = vmatpush1.msra.mxu0 %v1858
    %2028 = vmatprep.subr.mxu0 0.0
    %2029 = vmatpush1.msra.mxu0 %v1857
    %2030 = vmatprep.subr.mxu0 0.0
    %2031 = vmatpush1.msra.mxu0 %v1856
    %2032 = vmatprep.subr.mxu0 0.0
    %2033 = vmatpush1.msra.mxu0 %v1855
    %2034 = vmatprep.subr.mxu0 0.0
    %2035 = vmatpush1.msra.mxu0 %v1854
    %2036 = vmatprep.subr.mxu0 0.0
    %2037 = vmatpush1.msra.mxu0 %v1853
    %2038 = vmatprep.subr.mxu0 0.0
    %2039 = vmatpush1.msra.mxu0 %v1852
    %2040 = vmatprep.subr.mxu0 0.0
    %2041 = vmatpush2.msra.mxu0 0.0
    %2042 = vmatprep.subr.mxu0 0.0
    %2043 = vmatpush2.msra.mxu0 0.0
    %2044 = vmatprep.subr.mxu0 0.0
    %2045 = vmatpush2.msra.mxu0 0.0
    %2046 = vmatprep.subr.mxu0 0.0
    %2047 = vmatpush2.msra.mxu0 0.0
    %2048 = vmatprep.subr.mxu0 0.0
    %2049 = vmatpush2.msra.mxu0 0.0
    %2050 = vmatprep.subr.mxu0 0.0
    %2051 = vmatpush2.msra.mxu0 0.0
    %2052 = vmatprep.subr.mxu0 0.0
    %2053 = vmatpush2.msra.mxu0 0.0
    %2054 = vmatprep.subr.mxu0 0.0
    %2055 = vmatpush2.msra.mxu0 0.0
    %2056 = vmatprep.subr.mxu0 0.0
    %2057 = vmatpush2.msra.mxu0 0.0
    %2058 = vmatprep.subr.mxu0 0.0
    %2059 = vmatpush2.msra.mxu0 0.0
    %2060 = vmatprep.subr.mxu0 0.0
    %2061 = vmatpush2.msra.mxu0 0.0
    %2062 = vmatprep.subr.mxu0 0.0
    %2063 = vmatpush2.msra.mxu0 0.0
    %2064 = vmatprep.subr.mxu0 0.0
    %2065 = vmatpush2.msra.mxu0 0.0
    %2066 = vmatprep.subr.mxu0 0.0
    %2067 = vmatpush2.msra.mxu0 0.0
    %2068 = vmatprep.subr.mxu0 0.0
    %2069 = vmatpush2.msra.mxu0 0.0
    %2070 = vmatprep.subr.mxu0 0.0
    %2071 = vmatpush2.msra.mxu0 0.0
    %2072 = vmatprep.mubr.f32.mxu0 0.0
    %2073 = vmatmul.mubr.f32.gmra.mxu0 %v1787
    %v2074 = vpop.f32.mrf.mxu0
    %v2075 = vadd.f32 %v2005, %v2074
    %v2076 = vpop.f32.mrf.mxu0
    %2077 = vdwg.mxu0
    %v2078 = vmul.f32 %v2075, 0.001953125
    %v2079 = vmul.f32 %v2078, %v2078
    %v2081 = vrot.slane %v2079, 7
    %v2083 = vsub.f32 %v2078, %v2081
    %v2084 = vmax.f32 %v2083, 0.0
    %v2085 = vld [vmem:[#allocation11] sm:$0x1]
    %v2086 = vadd.f32 %v2084, 1e-05
    %v2087 = vrsqrt.pop %v2086
    %v2090 = vunpack.c.l.s4 1966171168
    %v2091 = vunpack.c.0.s8 %v2090
    %v2092 = vlaneseq
    %v2093 = vshrl.u32 %v2092, 7
    %v2094 = vsub.s32 %v2091, %v2093
    %v2095 = vrot.slane %v2087, %v2094
    %v2096 = vcombine.high %v2095, %v2095
    %v2098 = vunpack.c.l.s4 1966171168
    %v2099 = vunpack.c.0.s8 %v2098
    %v2100 = vlaneseq
    %v2101 = vshrl.u32 %v2100, 7
    %v2102 = vsub.s32 %v2099, %v2101
    %v2103 = vrot.slane %v2096, %v2102
    %v2105 = vmul.f32 %v2085, %v2103
    %v2106 = vld [vmem:[#allocation12] sm:$0x1]
    %v2107 = vmul.f32 %v2078, %v2105
    %v2108 = vsub.f32 %v2106, %v2107
    %v2110 = vlaneseq
    %v2111 = vshrl.u32 %v2110, 7
    %v2112 = vsub.s32 0, %v2111
    %v2113 = vrot.slane %v2108, %v2112
    %v2115 = vsel %vm1782, %v2105, %v2113
    %v2116 = vld [vmem:[#allocation15] sm:$0xff]
    %v2117 = vld [vmem:[#allocation15 + $0x8] sm:$0xff]
    %v2118 = vld [vmem:[#allocation15 + $0x10] sm:$0xff]
    %v2119 = vld [vmem:[#allocation15 + $0x18] sm:$0xff]
    %v2120 = vld [vmem:[#allocation15 + $0x20] sm:$0xff]
    %v2121 = vld [vmem:[#allocation15 + $0x28] sm:$0xff]
    %v2122 = vld [vmem:[#allocation15 + $0x30] sm:$0xff]
    %v2123 = vld [vmem:[#allocation15 + $0x38] sm:$0xff]
    %v2124 = vld [vmem:[#allocation15 + $0x40] sm:$0xff]
    %v2125 = vld [vmem:[#allocation15 + $0x48] sm:$0xff]
    %v2126 = vld [vmem:[#allocation15 + $0x50] sm:$0xff]
    %v2127 = vld [vmem:[#allocation15 + $0x58] sm:$0xff]
    %v2128 = vld [vmem:[#allocation15 + $0x60] sm:$0xff]
    %v2129 = vld [vmem:[#allocation15 + $0x68] sm:$0xff]
    %v2130 = vld [vmem:[#allocation15 + $0x70] sm:$0xff]
    %v2131 = vld [vmem:[#allocation15 + $0x78] sm:$0xff]
    %v2132 = vld [vmem:[#allocation15 + $0x80] sm:$0xff]
    %v2133 = vld [vmem:[#allocation15 + $0x88] sm:$0xff]
    %v2134 = vld [vmem:[#allocation15 + $0x90] sm:$0xff]
    %v2135 = vld [vmem:[#allocation15 + $0x98] sm:$0xff]
    %vm2136 = vcmask 261120
    %v2138 = vsel %vm2136, %v2115, 0
    %2140 = vmatprep.subr.mxu0 0.0
    %2141 = vmatpush1.msra.mxu0 0.0
    %2142 = vmatprep.subr.mxu0 0.0
    %2143 = vmatpush1.msra.mxu0 0.0
    %2144 = vmatprep.subr.mxu0 0.0
    %2145 = vmatpush1.msra.mxu0 0.0
    %2146 = vmatprep.subr.mxu0 0.0
    %2147 = vmatpush1.msra.mxu0 0.0
    %2148 = vmatprep.subr.mxu0 0.0
    %2149 = vmatpush1.msra.mxu0 0.0
    %2150 = vmatprep.subr.mxu0 0.0
    %2151 = vmatpush1.msra.mxu0 0.0
    %2152 = vmatprep.subr.mxu0 0.0
    %2153 = vmatpush1.msra.mxu0 0.0
    %2154 = vmatprep.subr.mxu0 0.0
    %2155 = vmatpush1.msra.mxu0 0.0
    %2156 = vmatprep.subr.mxu0 0.0
    %2157 = vmatpush1.msra.mxu0 0.0
    %2158 = vmatprep.subr.mxu0 0.0
    %2159 = vmatpush1.msra.mxu0 0.0
    %2160 = vmatprep.subr.mxu0 0.0
    %2161 = vmatpush1.msra.mxu0 0.0
    %2162 = vmatprep.subr.mxu0 0.0
    %2163 = vmatpush1.msra.mxu0 0.0
    %2164 = vmatprep.subr.mxu0 %v2132
    %2165 = vmatpush1.msra.mxu0 %v2131
    %2166 = vmatprep.subr.mxu0 %v2127
    %2167 = vmatpush1.msra.mxu0 %v2126
    %2168 = vmatprep.subr.mxu0 %v2122
    %2169 = vmatpush1.msra.mxu0 %v2121
    %2170 = vmatprep.subr.mxu0 %v2117
    %2171 = vmatpush1.msra.mxu0 %v2116
    %2172 = vmatprep.subr.mxu0 0.0
    %2173 = vmatpush2.msra.mxu0 0.0
    %2174 = vmatprep.subr.mxu0 0.0
    %2175 = vmatpush2.msra.mxu0 0.0
    %2176 = vmatprep.subr.mxu0 0.0
    %2177 = vmatpush2.msra.mxu0 0.0
    %2178 = vmatprep.subr.mxu0 0.0
    %2179 = vmatpush2.msra.mxu0 0.0
    %2180 = vmatprep.subr.mxu0 0.0
    %2181 = vmatpush2.msra.mxu0 0.0
    %2182 = vmatprep.subr.mxu0 0.0
    %2183 = vmatpush2.msra.mxu0 0.0
    %2184 = vmatprep.subr.mxu0 0.0
    %2185 = vmatpush2.msra.mxu0 0.0
    %2186 = vmatprep.subr.mxu0 0.0
    %2187 = vmatpush2.msra.mxu0 0.0
    %2188 = vmatprep.subr.mxu0 0.0
    %2189 = vmatpush2.msra.mxu0 0.0
    %2190 = vmatprep.subr.mxu0 0.0
    %2191 = vmatpush2.msra.mxu0 0.0
    %2192 = vmatprep.subr.mxu0 0.0
    %2193 = vmatpush2.msra.mxu0 0.0
    %2194 = vmatprep.subr.mxu0 0.0
    %2195 = vmatpush2.msra.mxu0 0.0
    %2196 = vmatprep.subr.mxu0 0.0
    %2197 = vmatpush2.msra.mxu0 0.0
    %2198 = vmatprep.subr.mxu0 0.0
    %2199 = vmatpush2.msra.mxu0 0.0
    %2200 = vmatprep.subr.mxu0 0.0
    %2201 = vmatpush2.msra.mxu0 0.0
    %2202 = vmatprep.subr.mxu0 0.0
    %2203 = vmatpush2.msra.mxu0 0.0
    %2204 = vmatprep.mubr.f32.mxu0 0.0
    %2205 = vmatmul.mubr.f32.gmra.mxu0 %v2138
    %v2206 = vpop.f32.mrf.mxu0
    %v2207 = vadd.f32 0.0, %v2206
    %v2208 = vpop.f32.mrf.mxu0
    %v2209 = vadd.f32 0.0, %v2208
    %2210 = vdwg.mxu0
    %2211 = vmatprep.subr.mxu0 0.0
    %2212 = vmatpush1.msra.mxu0 0.0
    %2213 = vmatprep.subr.mxu0 0.0
    %2214 = vmatpush1.msra.mxu0 0.0
    %2215 = vmatprep.subr.mxu0 0.0
    %2216 = vmatpush1.msra.mxu0 0.0
    %2217 = vmatprep.subr.mxu0 0.0
    %2218 = vmatpush1.msra.mxu0 0.0
    %2219 = vmatprep.subr.mxu0 0.0
    %2220 = vmatpush1.msra.mxu0 0.0
    %2221 = vmatprep.subr.mxu0 0.0
    %2222 = vmatpush1.msra.mxu0 0.0
    %2223 = vmatprep.subr.mxu0 0.0
    %2224 = vmatpush1.msra.mxu0 0.0
    %2225 = vmatprep.subr.mxu0 0.0
    %2226 = vmatpush1.msra.mxu0 0.0
    %2227 = vmatprep.subr.mxu0 0.0
    %2228 = vmatpush1.msra.mxu0 0.0
    %2229 = vmatprep.subr.mxu0 0.0
    %2230 = vmatpush1.msra.mxu0 0.0
    %2231 = vmatprep.subr.mxu0 0.0
    %2232 = vmatpush1.msra.mxu0 0.0
    %2233 = vmatprep.subr.mxu0 0.0
    %2234 = vmatpush1.msra.mxu0 0.0
    %2235 = vmatprep.subr.mxu0 %v2134
    %2236 = vmatpush1.msra.mxu0 %v2133
    %2237 = vmatprep.subr.mxu0 %v2129
    %2238 = vmatpush1.msra.mxu0 %v2128
    %2239 = vmatprep.subr.mxu0 %v2124
    %2240 = vmatpush1.msra.mxu0 %v2123
    %2241 = vmatprep.subr.mxu0 %v2119
    %2242 = vmatpush1.msra.mxu0 %v2118
    %2243 = vmatprep.subr.mxu0 0.0
    %2244 = vmatpush2.msra.mxu0 0.0
    %2245 = vmatprep.subr.mxu0 0.0
    %2246 = vmatpush2.msra.mxu0 0.0
    %2247 = vmatprep.subr.mxu0 0.0
    %2248 = vmatpush2.msra.mxu0 0.0
    %2249 = vmatprep.subr.mxu0 0.0
    %2250 = vmatpush2.msra.mxu0 0.0
    %2251 = vmatprep.subr.mxu0 0.0
    %2252 = vmatpush2.msra.mxu0 0.0
    %2253 = vmatprep.subr.mxu0 0.0
    %2254 = vmatpush2.msra.mxu0 0.0
    %2255 = vmatprep.subr.mxu0 0.0
    %2256 = vmatpush2.msra.mxu0 0.0
    %2257 = vmatprep.subr.mxu0 0.0
    %2258 = vmatpush2.msra.mxu0 0.0
    %2259 = vmatprep.subr.mxu0 0.0
    %2260 = vmatpush2.msra.mxu0 0.0
    %2261 = vmatprep.subr.mxu0 0.0
    %2262 = vmatpush2.msra.mxu0 0.0
    %2263 = vmatprep.subr.mxu0 0.0
    %2264 = vmatpush2.msra.mxu0 0.0
    %2265 = vmatprep.subr.mxu0 0.0
    %2266 = vmatpush2.msra.mxu0 0.0
    %2267 = vmatprep.subr.mxu0 0.0
    %2268 = vmatpush2.msra.mxu0 0.0
    %2269 = vmatprep.subr.mxu0 0.0
    %2270 = vmatpush2.msra.mxu0 0.0
    %2271 = vmatprep.subr.mxu0 0.0
    %2272 = vmatpush2.msra.mxu0 0.0
    %2273 = vmatprep.subr.mxu0 0.0
    %2274 = vmatpush2.msra.mxu0 0.0
    %2275 = vmatprep.mubr.f32.mxu0 0.0
    %2276 = vmatmul.mubr.f32.gmra.mxu0 %v2138
    %v2277 = vpop.f32.mrf.mxu0
    %v2278 = vadd.f32 0.0, %v2277
    %v2279 = vpop.f32.mrf.mxu0
    %v2280 = vadd.f32 0.0, %v2279
    %2281 = vdwg.mxu0
    %2282 = vmatprep.subr.mxu0 0.0
    %2283 = vmatpush1.msra.mxu0 0.0
    %2284 = vmatprep.subr.mxu0 0.0
    %2285 = vmatpush1.msra.mxu0 0.0
    %2286 = vmatprep.subr.mxu0 0.0
    %2287 = vmatpush1.msra.mxu0 0.0
    %2288 = vmatprep.subr.mxu0 0.0
    %2289 = vmatpush1.msra.mxu0 0.0
    %2290 = vmatprep.subr.mxu0 0.0
    %2291 = vmatpush1.msra.mxu0 0.0
    %2292 = vmatprep.subr.mxu0 0.0
    %2293 = vmatpush1.msra.mxu0 0.0
    %2294 = vmatprep.subr.mxu0 0.0
    %2295 = vmatpush1.msra.mxu0 0.0
    %2296 = vmatprep.subr.mxu0 0.0
    %2297 = vmatpush1.msra.mxu0 0.0
    %2298 = vmatprep.subr.mxu0 0.0
    %2299 = vmatpush1.msra.mxu0 0.0
    %2300 = vmatprep.subr.mxu0 0.0
    %2301 = vmatpush1.msra.mxu0 0.0
    %2302 = vmatprep.subr.mxu0 0.0
    %2303 = vmatpush1.msra.mxu0 0.0
    %2304 = vmatprep.subr.mxu0 0.0
    %2305 = vmatpush1.msra.mxu0 0.0
    %2306 = vmatprep.subr.mxu0 0.0
    %2307 = vmatpush1.msra.mxu0 %v2135
    %2308 = vmatprep.subr.mxu0 0.0
    %2309 = vmatpush1.msra.mxu0 %v2130
    %2310 = vmatprep.subr.mxu0 0.0
    %2311 = vmatpush1.msra.mxu0 %v2125
    %2312 = vmatprep.subr.mxu0 0.0
    %2313 = vmatpush1.msra.mxu0 %v2120
    %2314 = vmatprep.subr.mxu0 0.0
    %2315 = vmatpush2.msra.mxu0 0.0
    %2316 = vmatprep.subr.mxu0 0.0
    %2317 = vmatpush2.msra.mxu0 0.0
    %2318 = vmatprep.subr.mxu0 0.0
    %2319 = vmatpush2.msra.mxu0 0.0
    %2320 = vmatprep.subr.mxu0 0.0
    %2321 = vmatpush2.msra.mxu0 0.0
    %2322 = vmatprep.subr.mxu0 0.0
    %2323 = vmatpush2.msra.mxu0 0.0
    %2324 = vmatprep.subr.mxu0 0.0
    %2325 = vmatpush2.msra.mxu0 0.0
    %2326 = vmatprep.subr.mxu0 0.0
    %2327 = vmatpush2.msra.mxu0 0.0
    %2328 = vmatprep.subr.mxu0 0.0
    %2329 = vmatpush2.msra.mxu0 0.0
    %2330 = vmatprep.subr.mxu0 0.0
    %2331 = vmatpush2.msra.mxu0 0.0
    %2332 = vmatprep.subr.mxu0 0.0
    %2333 = vmatpush2.msra.mxu0 0.0
    %2334 = vmatprep.subr.mxu0 0.0
    %2335 = vmatpush2.msra.mxu0 0.0
    %2336 = vmatprep.subr.mxu0 0.0
    %2337 = vmatpush2.msra.mxu0 0.0
    %2338 = vmatprep.subr.mxu0 0.0
    %2339 = vmatpush2.msra.mxu0 0.0
    %2340 = vmatprep.subr.mxu0 0.0
    %2341 = vmatpush2.msra.mxu0 0.0
    %2342 = vmatprep.subr.mxu0 0.0
    %2343 = vmatpush2.msra.mxu0 0.0
    %2344 = vmatprep.subr.mxu0 0.0
    %2345 = vmatpush2.msra.mxu0 0.0
    %2346 = vmatprep.mubr.f32.mxu0 0.0
    %2347 = vmatmul.mubr.f32.gmra.mxu0 %v2138
    %v2348 = vpop.f32.mrf.mxu0
    %v2349 = vadd.f32 0.0, %v2348
    %v2350 = vpop.f32.mrf.mxu0
    %2351 = vdwg.mxu0
    %v2352 = vlaneseq
    %v2353 = vshrl.u32 %v2352, 7
    %v2354 = vsub.s32 0, %v2353
    %v2355 = vrot.slane %v2207, %v2354
    %v2356 = vlaneseq
    %v2357 = vshrl.u32 %v2356, 7
    %v2358 = vsub.s32 0, %v2357
    %v2359 = vrot.slane %v2209, %v2358
    %v2360 = vlaneseq
    %v2361 = vshrl.u32 %v2360, 7
    %v2362 = vsub.s32 0, %v2361
    %v2363 = vrot.slane %v2278, %v2362
    %v2364 = vlaneseq
    %v2365 = vshrl.u32 %v2364, 7
    %v2366 = vsub.s32 0, %v2365
    %v2367 = vrot.slane %v2280, %v2366
    %v2368 = vlaneseq
    %v2369 = vshrl.u32 %v2368, 7
    %v2370 = vsub.s32 0, %v2369
    %v2371 = vrot.slane %v2349, %v2370
    %v2372 = vmul.f32 %v1632, %v2355
    %v2373 = vmul.f32 %v1633, %v2359
    %v2374 = vmul.f32 %v1634, %v2363
    %v2375 = vmul.f32 %v1635, %v2367
    %v2376 = vmul.f32 %v1636, %v2371
    %v2377 = vmul.f32 %v1637, %v2355
    %v2378 = vmul.f32 %v1638, %v2359
    %v2379 = vmul.f32 %v1639, %v2363
    %v2380 = vmul.f32 %v1640, %v2367
    %v2381 = vmul.f32 %v1641, %v2371
    %v2382 = vmul.f32 %v1642, %v2355
    %v2383 = vmul.f32 %v1643, %v2359
    %v2384 = vmul.f32 %v1644, %v2363
    %v2385 = vmul.f32 %v1645, %v2367
    %v2386 = vmul.f32 %v1646, %v2371
    %v2387 = vmul.f32 %v1647, %v2355
    %v2388 = vmul.f32 %v1648, %v2359
    %v2389 = vmul.f32 %v1649, %v2363
    %v2390 = vmul.f32 %v1650, %v2367
    %v2391 = vmul.f32 %v1651, %v2371
    %v2392 = vmul.f32 %v1652, %v2355
    %v2393 = vmul.f32 %v1653, %v2359
    %v2394 = vmul.f32 %v1654, %v2363
    %v2395 = vmul.f32 %v1655, %v2367
    %v2396 = vmul.f32 %v1656, %v2371
    %v2397 = vlaneseq
    %v2398 = vshrl.u32 %v2397, 7
    %v2399 = vsub.s32 1, %v2398
    %v2400 = vrot.slane %v2207, %v2399
    %v2401 = vlaneseq
    %v2402 = vshrl.u32 %v2401, 7
    %v2403 = vsub.s32 1, %v2402
    %v2404 = vrot.slane %v2209, %v2403
    %v2405 = vlaneseq
    %v2406 = vshrl.u32 %v2405, 7
    %v2407 = vsub.s32 1, %v2406
    %v2408 = vrot.slane %v2278, %v2407
    %v2409 = vlaneseq
    %v2410 = vshrl.u32 %v2409, 7
    %v2411 = vsub.s32 1, %v2410
    %v2412 = vrot.slane %v2280, %v2411
    %v2413 = vlaneseq
    %v2414 = vshrl.u32 %v2413, 7
    %v2415 = vsub.s32 1, %v2414
    %v2416 = vrot.slane %v2349, %v2415
    %v2417 = vmul.f32 %v2400, %v1607
    %v2418 = vmul.f32 %v2404, %v1608
    %v2419 = vmul.f32 %v2408, %v1609
    %v2420 = vmul.f32 %v2412, %v1610
    %v2421 = vmul.f32 %v2416, %v1611
    %v2422 = vmul.f32 %v2400, %v1612
    %v2423 = vmul.f32 %v2404, %v1613
    %v2424 = vmul.f32 %v2408, %v1614
    %v2425 = vmul.f32 %v2412, %v1615
    %v2426 = vmul.f32 %v2416, %v1616
    %v2427 = vmul.f32 %v2400, %v1617
    %v2428 = vmul.f32 %v2404, %v1618
    %v2429 = vmul.f32 %v2408, %v1619
    %v2430 = vmul.f32 %v2412, %v1620
    %v2431 = vmul.f32 %v2416, %v1621
    %v2432 = vmul.f32 %v2400, %v1622
    %v2433 = vmul.f32 %v2404, %v1623
    %v2434 = vmul.f32 %v2408, %v1624
    %v2435 = vmul.f32 %v2412, %v1625
    %v2436 = vmul.f32 %v2416, %v1626
    %v2437 = vmul.f32 %v2400, %v1627
    %v2438 = vmul.f32 %v2404, %v1628
    %v2439 = vmul.f32 %v2408, %v1629
    %v2440 = vmul.f32 %v2412, %v1630
    %v2441 = vmul.f32 %v2416, %v1631
    %v2442 = vadd.f32 %v2372, %v2417
    %v2443 = vadd.f32 %v2373, %v2418
    %v2444 = vadd.f32 %v2374, %v2419
    %v2445 = vadd.f32 %v2375, %v2420
    %v2446 = vadd.f32 %v2376, %v2421
    %v2447 = vadd.f32 %v2377, %v2422
    %v2448 = vadd.f32 %v2378, %v2423
    %v2449 = vadd.f32 %v2379, %v2424
    %v2450 = vadd.f32 %v2380, %v2425
    %v2451 = vadd.f32 %v2381, %v2426
    %v2452 = vadd.f32 %v2382, %v2427
    %v2453 = vadd.f32 %v2383, %v2428
    %v2454 = vadd.f32 %v2384, %v2429
    %v2455 = vadd.f32 %v2385, %v2430
    %v2456 = vadd.f32 %v2386, %v2431
    %v2457 = vadd.f32 %v2387, %v2432
    %v2458 = vadd.f32 %v2388, %v2433
    %v2459 = vadd.f32 %v2389, %v2434
    %v2460 = vadd.f32 %v2390, %v2435
    %v2461 = vadd.f32 %v2391, %v2436
    %v2462 = vadd.f32 %v2392, %v2437
    %v2463 = vadd.f32 %v2393, %v2438
    %v2464 = vadd.f32 %v2394, %v2439
    %v2465 = vadd.f32 %v2395, %v2440
    %v2466 = vadd.f32 %v2396, %v2441
    %2467 = vst [vmem:[#allocation2 + $0x28] sm:$0xff] %v2442
    %2468 = vst [vmem:[#allocation2 + $0x30] sm:$0xff] %v2443
    %2469 = vst [vmem:[#allocation2 + $0x38] sm:$0xff] %v2444
    %2470 = vst [vmem:[#allocation2 + $0x40] sm:$0xff] %v2445
    %2471 = vst [vmem:[#allocation2 + $0x48] sm:$0xff] %v2446
    %2472 = vst [vmem:[#allocation2 + $0x50] sm:$0xff] %v2447
    %2473 = vst [vmem:[#allocation2 + $0x58] sm:$0xff] %v2448
    %2474 = vst [vmem:[#allocation2 + $0x60] sm:$0xff] %v2449
    %2475 = vst [vmem:[#allocation2 + $0x68] sm:$0xff] %v2450
    %2476 = vst [vmem:[#allocation2 + $0x70] sm:$0xff] %v2451
    %2477 = vst [vmem:[#allocation2 + $0x78] sm:$0xff] %v2452
    %2478 = vst [vmem:[#allocation2 + $0x80] sm:$0xff] %v2453
    %2479 = vst [vmem:[#allocation2 + $0x88] sm:$0xff] %v2454
    %2480 = vst [vmem:[#allocation2 + $0x90] sm:$0xff] %v2455
    %2481 = vst [vmem:[#allocation2 + $0x98] sm:$0xff] %v2456
    %2482 = vst [vmem:[#allocation2 + $0xa0] sm:$0xff] %v2457
    %2483 = vst [vmem:[#allocation2 + $0xa8] sm:$0xff] %v2458
    %2484 = vst [vmem:[#allocation2 + $0xb0] sm:$0xff] %v2459
    %2485 = vst [vmem:[#allocation2 + $0xb8] sm:$0xff] %v2460
    %2486 = vst [vmem:[#allocation2 + $0xc0] sm:$0xff] %v2461
    %2487 = vst [vmem:[#allocation2 + $0xc8] sm:$0xff] %v2462
    %2488 = vst [vmem:[#allocation2 + $0xd0] sm:$0xff] %v2463
    %2489 = vst [vmem:[#allocation2 + $0xd8] sm:$0xff] %v2464
    %2490 = vst [vmem:[#allocation2 + $0xe0] sm:$0xff] %v2465
    %2491 = vst [vmem:[#allocation2 + $0xe8] sm:$0xff] %v2466
    %s2492 = smul.u32 4, 3
    %s2493 = smul.u32 %s2492, 80
    %s2494 = smul.u32 %s2493, 5
    %s2495 = sshll.u32 %s2494, 4
    %2496 = dma.done [#allocation5], %s2495
    %v2497 = vld [vmem:[#allocation2] sm:$0x80]
    %v2498 = vld [vmem:[#allocation2 + $0x8] sm:$0x80]
    %v2499 = vld [vmem:[#allocation2 + $0x10] sm:$0x80]
    %v2500 = vld [vmem:[#allocation2 + $0x18] sm:$0x80]
    %v2501 = vld [vmem:[#allocation2 + $0x20] sm:$0x80]
    %v2502 = vld [vmem:[#allocation2 + $0x28] sm:$0xff]
    %v2503 = vld [vmem:[#allocation2 + $0x30] sm:$0xff]
    %v2504 = vld [vmem:[#allocation2 + $0x38] sm:$0xff]
    %v2505 = vld [vmem:[#allocation2 + $0x40] sm:$0xff]
    %v2506 = vld [vmem:[#allocation2 + $0x48] sm:$0xff]
    %v2507 = vld [vmem:[#allocation2 + $0x50] sm:$0xff]
    %v2508 = vld [vmem:[#allocation2 + $0x58] sm:$0xff]
    %v2509 = vld [vmem:[#allocation2 + $0x60] sm:$0xff]
    %v2510 = vld [vmem:[#allocation2 + $0x68] sm:$0xff]
    %v2511 = vld [vmem:[#allocation2 + $0x70] sm:$0xff]
    %v2512 = vld [vmem:[#allocation2 + $0x78] sm:$0xff]
    %v2513 = vld [vmem:[#allocation2 + $0x80] sm:$0xff]
    %v2514 = vld [vmem:[#allocation2 + $0x88] sm:$0xff]
    %v2515 = vld [vmem:[#allocation2 + $0x90] sm:$0xff]
    %v2516 = vld [vmem:[#allocation2 + $0x98] sm:$0xff]
    %v2517 = vld [vmem:[#allocation2 + $0xa0] sm:$0xff]
    %v2518 = vld [vmem:[#allocation2 + $0xa8] sm:$0xff]
    %v2519 = vld [vmem:[#allocation2 + $0xb0] sm:$0xff]
    %v2520 = vld [vmem:[#allocation2 + $0xb8] sm:$0xff]
    %v2521 = vld [vmem:[#allocation2 + $0xc0] sm:$0xff]
    %v2522 = vld [vmem:[#allocation2 + $0xc8] sm:$0x7f]
    %v2523 = vld [vmem:[#allocation2 + $0xd0] sm:$0x7f]
    %v2524 = vld [vmem:[#allocation2 + $0xd8] sm:$0x7f]
    %v2525 = vld [vmem:[#allocation2 + $0xe0] sm:$0x7f]
    %v2526 = vld [vmem:[#allocation2 + $0xe8] sm:$0x7f]
    %v2527 = vpack.c.bf16 %v2502, %v2497
    %v2528 = vpack.c.bf16 %v2503, %v2498
    %v2529 = vpack.c.bf16 %v2504, %v2499
    %v2530 = vpack.c.bf16 %v2505, %v2500
    %v2531 = vpack.c.bf16 %v2506, %v2501
    %v2532 = vpack.c.bf16 %v2512, %v2507
    %v2533 = vpack.c.bf16 %v2513, %v2508
    %v2534 = vpack.c.bf16 %v2514, %v2509
    %v2535 = vpack.c.bf16 %v2515, %v2510
    %v2536 = vpack.c.bf16 %v2516, %v2511
    %v2537 = vpack.c.bf16 %v2522, %v2517
    %v2538 = vpack.c.bf16 %v2523, %v2518
    %v2539 = vpack.c.bf16 %v2524, %v2519
    %v2540 = vpack.c.bf16 %v2525, %v2520
    %v2541 = vpack.c.bf16 %v2526, %v2521
    %v2542 = vld [vmem:[#allocation4] sm:$0xff]
    %v2543 = vld [vmem:[#allocation4 + $0x8] sm:$0xff]
    %v2544 = vld [vmem:[#allocation4 + $0x10] sm:$0xf]
    %v2545 = vld [vmem:[#allocation4 + $0x14] sm:$0xff]
    %v2546 = vld [vmem:[#allocation4 + $0x1c] sm:$0xff]
    %v2547 = vld [vmem:[#allocation4 + $0x24] sm:$0xf]
    %v2548 = vld [vmem:[#allocation4 + $0x28] sm:$0xff]
    %v2549 = vld [vmem:[#allocation4 + $0x30] sm:$0xff]
    %v2550 = vld [vmem:[#allocation4 + $0x38] sm:$0xf]
    %v2551 = vld [vmem:[#allocation4 + $0x3c] sm:$0xff]
    %v2552 = vld [vmem:[#allocation4 + $0x44] sm:$0xff]
    %v2553 = vld [vmem:[#allocation4 + $0x4c] sm:$0xf]
    %v2554 = vld [vmem:[#allocation4 + $0x50] sm:$0xff]
    %v2555 = vld [vmem:[#allocation4 + $0x58] sm:$0xff]
    %v2556 = vld [vmem:[#allocation4 + $0x60] sm:$0xf]
    %v2557 = vld [vmem:[#allocation4 + $0x64] sm:$0xff]
    %v2558 = vld [vmem:[#allocation4 + $0x6c] sm:$0xff]
    %v2559 = vld [vmem:[#allocation4 + $0x74] sm:$0xf]
    %v2560 = vld [vmem:[#allocation4 + $0x78] sm:$0xff]
    %v2561 = vld [vmem:[#allocation4 + $0x80] sm:$0xff]
    %v2562 = vld [vmem:[#allocation4 + $0x88] sm:$0xf]
    %v2563 = vld [vmem:[#allocation4 + $0x8c] sm:$0xff]
    %v2564 = vld [vmem:[#allocation4 + $0x94] sm:$0xff]
    %v2565 = vld [vmem:[#allocation4 + $0x9c] sm:$0xf]
    %v2566 = vld [vmem:[#allocation4 + $0xa0] sm:$0xff]
    %v2567 = vld [vmem:[#allocation4 + $0xa8] sm:$0xff]
    %v2568 = vld [vmem:[#allocation4 + $0xb0] sm:$0xf]
    %v2569 = vld [vmem:[#allocation4 + $0xb4] sm:$0xff]
    %v2570 = vld [vmem:[#allocation4 + $0xbc] sm:$0xff]
    %v2571 = vld [vmem:[#allocation4 + $0xc4] sm:$0xf]
    %v2572 = vld [vmem:[#allocation4 + $0xc8] sm:$0xff]
    %v2573 = vld [vmem:[#allocation4 + $0xd0] sm:$0xff]
    %v2574 = vld [vmem:[#allocation4 + $0xd8] sm:$0xf]
    %v2575 = vld [vmem:[#allocation4 + $0xdc] sm:$0xff]
    %v2576 = vld [vmem:[#allocation4 + $0xe4] sm:$0xff]
    %v2577 = vld [vmem:[#allocation4 + $0xec] sm:$0xf]
    %v2578 = vld [vmem:[#allocation4 + $0xf0] sm:$0xff]
    %v2579 = vld [vmem:[#allocation4 + $0xf8] sm:$0xff]
    %v2580 = vld [vmem:[#allocation4 + $0x100] sm:$0xf]
    %v2581 = vld [vmem:[#allocation4 + $0x104] sm:$0xff]
    %v2582 = vld [vmem:[#allocation4 + $0x10c] sm:$0xff]
    %v2583 = vld [vmem:[#allocation4 + $0x114] sm:$0xf]
    %v2584 = vld [vmem:[#allocation4 + $0x118] sm:$0xff]
    %v2585 = vld [vmem:[#allocation4 + $0x120] sm:$0xff]
    %v2586 = vld [vmem:[#allocation4 + $0x128] sm:$0xf]
    %v2587 = vld [vmem:[#allocation4 + $0x12c] sm:$0xff]
    %v2588 = vld [vmem:[#allocation4 + $0x134] sm:$0xff]
    %v2589 = vld [vmem:[#allocation4 + $0x13c] sm:$0xf]
    %v2590 = vld [vmem:[#allocation4 + $0x140] sm:$0xff]
    %v2591 = vld [vmem:[#allocation4 + $0x148] sm:$0xff]
    %v2592 = vld [vmem:[#allocation4 + $0x150] sm:$0xf]
    %v2593 = vld [vmem:[#allocation4 + $0x154] sm:$0xff]
    %v2594 = vld [vmem:[#allocation4 + $0x15c] sm:$0xff]
    %v2595 = vld [vmem:[#allocation4 + $0x164] sm:$0xf]
    %v2596 = vld [vmem:[#allocation4 + $0x168] sm:$0xff]
    %v2597 = vld [vmem:[#allocation4 + $0x170] sm:$0xff]
    %v2598 = vld [vmem:[#allocation4 + $0x178] sm:$0xf]
    %v2599 = vld [vmem:[#allocation4 + $0x17c] sm:$0xff]
    %v2600 = vld [vmem:[#allocation4 + $0x184] sm:$0xff]
    %v2601 = vld [vmem:[#allocation4 + $0x18c] sm:$0xf]
    %v2602 = vld [vmem:[#allocation4 + $0x190] sm:$0xff]
    %v2603 = vld [vmem:[#allocation4 + $0x198] sm:$0xff]
    %v2604 = vld [vmem:[#allocation4 + $0x1a0] sm:$0xf]
    %v2605 = vld [vmem:[#allocation4 + $0x1a4] sm:$0xff]
    %v2606 = vld [vmem:[#allocation4 + $0x1ac] sm:$0xff]
    %v2607 = vld [vmem:[#allocation4 + $0x1b4] sm:$0xf]
    %v2608 = vld [vmem:[#allocation4 + $0x1b8] sm:$0xff]
    %v2609 = vld [vmem:[#allocation4 + $0x1c0] sm:$0xff]
    %v2610 = vld [vmem:[#allocation4 + $0x1c8] sm:$0xf]
    %v2611 = vld [vmem:[#allocation4 + $0x1cc] sm:$0xff]
    %v2612 = vld [vmem:[#allocation4 + $0x1d4] sm:$0xff]
    %v2613 = vld [vmem:[#allocation4 + $0x1dc] sm:$0xf]
    %v2614 = vld [vmem:[#allocation4 + $0x1e0] sm:$0xff]
    %v2615 = vld [vmem:[#allocation4 + $0x1e8] sm:$0xff]
    %v2616 = vld [vmem:[#allocation4 + $0x1f0] sm:$0xf]
    %v2617 = vld [vmem:[#allocation4 + $0x1f4] sm:$0xff]
    %v2618 = vld [vmem:[#allocation4 + $0x1fc] sm:$0xff]
    %v2619 = vld [vmem:[#allocation4 + $0x204] sm:$0xf]
    %v2620 = vld [vmem:[#allocation4 + $0x208] sm:$0xff]
    %v2621 = vld [vmem:[#allocation4 + $0x210] sm:$0xff]
    %v2622 = vld [vmem:[#allocation4 + $0x218] sm:$0xf]
    %v2623 = vld [vmem:[#allocation4 + $0x21c] sm:$0xff]
    %v2624 = vld [vmem:[#allocation4 + $0x224] sm:$0xff]
    %v2625 = vld [vmem:[#allocation4 + $0x22c] sm:$0xf]
    %v2626 = vld [vmem:[#allocation4 + $0x230] sm:$0xff]
    %v2627 = vld [vmem:[#allocation4 + $0x238] sm:$0xff]
    %v2628 = vld [vmem:[#allocation4 + $0x240] sm:$0xf]
    %v2629 = vld [vmem:[#allocation4 + $0x244] sm:$0xff]
    %v2630 = vld [vmem:[#allocation4 + $0x24c] sm:$0xff]
    %v2631 = vld [vmem:[#allocation4 + $0x254] sm:$0xf]
    %v2632 = vld [vmem:[#allocation4 + $0x258] sm:$0xff]
    %v2633 = vld [vmem:[#allocation4 + $0x260] sm:$0xff]
    %v2634 = vld [vmem:[#allocation4 + $0x268] sm:$0xf]
    %v2635 = vld [vmem:[#allocation4 + $0x26c] sm:$0xff]
    %v2636 = vld [vmem:[#allocation4 + $0x274] sm:$0xff]
    %v2637 = vld [vmem:[#allocation4 + $0x27c] sm:$0xf]
    %v2638 = vld [vmem:[#allocation4 + $0x280] sm:$0xff]
    %v2639 = vld [vmem:[#allocation4 + $0x288] sm:$0xff]
    %v2640 = vld [vmem:[#allocation4 + $0x290] sm:$0xf]
    %v2641 = vld [vmem:[#allocation4 + $0x294] sm:$0xff]
    %v2642 = vld [vmem:[#allocation4 + $0x29c] sm:$0xff]
    %v2643 = vld [vmem:[#allocation4 + $0x2a4] sm:$0xf]
    %v2644 = vld [vmem:[#allocation4 + $0x2a8] sm:$0xff]
    %v2645 = vld [vmem:[#allocation4 + $0x2b0] sm:$0xff]
    %v2646 = vld [vmem:[#allocation4 + $0x2b8] sm:$0xf]
    %v2647 = vld [vmem:[#allocation4 + $0x2bc] sm:$0xff]
    %v2648 = vld [vmem:[#allocation4 + $0x2c4] sm:$0xff]
    %v2649 = vld [vmem:[#allocation4 + $0x2cc] sm:$0xf]
    %v2650 = vld [vmem:[#allocation4 + $0x2d0] sm:$0xff]
    %v2651 = vld [vmem:[#allocation4 + $0x2d8] sm:$0xff]
    %v2652 = vld [vmem:[#allocation4 + $0x2e0] sm:$0xf]
    %v2653 = vld [vmem:[#allocation4 + $0x2e4] sm:$0xff]
    %v2654 = vld [vmem:[#allocation4 + $0x2ec] sm:$0xff]
    %v2655 = vld [vmem:[#allocation4 + $0x2f4] sm:$0xf]
    %v2656 = vld [vmem:[#allocation4 + $0x2f8] sm:$0xff]
    %v2657 = vld [vmem:[#allocation4 + $0x300] sm:$0xff]
    %v2658 = vld [vmem:[#allocation4 + $0x308] sm:$0xf]
    %v2659 = vld [vmem:[#allocation4 + $0x30c] sm:$0xff]
    %v2660 = vld [vmem:[#allocation4 + $0x314] sm:$0xff]
    %v2661 = vld [vmem:[#allocation4 + $0x31c] sm:$0xf]
    %v2662 = vld [vmem:[#allocation4 + $0x320] sm:$0xff]
    %v2663 = vld [vmem:[#allocation4 + $0x328] sm:$0xff]
    %v2664 = vld [vmem:[#allocation4 + $0x330] sm:$0xf]
    %v2665 = vld [vmem:[#allocation4 + $0x334] sm:$0xff]
    %v2666 = vld [vmem:[#allocation4 + $0x33c] sm:$0xff]
    %v2667 = vld [vmem:[#allocation4 + $0x344] sm:$0xf]
    %v2668 = vld [vmem:[#allocation4 + $0x348] sm:$0xff]
    %v2669 = vld [vmem:[#allocation4 + $0x350] sm:$0xff]
    %v2670 = vld [vmem:[#allocation4 + $0x358] sm:$0xf]
    %v2671 = vld [vmem:[#allocation4 + $0x35c] sm:$0xff]
    %v2672 = vld [vmem:[#allocation4 + $0x364] sm:$0xff]
    %v2673 = vld [vmem:[#allocation4 + $0x36c] sm:$0xf]
    %v2674 = vld [vmem:[#allocation4 + $0x370] sm:$0xff]
    %v2675 = vld [vmem:[#allocation4 + $0x378] sm:$0xff]
    %v2676 = vld [vmem:[#allocation4 + $0x380] sm:$0xf]
    %v2677 = vld [vmem:[#allocation4 + $0x384] sm:$0xff]
    %v2678 = vld [vmem:[#allocation4 + $0x38c] sm:$0xff]
    %v2679 = vld [vmem:[#allocation4 + $0x394] sm:$0xf]
    %v2680 = vld [vmem:[#allocation4 + $0x398] sm:$0xff]
    %v2681 = vld [vmem:[#allocation4 + $0x3a0] sm:$0xff]
    %v2682 = vld [vmem:[#allocation4 + $0x3a8] sm:$0xf]
    %v2683 = vld [vmem:[#allocation4 + $0x3ac] sm:$0xff]
    %v2684 = vld [vmem:[#allocation4 + $0x3b4] sm:$0xff]
    %v2685 = vld [vmem:[#allocation4 + $0x3bc] sm:$0xf]
    %v2686 = vld [vmem:[#allocation4 + $0x3c0] sm:$0xff]
    %v2687 = vld [vmem:[#allocation4 + $0x3c8] sm:$0xff]
    %v2688 = vld [vmem:[#allocation4 + $0x3d0] sm:$0xf]
    %v2689 = vld [vmem:[#allocation4 + $0x3d4] sm:$0xff]
    %v2690 = vld [vmem:[#allocation4 + $0x3dc] sm:$0xff]
    %v2691 = vld [vmem:[#allocation4 + $0x3e4] sm:$0xf]
    %v2692 = vld [vmem:[#allocation4 + $0x3e8] sm:$0xff]
    %v2693 = vld [vmem:[#allocation4 + $0x3f0] sm:$0xff]
    %v2694 = vld [vmem:[#allocation4 + $0x3f8] sm:$0xf]
    %v2695 = vld [vmem:[#allocation4 + $0x3fc] sm:$0xff]
    %v2696 = vld [vmem:[#allocation4 + $0x404] sm:$0xff]
    %v2697 = vld [vmem:[#allocation4 + $0x40c] sm:$0xf]
    %v2698 = vld [vmem:[#allocation4 + $0x410] sm:$0xff]
    %v2699 = vld [vmem:[#allocation4 + $0x418] sm:$0xff]
    %v2700 = vld [vmem:[#allocation4 + $0x420] sm:$0xf]
    %v2701 = vld [vmem:[#allocation4 + $0x424] sm:$0xff]
    %v2702 = vld [vmem:[#allocation4 + $0x42c] sm:$0xff]
    %v2703 = vld [vmem:[#allocation4 + $0x434] sm:$0xf]
    %v2704 = vld [vmem:[#allocation4 + $0x438] sm:$0xff]
    %v2705 = vld [vmem:[#allocation4 + $0x440] sm:$0xff]
    %v2706 = vld [vmem:[#allocation4 + $0x448] sm:$0xf]
    %v2707 = vld [vmem:[#allocation4 + $0x44c] sm:$0xff]
    %v2708 = vld [vmem:[#allocation4 + $0x454] sm:$0xff]
    %v2709 = vld [vmem:[#allocation4 + $0x45c] sm:$0xf]
    %v2710 = vld [vmem:[#allocation4 + $0x460] sm:$0xff]
    %v2711 = vld [vmem:[#allocation4 + $0x468] sm:$0xff]
    %v2712 = vld [vmem:[#allocation4 + $0x470] sm:$0xf]
    %v2713 = vld [vmem:[#allocation4 + $0x474] sm:$0xff]
    %v2714 = vld [vmem:[#allocation4 + $0x47c] sm:$0xff]
    %v2715 = vld [vmem:[#allocation4 + $0x484] sm:$0xf]
    %v2716 = vld [vmem:[#allocation4 + $0x488] sm:$0xff]
    %v2717 = vld [vmem:[#allocation4 + $0x490] sm:$0xff]
    %v2718 = vld [vmem:[#allocation4 + $0x498] sm:$0xf]
    %v2719 = vld [vmem:[#allocation4 + $0x49c] sm:$0xff]
    %v2720 = vld [vmem:[#allocation4 + $0x4a4] sm:$0xff]
    %v2721 = vld [vmem:[#allocation4 + $0x4ac] sm:$0xf]
    %v2722 = vld [vmem:[#allocation4 + $0x4b0] sm:$0xff]
    %v2723 = vld [vmem:[#allocation4 + $0x4b8] sm:$0xff]
    %v2724 = vld [vmem:[#allocation4 + $0x4c0] sm:$0xf]
    %v2725 = vld [vmem:[#allocation4 + $0x4c4] sm:$0xff]
    %v2726 = vld [vmem:[#allocation4 + $0x4cc] sm:$0xff]
    %v2727 = vld [vmem:[#allocation4 + $0x4d4] sm:$0xf]
    %v2728 = vld [vmem:[#allocation4 + $0x4d8] sm:$0xff]
    %v2729 = vld [vmem:[#allocation4 + $0x4e0] sm:$0xff]
    %v2730 = vld [vmem:[#allocation4 + $0x4e8] sm:$0xf]
    %v2731 = vld [vmem:[#allocation4 + $0x4ec] sm:$0xff]
    %v2732 = vld [vmem:[#allocation4 + $0x4f4] sm:$0xff]
    %v2733 = vld [vmem:[#allocation4 + $0x4fc] sm:$0xf]
    %v2734 = vld [vmem:[#allocation4 + $0x500] sm:$0xff]
    %v2735 = vld [vmem:[#allocation4 + $0x508] sm:$0xff]
    %v2736 = vld [vmem:[#allocation4 + $0x510] sm:$0xf]
    %v2737 = vld [vmem:[#allocation4 + $0x514] sm:$0xff]
    %v2738 = vld [vmem:[#allocation4 + $0x51c] sm:$0xff]
    %v2739 = vld [vmem:[#allocation4 + $0x524] sm:$0xf]
    %v2740 = vld [vmem:[#allocation4 + $0x528] sm:$0xff]
    %v2741 = vld [vmem:[#allocation4 + $0x530] sm:$0xff]
    %v2742 = vld [vmem:[#allocation4 + $0x538] sm:$0xf]
    %v2743 = vld [vmem:[#allocation4 + $0x53c] sm:$0xff]
    %v2744 = vld [vmem:[#allocation4 + $0x544] sm:$0xff]
    %v2745 = vld [vmem:[#allocation4 + $0x54c] sm:$0xf]
    %v2746 = vld [vmem:[#allocation4 + $0x550] sm:$0xff]
    %v2747 = vld [vmem:[#allocation4 + $0x558] sm:$0xff]
    %v2748 = vld [vmem:[#allocation4 + $0x560] sm:$0xf]
    %v2749 = vld [vmem:[#allocation4 + $0x564] sm:$0xff]
    %v2750 = vld [vmem:[#allocation4 + $0x56c] sm:$0xff]
    %v2751 = vld [vmem:[#allocation4 + $0x574] sm:$0xf]
    %v2752 = vld [vmem:[#allocation4 + $0x578] sm:$0xff]
    %v2753 = vld [vmem:[#allocation4 + $0x580] sm:$0xff]
    %v2754 = vld [vmem:[#allocation4 + $0x588] sm:$0xf]
    %v2755 = vld [vmem:[#allocation4 + $0x58c] sm:$0xff]
    %v2756 = vld [vmem:[#allocation4 + $0x594] sm:$0xff]
    %v2757 = vld [vmem:[#allocation4 + $0x59c] sm:$0xf]
    %v2758 = vld [vmem:[#allocation4 + $0x5a0] sm:$0xff]
    %v2759 = vld [vmem:[#allocation4 + $0x5a8] sm:$0xff]
    %v2760 = vld [vmem:[#allocation4 + $0x5b0] sm:$0xf]
    %v2761 = vld [vmem:[#allocation4 + $0x5b4] sm:$0xff]
    %v2762 = vld [vmem:[#allocation4 + $0x5bc] sm:$0xff]
    %v2763 = vld [vmem:[#allocation4 + $0x5c4] sm:$0xf]
    %v2764 = vld [vmem:[#allocation4 + $0x5c8] sm:$0xff]
    %v2765 = vld [vmem:[#allocation4 + $0x5d0] sm:$0xff]
    %v2766 = vld [vmem:[#allocation4 + $0x5d8] sm:$0xf]
    %v2767 = vld [vmem:[#allocation4 + $0x5dc] sm:$0xff]
    %v2768 = vld [vmem:[#allocation4 + $0x5e4] sm:$0xff]
    %v2769 = vld [vmem:[#allocation4 + $0x5ec] sm:$0xf]
    %v2770 = vld [vmem:[#allocation4 + $0x5f0] sm:$0xff]
    %v2771 = vld [vmem:[#allocation4 + $0x5f8] sm:$0xff]
    %v2772 = vld [vmem:[#allocation4 + $0x600] sm:$0xf]
    %v2773 = vld [vmem:[#allocation4 + $0x604] sm:$0xff]
    %v2774 = vld [vmem:[#allocation4 + $0x60c] sm:$0xff]
    %v2775 = vld [vmem:[#allocation4 + $0x614] sm:$0xf]
    %v2776 = vld [vmem:[#allocation4 + $0x618] sm:$0xff]
    %v2777 = vld [vmem:[#allocation4 + $0x620] sm:$0xff]
    %v2778 = vld [vmem:[#allocation4 + $0x628] sm:$0xf]
    %v2779 = vld [vmem:[#allocation4 + $0x62c] sm:$0xff]
    %v2780 = vld [vmem:[#allocation4 + $0x634] sm:$0xff]
    %v2781 = vld [vmem:[#allocation4 + $0x63c] sm:$0xf]
    %v2782 = vld [vmem:[#allocation2 + $0xc8] sm:$0xff]
    %v2783 = vld [vmem:[#allocation2 + $0xd0] sm:$0xff]
    %v2784 = vld [vmem:[#allocation2 + $0xd8] sm:$0xff]
    %v2785 = vld [vmem:[#allocation2 + $0xe0] sm:$0xff]
    %v2786 = vld [vmem:[#allocation2 + $0xe8] sm:$0xff]
    %v2787 = vpack.c.bf16 %v2507, %v2502
    %v2788 = vpack.c.bf16 %v2508, %v2503
    %v2789 = vpack.c.bf16 %v2509, %v2504
    %v2790 = vpack.c.bf16 %v2510, %v2505
    %v2791 = vpack.c.bf16 %v2511, %v2506
    %v2792 = vpack.c.bf16 %v2517, %v2512
    %v2793 = vpack.c.bf16 %v2518, %v2513
    %v2794 = vpack.c.bf16 %v2519, %v2514
    %v2795 = vpack.c.bf16 %v2520, %v2515
    %v2796 = vpack.c.bf16 %v2521, %v2516
    %v2797 = vpack.c.bf16 %v2782, %v2782
    %v2798 = vpack.c.bf16 %v2783, %v2783
    %v2799 = vpack.c.bf16 %v2784, %v2784
    %v2800 = vpack.c.bf16 %v2785, %v2785
    %v2801 = vpack.c.bf16 %v2786, %v2786
    %s2802 = scalar_lea.vmem [#allocation4], 1600
    %v2803 = vld [vmem:[%s2802] sm:$0xff]
    %v2804 = vld [vmem:[%s2802 + $0x8] sm:$0xff]
    %v2805 = vld [vmem:[%s2802 + $0x10] sm:$0xf]
    %v2806 = vld [vmem:[%s2802 + $0x14] sm:$0xff]
    %v2807 = vld [vmem:[%s2802 + $0x1c] sm:$0xff]
    %v2808 = vld [vmem:[%s2802 + $0x24] sm:$0xf]
    %v2809 = vld [vmem:[%s2802 + $0x28] sm:$0xff]
    %v2810 = vld [vmem:[%s2802 + $0x30] sm:$0xff]
    %v2811 = vld [vmem:[%s2802 + $0x38] sm:$0xf]
    %v2812 = vld [vmem:[%s2802 + $0x3c] sm:$0xff]
    %v2813 = vld [vmem:[%s2802 + $0x44] sm:$0xff]
    %v2814 = vld [vmem:[%s2802 + $0x4c] sm:$0xf]
    %v2815 = vld [vmem:[%s2802 + $0x50] sm:$0xff]
    %v2816 = vld [vmem:[%s2802 + $0x58] sm:$0xff]
    %v2817 = vld [vmem:[%s2802 + $0x60] sm:$0xf]
    %v2818 = vld [vmem:[%s2802 + $0x64] sm:$0xff]
    %v2819 = vld [vmem:[%s2802 + $0x6c] sm:$0xff]
    %v2820 = vld [vmem:[%s2802 + $0x74] sm:$0xf]
    %v2821 = vld [vmem:[%s2802 + $0x78] sm:$0xff]
    %v2822 = vld [vmem:[%s2802 + $0x80] sm:$0xff]
    %v2823 = vld [vmem:[%s2802 + $0x88] sm:$0xf]
    %v2824 = vld [vmem:[%s2802 + $0x8c] sm:$0xff]
    %v2825 = vld [vmem:[%s2802 + $0x94] sm:$0xff]
    %v2826 = vld [vmem:[%s2802 + $0x9c] sm:$0xf]
    %v2827 = vld [vmem:[%s2802 + $0xa0] sm:$0xff]
    %v2828 = vld [vmem:[%s2802 + $0xa8] sm:$0xff]
    %v2829 = vld [vmem:[%s2802 + $0xb0] sm:$0xf]
    %v2830 = vld [vmem:[%s2802 + $0xb4] sm:$0xff]
    %v2831 = vld [vmem:[%s2802 + $0xbc] sm:$0xff]
    %v2832 = vld [vmem:[%s2802 + $0xc4] sm:$0xf]
    %v2833 = vld [vmem:[%s2802 + $0xc8] sm:$0xff]
    %v2834 = vld [vmem:[%s2802 + $0xd0] sm:$0xff]
    %v2835 = vld [vmem:[%s2802 + $0xd8] sm:$0xf]
    %v2836 = vld [vmem:[%s2802 + $0xdc] sm:$0xff]
    %v2837 = vld [vmem:[%s2802 + $0xe4] sm:$0xff]
    %v2838 = vld [vmem:[%s2802 + $0xec] sm:$0xf]
    %v2839 = vld [vmem:[%s2802 + $0xf0] sm:$0xff]
    %v2840 = vld [vmem:[%s2802 + $0xf8] sm:$0xff]
    %v2841 = vld [vmem:[%s2802 + $0x100] sm:$0xf]
    %v2842 = vld [vmem:[%s2802 + $0x104] sm:$0xff]
    %v2843 = vld [vmem:[%s2802 + $0x10c] sm:$0xff]
    %v2844 = vld [vmem:[%s2802 + $0x114] sm:$0xf]
    %v2845 = vld [vmem:[%s2802 + $0x118] sm:$0xff]
    %v2846 = vld [vmem:[%s2802 + $0x120] sm:$0xff]
    %v2847 = vld [vmem:[%s2802 + $0x128] sm:$0xf]
    %v2848 = vld [vmem:[%s2802 + $0x12c] sm:$0xff]
    %v2849 = vld [vmem:[%s2802 + $0x134] sm:$0xff]
    %v2850 = vld [vmem:[%s2802 + $0x13c] sm:$0xf]
    %v2851 = vld [vmem:[%s2802 + $0x140] sm:$0xff]
    %v2852 = vld [vmem:[%s2802 + $0x148] sm:$0xff]
    %v2853 = vld [vmem:[%s2802 + $0x150] sm:$0xf]
    %v2854 = vld [vmem:[%s2802 + $0x154] sm:$0xff]
    %v2855 = vld [vmem:[%s2802 + $0x15c] sm:$0xff]
    %v2856 = vld [vmem:[%s2802 + $0x164] sm:$0xf]
    %v2857 = vld [vmem:[%s2802 + $0x168] sm:$0xff]
    %v2858 = vld [vmem:[%s2802 + $0x170] sm:$0xff]
    %v2859 = vld [vmem:[%s2802 + $0x178] sm:$0xf]
    %v2860 = vld [vmem:[%s2802 + $0x17c] sm:$0xff]
    %v2861 = vld [vmem:[%s2802 + $0x184] sm:$0xff]
    %v2862 = vld [vmem:[%s2802 + $0x18c] sm:$0xf]
    %v2863 = vld [vmem:[%s2802 + $0x190] sm:$0xff]
    %v2864 = vld [vmem:[%s2802 + $0x198] sm:$0xff]
    %v2865 = vld [vmem:[%s2802 + $0x1a0] sm:$0xf]
    %v2866 = vld [vmem:[%s2802 + $0x1a4] sm:$0xff]
    %v2867 = vld [vmem:[%s2802 + $0x1ac] sm:$0xff]
    %v2868 = vld [vmem:[%s2802 + $0x1b4] sm:$0xf]
    %v2869 = vld [vmem:[%s2802 + $0x1b8] sm:$0xff]
    %v2870 = vld [vmem:[%s2802 + $0x1c0] sm:$0xff]
    %v2871 = vld [vmem:[%s2802 + $0x1c8] sm:$0xf]
    %v2872 = vld [vmem:[%s2802 + $0x1cc] sm:$0xff]
    %v2873 = vld [vmem:[%s2802 + $0x1d4] sm:$0xff]
    %v2874 = vld [vmem:[%s2802 + $0x1dc] sm:$0xf]
    %v2875 = vld [vmem:[%s2802 + $0x1e0] sm:$0xff]
    %v2876 = vld [vmem:[%s2802 + $0x1e8] sm:$0xff]
    %v2877 = vld [vmem:[%s2802 + $0x1f0] sm:$0xf]
    %v2878 = vld [vmem:[%s2802 + $0x1f4] sm:$0xff]
    %v2879 = vld [vmem:[%s2802 + $0x1fc] sm:$0xff]
    %v2880 = vld [vmem:[%s2802 + $0x204] sm:$0xf]
    %v2881 = vld [vmem:[%s2802 + $0x208] sm:$0xff]
    %v2882 = vld [vmem:[%s2802 + $0x210] sm:$0xff]
    %v2883 = vld [vmem:[%s2802 + $0x218] sm:$0xf]
    %v2884 = vld [vmem:[%s2802 + $0x21c] sm:$0xff]
    %v2885 = vld [vmem:[%s2802 + $0x224] sm:$0xff]
    %v2886 = vld [vmem:[%s2802 + $0x22c] sm:$0xf]
    %v2887 = vld [vmem:[%s2802 + $0x230] sm:$0xff]
    %v2888 = vld [vmem:[%s2802 + $0x238] sm:$0xff]
    %v2889 = vld [vmem:[%s2802 + $0x240] sm:$0xf]
    %v2890 = vld [vmem:[%s2802 + $0x244] sm:$0xff]
    %v2891 = vld [vmem:[%s2802 + $0x24c] sm:$0xff]
    %v2892 = vld [vmem:[%s2802 + $0x254] sm:$0xf]
    %v2893 = vld [vmem:[%s2802 + $0x258] sm:$0xff]
    %v2894 = vld [vmem:[%s2802 + $0x260] sm:$0xff]
    %v2895 = vld [vmem:[%s2802 + $0x268] sm:$0xf]
    %v2896 = vld [vmem:[%s2802 + $0x26c] sm:$0xff]
    %v2897 = vld [vmem:[%s2802 + $0x274] sm:$0xff]
    %v2898 = vld [vmem:[%s2802 + $0x27c] sm:$0xf]
    %v2899 = vld [vmem:[%s2802 + $0x280] sm:$0xff]
    %v2900 = vld [vmem:[%s2802 + $0x288] sm:$0xff]
    %v2901 = vld [vmem:[%s2802 + $0x290] sm:$0xf]
    %v2902 = vld [vmem:[%s2802 + $0x294] sm:$0xff]
    %v2903 = vld [vmem:[%s2802 + $0x29c] sm:$0xff]
    %v2904 = vld [vmem:[%s2802 + $0x2a4] sm:$0xf]
    %v2905 = vld [vmem:[%s2802 + $0x2a8] sm:$0xff]
    %v2906 = vld [vmem:[%s2802 + $0x2b0] sm:$0xff]
    %v2907 = vld [vmem:[%s2802 + $0x2b8] sm:$0xf]
    %v2908 = vld [vmem:[%s2802 + $0x2bc] sm:$0xff]
    %v2909 = vld [vmem:[%s2802 + $0x2c4] sm:$0xff]
    %v2910 = vld [vmem:[%s2802 + $0x2cc] sm:$0xf]
    %v2911 = vld [vmem:[%s2802 + $0x2d0] sm:$0xff]
    %v2912 = vld [vmem:[%s2802 + $0x2d8] sm:$0xff]
    %v2913 = vld [vmem:[%s2802 + $0x2e0] sm:$0xf]
    %v2914 = vld [vmem:[%s2802 + $0x2e4] sm:$0xff]
    %v2915 = vld [vmem:[%s2802 + $0x2ec] sm:$0xff]
    %v2916 = vld [vmem:[%s2802 + $0x2f4] sm:$0xf]
    %v2917 = vld [vmem:[%s2802 + $0x2f8] sm:$0xff]
    %v2918 = vld [vmem:[%s2802 + $0x300] sm:$0xff]
    %v2919 = vld [vmem:[%s2802 + $0x308] sm:$0xf]
    %v2920 = vld [vmem:[%s2802 + $0x30c] sm:$0xff]
    %v2921 = vld [vmem:[%s2802 + $0x314] sm:$0xff]
    %v2922 = vld [vmem:[%s2802 + $0x31c] sm:$0xf]
    %v2923 = vld [vmem:[%s2802 + $0x320] sm:$0xff]
    %v2924 = vld [vmem:[%s2802 + $0x328] sm:$0xff]
    %v2925 = vld [vmem:[%s2802 + $0x330] sm:$0xf]
    %v2926 = vld [vmem:[%s2802 + $0x334] sm:$0xff]
    %v2927 = vld [vmem:[%s2802 + $0x33c] sm:$0xff]
    %v2928 = vld [vmem:[%s2802 + $0x344] sm:$0xf]
    %v2929 = vld [vmem:[%s2802 + $0x348] sm:$0xff]
    %v2930 = vld [vmem:[%s2802 + $0x350] sm:$0xff]
    %v2931 = vld [vmem:[%s2802 + $0x358] sm:$0xf]
    %v2932 = vld [vmem:[%s2802 + $0x35c] sm:$0xff]
    %v2933 = vld [vmem:[%s2802 + $0x364] sm:$0xff]
    %v2934 = vld [vmem:[%s2802 + $0x36c] sm:$0xf]
    %v2935 = vld [vmem:[%s2802 + $0x370] sm:$0xff]
    %v2936 = vld [vmem:[%s2802 + $0x378] sm:$0xff]
    %v2937 = vld [vmem:[%s2802 + $0x380] sm:$0xf]
    %v2938 = vld [vmem:[%s2802 + $0x384] sm:$0xff]
    %v2939 = vld [vmem:[%s2802 + $0x38c] sm:$0xff]
    %v2940 = vld [vmem:[%s2802 + $0x394] sm:$0xf]
    %v2941 = vld [vmem:[%s2802 + $0x398] sm:$0xff]
    %v2942 = vld [vmem:[%s2802 + $0x3a0] sm:$0xff]
    %v2943 = vld [vmem:[%s2802 + $0x3a8] sm:$0xf]
    %v2944 = vld [vmem:[%s2802 + $0x3ac] sm:$0xff]
    %v2945 = vld [vmem:[%s2802 + $0x3b4] sm:$0xff]
    %v2946 = vld [vmem:[%s2802 + $0x3bc] sm:$0xf]
    %v2947 = vld [vmem:[%s2802 + $0x3c0] sm:$0xff]
    %v2948 = vld [vmem:[%s2802 + $0x3c8] sm:$0xff]
    %v2949 = vld [vmem:[%s2802 + $0x3d0] sm:$0xf]
    %v2950 = vld [vmem:[%s2802 + $0x3d4] sm:$0xff]
    %v2951 = vld [vmem:[%s2802 + $0x3dc] sm:$0xff]
    %v2952 = vld [vmem:[%s2802 + $0x3e4] sm:$0xf]
    %v2953 = vld [vmem:[%s2802 + $0x3e8] sm:$0xff]
    %v2954 = vld [vmem:[%s2802 + $0x3f0] sm:$0xff]
    %v2955 = vld [vmem:[%s2802 + $0x3f8] sm:$0xf]
    %v2956 = vld [vmem:[%s2802 + $0x3fc] sm:$0xff]
    %v2957 = vld [vmem:[%s2802 + $0x404] sm:$0xff]
    %v2958 = vld [vmem:[%s2802 + $0x40c] sm:$0xf]
    %v2959 = vld [vmem:[%s2802 + $0x410] sm:$0xff]
    %v2960 = vld [vmem:[%s2802 + $0x418] sm:$0xff]
    %v2961 = vld [vmem:[%s2802 + $0x420] sm:$0xf]
    %v2962 = vld [vmem:[%s2802 + $0x424] sm:$0xff]
    %v2963 = vld [vmem:[%s2802 + $0x42c] sm:$0xff]
    %v2964 = vld [vmem:[%s2802 + $0x434] sm:$0xf]
    %v2965 = vld [vmem:[%s2802 + $0x438] sm:$0xff]
    %v2966 = vld [vmem:[%s2802 + $0x440] sm:$0xff]
    %v2967 = vld [vmem:[%s2802 + $0x448] sm:$0xf]
    %v2968 = vld [vmem:[%s2802 + $0x44c] sm:$0xff]
    %v2969 = vld [vmem:[%s2802 + $0x454] sm:$0xff]
    %v2970 = vld [vmem:[%s2802 + $0x45c] sm:$0xf]
    %v2971 = vld [vmem:[%s2802 + $0x460] sm:$0xff]
    %v2972 = vld [vmem:[%s2802 + $0x468] sm:$0xff]
    %v2973 = vld [vmem:[%s2802 + $0x470] sm:$0xf]
    %v2974 = vld [vmem:[%s2802 + $0x474] sm:$0xff]
    %v2975 = vld [vmem:[%s2802 + $0x47c] sm:$0xff]
    %v2976 = vld [vmem:[%s2802 + $0x484] sm:$0xf]
    %v2977 = vld [vmem:[%s2802 + $0x488] sm:$0xff]
    %v2978 = vld [vmem:[%s2802 + $0x490] sm:$0xff]
    %v2979 = vld [vmem:[%s2802 + $0x498] sm:$0xf]
    %v2980 = vld [vmem:[%s2802 + $0x49c] sm:$0xff]
    %v2981 = vld [vmem:[%s2802 + $0x4a4] sm:$0xff]
    %v2982 = vld [vmem:[%s2802 + $0x4ac] sm:$0xf]
    %v2983 = vld [vmem:[%s2802 + $0x4b0] sm:$0xff]
    %v2984 = vld [vmem:[%s2802 + $0x4b8] sm:$0xff]
    %v2985 = vld [vmem:[%s2802 + $0x4c0] sm:$0xf]
    %v2986 = vld [vmem:[%s2802 + $0x4c4] sm:$0xff]
    %v2987 = vld [vmem:[%s2802 + $0x4cc] sm:$0xff]
    %v2988 = vld [vmem:[%s2802 + $0x4d4] sm:$0xf]
    %v2989 = vld [vmem:[%s2802 + $0x4d8] sm:$0xff]
    %v2990 = vld [vmem:[%s2802 + $0x4e0] sm:$0xff]
    %v2991 = vld [vmem:[%s2802 + $0x4e8] sm:$0xf]
    %v2992 = vld [vmem:[%s2802 + $0x4ec] sm:$0xff]
    %v2993 = vld [vmem:[%s2802 + $0x4f4] sm:$0xff]
    %v2994 = vld [vmem:[%s2802 + $0x4fc] sm:$0xf]
    %v2995 = vld [vmem:[%s2802 + $0x500] sm:$0xff]
    %v2996 = vld [vmem:[%s2802 + $0x508] sm:$0xff]
    %v2997 = vld [vmem:[%s2802 + $0x510] sm:$0xf]
    %v2998 = vld [vmem:[%s2802 + $0x514] sm:$0xff]
    %v2999 = vld [vmem:[%s2802 + $0x51c] sm:$0xff]
    %v3000 = vld [vmem:[%s2802 + $0x524] sm:$0xf]
    %v3001 = vld [vmem:[%s2802 + $0x528] sm:$0xff]
    %v3002 = vld [vmem:[%s2802 + $0x530] sm:$0xff]
    %v3003 = vld [vmem:[%s2802 + $0x538] sm:$0xf]
    %v3004 = vld [vmem:[%s2802 + $0x53c] sm:$0xff]
    %v3005 = vld [vmem:[%s2802 + $0x544] sm:$0xff]
    %v3006 = vld [vmem:[%s2802 + $0x54c] sm:$0xf]
    %v3007 = vld [vmem:[%s2802 + $0x550] sm:$0xff]
    %v3008 = vld [vmem:[%s2802 + $0x558] sm:$0xff]
    %v3009 = vld [vmem:[%s2802 + $0x560] sm:$0xf]
    %v3010 = vld [vmem:[%s2802 + $0x564] sm:$0xff]
    %v3011 = vld [vmem:[%s2802 + $0x56c] sm:$0xff]
    %v3012 = vld [vmem:[%s2802 + $0x574] sm:$0xf]
    %v3013 = vld [vmem:[%s2802 + $0x578] sm:$0xff]
    %v3014 = vld [vmem:[%s2802 + $0x580] sm:$0xff]
    %v3015 = vld [vmem:[%s2802 + $0x588] sm:$0xf]
    %v3016 = vld [vmem:[%s2802 + $0x58c] sm:$0xff]
    %v3017 = vld [vmem:[%s2802 + $0x594] sm:$0xff]
    %v3018 = vld [vmem:[%s2802 + $0x59c] sm:$0xf]
    %v3019 = vld [vmem:[%s2802 + $0x5a0] sm:$0xff]
    %v3020 = vld [vmem:[%s2802 + $0x5a8] sm:$0xff]
    %v3021 = vld [vmem:[%s2802 + $0x5b0] sm:$0xf]
    %v3022 = vld [vmem:[%s2802 + $0x5b4] sm:$0xff]
    %v3023 = vld [vmem:[%s2802 + $0x5bc] sm:$0xff]
    %v3024 = vld [vmem:[%s2802 + $0x5c4] sm:$0xf]
    %v3025 = vld [vmem:[%s2802 + $0x5c8] sm:$0xff]
    %v3026 = vld [vmem:[%s2802 + $0x5d0] sm:$0xff]
    %v3027 = vld [vmem:[%s2802 + $0x5d8] sm:$0xf]
    %v3028 = vld [vmem:[%s2802 + $0x5dc] sm:$0xff]
    %v3029 = vld [vmem:[%s2802 + $0x5e4] sm:$0xff]
    %v3030 = vld [vmem:[%s2802 + $0x5ec] sm:$0xf]
    %v3031 = vld [vmem:[%s2802 + $0x5f0] sm:$0xff]
    %v3032 = vld [vmem:[%s2802 + $0x5f8] sm:$0xff]
    %v3033 = vld [vmem:[%s2802 + $0x600] sm:$0xf]
    %v3034 = vld [vmem:[%s2802 + $0x604] sm:$0xff]
    %v3035 = vld [vmem:[%s2802 + $0x60c] sm:$0xff]
    %v3036 = vld [vmem:[%s2802 + $0x614] sm:$0xf]
    %v3037 = vld [vmem:[%s2802 + $0x618] sm:$0xff]
    %v3038 = vld [vmem:[%s2802 + $0x620] sm:$0xff]
    %v3039 = vld [vmem:[%s2802 + $0x628] sm:$0xf]
    %v3040 = vld [vmem:[%s2802 + $0x62c] sm:$0xff]
    %v3041 = vld [vmem:[%s2802 + $0x634] sm:$0xff]
    %v3042 = vld [vmem:[%s2802 + $0x63c] sm:$0xf]
    %v3283 = vunpack.c.l.b16 %v2803
    %v3284 = vunpack.c.h.b16 %v2803
    %v3285 = vunpack.c.l.b16 %v2804
    %v3286 = vunpack.c.h.b16 %v2804
    %v3287 = vunpack.c.l.b16 %v2805
    %v3288 = vunpack.c.l.b16 %v2806
    %v3289 = vunpack.c.h.b16 %v2806
    %v3290 = vunpack.c.l.b16 %v2807
    %v3291 = vunpack.c.h.b16 %v2807
    %v3292 = vunpack.c.l.b16 %v2808
    %v3293 = vunpack.c.l.b16 %v2809
    %v3294 = vunpack.c.h.b16 %v2809
    %v3295 = vunpack.c.l.b16 %v2810
    %v3296 = vunpack.c.h.b16 %v2810
    %v3297 = vunpack.c.l.b16 %v2811
    %v3298 = vunpack.c.l.b16 %v2812
    %v3299 = vunpack.c.h.b16 %v2812
    %v3300 = vunpack.c.l.b16 %v2813
    %v3301 = vunpack.c.h.b16 %v2813
    %v3302 = vunpack.c.l.b16 %v2814
    %v3303 = vunpack.c.l.b16 %v2815
    %v3304 = vunpack.c.h.b16 %v2815
    %v3305 = vunpack.c.l.b16 %v2816
    %v3306 = vunpack.c.h.b16 %v2816
    %v3307 = vunpack.c.l.b16 %v2817
    %v3308 = vunpack.c.l.b16 %v2818
    %v3309 = vunpack.c.h.b16 %v2818
    %v3310 = vunpack.c.l.b16 %v2819
    %v3311 = vunpack.c.h.b16 %v2819
    %v3312 = vunpack.c.l.b16 %v2820
    %v3313 = vunpack.c.l.b16 %v2821
    %v3314 = vunpack.c.h.b16 %v2821
    %v3315 = vunpack.c.l.b16 %v2822
    %v3316 = vunpack.c.h.b16 %v2822
    %v3317 = vunpack.c.l.b16 %v2823
    %v3318 = vunpack.c.l.b16 %v2824
    %v3319 = vunpack.c.h.b16 %v2824
    %v3320 = vunpack.c.l.b16 %v2825
    %v3321 = vunpack.c.h.b16 %v2825
    %v3322 = vunpack.c.l.b16 %v2826
    %v3323 = vunpack.c.l.b16 %v2827
    %v3324 = vunpack.c.h.b16 %v2827
    %v3325 = vunpack.c.l.b16 %v2828
    %v3326 = vunpack.c.h.b16 %v2828
    %v3327 = vunpack.c.l.b16 %v2829
    %v3328 = vunpack.c.l.b16 %v2830
    %v3329 = vunpack.c.h.b16 %v2830
    %v3330 = vunpack.c.l.b16 %v2831
    %v3331 = vunpack.c.h.b16 %v2831
    %v3332 = vunpack.c.l.b16 %v2832
    %v3333 = vunpack.c.l.b16 %v2833
    %v3334 = vunpack.c.h.b16 %v2833
    %v3335 = vunpack.c.l.b16 %v2834
    %v3336 = vunpack.c.h.b16 %v2834
    %v3337 = vunpack.c.l.b16 %v2835
    %v3338 = vunpack.c.l.b16 %v2836
    %v3339 = vunpack.c.h.b16 %v2836
    %v3340 = vunpack.c.l.b16 %v2837
    %v3341 = vunpack.c.h.b16 %v2837
    %v3342 = vunpack.c.l.b16 %v2838
    %v3343 = vunpack.c.l.b16 %v2839
    %v3344 = vunpack.c.h.b16 %v2839
    %v3345 = vunpack.c.l.b16 %v2840
    %v3346 = vunpack.c.h.b16 %v2840
    %v3347 = vunpack.c.l.b16 %v2841
    %v3348 = vunpack.c.l.b16 %v2842
    %v3349 = vunpack.c.h.b16 %v2842
    %v3350 = vunpack.c.l.b16 %v2843
    %v3351 = vunpack.c.h.b16 %v2843
    %v3352 = vunpack.c.l.b16 %v2844
    %v3353 = vunpack.c.l.b16 %v2845
    %v3354 = vunpack.c.h.b16 %v2845
    %v3355 = vunpack.c.l.b16 %v2846
    %v3356 = vunpack.c.h.b16 %v2846
    %v3357 = vunpack.c.l.b16 %v2847
    %v3358 = vunpack.c.l.b16 %v2848
    %v3359 = vunpack.c.h.b16 %v2848
    %v3360 = vunpack.c.l.b16 %v2849
    %v3361 = vunpack.c.h.b16 %v2849
    %v3362 = vunpack.c.l.b16 %v2850
    %v3363 = vunpack.c.l.b16 %v2851
    %v3364 = vunpack.c.h.b16 %v2851
    %v3365 = vunpack.c.l.b16 %v2852
    %v3366 = vunpack.c.h.b16 %v2852
    %v3367 = vunpack.c.l.b16 %v2853
    %v3368 = vunpack.c.l.b16 %v2854
    %v3369 = vunpack.c.h.b16 %v2854
    %v3370 = vunpack.c.l.b16 %v2855
    %v3371 = vunpack.c.h.b16 %v2855
    %v3372 = vunpack.c.l.b16 %v2856
    %v3373 = vunpack.c.l.b16 %v2857
    %v3374 = vunpack.c.h.b16 %v2857
    %v3375 = vunpack.c.l.b16 %v2858
    %v3376 = vunpack.c.h.b16 %v2858
    %v3377 = vunpack.c.l.b16 %v2859
    %v3378 = vunpack.c.l.b16 %v2860
    %v3379 = vunpack.c.h.b16 %v2860
    %v3380 = vunpack.c.l.b16 %v2861
    %v3381 = vunpack.c.h.b16 %v2861
    %v3382 = vunpack.c.l.b16 %v2862
    %v3383 = vunpack.c.l.b16 %v2863
    %v3384 = vunpack.c.h.b16 %v2863
    %v3385 = vunpack.c.l.b16 %v2864
    %v3386 = vunpack.c.h.b16 %v2864
    %v3387 = vunpack.c.l.b16 %v2865
    %v3388 = vunpack.c.l.b16 %v2866
    %v3389 = vunpack.c.h.b16 %v2866
    %v3390 = vunpack.c.l.b16 %v2867
    %v3391 = vunpack.c.h.b16 %v2867
    %v3392 = vunpack.c.l.b16 %v2868
    %v3393 = vunpack.c.l.b16 %v2869
    %v3394 = vunpack.c.h.b16 %v2869
    %v3395 = vunpack.c.l.b16 %v2870
    %v3396 = vunpack.c.h.b16 %v2870
    %v3397 = vunpack.c.l.b16 %v2871
    %v3398 = vunpack.c.l.b16 %v2872
    %v3399 = vunpack.c.h.b16 %v2872
    %v3400 = vunpack.c.l.b16 %v2873
    %v3401 = vunpack.c.h.b16 %v2873
    %v3402 = vunpack.c.l.b16 %v2874
    %v3403 = vunpack.c.l.b16 %v2875
    %v3404 = vunpack.c.h.b16 %v2875
    %v3405 = vunpack.c.l.b16 %v2876
    %v3406 = vunpack.c.h.b16 %v2876
    %v3407 = vunpack.c.l.b16 %v2877
    %v3408 = vunpack.c.l.b16 %v2878
    %v3409 = vunpack.c.h.b16 %v2878
    %v3410 = vunpack.c.l.b16 %v2879
    %v3411 = vunpack.c.h.b16 %v2879
    %v3412 = vunpack.c.l.b16 %v2880
    %v3413 = vunpack.c.l.b16 %v2881
    %v3414 = vunpack.c.h.b16 %v2881
    %v3415 = vunpack.c.l.b16 %v2882
    %v3416 = vunpack.c.h.b16 %v2882
    %v3417 = vunpack.c.l.b16 %v2883
    %v3418 = vunpack.c.l.b16 %v2884
    %v3419 = vunpack.c.h.b16 %v2884
    %v3420 = vunpack.c.l.b16 %v2885
    %v3421 = vunpack.c.h.b16 %v2885
    %v3422 = vunpack.c.l.b16 %v2886
    %v3423 = vunpack.c.l.b16 %v2887
    %v3424 = vunpack.c.h.b16 %v2887
    %v3425 = vunpack.c.l.b16 %v2888
    %v3426 = vunpack.c.h.b16 %v2888
    %v3427 = vunpack.c.l.b16 %v2889
    %v3428 = vunpack.c.l.b16 %v2890
    %v3429 = vunpack.c.h.b16 %v2890
    %v3430 = vunpack.c.l.b16 %v2891
    %v3431 = vunpack.c.h.b16 %v2891
    %v3432 = vunpack.c.l.b16 %v2892
    %v3433 = vunpack.c.l.b16 %v2893
    %v3434 = vunpack.c.h.b16 %v2893
    %v3435 = vunpack.c.l.b16 %v2894
    %v3436 = vunpack.c.h.b16 %v2894
    %v3437 = vunpack.c.l.b16 %v2895
    %v3438 = vunpack.c.l.b16 %v2896
    %v3439 = vunpack.c.h.b16 %v2896
    %v3440 = vunpack.c.l.b16 %v2897
    %v3441 = vunpack.c.h.b16 %v2897
    %v3442 = vunpack.c.l.b16 %v2898
    %v3443 = vunpack.c.l.b16 %v2899
    %v3444 = vunpack.c.h.b16 %v2899
    %v3445 = vunpack.c.l.b16 %v2900
    %v3446 = vunpack.c.h.b16 %v2900
    %v3447 = vunpack.c.l.b16 %v2901
    %v3448 = vunpack.c.l.b16 %v2902
    %v3449 = vunpack.c.h.b16 %v2902
    %v3450 = vunpack.c.l.b16 %v2903
    %v3451 = vunpack.c.h.b16 %v2903
    %v3452 = vunpack.c.l.b16 %v2904
    %v3453 = vunpack.c.l.b16 %v2905
    %v3454 = vunpack.c.h.b16 %v2905
    %v3455 = vunpack.c.l.b16 %v2906
    %v3456 = vunpack.c.h.b16 %v2906
    %v3457 = vunpack.c.l.b16 %v2907
    %v3458 = vunpack.c.l.b16 %v2908
    %v3459 = vunpack.c.h.b16 %v2908
    %v3460 = vunpack.c.l.b16 %v2909
    %v3461 = vunpack.c.h.b16 %v2909
    %v3462 = vunpack.c.l.b16 %v2910
    %v3463 = vunpack.c.l.b16 %v2911
    %v3464 = vunpack.c.h.b16 %v2911
    %v3465 = vunpack.c.l.b16 %v2912
    %v3466 = vunpack.c.h.b16 %v2912
    %v3467 = vunpack.c.l.b16 %v2913
    %v3468 = vunpack.c.l.b16 %v2914
    %v3469 = vunpack.c.h.b16 %v2914
    %v3470 = vunpack.c.l.b16 %v2915
    %v3471 = vunpack.c.h.b16 %v2915
    %v3472 = vunpack.c.l.b16 %v2916
    %v3473 = vunpack.c.l.b16 %v2917
    %v3474 = vunpack.c.h.b16 %v2917
    %v3475 = vunpack.c.l.b16 %v2918
    %v3476 = vunpack.c.h.b16 %v2918
    %v3477 = vunpack.c.l.b16 %v2919
    %v3478 = vunpack.c.l.b16 %v2920
    %v3479 = vunpack.c.h.b16 %v2920
    %v3480 = vunpack.c.l.b16 %v2921
    %v3481 = vunpack.c.h.b16 %v2921
    %v3482 = vunpack.c.l.b16 %v2922
    %v3483 = vunpack.c.l.b16 %v2923
    %v3484 = vunpack.c.h.b16 %v2923
    %v3485 = vunpack.c.l.b16 %v2924
    %v3486 = vunpack.c.h.b16 %v2924
    %v3487 = vunpack.c.l.b16 %v2925
    %v3488 = vunpack.c.l.b16 %v2926
    %v3489 = vunpack.c.h.b16 %v2926
    %v3490 = vunpack.c.l.b16 %v2927
    %v3491 = vunpack.c.h.b16 %v2927
    %v3492 = vunpack.c.l.b16 %v2928
    %v3493 = vunpack.c.l.b16 %v2929
    %v3494 = vunpack.c.h.b16 %v2929
    %v3495 = vunpack.c.l.b16 %v2930
    %v3496 = vunpack.c.h.b16 %v2930
    %v3497 = vunpack.c.l.b16 %v2931
    %v3498 = vunpack.c.l.b16 %v2932
    %v3499 = vunpack.c.h.b16 %v2932
    %v3500 = vunpack.c.l.b16 %v2933
    %v3501 = vunpack.c.h.b16 %v2933
    %v3502 = vunpack.c.l.b16 %v2934
    %v3503 = vunpack.c.l.b16 %v2935
    %v3504 = vunpack.c.h.b16 %v2935
    %v3505 = vunpack.c.l.b16 %v2936
    %v3506 = vunpack.c.h.b16 %v2936
    %v3507 = vunpack.c.l.b16 %v2937
    %v3508 = vunpack.c.l.b16 %v2938
    %v3509 = vunpack.c.h.b16 %v2938
    %v3510 = vunpack.c.l.b16 %v2939
    %v3511 = vunpack.c.h.b16 %v2939
    %v3512 = vunpack.c.l.b16 %v2940
    %v3513 = vunpack.c.l.b16 %v2941
    %v3514 = vunpack.c.h.b16 %v2941
    %v3515 = vunpack.c.l.b16 %v2942
    %v3516 = vunpack.c.h.b16 %v2942
    %v3517 = vunpack.c.l.b16 %v2943
    %v3518 = vunpack.c.l.b16 %v2944
    %v3519 = vunpack.c.h.b16 %v2944
    %v3520 = vunpack.c.l.b16 %v2945
    %v3521 = vunpack.c.h.b16 %v2945
    %v3522 = vunpack.c.l.b16 %v2946
    %v3523 = vunpack.c.l.b16 %v2947
    %v3524 = vunpack.c.h.b16 %v2947
    %v3525 = vunpack.c.l.b16 %v2948
    %v3526 = vunpack.c.h.b16 %v2948
    %v3527 = vunpack.c.l.b16 %v2949
    %v3528 = vunpack.c.l.b16 %v2950
    %v3529 = vunpack.c.h.b16 %v2950
    %v3530 = vunpack.c.l.b16 %v2951
    %v3531 = vunpack.c.h.b16 %v2951
    %v3532 = vunpack.c.l.b16 %v2952
    %v3533 = vunpack.c.l.b16 %v2953
    %v3534 = vunpack.c.h.b16 %v2953
    %v3535 = vunpack.c.l.b16 %v2954
    %v3536 = vunpack.c.h.b16 %v2954
    %v3537 = vunpack.c.l.b16 %v2955
    %v3538 = vunpack.c.l.b16 %v2956
    %v3539 = vunpack.c.h.b16 %v2956
    %v3540 = vunpack.c.l.b16 %v2957
    %v3541 = vunpack.c.h.b16 %v2957
    %v3542 = vunpack.c.l.b16 %v2958
    %v3543 = vunpack.c.l.b16 %v2959
    %v3544 = vunpack.c.h.b16 %v2959
    %v3545 = vunpack.c.l.b16 %v2960
    %v3546 = vunpack.c.h.b16 %v2960
    %v3547 = vunpack.c.l.b16 %v2961
    %v3548 = vunpack.c.l.b16 %v2962
    %v3549 = vunpack.c.h.b16 %v2962
    %v3550 = vunpack.c.l.b16 %v2963
    %v3551 = vunpack.c.h.b16 %v2963
    %v3552 = vunpack.c.l.b16 %v2964
    %v3553 = vunpack.c.l.b16 %v2965
    %v3554 = vunpack.c.h.b16 %v2965
    %v3555 = vunpack.c.l.b16 %v2966
    %v3556 = vunpack.c.h.b16 %v2966
    %v3557 = vunpack.c.l.b16 %v2967
    %v3558 = vunpack.c.l.b16 %v2968
    %v3559 = vunpack.c.h.b16 %v2968
    %v3560 = vunpack.c.l.b16 %v2969
    %v3561 = vunpack.c.h.b16 %v2969
    %v3562 = vunpack.c.l.b16 %v2970
    %v3563 = vunpack.c.l.b16 %v2971
    %v3564 = vunpack.c.h.b16 %v2971
    %v3565 = vunpack.c.l.b16 %v2972
    %v3566 = vunpack.c.h.b16 %v2972
    %v3567 = vunpack.c.l.b16 %v2973
    %v3568 = vunpack.c.l.b16 %v2974
    %v3569 = vunpack.c.h.b16 %v2974
    %v3570 = vunpack.c.l.b16 %v2975
    %v3571 = vunpack.c.h.b16 %v2975
    %v3572 = vunpack.c.l.b16 %v2976
    %v3573 = vunpack.c.l.b16 %v2977
    %v3574 = vunpack.c.h.b16 %v2977
    %v3575 = vunpack.c.l.b16 %v2978
    %v3576 = vunpack.c.h.b16 %v2978
    %v3577 = vunpack.c.l.b16 %v2979
    %v3578 = vunpack.c.l.b16 %v2980
    %v3579 = vunpack.c.h.b16 %v2980
    %v3580 = vunpack.c.l.b16 %v2981
    %v3581 = vunpack.c.h.b16 %v2981
    %v3582 = vunpack.c.l.b16 %v2982
    %v3583 = vunpack.c.l.b16 %v2983
    %v3584 = vunpack.c.h.b16 %v2983
    %v3585 = vunpack.c.l.b16 %v2984
    %v3586 = vunpack.c.h.b16 %v2984
    %v3587 = vunpack.c.l.b16 %v2985
    %v3588 = vunpack.c.l.b16 %v2986
    %v3589 = vunpack.c.h.b16 %v2986
    %v3590 = vunpack.c.l.b16 %v2987
    %v3591 = vunpack.c.h.b16 %v2987
    %v3592 = vunpack.c.l.b16 %v2988
    %v3593 = vunpack.c.l.b16 %v2989
    %v3594 = vunpack.c.h.b16 %v2989
    %v3595 = vunpack.c.l.b16 %v2990
    %v3596 = vunpack.c.h.b16 %v2990
    %v3597 = vunpack.c.l.b16 %v2991
    %v3598 = vunpack.c.l.b16 %v2992
    %v3599 = vunpack.c.h.b16 %v2992
    %v3600 = vunpack.c.l.b16 %v2993
    %v3601 = vunpack.c.h.b16 %v2993
    %v3602 = vunpack.c.l.b16 %v2994
    %v3603 = vunpack.c.l.b16 %v2995
    %v3604 = vunpack.c.h.b16 %v2995
    %v3605 = vunpack.c.l.b16 %v2996
    %v3606 = vunpack.c.h.b16 %v2996
    %v3607 = vunpack.c.l.b16 %v2997
    %v3608 = vunpack.c.l.b16 %v2998
    %v3609 = vunpack.c.h.b16 %v2998
    %v3610 = vunpack.c.l.b16 %v2999
    %v3611 = vunpack.c.h.b16 %v2999
    %v3612 = vunpack.c.l.b16 %v3000
    %v3613 = vunpack.c.l.b16 %v3001
    %v3614 = vunpack.c.h.b16 %v3001
    %v3615 = vunpack.c.l.b16 %v3002
    %v3616 = vunpack.c.h.b16 %v3002
    %v3617 = vunpack.c.l.b16 %v3003
    %v3618 = vunpack.c.l.b16 %v3004
    %v3619 = vunpack.c.h.b16 %v3004
    %v3620 = vunpack.c.l.b16 %v3005
    %v3621 = vunpack.c.h.b16 %v3005
    %v3622 = vunpack.c.l.b16 %v3006
    %v3623 = vunpack.c.l.b16 %v3007
    %v3624 = vunpack.c.h.b16 %v3007
    %v3625 = vunpack.c.l.b16 %v3008
    %v3626 = vunpack.c.h.b16 %v3008
    %v3627 = vunpack.c.l.b16 %v3009
    %v3628 = vunpack.c.l.b16 %v3010
    %v3629 = vunpack.c.h.b16 %v3010
    %v3630 = vunpack.c.l.b16 %v3011
    %v3631 = vunpack.c.h.b16 %v3011
    %v3632 = vunpack.c.l.b16 %v3012
    %v3633 = vunpack.c.l.b16 %v3013
    %v3634 = vunpack.c.h.b16 %v3013
    %v3635 = vunpack.c.l.b16 %v3014
    %v3636 = vunpack.c.h.b16 %v3014
    %v3637 = vunpack.c.l.b16 %v3015
    %v3638 = vunpack.c.l.b16 %v3016
    %v3639 = vunpack.c.h.b16 %v3016
    %v3640 = vunpack.c.l.b16 %v3017
    %v3641 = vunpack.c.h.b16 %v3017
    %v3642 = vunpack.c.l.b16 %v3018
    %v3643 = vunpack.c.l.b16 %v3019
    %v3644 = vunpack.c.h.b16 %v3019
    %v3645 = vunpack.c.l.b16 %v3020
    %v3646 = vunpack.c.h.b16 %v3020
    %v3647 = vunpack.c.l.b16 %v3021
    %v3648 = vunpack.c.l.b16 %v3022
    %v3649 = vunpack.c.h.b16 %v3022
    %v3650 = vunpack.c.l.b16 %v3023
    %v3651 = vunpack.c.h.b16 %v3023
    %v3652 = vunpack.c.l.b16 %v3024
    %v3653 = vunpack.c.l.b16 %v3025
    %v3654 = vunpack.c.h.b16 %v3025
    %v3655 = vunpack.c.l.b16 %v3026
    %v3656 = vunpack.c.h.b16 %v3026
    %v3657 = vunpack.c.l.b16 %v3027
    %v3658 = vunpack.c.l.b16 %v3028
    %v3659 = vunpack.c.h.b16 %v3028
    %v3660 = vunpack.c.l.b16 %v3029
    %v3661 = vunpack.c.h.b16 %v3029
    %v3662 = vunpack.c.l.b16 %v3030
    %v3663 = vunpack.c.l.b16 %v3031
    %v3664 = vunpack.c.h.b16 %v3031
    %v3665 = vunpack.c.l.b16 %v3032
    %v3666 = vunpack.c.h.b16 %v3032
    %v3667 = vunpack.c.l.b16 %v3033
    %v3668 = vunpack.c.l.b16 %v3034
    %v3669 = vunpack.c.h.b16 %v3034
    %v3670 = vunpack.c.l.b16 %v3035
    %v3671 = vunpack.c.h.b16 %v3035
    %v3672 = vunpack.c.l.b16 %v3036
    %v3673 = vunpack.c.l.b16 %v3037
    %v3674 = vunpack.c.h.b16 %v3037
    %v3675 = vunpack.c.l.b16 %v3038
    %v3676 = vunpack.c.h.b16 %v3038
    %v3677 = vunpack.c.l.b16 %v3039
    %v3678 = vunpack.c.l.b16 %v3040
    %v3679 = vunpack.c.h.b16 %v3040
    %v3680 = vunpack.c.l.b16 %v3041
    %v3681 = vunpack.c.h.b16 %v3041
    %v3682 = vunpack.c.l.b16 %v3042
    %v3683 = vpack.c.b16 %v3288, %v3283
    %v3684 = vpack.c.b16 %v3289, %v3284
    %v3685 = vpack.c.b16 %v3290, %v3285
    %v3686 = vpack.c.b16 %v3291, %v3286
    %v3687 = vpack.c.b16 %v3292, %v3287
    %v3688 = vpack.c.b16 %v3298, %v3293
    %v3689 = vpack.c.b16 %v3299, %v3294
    %v3690 = vpack.c.b16 %v3300, %v3295
    %v3691 = vpack.c.b16 %v3301, %v3296
    %v3692 = vpack.c.b16 %v3302, %v3297
    %v3693 = vpack.c.b16 %v3308, %v3303
    %v3694 = vpack.c.b16 %v3309, %v3304
    %v3695 = vpack.c.b16 %v3310, %v3305
    %v3696 = vpack.c.b16 %v3311, %v3306
    %v3697 = vpack.c.b16 %v3312, %v3307
    %v3698 = vpack.c.b16 %v3318, %v3313
    %v3699 = vpack.c.b16 %v3319, %v3314
    %v3700 = vpack.c.b16 %v3320, %v3315
    %v3701 = vpack.c.b16 %v3321, %v3316
    %v3702 = vpack.c.b16 %v3322, %v3317
    %v3703 = vpack.c.b16 %v3328, %v3323
    %v3704 = vpack.c.b16 %v3329, %v3324
    %v3705 = vpack.c.b16 %v3330, %v3325
    %v3706 = vpack.c.b16 %v3331, %v3326
    %v3707 = vpack.c.b16 %v3332, %v3327
    %v3708 = vpack.c.b16 %v3338, %v3333
    %v3709 = vpack.c.b16 %v3339, %v3334
    %v3710 = vpack.c.b16 %v3340, %v3335
    %v3711 = vpack.c.b16 %v3341, %v3336
    %v3712 = vpack.c.b16 %v3342, %v3337
    %v3713 = vpack.c.b16 %v3348, %v3343
    %v3714 = vpack.c.b16 %v3349, %v3344
    %v3715 = vpack.c.b16 %v3350, %v3345
    %v3716 = vpack.c.b16 %v3351, %v3346
    %v3717 = vpack.c.b16 %v3352, %v3347
    %v3718 = vpack.c.b16 %v3358, %v3353
    %v3719 = vpack.c.b16 %v3359, %v3354
    %v3720 = vpack.c.b16 %v3360, %v3355
    %v3721 = vpack.c.b16 %v3361, %v3356
    %v3722 = vpack.c.b16 %v3362, %v3357
    %v3723 = vpack.c.b16 %v3368, %v3363
    %v3724 = vpack.c.b16 %v3369, %v3364
    %v3725 = vpack.c.b16 %v3370, %v3365
    %v3726 = vpack.c.b16 %v3371, %v3366
    %v3727 = vpack.c.b16 %v3372, %v3367
    %v3728 = vpack.c.b16 %v3378, %v3373
    %v3729 = vpack.c.b16 %v3379, %v3374
    %v3730 = vpack.c.b16 %v3380, %v3375
    %v3731 = vpack.c.b16 %v3381, %v3376
    %v3732 = vpack.c.b16 %v3382, %v3377
    %v3733 = vpack.c.b16 %v3388, %v3383
    %v3734 = vpack.c.b16 %v3389, %v3384
    %v3735 = vpack.c.b16 %v3390, %v3385
    %v3736 = vpack.c.b16 %v3391, %v3386
    %v3737 = vpack.c.b16 %v3392, %v3387
    %v3738 = vpack.c.b16 %v3398, %v3393
    %v3739 = vpack.c.b16 %v3399, %v3394
    %v3740 = vpack.c.b16 %v3400, %v3395
    %v3741 = vpack.c.b16 %v3401, %v3396
    %v3742 = vpack.c.b16 %v3402, %v3397
    %v3743 = vpack.c.b16 %v3408, %v3403
    %v3744 = vpack.c.b16 %v3409, %v3404
    %v3745 = vpack.c.b16 %v3410, %v3405
    %v3746 = vpack.c.b16 %v3411, %v3406
    %v3747 = vpack.c.b16 %v3412, %v3407
    %v3748 = vpack.c.b16 %v3418, %v3413
    %v3749 = vpack.c.b16 %v3419, %v3414
    %v3750 = vpack.c.b16 %v3420, %v3415
    %v3751 = vpack.c.b16 %v3421, %v3416
    %v3752 = vpack.c.b16 %v3422, %v3417
    %v3753 = vpack.c.b16 %v3428, %v3423
    %v3754 = vpack.c.b16 %v3429, %v3424
    %v3755 = vpack.c.b16 %v3430, %v3425
    %v3756 = vpack.c.b16 %v3431, %v3426
    %v3757 = vpack.c.b16 %v3432, %v3427
    %v3758 = vpack.c.b16 %v3438, %v3433
    %v3759 = vpack.c.b16 %v3439, %v3434
    %v3760 = vpack.c.b16 %v3440, %v3435
    %v3761 = vpack.c.b16 %v3441, %v3436
    %v3762 = vpack.c.b16 %v3442, %v3437
    %v3763 = vpack.c.b16 %v3448, %v3443
    %v3764 = vpack.c.b16 %v3449, %v3444
    %v3765 = vpack.c.b16 %v3450, %v3445
    %v3766 = vpack.c.b16 %v3451, %v3446
    %v3767 = vpack.c.b16 %v3452, %v3447
    %v3768 = vpack.c.b16 %v3458, %v3453
    %v3769 = vpack.c.b16 %v3459, %v3454
    %v3770 = vpack.c.b16 %v3460, %v3455
    %v3771 = vpack.c.b16 %v3461, %v3456
    %v3772 = vpack.c.b16 %v3462, %v3457
    %v3773 = vpack.c.b16 %v3468, %v3463
    %v3774 = vpack.c.b16 %v3469, %v3464
    %v3775 = vpack.c.b16 %v3470, %v3465
    %v3776 = vpack.c.b16 %v3471, %v3466
    %v3777 = vpack.c.b16 %v3472, %v3467
    %v3778 = vpack.c.b16 %v3478, %v3473
    %v3779 = vpack.c.b16 %v3479, %v3474
    %v3780 = vpack.c.b16 %v3480, %v3475
    %v3781 = vpack.c.b16 %v3481, %v3476
    %v3782 = vpack.c.b16 %v3482, %v3477
    %v3783 = vpack.c.b16 %v3488, %v3483
    %v3784 = vpack.c.b16 %v3489, %v3484
    %v3785 = vpack.c.b16 %v3490, %v3485
    %v3786 = vpack.c.b16 %v3491, %v3486
    %v3787 = vpack.c.b16 %v3492, %v3487
    %v3788 = vpack.c.b16 %v3498, %v3493
    %v3789 = vpack.c.b16 %v3499, %v3494
    %v3790 = vpack.c.b16 %v3500, %v3495
    %v3791 = vpack.c.b16 %v3501, %v3496
    %v3792 = vpack.c.b16 %v3502, %v3497
    %v3793 = vpack.c.b16 %v3508, %v3503
    %v3794 = vpack.c.b16 %v3509, %v3504
    %v3795 = vpack.c.b16 %v3510, %v3505
    %v3796 = vpack.c.b16 %v3511, %v3506
    %v3797 = vpack.c.b16 %v3512, %v3507
    %v3798 = vpack.c.b16 %v3518, %v3513
    %v3799 = vpack.c.b16 %v3519, %v3514
    %v3800 = vpack.c.b16 %v3520, %v3515
    %v3801 = vpack.c.b16 %v3521, %v3516
    %v3802 = vpack.c.b16 %v3522, %v3517
    %v3803 = vpack.c.b16 %v3528, %v3523
    %v3804 = vpack.c.b16 %v3529, %v3524
    %v3805 = vpack.c.b16 %v3530, %v3525
    %v3806 = vpack.c.b16 %v3531, %v3526
    %v3807 = vpack.c.b16 %v3532, %v3527
    %v3808 = vpack.c.b16 %v3538, %v3533
    %v3809 = vpack.c.b16 %v3539, %v3534
    %v3810 = vpack.c.b16 %v3540, %v3535
    %v3811 = vpack.c.b16 %v3541, %v3536
    %v3812 = vpack.c.b16 %v3542, %v3537
    %v3813 = vpack.c.b16 %v3548, %v3543
    %v3814 = vpack.c.b16 %v3549, %v3544
    %v3815 = vpack.c.b16 %v3550, %v3545
    %v3816 = vpack.c.b16 %v3551, %v3546
    %v3817 = vpack.c.b16 %v3552, %v3547
    %v3818 = vpack.c.b16 %v3558, %v3553
    %v3819 = vpack.c.b16 %v3559, %v3554
    %v3820 = vpack.c.b16 %v3560, %v3555
    %v3821 = vpack.c.b16 %v3561, %v3556
    %v3822 = vpack.c.b16 %v3562, %v3557
    %v3823 = vpack.c.b16 %v3568, %v3563
    %v3824 = vpack.c.b16 %v3569, %v3564
    %v3825 = vpack.c.b16 %v3570, %v3565
    %v3826 = vpack.c.b16 %v3571, %v3566
    %v3827 = vpack.c.b16 %v3572, %v3567
    %v3828 = vpack.c.b16 %v3578, %v3573
    %v3829 = vpack.c.b16 %v3579, %v3574
    %v3830 = vpack.c.b16 %v3580, %v3575
    %v3831 = vpack.c.b16 %v3581, %v3576
    %v3832 = vpack.c.b16 %v3582, %v3577
    %v3833 = vpack.c.b16 %v3588, %v3583
    %v3834 = vpack.c.b16 %v3589, %v3584
    %v3835 = vpack.c.b16 %v3590, %v3585
    %v3836 = vpack.c.b16 %v3591, %v3586
    %v3837 = vpack.c.b16 %v3592, %v3587
    %v3838 = vpack.c.b16 %v3598, %v3593
    %v3839 = vpack.c.b16 %v3599, %v3594
    %v3840 = vpack.c.b16 %v3600, %v3595
    %v3841 = vpack.c.b16 %v3601, %v3596
    %v3842 = vpack.c.b16 %v3602, %v3597
    %v3843 = vpack.c.b16 %v3608, %v3603
    %v3844 = vpack.c.b16 %v3609, %v3604
    %v3845 = vpack.c.b16 %v3610, %v3605
    %v3846 = vpack.c.b16 %v3611, %v3606
    %v3847 = vpack.c.b16 %v3612, %v3607
    %v3848 = vpack.c.b16 %v3618, %v3613
    %v3849 = vpack.c.b16 %v3619, %v3614
    %v3850 = vpack.c.b16 %v3620, %v3615
    %v3851 = vpack.c.b16 %v3621, %v3616
    %v3852 = vpack.c.b16 %v3622, %v3617
    %v3853 = vpack.c.b16 %v3628, %v3623
    %v3854 = vpack.c.b16 %v3629, %v3624
    %v3855 = vpack.c.b16 %v3630, %v3625
    %v3856 = vpack.c.b16 %v3631, %v3626
    %v3857 = vpack.c.b16 %v3632, %v3627
    %v3858 = vpack.c.b16 %v3638, %v3633
    %v3859 = vpack.c.b16 %v3639, %v3634
    %v3860 = vpack.c.b16 %v3640, %v3635
    %v3861 = vpack.c.b16 %v3641, %v3636
    %v3862 = vpack.c.b16 %v3642, %v3637
    %v3863 = vpack.c.b16 %v3648, %v3643
    %v3864 = vpack.c.b16 %v3649, %v3644
    %v3865 = vpack.c.b16 %v3650, %v3645
    %v3866 = vpack.c.b16 %v3651, %v3646
    %v3867 = vpack.c.b16 %v3652, %v3647
    %v3868 = vpack.c.b16 %v3658, %v3653
    %v3869 = vpack.c.b16 %v3659, %v3654
    %v3870 = vpack.c.b16 %v3660, %v3655
    %v3871 = vpack.c.b16 %v3661, %v3656
    %v3872 = vpack.c.b16 %v3662, %v3657
    %v3873 = vpack.c.b16 %v3668, %v3663
    %v3874 = vpack.c.b16 %v3669, %v3664
    %v3875 = vpack.c.b16 %v3670, %v3665
    %v3876 = vpack.c.b16 %v3671, %v3666
    %v3877 = vpack.c.b16 %v3672, %v3667
    %v3878 = vpack.c.b16 %v3678, %v3673
    %v3879 = vpack.c.b16 %v3679, %v3674
    %v3880 = vpack.c.b16 %v3680, %v3675
    %v3881 = vpack.c.b16 %v3681, %v3676
    %v3882 = vpack.c.b16 %v3682, %v3677
    %4083 = vmatprep.subr.bf16.mxu0 %v3719
    %4084 = vmatpush1.bf16.msra.mxu0 %v3718
    %4085 = vmatprep.subr.bf16.mxu0 %v3714
    %4086 = vmatpush1.bf16.msra.mxu0 %v3713
    %4087 = vmatprep.subr.bf16.mxu0 %v3709
    %4088 = vmatpush1.bf16.msra.mxu0 %v3708
    %4089 = vmatprep.subr.bf16.mxu0 %v3704
    %4090 = vmatpush1.bf16.msra.mxu0 %v3703
    %4091 = vmatprep.subr.bf16.mxu0 %v3699
    %4092 = vmatpush1.bf16.msra.mxu0 %v3698
    %4093 = vmatprep.subr.bf16.mxu0 %v3694
    %4094 = vmatpush1.bf16.msra.mxu0 %v3693
    %4095 = vmatprep.subr.bf16.mxu0 %v3689
    %4096 = vmatpush1.bf16.msra.mxu0 %v3688
    %4097 = vmatprep.subr.bf16.mxu0 %v3684
    %4098 = vmatpush1.bf16.msra.mxu0 %v3683
    %4099 = vmatprep.subr.bf16.mxu0 %v3759
    %4100 = vmatpush2.bf16.msra.mxu0 %v3758
    %4101 = vmatprep.subr.bf16.mxu0 %v3754
    %4102 = vmatpush2.bf16.msra.mxu0 %v3753
    %4103 = vmatprep.subr.bf16.mxu0 %v3749
    %4104 = vmatpush2.bf16.msra.mxu0 %v3748
    %4105 = vmatprep.subr.bf16.mxu0 %v3744
    %4106 = vmatpush2.bf16.msra.mxu0 %v3743
    %4107 = vmatprep.subr.bf16.mxu0 %v3739
    %4108 = vmatpush2.bf16.msra.mxu0 %v3738
    %4109 = vmatprep.subr.bf16.mxu0 %v3734
    %4110 = vmatpush2.bf16.msra.mxu0 %v3733
    %4111 = vmatprep.subr.bf16.mxu0 %v3729
    %4112 = vmatpush2.bf16.msra.mxu0 %v3728
    %4113 = vmatprep.subr.bf16.mxu0 %v3724
    %4114 = vmatpush2.bf16.msra.mxu0 %v3723
    %4115 = vmatprep.mubr.bf16.mxu0 %v2788
    %4116 = vmatmul.mubr.bf16.gmra.mxu0 %v2787
    %v4117 = vpop.f32.mrf.mxu0
    %v4118 = vadd.f32 0.0, %v4117
    %v4119 = vpop.f32.mrf.mxu0
    %v4120 = vadd.f32 0.0, %v4119
    %v4121 = vpop.f32.mrf.mxu0
    %v4122 = vadd.f32 0.0, %v4121
    %v4123 = vpop.f32.mrf.mxu0
    %v4124 = vadd.f32 0.0, %v4123
    %4125 = vmatprep.mubr.bf16.mxu0 %v2793
    %4126 = vmatmul.mubr.bf16.gmra.mxu0 %v2792
    %v4127 = vpop.f32.mrf.mxu0
    %v4128 = vadd.f32 0.0, %v4127
    %v4129 = vpop.f32.mrf.mxu0
    %v4130 = vadd.f32 0.0, %v4129
    %v4131 = vpop.f32.mrf.mxu0
    %v4132 = vadd.f32 0.0, %v4131
    %v4133 = vpop.f32.mrf.mxu0
    %v4134 = vadd.f32 0.0, %v4133
    %4135 = vmatprep.mubr.bf16.mxu0 %v2798
    %4136 = vmatmul.mubr.bf16.gmra.mxu0 %v2797
    %v4137 = vpop.f32.mrf.mxu0
    %v4138 = vadd.f32 0.0, %v4137
    %v4139 = vpop.f32.mrf.mxu0
    %v4140 = vadd.f32 0.0, %v4139
    %v4141 = vpop.f32.mrf.mxu0
    %v4142 = vpop.f32.mrf.mxu0
    %4143 = vdwg.mxu0
    %4144 = vmatprep.subr.bf16.mxu0 %v3799
    %4145 = vmatpush1.bf16.msra.mxu0 %v3798
    %4146 = vmatprep.subr.bf16.mxu0 %v3794
    %4147 = vmatpush1.bf16.msra.mxu0 %v3793
    %4148 = vmatprep.subr.bf16.mxu0 %v3789
    %4149 = vmatpush1.bf16.msra.mxu0 %v3788
    %4150 = vmatprep.subr.bf16.mxu0 %v3784
    %4151 = vmatpush1.bf16.msra.mxu0 %v3783
    %4152 = vmatprep.subr.bf16.mxu0 %v3779
    %4153 = vmatpush1.bf16.msra.mxu0 %v3778
    %4154 = vmatprep.subr.bf16.mxu0 %v3774
    %4155 = vmatpush1.bf16.msra.mxu0 %v3773
    %4156 = vmatprep.subr.bf16.mxu0 %v3769
    %4157 = vmatpush1.bf16.msra.mxu0 %v3768
    %4158 = vmatprep.subr.bf16.mxu0 %v3764
    %4159 = vmatpush1.bf16.msra.mxu0 %v3763
    %4160 = vmatprep.subr.bf16.mxu0 %v3839
    %4161 = vmatpush2.bf16.msra.mxu0 %v3838
    %4162 = vmatprep.subr.bf16.mxu0 %v3834
    %4163 = vmatpush2.bf16.msra.mxu0 %v3833
    %4164 = vmatprep.subr.bf16.mxu0 %v3829
    %4165 = vmatpush2.bf16.msra.mxu0 %v3828
    %4166 = vmatprep.subr.bf16.mxu0 %v3824
    %4167 = vmatpush2.bf16.msra.mxu0 %v3823
    %4168 = vmatprep.subr.bf16.mxu0 %v3819
    %4169 = vmatpush2.bf16.msra.mxu0 %v3818
    %4170 = vmatprep.subr.bf16.mxu0 %v3814
    %4171 = vmatpush2.bf16.msra.mxu0 %v3813
    %4172 = vmatprep.subr.bf16.mxu0 %v3809
    %4173 = vmatpush2.bf16.msra.mxu0 %v3808
    %4174 = vmatprep.subr.bf16.mxu0 %v3804
    %4175 = vmatpush2.bf16.msra.mxu0 %v3803
    %4176 = vmatprep.mubr.bf16.mxu0 %v2790
    %4177 = vmatmul.mubr.bf16.gmra.mxu0 %v2789
    %v4178 = vpop.f32.mrf.mxu0
    %v4179 = vadd.f32 %v4118, %v4178
    %v4180 = vpop.f32.mrf.mxu0
    %v4181 = vadd.f32 %v4120, %v4180
    %v4182 = vpop.f32.mrf.mxu0
    %v4183 = vadd.f32 %v4122, %v4182
    %v4184 = vpop.f32.mrf.mxu0
    %v4185 = vadd.f32 %v4124, %v4184
    %4186 = vmatprep.mubr.bf16.mxu0 %v2795
    %4187 = vmatmul.mubr.bf16.gmra.mxu0 %v2794
    %v4188 = vpop.f32.mrf.mxu0
    %v4189 = vadd.f32 %v4128, %v4188
    %v4190 = vpop.f32.mrf.mxu0
    %v4191 = vadd.f32 %v4130, %v4190
    %v4192 = vpop.f32.mrf.mxu0
    %v4193 = vadd.f32 %v4132, %v4192
    %v4194 = vpop.f32.mrf.mxu0
    %v4195 = vadd.f32 %v4134, %v4194
    %4196 = vmatprep.mubr.bf16.mxu0 %v2800
    %4197 = vmatmul.mubr.bf16.gmra.mxu0 %v2799
    %v4198 = vpop.f32.mrf.mxu0
    %v4199 = vadd.f32 %v4138, %v4198
    %v4200 = vpop.f32.mrf.mxu0
    %v4201 = vadd.f32 %v4140, %v4200
    %v4202 = vpop.f32.mrf.mxu0
    %v4203 = vpop.f32.mrf.mxu0
    %4204 = vdwg.mxu0
    %4205 = vmatprep.subr.bf16.mxu0 %v3879
    %4206 = vmatpush1.bf16.msra.mxu0 %v3878
    %4207 = vmatprep.subr.bf16.mxu0 %v3874
    %4208 = vmatpush1.bf16.msra.mxu0 %v3873
    %4209 = vmatprep.subr.bf16.mxu0 %v3869
    %4210 = vmatpush1.bf16.msra.mxu0 %v3868
    %4211 = vmatprep.subr.bf16.mxu0 %v3864
    %4212 = vmatpush1.bf16.msra.mxu0 %v3863
    %4213 = vmatprep.subr.bf16.mxu0 %v3859
    %4214 = vmatpush1.bf16.msra.mxu0 %v3858
    %4215 = vmatprep.subr.bf16.mxu0 %v3854
    %4216 = vmatpush1.bf16.msra.mxu0 %v3853
    %4217 = vmatprep.subr.bf16.mxu0 %v3849
    %4218 = vmatpush1.bf16.msra.mxu0 %v3848
    %4219 = vmatprep.subr.bf16.mxu0 %v3844
    %4220 = vmatpush1.bf16.msra.mxu0 %v3843
    %4221 = vmatprep.subr.bf16.mxu0 0
    %4222 = vmatpush2.bf16.msra.mxu0 0
    %4223 = vmatprep.subr.bf16.mxu0 0
    %4224 = vmatpush2.bf16.msra.mxu0 0
    %4225 = vmatprep.subr.bf16.mxu0 0
    %4226 = vmatpush2.bf16.msra.mxu0 0
    %4227 = vmatprep.subr.bf16.mxu0 0
    %4228 = vmatpush2.bf16.msra.mxu0 0
    %4229 = vmatprep.subr.bf16.mxu0 0
    %4230 = vmatpush2.bf16.msra.mxu0 0
    %4231 = vmatprep.subr.bf16.mxu0 0
    %4232 = vmatpush2.bf16.msra.mxu0 0
    %4233 = vmatprep.subr.bf16.mxu0 0
    %4234 = vmatpush2.bf16.msra.mxu0 0
    %4235 = vmatprep.subr.bf16.mxu0 0
    %4236 = vmatpush2.bf16.msra.mxu0 0
    %4237 = vmatprep.mubr.bf16.mxu0 0
    %4238 = vmatmul.mubr.bf16.gmra.mxu0 %v2791
    %v4239 = vpop.f32.mrf.mxu0
    %v4240 = vadd.f32 %v4179, %v4239
    %v4241 = vpop.f32.mrf.mxu0
    %v4242 = vadd.f32 %v4181, %v4241
    %v4243 = vpop.f32.mrf.mxu0
    %v4244 = vadd.f32 %v4183, %v4243
    %v4245 = vpop.f32.mrf.mxu0
    %v4246 = vadd.f32 %v4185, %v4245
    %4247 = vmatprep.mubr.bf16.mxu0 0
    %4248 = vmatmul.mubr.bf16.gmra.mxu0 %v2796
    %v4249 = vpop.f32.mrf.mxu0
    %v4250 = vadd.f32 %v4189, %v4249
    %v4251 = vpop.f32.mrf.mxu0
    %v4252 = vadd.f32 %v4191, %v4251
    %v4253 = vpop.f32.mrf.mxu0
    %v4254 = vadd.f32 %v4193, %v4253
    %v4255 = vpop.f32.mrf.mxu0
    %v4256 = vadd.f32 %v4195, %v4255
    %4257 = vmatprep.mubr.bf16.mxu0 0
    %4258 = vmatmul.mubr.bf16.gmra.mxu0 %v2801
    %v4259 = vpop.f32.mrf.mxu0
    %v4260 = vadd.f32 %v4199, %v4259
    %v4261 = vpop.f32.mrf.mxu0
    %v4262 = vadd.f32 %v4201, %v4261
    %v4263 = vpop.f32.mrf.mxu0
    %v4264 = vpop.f32.mrf.mxu0
    %4265 = vdwg.mxu0
    %4266 = vmatprep.subr.bf16.mxu0 %v3721
    %4267 = vmatpush1.bf16.msra.mxu0 %v3720
    %4268 = vmatprep.subr.bf16.mxu0 %v3716
    %4269 = vmatpush1.bf16.msra.mxu0 %v3715
    %4270 = vmatprep.subr.bf16.mxu0 %v3711
    %4271 = vmatpush1.bf16.msra.mxu0 %v3710
    %4272 = vmatprep.subr.bf16.mxu0 %v3706
    %4273 = vmatpush1.bf16.msra.mxu0 %v3705
    %4274 = vmatprep.subr.bf16.mxu0 %v3701
    %4275 = vmatpush1.bf16.msra.mxu0 %v3700
    %4276 = vmatprep.subr.bf16.mxu0 %v3696
    %4277 = vmatpush1.bf16.msra.mxu0 %v3695
    %4278 = vmatprep.subr.bf16.mxu0 %v3691
    %4279 = vmatpush1.bf16.msra.mxu0 %v3690
    %4280 = vmatprep.subr.bf16.mxu0 %v3686
    %4281 = vmatpush1.bf16.msra.mxu0 %v3685
    %4282 = vmatprep.subr.bf16.mxu0 %v3761
    %4283 = vmatpush2.bf16.msra.mxu0 %v3760
    %4284 = vmatprep.subr.bf16.mxu0 %v3756
    %4285 = vmatpush2.bf16.msra.mxu0 %v3755
    %4286 = vmatprep.subr.bf16.mxu0 %v3751
    %4287 = vmatpush2.bf16.msra.mxu0 %v3750
    %4288 = vmatprep.subr.bf16.mxu0 %v3746
    %4289 = vmatpush2.bf16.msra.mxu0 %v3745
    %4290 = vmatprep.subr.bf16.mxu0 %v3741
    %4291 = vmatpush2.bf16.msra.mxu0 %v3740
    %4292 = vmatprep.subr.bf16.mxu0 %v3736
    %4293 = vmatpush2.bf16.msra.mxu0 %v3735
    %4294 = vmatprep.subr.bf16.mxu0 %v3731
    %4295 = vmatpush2.bf16.msra.mxu0 %v3730
    %4296 = vmatprep.subr.bf16.mxu0 %v3726
    %4297 = vmatpush2.bf16.msra.mxu0 %v3725
    %4298 = vmatprep.mubr.bf16.mxu0 %v2788
    %4299 = vmatmul.mubr.bf16.gmra.mxu0 %v2787
    %v4300 = vpop.f32.mrf.mxu0
    %v4301 = vadd.f32 0.0, %v4300
    %v4302 = vpop.f32.mrf.mxu0
    %v4303 = vadd.f32 0.0, %v4302
    %v4304 = vpop.f32.mrf.mxu0
    %v4305 = vadd.f32 0.0, %v4304
    %v4306 = vpop.f32.mrf.mxu0
    %v4307 = vadd.f32 0.0, %v4306
    %4308 = vmatprep.mubr.bf16.mxu0 %v2793
    %4309 = vmatmul.mubr.bf16.gmra.mxu0 %v2792
    %v4310 = vpop.f32.mrf.mxu0
    %v4311 = vadd.f32 0.0, %v4310
    %v4312 = vpop.f32.mrf.mxu0
    %v4313 = vadd.f32 0.0, %v4312
    %v4314 = vpop.f32.mrf.mxu0
    %v4315 = vadd.f32 0.0, %v4314
    %v4316 = vpop.f32.mrf.mxu0
    %v4317 = vadd.f32 0.0, %v4316
    %4318 = vmatprep.mubr.bf16.mxu0 %v2798
    %4319 = vmatmul.mubr.bf16.gmra.mxu0 %v2797
    %v4320 = vpop.f32.mrf.mxu0
    %v4321 = vadd.f32 0.0, %v4320
    %v4322 = vpop.f32.mrf.mxu0
    %v4323 = vadd.f32 0.0, %v4322
    %v4324 = vpop.f32.mrf.mxu0
    %v4325 = vpop.f32.mrf.mxu0
    %4326 = vdwg.mxu0
    %4327 = vmatprep.subr.bf16.mxu0 %v3801
    %4328 = vmatpush1.bf16.msra.mxu0 %v3800
    %4329 = vmatprep.subr.bf16.mxu0 %v3796
    %4330 = vmatpush1.bf16.msra.mxu0 %v3795
    %4331 = vmatprep.subr.bf16.mxu0 %v3791
    %4332 = vmatpush1.bf16.msra.mxu0 %v3790
    %4333 = vmatprep.subr.bf16.mxu0 %v3786
    %4334 = vmatpush1.bf16.msra.mxu0 %v3785
    %4335 = vmatprep.subr.bf16.mxu0 %v3781
    %4336 = vmatpush1.bf16.msra.mxu0 %v3780
    %4337 = vmatprep.subr.bf16.mxu0 %v3776
    %4338 = vmatpush1.bf16.msra.mxu0 %v3775
    %4339 = vmatprep.subr.bf16.mxu0 %v3771
    %4340 = vmatpush1.bf16.msra.mxu0 %v3770
    %4341 = vmatprep.subr.bf16.mxu0 %v3766
    %4342 = vmatpush1.bf16.msra.mxu0 %v3765
    %4343 = vmatprep.subr.bf16.mxu0 %v3841
    %4344 = vmatpush2.bf16.msra.mxu0 %v3840
    %4345 = vmatprep.subr.bf16.mxu0 %v3836
    %4346 = vmatpush2.bf16.msra.mxu0 %v3835
    %4347 = vmatprep.subr.bf16.mxu0 %v3831
    %4348 = vmatpush2.bf16.msra.mxu0 %v3830
    %4349 = vmatprep.subr.bf16.mxu0 %v3826
    %4350 = vmatpush2.bf16.msra.mxu0 %v3825
    %4351 = vmatprep.subr.bf16.mxu0 %v3821
    %4352 = vmatpush2.bf16.msra.mxu0 %v3820
    %4353 = vmatprep.subr.bf16.mxu0 %v3816
    %4354 = vmatpush2.bf16.msra.mxu0 %v3815
    %4355 = vmatprep.subr.bf16.mxu0 %v3811
    %4356 = vmatpush2.bf16.msra.mxu0 %v3810
    %4357 = vmatprep.subr.bf16.mxu0 %v3806
    %4358 = vmatpush2.bf16.msra.mxu0 %v3805
    %4359 = vmatprep.mubr.bf16.mxu0 %v2790
    %4360 = vmatmul.mubr.bf16.gmra.mxu0 %v2789
    %v4361 = vpop.f32.mrf.mxu0
    %v4362 = vadd.f32 %v4301, %v4361
    %v4363 = vpop.f32.mrf.mxu0
    %v4364 = vadd.f32 %v4303, %v4363
    %v4365 = vpop.f32.mrf.mxu0
    %v4366 = vadd.f32 %v4305, %v4365
    %v4367 = vpop.f32.mrf.mxu0
    %v4368 = vadd.f32 %v4307, %v4367
    %4369 = vmatprep.mubr.bf16.mxu0 %v2795
    %4370 = vmatmul.mubr.bf16.gmra.mxu0 %v2794
    %v4371 = vpop.f32.mrf.mxu0
    %v4372 = vadd.f32 %v4311, %v4371
    %v4373 = vpop.f32.mrf.mxu0
    %v4374 = vadd.f32 %v4313, %v4373
    %v4375 = vpop.f32.mrf.mxu0
    %v4376 = vadd.f32 %v4315, %v4375
    %v4377 = vpop.f32.mrf.mxu0
    %v4378 = vadd.f32 %v4317, %v4377
    %4379 = vmatprep.mubr.bf16.mxu0 %v2800
    %4380 = vmatmul.mubr.bf16.gmra.mxu0 %v2799
    %v4381 = vpop.f32.mrf.mxu0
    %v4382 = vadd.f32 %v4321, %v4381
    %v4383 = vpop.f32.mrf.mxu0
    %v4384 = vadd.f32 %v4323, %v4383
    %v4385 = vpop.f32.mrf.mxu0
    %v4386 = vpop.f32.mrf.mxu0
    %4387 = vdwg.mxu0
    %4388 = vmatprep.subr.bf16.mxu0 %v3881
    %4389 = vmatpush1.bf16.msra.mxu0 %v3880
    %4390 = vmatprep.subr.bf16.mxu0 %v3876
    %4391 = vmatpush1.bf16.msra.mxu0 %v3875
    %4392 = vmatprep.subr.bf16.mxu0 %v3871
    %4393 = vmatpush1.bf16.msra.mxu0 %v3870
    %4394 = vmatprep.subr.bf16.mxu0 %v3866
    %4395 = vmatpush1.bf16.msra.mxu0 %v3865
    %4396 = vmatprep.subr.bf16.mxu0 %v3861
    %4397 = vmatpush1.bf16.msra.mxu0 %v3860
    %4398 = vmatprep.subr.bf16.mxu0 %v3856
    %4399 = vmatpush1.bf16.msra.mxu0 %v3855
    %4400 = vmatprep.subr.bf16.mxu0 %v3851
    %4401 = vmatpush1.bf16.msra.mxu0 %v3850
    %4402 = vmatprep.subr.bf16.mxu0 %v3846
    %4403 = vmatpush1.bf16.msra.mxu0 %v3845
    %4404 = vmatprep.subr.bf16.mxu0 0
    %4405 = vmatpush2.bf16.msra.mxu0 0
    %4406 = vmatprep.subr.bf16.mxu0 0
    %4407 = vmatpush2.bf16.msra.mxu0 0
    %4408 = vmatprep.subr.bf16.mxu0 0
    %4409 = vmatpush2.bf16.msra.mxu0 0
    %4410 = vmatprep.subr.bf16.mxu0 0
    %4411 = vmatpush2.bf16.msra.mxu0 0
    %4412 = vmatprep.subr.bf16.mxu0 0
    %4413 = vmatpush2.bf16.msra.mxu0 0
    %4414 = vmatprep.subr.bf16.mxu0 0
    %4415 = vmatpush2.bf16.msra.mxu0 0
    %4416 = vmatprep.subr.bf16.mxu0 0
    %4417 = vmatpush2.bf16.msra.mxu0 0
    %4418 = vmatprep.subr.bf16.mxu0 0
    %4419 = vmatpush2.bf16.msra.mxu0 0
    %4420 = vmatprep.mubr.bf16.mxu0 0
    %4421 = vmatmul.mubr.bf16.gmra.mxu0 %v2791
    %v4422 = vpop.f32.mrf.mxu0
    %v4423 = vadd.f32 %v4362, %v4422
    %v4424 = vpop.f32.mrf.mxu0
    %v4425 = vadd.f32 %v4364, %v4424
    %v4426 = vpop.f32.mrf.mxu0
    %v4427 = vadd.f32 %v4366, %v4426
    %v4428 = vpop.f32.mrf.mxu0
    %v4429 = vadd.f32 %v4368, %v4428
    %4430 = vmatprep.mubr.bf16.mxu0 0
    %4431 = vmatmul.mubr.bf16.gmra.mxu0 %v2796
    %v4432 = vpop.f32.mrf.mxu0
    %v4433 = vadd.f32 %v4372, %v4432
    %v4434 = vpop.f32.mrf.mxu0
    %v4435 = vadd.f32 %v4374, %v4434
    %v4436 = vpop.f32.mrf.mxu0
    %v4437 = vadd.f32 %v4376, %v4436
    %v4438 = vpop.f32.mrf.mxu0
    %v4439 = vadd.f32 %v4378, %v4438
    %4440 = vmatprep.mubr.bf16.mxu0 0
    %4441 = vmatmul.mubr.bf16.gmra.mxu0 %v2801
    %v4442 = vpop.f32.mrf.mxu0
    %v4443 = vadd.f32 %v4382, %v4442
    %v4444 = vpop.f32.mrf.mxu0
    %v4445 = vadd.f32 %v4384, %v4444
    %v4446 = vpop.f32.mrf.mxu0
    %v4447 = vpop.f32.mrf.mxu0
    %4448 = vdwg.mxu0
    %4449 = vmatprep.subr.bf16.mxu0 0
    %4450 = vmatpush1.bf16.msra.mxu0 %v3722
    %4451 = vmatprep.subr.bf16.mxu0 0
    %4452 = vmatpush1.bf16.msra.mxu0 %v3717
    %4453 = vmatprep.subr.bf16.mxu0 0
    %4454 = vmatpush1.bf16.msra.mxu0 %v3712
    %4455 = vmatprep.subr.bf16.mxu0 0
    %4456 = vmatpush1.bf16.msra.mxu0 %v3707
    %4457 = vmatprep.subr.bf16.mxu0 0
    %4458 = vmatpush1.bf16.msra.mxu0 %v3702
    %4459 = vmatprep.subr.bf16.mxu0 0
    %4460 = vmatpush1.bf16.msra.mxu0 %v3697
    %4461 = vmatprep.subr.bf16.mxu0 0
    %4462 = vmatpush1.bf16.msra.mxu0 %v3692
    %4463 = vmatprep.subr.bf16.mxu0 0
    %4464 = vmatpush1.bf16.msra.mxu0 %v3687
    %4465 = vmatprep.subr.bf16.mxu0 0
    %4466 = vmatpush2.bf16.msra.mxu0 %v3762
    %4467 = vmatprep.subr.bf16.mxu0 0
    %4468 = vmatpush2.bf16.msra.mxu0 %v3757
    %4469 = vmatprep.subr.bf16.mxu0 0
    %4470 = vmatpush2.bf16.msra.mxu0 %v3752
    %4471 = vmatprep.subr.bf16.mxu0 0
    %4472 = vmatpush2.bf16.msra.mxu0 %v3747
    %4473 = vmatprep.subr.bf16.mxu0 0
    %4474 = vmatpush2.bf16.msra.mxu0 %v3742
    %4475 = vmatprep.subr.bf16.mxu0 0
    %4476 = vmatpush2.bf16.msra.mxu0 %v3737
    %4477 = vmatprep.subr.bf16.mxu0 0
    %4478 = vmatpush2.bf16.msra.mxu0 %v3732
    %4479 = vmatprep.subr.bf16.mxu0 0
    %4480 = vmatpush2.bf16.msra.mxu0 %v3727
    %4481 = vmatprep.mubr.bf16.mxu0 %v2788
    %4482 = vmatmul.mubr.bf16.gmra.mxu0 %v2787
    %v4483 = vpop.f32.mrf.mxu0
    %v4484 = vadd.f32 0.0, %v4483
    %v4485 = vpop.f32.mrf.mxu0
    %v4486 = vpop.f32.mrf.mxu0
    %v4487 = vadd.f32 0.0, %v4486
    %v4488 = vpop.f32.mrf.mxu0
    %4489 = vmatprep.mubr.bf16.mxu0 %v2793
    %4490 = vmatmul.mubr.bf16.gmra.mxu0 %v2792
    %v4491 = vpop.f32.mrf.mxu0
    %v4492 = vadd.f32 0.0, %v4491
    %v4493 = vpop.f32.mrf.mxu0
    %v4494 = vpop.f32.mrf.mxu0
    %v4495 = vadd.f32 0.0, %v4494
    %v4496 = vpop.f32.mrf.mxu0
    %4497 = vmatprep.mubr.bf16.mxu0 %v2798
    %4498 = vmatmul.mubr.bf16.gmra.mxu0 %v2797
    %v4499 = vpop.f32.mrf.mxu0
    %v4500 = vadd.f32 0.0, %v4499
    %v4501 = vpop.f32.mrf.mxu0
    %v4502 = vpop.f32.mrf.mxu0
    %v4503 = vpop.f32.mrf.mxu0
    %4504 = vdwg.mxu0
    %4505 = vmatprep.subr.bf16.mxu0 0
    %4506 = vmatpush1.bf16.msra.mxu0 %v3802
    %4507 = vmatprep.subr.bf16.mxu0 0
    %4508 = vmatpush1.bf16.msra.mxu0 %v3797
    %4509 = vmatprep.subr.bf16.mxu0 0
    %4510 = vmatpush1.bf16.msra.mxu0 %v3792
    %4511 = vmatprep.subr.bf16.mxu0 0
    %4512 = vmatpush1.bf16.msra.mxu0 %v3787
    %4513 = vmatprep.subr.bf16.mxu0 0
    %4514 = vmatpush1.bf16.msra.mxu0 %v3782
    %4515 = vmatprep.subr.bf16.mxu0 0
    %4516 = vmatpush1.bf16.msra.mxu0 %v3777
    %4517 = vmatprep.subr.bf16.mxu0 0
    %4518 = vmatpush1.bf16.msra.mxu0 %v3772
    %4519 = vmatprep.subr.bf16.mxu0 0
    %4520 = vmatpush1.bf16.msra.mxu0 %v3767
    %4521 = vmatprep.subr.bf16.mxu0 0
    %4522 = vmatpush2.bf16.msra.mxu0 %v3842
    %4523 = vmatprep.subr.bf16.mxu0 0
    %4524 = vmatpush2.bf16.msra.mxu0 %v3837
    %4525 = vmatprep.subr.bf16.mxu0 0
    %4526 = vmatpush2.bf16.msra.mxu0 %v3832
    %4527 = vmatprep.subr.bf16.mxu0 0
    %4528 = vmatpush2.bf16.msra.mxu0 %v3827
    %4529 = vmatprep.subr.bf16.mxu0 0
    %4530 = vmatpush2.bf16.msra.mxu0 %v3822
    %4531 = vmatprep.subr.bf16.mxu0 0
    %4532 = vmatpush2.bf16.msra.mxu0 %v3817
    %4533 = vmatprep.subr.bf16.mxu0 0
    %4534 = vmatpush2.bf16.msra.mxu0 %v3812
    %4535 = vmatprep.subr.bf16.mxu0 0
    %4536 = vmatpush2.bf16.msra.mxu0 %v3807
    %4537 = vmatprep.mubr.bf16.mxu0 %v2790
    %4538 = vmatmul.mubr.bf16.gmra.mxu0 %v2789
    %v4539 = vpop.f32.mrf.mxu0
    %v4540 = vadd.f32 %v4484, %v4539
    %v4541 = vpop.f32.mrf.mxu0
    %v4542 = vpop.f32.mrf.mxu0
    %v4543 = vadd.f32 %v4487, %v4542
    %v4544 = vpop.f32.mrf.mxu0
    %4545 = vmatprep.mubr.bf16.mxu0 %v2795
    %4546 = vmatmul.mubr.bf16.gmra.mxu0 %v2794
    %v4547 = vpop.f32.mrf.mxu0
    %v4548 = vadd.f32 %v4492, %v4547
    %v4549 = vpop.f32.mrf.mxu0
    %v4550 = vpop.f32.mrf.mxu0
    %v4551 = vadd.f32 %v4495, %v4550
    %v4552 = vpop.f32.mrf.mxu0
    %4553 = vmatprep.mubr.bf16.mxu0 %v2800
    %4554 = vmatmul.mubr.bf16.gmra.mxu0 %v2799
    %v4555 = vpop.f32.mrf.mxu0
    %v4556 = vadd.f32 %v4500, %v4555
    %v4557 = vpop.f32.mrf.mxu0
    %v4558 = vpop.f32.mrf.mxu0
    %v4559 = vpop.f32.mrf.mxu0
    %4560 = vdwg.mxu0
    %4561 = vmatprep.subr.bf16.mxu0 0
    %4562 = vmatpush1.bf16.msra.mxu0 %v3882
    %4563 = vmatprep.subr.bf16.mxu0 0
    %4564 = vmatpush1.bf16.msra.mxu0 %v3877
    %4565 = vmatprep.subr.bf16.mxu0 0
    %4566 = vmatpush1.bf16.msra.mxu0 %v3872
    %4567 = vmatprep.subr.bf16.mxu0 0
    %4568 = vmatpush1.bf16.msra.mxu0 %v3867
    %4569 = vmatprep.subr.bf16.mxu0 0
    %4570 = vmatpush1.bf16.msra.mxu0 %v3862
    %4571 = vmatprep.subr.bf16.mxu0 0
    %4572 = vmatpush1.bf16.msra.mxu0 %v3857
    %4573 = vmatprep.subr.bf16.mxu0 0
    %4574 = vmatpush1.bf16.msra.mxu0 %v3852
    %4575 = vmatprep.subr.bf16.mxu0 0
    %4576 = vmatpush1.bf16.msra.mxu0 %v3847
    %4577 = vmatprep.subr.bf16.mxu0 0
    %4578 = vmatpush2.bf16.msra.mxu0 0
    %4579 = vmatprep.subr.bf16.mxu0 0
    %4580 = vmatpush2.bf16.msra.mxu0 0
    %4581 = vmatprep.subr.bf16.mxu0 0
    %4582 = vmatpush2.bf16.msra.mxu0 0
    %4583 = vmatprep.subr.bf16.mxu0 0
    %4584 = vmatpush2.bf16.msra.mxu0 0
    %4585 = vmatprep.subr.bf16.mxu0 0
    %4586 = vmatpush2.bf16.msra.mxu0 0
    %4587 = vmatprep.subr.bf16.mxu0 0
    %4588 = vmatpush2.bf16.msra.mxu0 0
    %4589 = vmatprep.subr.bf16.mxu0 0
    %4590 = vmatpush2.bf16.msra.mxu0 0
    %4591 = vmatprep.subr.bf16.mxu0 0
    %4592 = vmatpush2.bf16.msra.mxu0 0
    %4593 = vmatprep.mubr.bf16.mxu0 0
    %4594 = vmatmul.mubr.bf16.gmra.mxu0 %v2791
    %v4595 = vpop.f32.mrf.mxu0
    %v4596 = vadd.f32 %v4540, %v4595
    %v4597 = vpop.f32.mrf.mxu0
    %v4598 = vpop.f32.mrf.mxu0
    %v4599 = vadd.f32 %v4543, %v4598
    %v4600 = vpop.f32.mrf.mxu0
    %4601 = vmatprep.mubr.bf16.mxu0 0
    %4602 = vmatmul.mubr.bf16.gmra.mxu0 %v2796
    %v4603 = vpop.f32.mrf.mxu0
    %v4604 = vadd.f32 %v4548, %v4603
    %v4605 = vpop.f32.mrf.mxu0
    %v4606 = vpop.f32.mrf.mxu0
    %v4607 = vadd.f32 %v4551, %v4606
    %v4608 = vpop.f32.mrf.mxu0
    %4609 = vmatprep.mubr.bf16.mxu0 0
    %4610 = vmatmul.mubr.bf16.gmra.mxu0 %v2801
    %v4611 = vpop.f32.mrf.mxu0
    %v4612 = vadd.f32 %v4556, %v4611
    %v4613 = vpop.f32.mrf.mxu0
    %v4614 = vpop.f32.mrf.mxu0
    %v4615 = vpop.f32.mrf.mxu0
    %4616 = vdwg.mxu0
    %vm4617 = vsmask.f32 4352
    %v4619 = vshrl.u32 %v2527, 16
    %v4621 = vrot.slane %v4619, 3
    %v4622 = vshll.u32 %v2527, 16
    %v4624 = vrot.slane %v4622, 4
    %v4625 = vor.u32 %v4621, %v4624
    %v4627 = vshrl.u32 %v2532, 16
    %v4629 = vrot.slane %v4627, 3
    %v4630 = vshll.u32 %v2532, 16
    %v4632 = vrot.slane %v4630, 4
    %v4633 = vor.u32 %v4629, %v4632
    %v4634 = vsel %vm4617, %v4625, %v4633
    %v4636 = vshrl.u32 %v2528, 16
    %v4638 = vrot.slane %v4636, 3
    %v4639 = vshll.u32 %v2528, 16
    %v4641 = vrot.slane %v4639, 4
    %v4642 = vor.u32 %v4638, %v4641
    %v4644 = vshrl.u32 %v2533, 16
    %v4646 = vrot.slane %v4644, 3
    %v4647 = vshll.u32 %v2533, 16
    %v4649 = vrot.slane %v4647, 4
    %v4650 = vor.u32 %v4646, %v4649
    %v4651 = vsel %vm4617, %v4642, %v4650
    %v4653 = vshrl.u32 %v2529, 16
    %v4655 = vrot.slane %v4653, 3
    %v4656 = vshll.u32 %v2529, 16
    %v4658 = vrot.slane %v4656, 4
    %v4659 = vor.u32 %v4655, %v4658
    %v4661 = vshrl.u32 %v2534, 16
    %v4663 = vrot.slane %v4661, 3
    %v4664 = vshll.u32 %v2534, 16
    %v4666 = vrot.slane %v4664, 4
    %v4667 = vor.u32 %v4663, %v4666
    %v4668 = vsel %vm4617, %v4659, %v4667
    %v4670 = vshrl.u32 %v2530, 16
    %v4672 = vrot.slane %v4670, 3
    %v4673 = vshll.u32 %v2530, 16
    %v4675 = vrot.slane %v4673, 4
    %v4676 = vor.u32 %v4672, %v4675
    %v4678 = vshrl.u32 %v2535, 16
    %v4680 = vrot.slane %v4678, 3
    %v4681 = vshll.u32 %v2535, 16
    %v4683 = vrot.slane %v4681, 4
    %v4684 = vor.u32 %v4680, %v4683
    %v4685 = vsel %vm4617, %v4676, %v4684
    %v4687 = vshrl.u32 %v2531, 16
    %v4689 = vrot.slane %v4687, 3
    %v4690 = vshll.u32 %v2531, 16
    %v4692 = vrot.slane %v4690, 4
    %v4693 = vor.u32 %v4689, %v4692
    %v4695 = vshrl.u32 %v2536, 16
    %v4697 = vrot.slane %v4695, 3
    %v4698 = vshll.u32 %v2536, 16
    %v4700 = vrot.slane %v4698, 4
    %v4701 = vor.u32 %v4697, %v4700
    %v4702 = vsel %vm4617, %v4693, %v4701
    %v4704 = vshrl.u32 %v2537, 16
    %v4706 = vrot.slane %v4704, 3
    %v4707 = vshll.u32 %v2537, 16
    %v4709 = vrot.slane %v4707, 4
    %v4710 = vor.u32 %v4706, %v4709
    %v4711 = vsel %vm4617, %v4633, %v4710
    %v4713 = vshrl.u32 %v2538, 16
    %v4715 = vrot.slane %v4713, 3
    %v4716 = vshll.u32 %v2538, 16
    %v4718 = vrot.slane %v4716, 4
    %v4719 = vor.u32 %v4715, %v4718
    %v4720 = vsel %vm4617, %v4650, %v4719
    %v4722 = vshrl.u32 %v2539, 16
    %v4724 = vrot.slane %v4722, 3
    %v4725 = vshll.u32 %v2539, 16
    %v4727 = vrot.slane %v4725, 4
    %v4728 = vor.u32 %v4724, %v4727
    %v4729 = vsel %vm4617, %v4667, %v4728
    %v4731 = vshrl.u32 %v2540, 16
    %v4733 = vrot.slane %v4731, 3
    %v4734 = vshll.u32 %v2540, 16
    %v4736 = vrot.slane %v4734, 4
    %v4737 = vor.u32 %v4733, %v4736
    %v4738 = vsel %vm4617, %v4684, %v4737
    %v4740 = vshrl.u32 %v2541, 16
    %v4742 = vrot.slane %v4740, 3
    %v4743 = vshll.u32 %v2541, 16
    %v4745 = vrot.slane %v4743, 4
    %v4746 = vor.u32 %v4742, %v4745
    %v4747 = vsel %vm4617, %v4701, %v4746
    %v5003 = vunpack.c.l.b16 %v2542
    %v5004 = vunpack.c.h.b16 %v2542
    %v5005 = vunpack.c.l.b16 %v2543
    %v5006 = vunpack.c.h.b16 %v2543
    %v5007 = vunpack.c.l.b16 %v2544
    %v5008 = vunpack.c.l.b16 %v2545
    %v5009 = vunpack.c.h.b16 %v2545
    %v5010 = vunpack.c.l.b16 %v2546
    %v5011 = vunpack.c.h.b16 %v2546
    %v5012 = vunpack.c.l.b16 %v2547
    %v5013 = vunpack.c.l.b16 %v2548
    %v5014 = vunpack.c.h.b16 %v2548
    %v5015 = vunpack.c.l.b16 %v2549
    %v5016 = vunpack.c.h.b16 %v2549
    %v5017 = vunpack.c.l.b16 %v2550
    %v5018 = vunpack.c.l.b16 %v2551
    %v5019 = vunpack.c.h.b16 %v2551
    %v5020 = vunpack.c.l.b16 %v2552
    %v5021 = vunpack.c.h.b16 %v2552
    %v5022 = vunpack.c.l.b16 %v2553
    %v5023 = vunpack.c.l.b16 %v2554
    %v5024 = vunpack.c.h.b16 %v2554
    %v5025 = vunpack.c.l.b16 %v2555
    %v5026 = vunpack.c.h.b16 %v2555
    %v5027 = vunpack.c.l.b16 %v2556
    %v5028 = vunpack.c.l.b16 %v2557
    %v5029 = vunpack.c.h.b16 %v2557
    %v5030 = vunpack.c.l.b16 %v2558
    %v5031 = vunpack.c.h.b16 %v2558
    %v5032 = vunpack.c.l.b16 %v2559
    %v5033 = vunpack.c.l.b16 %v2560
    %v5034 = vunpack.c.h.b16 %v2560
    %v5035 = vunpack.c.l.b16 %v2561
    %v5036 = vunpack.c.h.b16 %v2561
    %v5037 = vunpack.c.l.b16 %v2562
    %v5038 = vunpack.c.l.b16 %v2563
    %v5039 = vunpack.c.h.b16 %v2563
    %v5040 = vunpack.c.l.b16 %v2564
    %v5041 = vunpack.c.h.b16 %v2564
    %v5042 = vunpack.c.l.b16 %v2565
    %v5043 = vunpack.c.l.b16 %v2566
    %v5044 = vunpack.c.h.b16 %v2566
    %v5045 = vunpack.c.l.b16 %v2567
    %v5046 = vunpack.c.h.b16 %v2567
    %v5047 = vunpack.c.l.b16 %v2568
    %v5048 = vunpack.c.l.b16 %v2569
    %v5049 = vunpack.c.h.b16 %v2569
    %v5050 = vunpack.c.l.b16 %v2570
    %v5051 = vunpack.c.h.b16 %v2570
    %v5052 = vunpack.c.l.b16 %v2571
    %v5053 = vunpack.c.l.b16 %v2572
    %v5054 = vunpack.c.h.b16 %v2572
    %v5055 = vunpack.c.l.b16 %v2573
    %v5056 = vunpack.c.h.b16 %v2573
    %v5057 = vunpack.c.l.b16 %v2574
    %v5058 = vunpack.c.l.b16 %v2575
    %v5059 = vunpack.c.h.b16 %v2575
    %v5060 = vunpack.c.l.b16 %v2576
    %v5061 = vunpack.c.h.b16 %v2576
    %v5062 = vunpack.c.l.b16 %v2577
    %v5063 = vunpack.c.l.b16 %v2578
    %v5064 = vunpack.c.h.b16 %v2578
    %v5065 = vunpack.c.l.b16 %v2579
    %v5066 = vunpack.c.h.b16 %v2579
    %v5067 = vunpack.c.l.b16 %v2580
    %v5068 = vunpack.c.l.b16 %v2581
    %v5069 = vunpack.c.h.b16 %v2581
    %v5070 = vunpack.c.l.b16 %v2582
    %v5071 = vunpack.c.h.b16 %v2582
    %v5072 = vunpack.c.l.b16 %v2583
    %v5073 = vunpack.c.l.b16 %v2584
    %v5074 = vunpack.c.h.b16 %v2584
    %v5075 = vunpack.c.l.b16 %v2585
    %v5076 = vunpack.c.h.b16 %v2585
    %v5077 = vunpack.c.l.b16 %v2586
    %v5078 = vunpack.c.l.b16 %v2587
    %v5079 = vunpack.c.h.b16 %v2587
    %v5080 = vunpack.c.l.b16 %v2588
    %v5081 = vunpack.c.h.b16 %v2588
    %v5082 = vunpack.c.l.b16 %v2589
    %v5083 = vunpack.c.l.b16 %v2590
    %v5084 = vunpack.c.h.b16 %v2590
    %v5085 = vunpack.c.l.b16 %v2591
    %v5086 = vunpack.c.h.b16 %v2591
    %v5087 = vunpack.c.l.b16 %v2592
    %v5088 = vunpack.c.l.b16 %v2593
    %v5089 = vunpack.c.h.b16 %v2593
    %v5090 = vunpack.c.l.b16 %v2594
    %v5091 = vunpack.c.h.b16 %v2594
    %v5092 = vunpack.c.l.b16 %v2595
    %v5093 = vunpack.c.l.b16 %v2596
    %v5094 = vunpack.c.h.b16 %v2596
    %v5095 = vunpack.c.l.b16 %v2597
    %v5096 = vunpack.c.h.b16 %v2597
    %v5097 = vunpack.c.l.b16 %v2598
    %v5098 = vunpack.c.l.b16 %v2599
    %v5099 = vunpack.c.h.b16 %v2599
    %v5100 = vunpack.c.l.b16 %v2600
    %v5101 = vunpack.c.h.b16 %v2600
    %v5102 = vunpack.c.l.b16 %v2601
    %v5103 = vunpack.c.l.b16 %v2602
    %v5104 = vunpack.c.h.b16 %v2602
    %v5105 = vunpack.c.l.b16 %v2603
    %v5106 = vunpack.c.h.b16 %v2603
    %v5107 = vunpack.c.l.b16 %v2604
    %v5108 = vunpack.c.l.b16 %v2605
    %v5109 = vunpack.c.h.b16 %v2605
    %v5110 = vunpack.c.l.b16 %v2606
    %v5111 = vunpack.c.h.b16 %v2606
    %v5112 = vunpack.c.l.b16 %v2607
    %v5113 = vunpack.c.l.b16 %v2608
    %v5114 = vunpack.c.h.b16 %v2608
    %v5115 = vunpack.c.l.b16 %v2609
    %v5116 = vunpack.c.h.b16 %v2609
    %v5117 = vunpack.c.l.b16 %v2610
    %v5118 = vunpack.c.l.b16 %v2611
    %v5119 = vunpack.c.h.b16 %v2611
    %v5120 = vunpack.c.l.b16 %v2612
    %v5121 = vunpack.c.h.b16 %v2612
    %v5122 = vunpack.c.l.b16 %v2613
    %v5123 = vunpack.c.l.b16 %v2614
    %v5124 = vunpack.c.h.b16 %v2614
    %v5125 = vunpack.c.l.b16 %v2615
    %v5126 = vunpack.c.h.b16 %v2615
    %v5127 = vunpack.c.l.b16 %v2616
    %v5128 = vunpack.c.l.b16 %v2617
    %v5129 = vunpack.c.h.b16 %v2617
    %v5130 = vunpack.c.l.b16 %v2618
    %v5131 = vunpack.c.h.b16 %v2618
    %v5132 = vunpack.c.l.b16 %v2619
    %v5133 = vunpack.c.l.b16 %v2620
    %v5134 = vunpack.c.h.b16 %v2620
    %v5135 = vunpack.c.l.b16 %v2621
    %v5136 = vunpack.c.h.b16 %v2621
    %v5137 = vunpack.c.l.b16 %v2622
    %v5138 = vunpack.c.l.b16 %v2623
    %v5139 = vunpack.c.h.b16 %v2623
    %v5140 = vunpack.c.l.b16 %v2624
    %v5141 = vunpack.c.h.b16 %v2624
    %v5142 = vunpack.c.l.b16 %v2625
    %v5143 = vunpack.c.l.b16 %v2626
    %v5144 = vunpack.c.h.b16 %v2626
    %v5145 = vunpack.c.l.b16 %v2627
    %v5146 = vunpack.c.h.b16 %v2627
    %v5147 = vunpack.c.l.b16 %v2628
    %v5148 = vunpack.c.l.b16 %v2629
    %v5149 = vunpack.c.h.b16 %v2629
    %v5150 = vunpack.c.l.b16 %v2630
    %v5151 = vunpack.c.h.b16 %v2630
    %v5152 = vunpack.c.l.b16 %v2631
    %v5153 = vunpack.c.l.b16 %v2632
    %v5154 = vunpack.c.h.b16 %v2632
    %v5155 = vunpack.c.l.b16 %v2633
    %v5156 = vunpack.c.h.b16 %v2633
    %v5157 = vunpack.c.l.b16 %v2634
    %v5158 = vunpack.c.l.b16 %v2635
    %v5159 = vunpack.c.h.b16 %v2635
    %v5160 = vunpack.c.l.b16 %v2636
    %v5161 = vunpack.c.h.b16 %v2636
    %v5162 = vunpack.c.l.b16 %v2637
    %v5163 = vunpack.c.l.b16 %v2638
    %v5164 = vunpack.c.h.b16 %v2638
    %v5165 = vunpack.c.l.b16 %v2639
    %v5166 = vunpack.c.h.b16 %v2639
    %v5167 = vunpack.c.l.b16 %v2640
    %v5168 = vunpack.c.l.b16 %v2641
    %v5169 = vunpack.c.h.b16 %v2641
    %v5170 = vunpack.c.l.b16 %v2642
    %v5171 = vunpack.c.h.b16 %v2642
    %v5172 = vunpack.c.l.b16 %v2643
    %v5173 = vunpack.c.l.b16 %v2644
    %v5174 = vunpack.c.h.b16 %v2644
    %v5175 = vunpack.c.l.b16 %v2645
    %v5176 = vunpack.c.h.b16 %v2645
    %v5177 = vunpack.c.l.b16 %v2646
    %v5178 = vunpack.c.l.b16 %v2647
    %v5179 = vunpack.c.h.b16 %v2647
    %v5180 = vunpack.c.l.b16 %v2648
    %v5181 = vunpack.c.h.b16 %v2648
    %v5182 = vunpack.c.l.b16 %v2649
    %v5183 = vunpack.c.l.b16 %v2650
    %v5184 = vunpack.c.h.b16 %v2650
    %v5185 = vunpack.c.l.b16 %v2651
    %v5186 = vunpack.c.h.b16 %v2651
    %v5187 = vunpack.c.l.b16 %v2652
    %v5188 = vunpack.c.l.b16 %v2653
    %v5189 = vunpack.c.h.b16 %v2653
    %v5190 = vunpack.c.l.b16 %v2654
    %v5191 = vunpack.c.h.b16 %v2654
    %v5192 = vunpack.c.l.b16 %v2655
    %v5193 = vunpack.c.l.b16 %v2656
    %v5194 = vunpack.c.h.b16 %v2656
    %v5195 = vunpack.c.l.b16 %v2657
    %v5196 = vunpack.c.h.b16 %v2657
    %v5197 = vunpack.c.l.b16 %v2658
    %v5198 = vunpack.c.l.b16 %v2659
    %v5199 = vunpack.c.h.b16 %v2659
    %v5200 = vunpack.c.l.b16 %v2660
    %v5201 = vunpack.c.h.b16 %v2660
    %v5202 = vunpack.c.l.b16 %v2661
    %v5203 = vunpack.c.l.b16 %v2662
    %v5204 = vunpack.c.h.b16 %v2662
    %v5205 = vunpack.c.l.b16 %v2663
    %v5206 = vunpack.c.h.b16 %v2663
    %v5207 = vunpack.c.l.b16 %v2664
    %v5208 = vunpack.c.l.b16 %v2665
    %v5209 = vunpack.c.h.b16 %v2665
    %v5210 = vunpack.c.l.b16 %v2666
    %v5211 = vunpack.c.h.b16 %v2666
    %v5212 = vunpack.c.l.b16 %v2667
    %v5213 = vunpack.c.l.b16 %v2668
    %v5214 = vunpack.c.h.b16 %v2668
    %v5215 = vunpack.c.l.b16 %v2669
    %v5216 = vunpack.c.h.b16 %v2669
    %v5217 = vunpack.c.l.b16 %v2670
    %v5218 = vunpack.c.l.b16 %v2671
    %v5219 = vunpack.c.h.b16 %v2671
    %v5220 = vunpack.c.l.b16 %v2672
    %v5221 = vunpack.c.h.b16 %v2672
    %v5222 = vunpack.c.l.b16 %v2673
    %v5223 = vunpack.c.l.b16 %v2674
    %v5224 = vunpack.c.h.b16 %v2674
    %v5225 = vunpack.c.l.b16 %v2675
    %v5226 = vunpack.c.h.b16 %v2675
    %v5227 = vunpack.c.l.b16 %v2676
    %v5228 = vunpack.c.l.b16 %v2677
    %v5229 = vunpack.c.h.b16 %v2677
    %v5230 = vunpack.c.l.b16 %v2678
    %v5231 = vunpack.c.h.b16 %v2678
    %v5232 = vunpack.c.l.b16 %v2679
    %v5233 = vunpack.c.l.b16 %v2680
    %v5234 = vunpack.c.h.b16 %v2680
    %v5235 = vunpack.c.l.b16 %v2681
    %v5236 = vunpack.c.h.b16 %v2681
    %v5237 = vunpack.c.l.b16 %v2682
    %v5238 = vunpack.c.l.b16 %v2683
    %v5239 = vunpack.c.h.b16 %v2683
    %v5240 = vunpack.c.l.b16 %v2684
    %v5241 = vunpack.c.h.b16 %v2684
    %v5242 = vunpack.c.l.b16 %v2685
    %v5243 = vunpack.c.l.b16 %v2686
    %v5244 = vunpack.c.h.b16 %v2686
    %v5245 = vunpack.c.l.b16 %v2687
    %v5246 = vunpack.c.h.b16 %v2687
    %v5247 = vunpack.c.l.b16 %v2688
    %v5248 = vunpack.c.l.b16 %v2689
    %v5249 = vunpack.c.h.b16 %v2689
    %v5250 = vunpack.c.l.b16 %v2690
    %v5251 = vunpack.c.h.b16 %v2690
    %v5252 = vunpack.c.l.b16 %v2691
    %v5253 = vunpack.c.l.b16 %v2692
    %v5254 = vunpack.c.h.b16 %v2692
    %v5255 = vunpack.c.l.b16 %v2693
    %v5256 = vunpack.c.h.b16 %v2693
    %v5257 = vunpack.c.l.b16 %v2694
    %v5258 = vunpack.c.l.b16 %v2695
    %v5259 = vunpack.c.h.b16 %v2695
    %v5260 = vunpack.c.l.b16 %v2696
    %v5261 = vunpack.c.h.b16 %v2696
    %v5262 = vunpack.c.l.b16 %v2697
    %v5263 = vunpack.c.l.b16 %v2698
    %v5264 = vunpack.c.h.b16 %v2698
    %v5265 = vunpack.c.l.b16 %v2699
    %v5266 = vunpack.c.h.b16 %v2699
    %v5267 = vunpack.c.l.b16 %v2700
    %v5268 = vunpack.c.l.b16 %v2701
    %v5269 = vunpack.c.h.b16 %v2701
    %v5270 = vunpack.c.l.b16 %v2702
    %v5271 = vunpack.c.h.b16 %v2702
    %v5272 = vunpack.c.l.b16 %v2703
    %v5273 = vunpack.c.l.b16 %v2704
    %v5274 = vunpack.c.h.b16 %v2704
    %v5275 = vunpack.c.l.b16 %v2705
    %v5276 = vunpack.c.h.b16 %v2705
    %v5277 = vunpack.c.l.b16 %v2706
    %v5278 = vunpack.c.l.b16 %v2707
    %v5279 = vunpack.c.h.b16 %v2707
    %v5280 = vunpack.c.l.b16 %v2708
    %v5281 = vunpack.c.h.b16 %v2708
    %v5282 = vunpack.c.l.b16 %v2709
    %v5283 = vunpack.c.l.b16 %v2710
    %v5284 = vunpack.c.h.b16 %v2710
    %v5285 = vunpack.c.l.b16 %v2711
    %v5286 = vunpack.c.h.b16 %v2711
    %v5287 = vunpack.c.l.b16 %v2712
    %v5288 = vunpack.c.l.b16 %v2713
    %v5289 = vunpack.c.h.b16 %v2713
    %v5290 = vunpack.c.l.b16 %v2714
    %v5291 = vunpack.c.h.b16 %v2714
    %v5292 = vunpack.c.l.b16 %v2715
    %v5293 = vunpack.c.l.b16 %v2716
    %v5294 = vunpack.c.h.b16 %v2716
    %v5295 = vunpack.c.l.b16 %v2717
    %v5296 = vunpack.c.h.b16 %v2717
    %v5297 = vunpack.c.l.b16 %v2718
    %v5298 = vunpack.c.l.b16 %v2719
    %v5299 = vunpack.c.h.b16 %v2719
    %v5300 = vunpack.c.l.b16 %v2720
    %v5301 = vunpack.c.h.b16 %v2720
    %v5302 = vunpack.c.l.b16 %v2721
    %v5303 = vunpack.c.l.b16 %v2722
    %v5304 = vunpack.c.h.b16 %v2722
    %v5305 = vunpack.c.l.b16 %v2723
    %v5306 = vunpack.c.h.b16 %v2723
    %v5307 = vunpack.c.l.b16 %v2724
    %v5308 = vunpack.c.l.b16 %v2725
    %v5309 = vunpack.c.h.b16 %v2725
    %v5310 = vunpack.c.l.b16 %v2726
    %v5311 = vunpack.c.h.b16 %v2726
    %v5312 = vunpack.c.l.b16 %v2727
    %v5313 = vunpack.c.l.b16 %v2728
    %v5314 = vunpack.c.h.b16 %v2728
    %v5315 = vunpack.c.l.b16 %v2729
    %v5316 = vunpack.c.h.b16 %v2729
    %v5317 = vunpack.c.l.b16 %v2730
    %v5318 = vunpack.c.l.b16 %v2731
    %v5319 = vunpack.c.h.b16 %v2731
    %v5320 = vunpack.c.l.b16 %v2732
    %v5321 = vunpack.c.h.b16 %v2732
    %v5322 = vunpack.c.l.b16 %v2733
    %v5323 = vunpack.c.l.b16 %v2734
    %v5324 = vunpack.c.h.b16 %v2734
    %v5325 = vunpack.c.l.b16 %v2735
    %v5326 = vunpack.c.h.b16 %v2735
    %v5327 = vunpack.c.l.b16 %v2736
    %v5328 = vunpack.c.l.b16 %v2737
    %v5329 = vunpack.c.h.b16 %v2737
    %v5330 = vunpack.c.l.b16 %v2738
    %v5331 = vunpack.c.h.b16 %v2738
    %v5332 = vunpack.c.l.b16 %v2739
    %v5333 = vunpack.c.l.b16 %v2740
    %v5334 = vunpack.c.h.b16 %v2740
    %v5335 = vunpack.c.l.b16 %v2741
    %v5336 = vunpack.c.h.b16 %v2741
    %v5337 = vunpack.c.l.b16 %v2742
    %v5338 = vunpack.c.l.b16 %v2743
    %v5339 = vunpack.c.h.b16 %v2743
    %v5340 = vunpack.c.l.b16 %v2744
    %v5341 = vunpack.c.h.b16 %v2744
    %v5342 = vunpack.c.l.b16 %v2745
    %v5343 = vunpack.c.l.b16 %v2746
    %v5344 = vunpack.c.h.b16 %v2746
    %v5345 = vunpack.c.l.b16 %v2747
    %v5346 = vunpack.c.h.b16 %v2747
    %v5347 = vunpack.c.l.b16 %v2748
    %v5348 = vunpack.c.l.b16 %v2749
    %v5349 = vunpack.c.h.b16 %v2749
    %v5350 = vunpack.c.l.b16 %v2750
    %v5351 = vunpack.c.h.b16 %v2750
    %v5352 = vunpack.c.l.b16 %v2751
    %v5353 = vunpack.c.l.b16 %v2752
    %v5354 = vunpack.c.h.b16 %v2752
    %v5355 = vunpack.c.l.b16 %v2753
    %v5356 = vunpack.c.h.b16 %v2753
    %v5357 = vunpack.c.l.b16 %v2754
    %v5358 = vunpack.c.l.b16 %v2755
    %v5359 = vunpack.c.h.b16 %v2755
    %v5360 = vunpack.c.l.b16 %v2756
    %v5361 = vunpack.c.h.b16 %v2756
    %v5362 = vunpack.c.l.b16 %v2757
    %v5363 = vunpack.c.l.b16 %v2758
    %v5364 = vunpack.c.h.b16 %v2758
    %v5365 = vunpack.c.l.b16 %v2759
    %v5366 = vunpack.c.h.b16 %v2759
    %v5367 = vunpack.c.l.b16 %v2760
    %v5368 = vunpack.c.l.b16 %v2761
    %v5369 = vunpack.c.h.b16 %v2761
    %v5370 = vunpack.c.l.b16 %v2762
    %v5371 = vunpack.c.h.b16 %v2762
    %v5372 = vunpack.c.l.b16 %v2763
    %v5373 = vunpack.c.l.b16 %v2764
    %v5374 = vunpack.c.h.b16 %v2764
    %v5375 = vunpack.c.l.b16 %v2765
    %v5376 = vunpack.c.h.b16 %v2765
    %v5377 = vunpack.c.l.b16 %v2766
    %v5378 = vunpack.c.l.b16 %v2767
    %v5379 = vunpack.c.h.b16 %v2767
    %v5380 = vunpack.c.l.b16 %v2768
    %v5381 = vunpack.c.h.b16 %v2768
    %v5382 = vunpack.c.l.b16 %v2769
    %v5383 = vunpack.c.l.b16 %v2770
    %v5384 = vunpack.c.h.b16 %v2770
    %v5385 = vunpack.c.l.b16 %v2771
    %v5386 = vunpack.c.h.b16 %v2771
    %v5387 = vunpack.c.l.b16 %v2772
    %v5388 = vunpack.c.l.b16 %v2773
    %v5389 = vunpack.c.h.b16 %v2773
    %v5390 = vunpack.c.l.b16 %v2774
    %v5391 = vunpack.c.h.b16 %v2774
    %v5392 = vunpack.c.l.b16 %v2775
    %v5393 = vunpack.c.l.b16 %v2776
    %v5394 = vunpack.c.h.b16 %v2776
    %v5395 = vunpack.c.l.b16 %v2777
    %v5396 = vunpack.c.h.b16 %v2777
    %v5397 = vunpack.c.l.b16 %v2778
    %v5398 = vunpack.c.l.b16 %v2779
    %v5399 = vunpack.c.h.b16 %v2779
    %v5400 = vunpack.c.l.b16 %v2780
    %v5401 = vunpack.c.h.b16 %v2780
    %v5402 = vunpack.c.l.b16 %v2781
    %v5403 = vpack.c.b16 %v5008, %v5003
    %v5404 = vpack.c.b16 %v5009, %v5004
    %v5405 = vpack.c.b16 %v5010, %v5005
    %v5406 = vpack.c.b16 %v5011, %v5006
    %v5407 = vpack.c.b16 %v5012, %v5007
    %v5408 = vpack.c.b16 %v5018, %v5013
    %v5409 = vpack.c.b16 %v5019, %v5014
    %v5410 = vpack.c.b16 %v5020, %v5015
    %v5411 = vpack.c.b16 %v5021, %v5016
    %v5412 = vpack.c.b16 %v5022, %v5017
    %v5413 = vpack.c.b16 %v5028, %v5023
    %v5414 = vpack.c.b16 %v5029, %v5024
    %v5415 = vpack.c.b16 %v5030, %v5025
    %v5416 = vpack.c.b16 %v5031, %v5026
    %v5417 = vpack.c.b16 %v5032, %v5027
    %v5418 = vpack.c.b16 %v5038, %v5033
    %v5419 = vpack.c.b16 %v5039, %v5034
    %v5420 = vpack.c.b16 %v5040, %v5035
    %v5421 = vpack.c.b16 %v5041, %v5036
    %v5422 = vpack.c.b16 %v5042, %v5037
    %v5423 = vpack.c.b16 %v5048, %v5043
    %v5424 = vpack.c.b16 %v5049, %v5044
    %v5425 = vpack.c.b16 %v5050, %v5045
    %v5426 = vpack.c.b16 %v5051, %v5046
    %v5427 = vpack.c.b16 %v5052, %v5047
    %v5428 = vpack.c.b16 %v5058, %v5053
    %v5429 = vpack.c.b16 %v5059, %v5054
    %v5430 = vpack.c.b16 %v5060, %v5055
    %v5431 = vpack.c.b16 %v5061, %v5056
    %v5432 = vpack.c.b16 %v5062, %v5057
    %v5433 = vpack.c.b16 %v5068, %v5063
    %v5434 = vpack.c.b16 %v5069, %v5064
    %v5435 = vpack.c.b16 %v5070, %v5065
    %v5436 = vpack.c.b16 %v5071, %v5066
    %v5437 = vpack.c.b16 %v5072, %v5067
    %v5438 = vpack.c.b16 %v5078, %v5073
    %v5439 = vpack.c.b16 %v5079, %v5074
    %v5440 = vpack.c.b16 %v5080, %v5075
    %v5441 = vpack.c.b16 %v5081, %v5076
    %v5442 = vpack.c.b16 %v5082, %v5077
    %v5443 = vpack.c.b16 %v5088, %v5083
    %v5444 = vpack.c.b16 %v5089, %v5084
    %v5445 = vpack.c.b16 %v5090, %v5085
    %v5446 = vpack.c.b16 %v5091, %v5086
    %v5447 = vpack.c.b16 %v5092, %v5087
    %v5448 = vpack.c.b16 %v5098, %v5093
    %v5449 = vpack.c.b16 %v5099, %v5094
    %v5450 = vpack.c.b16 %v5100, %v5095
    %v5451 = vpack.c.b16 %v5101, %v5096
    %v5452 = vpack.c.b16 %v5102, %v5097
    %v5453 = vpack.c.b16 %v5108, %v5103
    %v5454 = vpack.c.b16 %v5109, %v5104
    %v5455 = vpack.c.b16 %v5110, %v5105
    %v5456 = vpack.c.b16 %v5111, %v5106
    %v5457 = vpack.c.b16 %v5112, %v5107
    %v5458 = vpack.c.b16 %v5118, %v5113
    %v5459 = vpack.c.b16 %v5119, %v5114
    %v5460 = vpack.c.b16 %v5120, %v5115
    %v5461 = vpack.c.b16 %v5121, %v5116
    %v5462 = vpack.c.b16 %v5122, %v5117
    %v5463 = vpack.c.b16 %v5128, %v5123
    %v5464 = vpack.c.b16 %v5129, %v5124
    %v5465 = vpack.c.b16 %v5130, %v5125
    %v5466 = vpack.c.b16 %v5131, %v5126
    %v5467 = vpack.c.b16 %v5132, %v5127
    %v5468 = vpack.c.b16 %v5138, %v5133
    %v5469 = vpack.c.b16 %v5139, %v5134
    %v5470 = vpack.c.b16 %v5140, %v5135
    %v5471 = vpack.c.b16 %v5141, %v5136
    %v5472 = vpack.c.b16 %v5142, %v5137
    %v5473 = vpack.c.b16 %v5148, %v5143
    %v5474 = vpack.c.b16 %v5149, %v5144
    %v5475 = vpack.c.b16 %v5150, %v5145
    %v5476 = vpack.c.b16 %v5151, %v5146
    %v5477 = vpack.c.b16 %v5152, %v5147
    %v5478 = vpack.c.b16 %v5158, %v5153
    %v5479 = vpack.c.b16 %v5159, %v5154
    %v5480 = vpack.c.b16 %v5160, %v5155
    %v5481 = vpack.c.b16 %v5161, %v5156
    %v5482 = vpack.c.b16 %v5162, %v5157
    %v5483 = vpack.c.b16 %v5168, %v5163
    %v5484 = vpack.c.b16 %v5169, %v5164
    %v5485 = vpack.c.b16 %v5170, %v5165
    %v5486 = vpack.c.b16 %v5171, %v5166
    %v5487 = vpack.c.b16 %v5172, %v5167
    %v5488 = vpack.c.b16 %v5178, %v5173
    %v5489 = vpack.c.b16 %v5179, %v5174
    %v5490 = vpack.c.b16 %v5180, %v5175
    %v5491 = vpack.c.b16 %v5181, %v5176
    %v5492 = vpack.c.b16 %v5182, %v5177
    %v5493 = vpack.c.b16 %v5188, %v5183
    %v5494 = vpack.c.b16 %v5189, %v5184
    %v5495 = vpack.c.b16 %v5190, %v5185
    %v5496 = vpack.c.b16 %v5191, %v5186
    %v5497 = vpack.c.b16 %v5192, %v5187
    %v5498 = vpack.c.b16 %v5198, %v5193
    %v5499 = vpack.c.b16 %v5199, %v5194
    %v5500 = vpack.c.b16 %v5200, %v5195
    %v5501 = vpack.c.b16 %v5201, %v5196
    %v5502 = vpack.c.b16 %v5202, %v5197
    %v5503 = vpack.c.b16 %v5208, %v5203
    %v5504 = vpack.c.b16 %v5209, %v5204
    %v5505 = vpack.c.b16 %v5210, %v5205
    %v5506 = vpack.c.b16 %v5211, %v5206
    %v5507 = vpack.c.b16 %v5212, %v5207
    %v5508 = vpack.c.b16 %v5218, %v5213
    %v5509 = vpack.c.b16 %v5219, %v5214
    %v5510 = vpack.c.b16 %v5220, %v5215
    %v5511 = vpack.c.b16 %v5221, %v5216
    %v5512 = vpack.c.b16 %v5222, %v5217
    %v5513 = vpack.c.b16 %v5228, %v5223
    %v5514 = vpack.c.b16 %v5229, %v5224
    %v5515 = vpack.c.b16 %v5230, %v5225
    %v5516 = vpack.c.b16 %v5231, %v5226
    %v5517 = vpack.c.b16 %v5232, %v5227
    %v5518 = vpack.c.b16 %v5238, %v5233
    %v5519 = vpack.c.b16 %v5239, %v5234
    %v5520 = vpack.c.b16 %v5240, %v5235
    %v5521 = vpack.c.b16 %v5241, %v5236
    %v5522 = vpack.c.b16 %v5242, %v5237
    %v5523 = vpack.c.b16 %v5248, %v5243
    %v5524 = vpack.c.b16 %v5249, %v5244
    %v5525 = vpack.c.b16 %v5250, %v5245
    %v5526 = vpack.c.b16 %v5251, %v5246
    %v5527 = vpack.c.b16 %v5252, %v5247
    %v5528 = vpack.c.b16 %v5258, %v5253
    %v5529 = vpack.c.b16 %v5259, %v5254
    %v5530 = vpack.c.b16 %v5260, %v5255
    %v5531 = vpack.c.b16 %v5261, %v5256
    %v5532 = vpack.c.b16 %v5262, %v5257
    %v5533 = vpack.c.b16 %v5268, %v5263
    %v5534 = vpack.c.b16 %v5269, %v5264
    %v5535 = vpack.c.b16 %v5270, %v5265
    %v5536 = vpack.c.b16 %v5271, %v5266
    %v5537 = vpack.c.b16 %v5272, %v5267
    %v5538 = vpack.c.b16 %v5278, %v5273
    %v5539 = vpack.c.b16 %v5279, %v5274
    %v5540 = vpack.c.b16 %v5280, %v5275
    %v5541 = vpack.c.b16 %v5281, %v5276
    %v5542 = vpack.c.b16 %v5282, %v5277
    %v5543 = vpack.c.b16 %v5288, %v5283
    %v5544 = vpack.c.b16 %v5289, %v5284
    %v5545 = vpack.c.b16 %v5290, %v5285
    %v5546 = vpack.c.b16 %v5291, %v5286
    %v5547 = vpack.c.b16 %v5292, %v5287
    %v5548 = vpack.c.b16 %v5298, %v5293
    %v5549 = vpack.c.b16 %v5299, %v5294
    %v5550 = vpack.c.b16 %v5300, %v5295
    %v5551 = vpack.c.b16 %v5301, %v5296
    %v5552 = vpack.c.b16 %v5302, %v5297
    %v5553 = vpack.c.b16 %v5308, %v5303
    %v5554 = vpack.c.b16 %v5309, %v5304
    %v5555 = vpack.c.b16 %v5310, %v5305
    %v5556 = vpack.c.b16 %v5311, %v5306
    %v5557 = vpack.c.b16 %v5312, %v5307
    %v5558 = vpack.c.b16 %v5318, %v5313
    %v5559 = vpack.c.b16 %v5319, %v5314
    %v5560 = vpack.c.b16 %v5320, %v5315
    %v5561 = vpack.c.b16 %v5321, %v5316
    %v5562 = vpack.c.b16 %v5322, %v5317
    %v5563 = vpack.c.b16 %v5328, %v5323
    %v5564 = vpack.c.b16 %v5329, %v5324
    %v5565 = vpack.c.b16 %v5330, %v5325
    %v5566 = vpack.c.b16 %v5331, %v5326
    %v5567 = vpack.c.b16 %v5332, %v5327
    %v5568 = vpack.c.b16 %v5338, %v5333
    %v5569 = vpack.c.b16 %v5339, %v5334
    %v5570 = vpack.c.b16 %v5340, %v5335
    %v5571 = vpack.c.b16 %v5341, %v5336
    %v5572 = vpack.c.b16 %v5342, %v5337
    %v5573 = vpack.c.b16 %v5348, %v5343
    %v5574 = vpack.c.b16 %v5349, %v5344
    %v5575 = vpack.c.b16 %v5350, %v5345
    %v5576 = vpack.c.b16 %v5351, %v5346
    %v5577 = vpack.c.b16 %v5352, %v5347
    %v5578 = vpack.c.b16 %v5358, %v5353
    %v5579 = vpack.c.b16 %v5359, %v5354
    %v5580 = vpack.c.b16 %v5360, %v5355
    %v5581 = vpack.c.b16 %v5361, %v5356
    %v5582 = vpack.c.b16 %v5362, %v5357
    %v5583 = vpack.c.b16 %v5368, %v5363
    %v5584 = vpack.c.b16 %v5369, %v5364
    %v5585 = vpack.c.b16 %v5370, %v5365
    %v5586 = vpack.c.b16 %v5371, %v5366
    %v5587 = vpack.c.b16 %v5372, %v5367
    %v5588 = vpack.c.b16 %v5378, %v5373
    %v5589 = vpack.c.b16 %v5379, %v5374
    %v5590 = vpack.c.b16 %v5380, %v5375
    %v5591 = vpack.c.b16 %v5381, %v5376
    %v5592 = vpack.c.b16 %v5382, %v5377
    %v5593 = vpack.c.b16 %v5388, %v5383
    %v5594 = vpack.c.b16 %v5389, %v5384
    %v5595 = vpack.c.b16 %v5390, %v5385
    %v5596 = vpack.c.b16 %v5391, %v5386
    %v5597 = vpack.c.b16 %v5392, %v5387
    %v5598 = vpack.c.b16 %v5398, %v5393
    %v5599 = vpack.c.b16 %v5399, %v5394
    %v5600 = vpack.c.b16 %v5400, %v5395
    %v5601 = vpack.c.b16 %v5401, %v5396
    %v5602 = vpack.c.b16 %v5402, %v5397
    %5803 = vmatprep.subr.bf16.mxu0 %v5439
    %5804 = vmatpush1.bf16.msra.mxu0 %v5438
    %5805 = vmatprep.subr.bf16.mxu0 %v5434
    %5806 = vmatpush1.bf16.msra.mxu0 %v5433
    %5807 = vmatprep.subr.bf16.mxu0 %v5429
    %5808 = vmatpush1.bf16.msra.mxu0 %v5428
    %5809 = vmatprep.subr.bf16.mxu0 %v5424
    %5810 = vmatpush1.bf16.msra.mxu0 %v5423
    %5811 = vmatprep.subr.bf16.mxu0 %v5419
    %5812 = vmatpush1.bf16.msra.mxu0 %v5418
    %5813 = vmatprep.subr.bf16.mxu0 %v5414
    %5814 = vmatpush1.bf16.msra.mxu0 %v5413
    %5815 = vmatprep.subr.bf16.mxu0 %v5409
    %5816 = vmatpush1.bf16.msra.mxu0 %v5408
    %5817 = vmatprep.subr.bf16.mxu0 %v5404
    %5818 = vmatpush1.bf16.msra.mxu0 %v5403
    %5819 = vmatprep.subr.bf16.mxu0 %v5479
    %5820 = vmatpush2.bf16.msra.mxu0 %v5478
    %5821 = vmatprep.subr.bf16.mxu0 %v5474
    %5822 = vmatpush2.bf16.msra.mxu0 %v5473
    %5823 = vmatprep.subr.bf16.mxu0 %v5469
    %5824 = vmatpush2.bf16.msra.mxu0 %v5468
    %5825 = vmatprep.subr.bf16.mxu0 %v5464
    %5826 = vmatpush2.bf16.msra.mxu0 %v5463
    %5827 = vmatprep.subr.bf16.mxu0 %v5459
    %5828 = vmatpush2.bf16.msra.mxu0 %v5458
    %5829 = vmatprep.subr.bf16.mxu0 %v5454
    %5830 = vmatpush2.bf16.msra.mxu0 %v5453
    %5831 = vmatprep.subr.bf16.mxu0 %v5449
    %5832 = vmatpush2.bf16.msra.mxu0 %v5448
    %5833 = vmatprep.subr.bf16.mxu0 %v5444
    %5834 = vmatpush2.bf16.msra.mxu0 %v5443
    %5835 = vmatprep.mubr.bf16.mxu0 %v4651
    %5836 = vmatmul.mubr.bf16.gmra.mxu0 %v4634
    %v5837 = vpop.f32.mrf.mxu0
    %v5838 = vadd.f32 %v4240, %v5837
    %v5839 = vpop.f32.mrf.mxu0
    %v5840 = vadd.f32 %v4242, %v5839
    %v5841 = vpop.f32.mrf.mxu0
    %v5842 = vadd.f32 %v4244, %v5841
    %v5843 = vpop.f32.mrf.mxu0
    %v5844 = vadd.f32 %v4246, %v5843
    %5845 = vmatprep.mubr.bf16.mxu0 %v4720
    %5846 = vmatmul.mubr.bf16.gmra.mxu0 %v4711
    %v5847 = vpop.f32.mrf.mxu0
    %v5848 = vadd.f32 %v4250, %v5847
    %v5849 = vpop.f32.mrf.mxu0
    %v5850 = vadd.f32 %v4252, %v5849
    %v5851 = vpop.f32.mrf.mxu0
    %v5852 = vadd.f32 %v4254, %v5851
    %v5853 = vpop.f32.mrf.mxu0
    %v5854 = vadd.f32 %v4256, %v5853
    %5855 = vmatprep.mubr.bf16.mxu0 %v4719
    %5856 = vmatmul.mubr.bf16.gmra.mxu0 %v4710
    %v5857 = vpop.f32.mrf.mxu0
    %v5858 = vadd.f32 %v4260, %v5857
    %v5859 = vpop.f32.mrf.mxu0
    %v5860 = vadd.f32 %v4262, %v5859
    %v5861 = vpop.f32.mrf.mxu0
    %v5862 = vpop.f32.mrf.mxu0
    %5863 = vdwg.mxu0
    %5864 = vmatprep.subr.bf16.mxu0 %v5519
    %5865 = vmatpush1.bf16.msra.mxu0 %v5518
    %5866 = vmatprep.subr.bf16.mxu0 %v5514
    %5867 = vmatpush1.bf16.msra.mxu0 %v5513
    %5868 = vmatprep.subr.bf16.mxu0 %v5509
    %5869 = vmatpush1.bf16.msra.mxu0 %v5508
    %5870 = vmatprep.subr.bf16.mxu0 %v5504
    %5871 = vmatpush1.bf16.msra.mxu0 %v5503
    %5872 = vmatprep.subr.bf16.mxu0 %v5499
    %5873 = vmatpush1.bf16.msra.mxu0 %v5498
    %5874 = vmatprep.subr.bf16.mxu0 %v5494
    %5875 = vmatpush1.bf16.msra.mxu0 %v5493
    %5876 = vmatprep.subr.bf16.mxu0 %v5489
    %5877 = vmatpush1.bf16.msra.mxu0 %v5488
    %5878 = vmatprep.subr.bf16.mxu0 %v5484
    %5879 = vmatpush1.bf16.msra.mxu0 %v5483
    %5880 = vmatprep.subr.bf16.mxu0 %v5559
    %5881 = vmatpush2.bf16.msra.mxu0 %v5558
    %5882 = vmatprep.subr.bf16.mxu0 %v5554
    %5883 = vmatpush2.bf16.msra.mxu0 %v5553
    %5884 = vmatprep.subr.bf16.mxu0 %v5549
    %5885 = vmatpush2.bf16.msra.mxu0 %v5548
    %5886 = vmatprep.subr.bf16.mxu0 %v5544
    %5887 = vmatpush2.bf16.msra.mxu0 %v5543
    %5888 = vmatprep.subr.bf16.mxu0 %v5539
    %5889 = vmatpush2.bf16.msra.mxu0 %v5538
    %5890 = vmatprep.subr.bf16.mxu0 %v5534
    %5891 = vmatpush2.bf16.msra.mxu0 %v5533
    %5892 = vmatprep.subr.bf16.mxu0 %v5529
    %5893 = vmatpush2.bf16.msra.mxu0 %v5528
    %5894 = vmatprep.subr.bf16.mxu0 %v5524
    %5895 = vmatpush2.bf16.msra.mxu0 %v5523
    %5896 = vmatprep.mubr.bf16.mxu0 %v4685
    %5897 = vmatmul.mubr.bf16.gmra.mxu0 %v4668
    %v5898 = vpop.f32.mrf.mxu0
    %v5899 = vadd.f32 %v5838, %v5898
    %v5900 = vpop.f32.mrf.mxu0
    %v5901 = vadd.f32 %v5840, %v5900
    %v5902 = vpop.f32.mrf.mxu0
    %v5903 = vadd.f32 %v5842, %v5902
    %v5904 = vpop.f32.mrf.mxu0
    %v5905 = vadd.f32 %v5844, %v5904
    %5906 = vmatprep.mubr.bf16.mxu0 %v4738
    %5907 = vmatmul.mubr.bf16.gmra.mxu0 %v4729
    %v5908 = vpop.f32.mrf.mxu0
    %v5909 = vadd.f32 %v5848, %v5908
    %v5910 = vpop.f32.mrf.mxu0
    %v5911 = vadd.f32 %v5850, %v5910
    %v5912 = vpop.f32.mrf.mxu0
    %v5913 = vadd.f32 %v5852, %v5912
    %v5914 = vpop.f32.mrf.mxu0
    %v5915 = vadd.f32 %v5854, %v5914
    %5916 = vmatprep.mubr.bf16.mxu0 %v4737
    %5917 = vmatmul.mubr.bf16.gmra.mxu0 %v4728
    %v5918 = vpop.f32.mrf.mxu0
    %v5919 = vadd.f32 %v5858, %v5918
    %v5920 = vpop.f32.mrf.mxu0
    %v5921 = vadd.f32 %v5860, %v5920
    %v5922 = vpop.f32.mrf.mxu0
    %v5923 = vpop.f32.mrf.mxu0
    %5924 = vdwg.mxu0
    %5925 = vmatprep.subr.bf16.mxu0 %v5599
    %5926 = vmatpush1.bf16.msra.mxu0 %v5598
    %5927 = vmatprep.subr.bf16.mxu0 %v5594
    %5928 = vmatpush1.bf16.msra.mxu0 %v5593
    %5929 = vmatprep.subr.bf16.mxu0 %v5589
    %5930 = vmatpush1.bf16.msra.mxu0 %v5588
    %5931 = vmatprep.subr.bf16.mxu0 %v5584
    %5932 = vmatpush1.bf16.msra.mxu0 %v5583
    %5933 = vmatprep.subr.bf16.mxu0 %v5579
    %5934 = vmatpush1.bf16.msra.mxu0 %v5578
    %5935 = vmatprep.subr.bf16.mxu0 %v5574
    %5936 = vmatpush1.bf16.msra.mxu0 %v5573
    %5937 = vmatprep.subr.bf16.mxu0 %v5569
    %5938 = vmatpush1.bf16.msra.mxu0 %v5568
    %5939 = vmatprep.subr.bf16.mxu0 %v5564
    %5940 = vmatpush1.bf16.msra.mxu0 %v5563
    %5941 = vmatprep.subr.bf16.mxu0 0
    %5942 = vmatpush2.bf16.msra.mxu0 0
    %5943 = vmatprep.subr.bf16.mxu0 0
    %5944 = vmatpush2.bf16.msra.mxu0 0
    %5945 = vmatprep.subr.bf16.mxu0 0
    %5946 = vmatpush2.bf16.msra.mxu0 0
    %5947 = vmatprep.subr.bf16.mxu0 0
    %5948 = vmatpush2.bf16.msra.mxu0 0
    %5949 = vmatprep.subr.bf16.mxu0 0
    %5950 = vmatpush2.bf16.msra.mxu0 0
    %5951 = vmatprep.subr.bf16.mxu0 0
    %5952 = vmatpush2.bf16.msra.mxu0 0
    %5953 = vmatprep.subr.bf16.mxu0 0
    %5954 = vmatpush2.bf16.msra.mxu0 0
    %5955 = vmatprep.subr.bf16.mxu0 0
    %5956 = vmatpush2.bf16.msra.mxu0 0
    %5957 = vmatprep.mubr.bf16.mxu0 0
    %5958 = vmatmul.mubr.bf16.gmra.mxu0 %v4702
    %v5959 = vpop.f32.mrf.mxu0
    %v5960 = vadd.f32 %v5899, %v5959
    %v5961 = vpop.f32.mrf.mxu0
    %v5962 = vadd.f32 %v5901, %v5961
    %v5963 = vpop.f32.mrf.mxu0
    %v5964 = vadd.f32 %v5903, %v5963
    %v5965 = vpop.f32.mrf.mxu0
    %v5966 = vadd.f32 %v5905, %v5965
    %5967 = vmatprep.mubr.bf16.mxu0 0
    %5968 = vmatmul.mubr.bf16.gmra.mxu0 %v4747
    %v5969 = vpop.f32.mrf.mxu0
    %v5970 = vadd.f32 %v5909, %v5969
    %v5971 = vpop.f32.mrf.mxu0
    %v5972 = vadd.f32 %v5911, %v5971
    %v5973 = vpop.f32.mrf.mxu0
    %v5974 = vadd.f32 %v5913, %v5973
    %v5975 = vpop.f32.mrf.mxu0
    %v5976 = vadd.f32 %v5915, %v5975
    %5977 = vmatprep.mubr.bf16.mxu0 0
    %5978 = vmatmul.mubr.bf16.gmra.mxu0 %v4746
    %v5979 = vpop.f32.mrf.mxu0
    %v5980 = vadd.f32 %v5919, %v5979
    %v5981 = vpop.f32.mrf.mxu0
    %v5982 = vadd.f32 %v5921, %v5981
    %v5983 = vpop.f32.mrf.mxu0
    %v5984 = vpop.f32.mrf.mxu0
    %5985 = vdwg.mxu0
    %5986 = vmatprep.subr.bf16.mxu0 %v5441
    %5987 = vmatpush1.bf16.msra.mxu0 %v5440
    %5988 = vmatprep.subr.bf16.mxu0 %v5436
    %5989 = vmatpush1.bf16.msra.mxu0 %v5435
    %5990 = vmatprep.subr.bf16.mxu0 %v5431
    %5991 = vmatpush1.bf16.msra.mxu0 %v5430
    %5992 = vmatprep.subr.bf16.mxu0 %v5426
    %5993 = vmatpush1.bf16.msra.mxu0 %v5425
    %5994 = vmatprep.subr.bf16.mxu0 %v5421
    %5995 = vmatpush1.bf16.msra.mxu0 %v5420
    %5996 = vmatprep.subr.bf16.mxu0 %v5416
    %5997 = vmatpush1.bf16.msra.mxu0 %v5415
    %5998 = vmatprep.subr.bf16.mxu0 %v5411
    %5999 = vmatpush1.bf16.msra.mxu0 %v5410
    %6000 = vmatprep.subr.bf16.mxu0 %v5406
    %6001 = vmatpush1.bf16.msra.mxu0 %v5405
    %6002 = vmatprep.subr.bf16.mxu0 %v5481
    %6003 = vmatpush2.bf16.msra.mxu0 %v5480
    %6004 = vmatprep.subr.bf16.mxu0 %v5476
    %6005 = vmatpush2.bf16.msra.mxu0 %v5475
    %6006 = vmatprep.subr.bf16.mxu0 %v5471
    %6007 = vmatpush2.bf16.msra.mxu0 %v5470
    %6008 = vmatprep.subr.bf16.mxu0 %v5466
    %6009 = vmatpush2.bf16.msra.mxu0 %v5465
    %6010 = vmatprep.subr.bf16.mxu0 %v5461
    %6011 = vmatpush2.bf16.msra.mxu0 %v5460
    %6012 = vmatprep.subr.bf16.mxu0 %v5456
    %6013 = vmatpush2.bf16.msra.mxu0 %v5455
    %6014 = vmatprep.subr.bf16.mxu0 %v5451
    %6015 = vmatpush2.bf16.msra.mxu0 %v5450
    %6016 = vmatprep.subr.bf16.mxu0 %v5446
    %6017 = vmatpush2.bf16.msra.mxu0 %v5445
    %6018 = vmatprep.mubr.bf16.mxu0 %v4651
    %6019 = vmatmul.mubr.bf16.gmra.mxu0 %v4634
    %v6020 = vpop.f32.mrf.mxu0
    %v6021 = vadd.f32 %v4423, %v6020
    %v6022 = vpop.f32.mrf.mxu0
    %v6023 = vadd.f32 %v4425, %v6022
    %v6024 = vpop.f32.mrf.mxu0
    %v6025 = vadd.f32 %v4427, %v6024
    %v6026 = vpop.f32.mrf.mxu0
    %v6027 = vadd.f32 %v4429, %v6026
    %6028 = vmatprep.mubr.bf16.mxu0 %v4720
    %6029 = vmatmul.mubr.bf16.gmra.mxu0 %v4711
    %v6030 = vpop.f32.mrf.mxu0
    %v6031 = vadd.f32 %v4433, %v6030
    %v6032 = vpop.f32.mrf.mxu0
    %v6033 = vadd.f32 %v4435, %v6032
    %v6034 = vpop.f32.mrf.mxu0
    %v6035 = vadd.f32 %v4437, %v6034
    %v6036 = vpop.f32.mrf.mxu0
    %v6037 = vadd.f32 %v4439, %v6036
    %6038 = vmatprep.mubr.bf16.mxu0 %v4719
    %6039 = vmatmul.mubr.bf16.gmra.mxu0 %v4710
    %v6040 = vpop.f32.mrf.mxu0
    %v6041 = vadd.f32 %v4443, %v6040
    %v6042 = vpop.f32.mrf.mxu0
    %v6043 = vadd.f32 %v4445, %v6042
    %v6044 = vpop.f32.mrf.mxu0
    %v6045 = vpop.f32.mrf.mxu0
    %6046 = vdwg.mxu0
    %6047 = vmatprep.subr.bf16.mxu0 %v5521
    %6048 = vmatpush1.bf16.msra.mxu0 %v5520
    %6049 = vmatprep.subr.bf16.mxu0 %v5516
    %6050 = vmatpush1.bf16.msra.mxu0 %v5515
    %6051 = vmatprep.subr.bf16.mxu0 %v5511
    %6052 = vmatpush1.bf16.msra.mxu0 %v5510
    %6053 = vmatprep.subr.bf16.mxu0 %v5506
    %6054 = vmatpush1.bf16.msra.mxu0 %v5505
    %6055 = vmatprep.subr.bf16.mxu0 %v5501
    %6056 = vmatpush1.bf16.msra.mxu0 %v5500
    %6057 = vmatprep.subr.bf16.mxu0 %v5496
    %6058 = vmatpush1.bf16.msra.mxu0 %v5495
    %6059 = vmatprep.subr.bf16.mxu0 %v5491
    %6060 = vmatpush1.bf16.msra.mxu0 %v5490
    %6061 = vmatprep.subr.bf16.mxu0 %v5486
    %6062 = vmatpush1.bf16.msra.mxu0 %v5485
    %6063 = vmatprep.subr.bf16.mxu0 %v5561
    %6064 = vmatpush2.bf16.msra.mxu0 %v5560
    %6065 = vmatprep.subr.bf16.mxu0 %v5556
    %6066 = vmatpush2.bf16.msra.mxu0 %v5555
    %6067 = vmatprep.subr.bf16.mxu0 %v5551
    %6068 = vmatpush2.bf16.msra.mxu0 %v5550
    %6069 = vmatprep.subr.bf16.mxu0 %v5546
    %6070 = vmatpush2.bf16.msra.mxu0 %v5545
    %6071 = vmatprep.subr.bf16.mxu0 %v5541
    %6072 = vmatpush2.bf16.msra.mxu0 %v5540
    %6073 = vmatprep.subr.bf16.mxu0 %v5536
    %6074 = vmatpush2.bf16.msra.mxu0 %v5535
    %6075 = vmatprep.subr.bf16.mxu0 %v5531
    %6076 = vmatpush2.bf16.msra.mxu0 %v5530
    %6077 = vmatprep.subr.bf16.mxu0 %v5526
    %6078 = vmatpush2.bf16.msra.mxu0 %v5525
    %6079 = vmatprep.mubr.bf16.mxu0 %v4685
    %6080 = vmatmul.mubr.bf16.gmra.mxu0 %v4668
    %v6081 = vpop.f32.mrf.mxu0
    %v6082 = vadd.f32 %v6021, %v6081
    %v6083 = vpop.f32.mrf.mxu0
    %v6084 = vadd.f32 %v6023, %v6083
    %v6085 = vpop.f32.mrf.mxu0
    %v6086 = vadd.f32 %v6025, %v6085
    %v6087 = vpop.f32.mrf.mxu0
    %v6088 = vadd.f32 %v6027, %v6087
    %6089 = vmatprep.mubr.bf16.mxu0 %v4738
    %6090 = vmatmul.mubr.bf16.gmra.mxu0 %v4729
    %v6091 = vpop.f32.mrf.mxu0
    %v6092 = vadd.f32 %v6031, %v6091
    %v6093 = vpop.f32.mrf.mxu0
    %v6094 = vadd.f32 %v6033, %v6093
    %v6095 = vpop.f32.mrf.mxu0
    %v6096 = vadd.f32 %v6035, %v6095
    %v6097 = vpop.f32.mrf.mxu0
    %v6098 = vadd.f32 %v6037, %v6097
    %6099 = vmatprep.mubr.bf16.mxu0 %v4737
    %6100 = vmatmul.mubr.bf16.gmra.mxu0 %v4728
    %v6101 = vpop.f32.mrf.mxu0
    %v6102 = vadd.f32 %v6041, %v6101
    %v6103 = vpop.f32.mrf.mxu0
    %v6104 = vadd.f32 %v6043, %v6103
    %v6105 = vpop.f32.mrf.mxu0
    %v6106 = vpop.f32.mrf.mxu0
    %6107 = vdwg.mxu0
    %6108 = vmatprep.subr.bf16.mxu0 %v5601
    %6109 = vmatpush1.bf16.msra.mxu0 %v5600
    %6110 = vmatprep.subr.bf16.mxu0 %v5596
    %6111 = vmatpush1.bf16.msra.mxu0 %v5595
    %6112 = vmatprep.subr.bf16.mxu0 %v5591
    %6113 = vmatpush1.bf16.msra.mxu0 %v5590
    %6114 = vmatprep.subr.bf16.mxu0 %v5586
    %6115 = vmatpush1.bf16.msra.mxu0 %v5585
    %6116 = vmatprep.subr.bf16.mxu0 %v5581
    %6117 = vmatpush1.bf16.msra.mxu0 %v5580
    %6118 = vmatprep.subr.bf16.mxu0 %v5576
    %6119 = vmatpush1.bf16.msra.mxu0 %v5575
    %6120 = vmatprep.subr.bf16.mxu0 %v5571
    %6121 = vmatpush1.bf16.msra.mxu0 %v5570
    %6122 = vmatprep.subr.bf16.mxu0 %v5566
    %6123 = vmatpush1.bf16.msra.mxu0 %v5565
    %6124 = vmatprep.subr.bf16.mxu0 0
    %6125 = vmatpush2.bf16.msra.mxu0 0
    %6126 = vmatprep.subr.bf16.mxu0 0
    %6127 = vmatpush2.bf16.msra.mxu0 0
    %6128 = vmatprep.subr.bf16.mxu0 0
    %6129 = vmatpush2.bf16.msra.mxu0 0
    %6130 = vmatprep.subr.bf16.mxu0 0
    %6131 = vmatpush2.bf16.msra.mxu0 0
    %6132 = vmatprep.subr.bf16.mxu0 0
    %6133 = vmatpush2.bf16.msra.mxu0 0
    %6134 = vmatprep.subr.bf16.mxu0 0
    %6135 = vmatpush2.bf16.msra.mxu0 0
    %6136 = vmatprep.subr.bf16.mxu0 0
    %6137 = vmatpush2.bf16.msra.mxu0 0
    %6138 = vmatprep.subr.bf16.mxu0 0
    %6139 = vmatpush2.bf16.msra.mxu0 0
    %6140 = vmatprep.mubr.bf16.mxu0 0
    %6141 = vmatmul.mubr.bf16.gmra.mxu0 %v4702
    %v6142 = vpop.f32.mrf.mxu0
    %v6143 = vadd.f32 %v6082, %v6142
    %v6144 = vpop.f32.mrf.mxu0
    %v6145 = vadd.f32 %v6084, %v6144
    %v6146 = vpop.f32.mrf.mxu0
    %v6147 = vadd.f32 %v6086, %v6146
    %v6148 = vpop.f32.mrf.mxu0
    %v6149 = vadd.f32 %v6088, %v6148
    %6150 = vmatprep.mubr.bf16.mxu0 0
    %6151 = vmatmul.mubr.bf16.gmra.mxu0 %v4747
    %v6152 = vpop.f32.mrf.mxu0
    %v6153 = vadd.f32 %v6092, %v6152
    %v6154 = vpop.f32.mrf.mxu0
    %v6155 = vadd.f32 %v6094, %v6154
    %v6156 = vpop.f32.mrf.mxu0
    %v6157 = vadd.f32 %v6096, %v6156
    %v6158 = vpop.f32.mrf.mxu0
    %v6159 = vadd.f32 %v6098, %v6158
    %6160 = vmatprep.mubr.bf16.mxu0 0
    %6161 = vmatmul.mubr.bf16.gmra.mxu0 %v4746
    %v6162 = vpop.f32.mrf.mxu0
    %v6163 = vadd.f32 %v6102, %v6162
    %v6164 = vpop.f32.mrf.mxu0
    %v6165 = vadd.f32 %v6104, %v6164
    %v6166 = vpop.f32.mrf.mxu0
    %v6167 = vpop.f32.mrf.mxu0
    %6168 = vdwg.mxu0
    %6169 = vmatprep.subr.bf16.mxu0 0
    %6170 = vmatpush1.bf16.msra.mxu0 %v5442
    %6171 = vmatprep.subr.bf16.mxu0 0
    %6172 = vmatpush1.bf16.msra.mxu0 %v5437
    %6173 = vmatprep.subr.bf16.mxu0 0
    %6174 = vmatpush1.bf16.msra.mxu0 %v5432
    %6175 = vmatprep.subr.bf16.mxu0 0
    %6176 = vmatpush1.bf16.msra.mxu0 %v5427
    %6177 = vmatprep.subr.bf16.mxu0 0
    %6178 = vmatpush1.bf16.msra.mxu0 %v5422
    %6179 = vmatprep.subr.bf16.mxu0 0
    %6180 = vmatpush1.bf16.msra.mxu0 %v5417
    %6181 = vmatprep.subr.bf16.mxu0 0
    %6182 = vmatpush1.bf16.msra.mxu0 %v5412
    %6183 = vmatprep.subr.bf16.mxu0 0
    %6184 = vmatpush1.bf16.msra.mxu0 %v5407
    %6185 = vmatprep.subr.bf16.mxu0 0
    %6186 = vmatpush2.bf16.msra.mxu0 %v5482
    %6187 = vmatprep.subr.bf16.mxu0 0
    %6188 = vmatpush2.bf16.msra.mxu0 %v5477
    %6189 = vmatprep.subr.bf16.mxu0 0
    %6190 = vmatpush2.bf16.msra.mxu0 %v5472
    %6191 = vmatprep.subr.bf16.mxu0 0
    %6192 = vmatpush2.bf16.msra.mxu0 %v5467
    %6193 = vmatprep.subr.bf16.mxu0 0
    %6194 = vmatpush2.bf16.msra.mxu0 %v5462
    %6195 = vmatprep.subr.bf16.mxu0 0
    %6196 = vmatpush2.bf16.msra.mxu0 %v5457
    %6197 = vmatprep.subr.bf16.mxu0 0
    %6198 = vmatpush2.bf16.msra.mxu0 %v5452
    %6199 = vmatprep.subr.bf16.mxu0 0
    %6200 = vmatpush2.bf16.msra.mxu0 %v5447
    %6201 = vmatprep.mubr.bf16.mxu0 %v4651
    %6202 = vmatmul.mubr.bf16.gmra.mxu0 %v4634
    %v6203 = vpop.f32.mrf.mxu0
    %v6204 = vadd.f32 %v4596, %v6203
    %v6205 = vpop.f32.mrf.mxu0
    %v6206 = vpop.f32.mrf.mxu0
    %v6207 = vadd.f32 %v4599, %v6206
    %v6208 = vpop.f32.mrf.mxu0
    %6209 = vmatprep.mubr.bf16.mxu0 %v4720
    %6210 = vmatmul.mubr.bf16.gmra.mxu0 %v4711
    %v6211 = vpop.f32.mrf.mxu0
    %v6212 = vadd.f32 %v4604, %v6211
    %v6213 = vpop.f32.mrf.mxu0
    %v6214 = vpop.f32.mrf.mxu0
    %v6215 = vadd.f32 %v4607, %v6214
    %v6216 = vpop.f32.mrf.mxu0
    %6217 = vmatprep.mubr.bf16.mxu0 %v4719
    %6218 = vmatmul.mubr.bf16.gmra.mxu0 %v4710
    %v6219 = vpop.f32.mrf.mxu0
    %v6220 = vadd.f32 %v4612, %v6219
    %v6221 = vpop.f32.mrf.mxu0
    %v6222 = vpop.f32.mrf.mxu0
    %v6223 = vpop.f32.mrf.mxu0
    %6224 = vdwg.mxu0
    %6225 = vmatprep.subr.bf16.mxu0 0
    %6226 = vmatpush1.bf16.msra.mxu0 %v5522
    %6227 = vmatprep.subr.bf16.mxu0 0
    %6228 = vmatpush1.bf16.msra.mxu0 %v5517
    %6229 = vmatprep.subr.bf16.mxu0 0
    %6230 = vmatpush1.bf16.msra.mxu0 %v5512
    %6231 = vmatprep.subr.bf16.mxu0 0
    %6232 = vmatpush1.bf16.msra.mxu0 %v5507
    %6233 = vmatprep.subr.bf16.mxu0 0
    %6234 = vmatpush1.bf16.msra.mxu0 %v5502
    %6235 = vmatprep.subr.bf16.mxu0 0
    %6236 = vmatpush1.bf16.msra.mxu0 %v5497
    %6237 = vmatprep.subr.bf16.mxu0 0
    %6238 = vmatpush1.bf16.msra.mxu0 %v5492
    %6239 = vmatprep.subr.bf16.mxu0 0
    %6240 = vmatpush1.bf16.msra.mxu0 %v5487
    %6241 = vmatprep.subr.bf16.mxu0 0
    %6242 = vmatpush2.bf16.msra.mxu0 %v5562
    %6243 = vmatprep.subr.bf16.mxu0 0
    %6244 = vmatpush2.bf16.msra.mxu0 %v5557
    %6245 = vmatprep.subr.bf16.mxu0 0
    %6246 = vmatpush2.bf16.msra.mxu0 %v5552
    %6247 = vmatprep.subr.bf16.mxu0 0
    %6248 = vmatpush2.bf16.msra.mxu0 %v5547
    %6249 = vmatprep.subr.bf16.mxu0 0
    %6250 = vmatpush2.bf16.msra.mxu0 %v5542
    %6251 = vmatprep.subr.bf16.mxu0 0
    %6252 = vmatpush2.bf16.msra.mxu0 %v5537
    %6253 = vmatprep.subr.bf16.mxu0 0
    %6254 = vmatpush2.bf16.msra.mxu0 %v5532
    %6255 = vmatprep.subr.bf16.mxu0 0
    %6256 = vmatpush2.bf16.msra.mxu0 %v5527
    %6257 = vmatprep.mubr.bf16.mxu0 %v4685
    %6258 = vmatmul.mubr.bf16.gmra.mxu0 %v4668
    %v6259 = vpop.f32.mrf.mxu0
    %v6260 = vadd.f32 %v6204, %v6259
    %v6261 = vpop.f32.mrf.mxu0
    %v6262 = vpop.f32.mrf.mxu0
    %v6263 = vadd.f32 %v6207, %v6262
    %v6264 = vpop.f32.mrf.mxu0
    %6265 = vmatprep.mubr.bf16.mxu0 %v4738
    %6266 = vmatmul.mubr.bf16.gmra.mxu0 %v4729
    %v6267 = vpop.f32.mrf.mxu0
    %v6268 = vadd.f32 %v6212, %v6267
    %v6269 = vpop.f32.mrf.mxu0
    %v6270 = vpop.f32.mrf.mxu0
    %v6271 = vadd.f32 %v6215, %v6270
    %v6272 = vpop.f32.mrf.mxu0
    %6273 = vmatprep.mubr.bf16.mxu0 %v4737
    %6274 = vmatmul.mubr.bf16.gmra.mxu0 %v4728
    %v6275 = vpop.f32.mrf.mxu0
    %v6276 = vadd.f32 %v6220, %v6275
    %v6277 = vpop.f32.mrf.mxu0
    %v6278 = vpop.f32.mrf.mxu0
    %v6279 = vpop.f32.mrf.mxu0
    %6280 = vdwg.mxu0
    %6281 = vmatprep.subr.bf16.mxu0 0
    %6282 = vmatpush1.bf16.msra.mxu0 %v5602
    %6283 = vmatprep.subr.bf16.mxu0 0
    %6284 = vmatpush1.bf16.msra.mxu0 %v5597
    %6285 = vmatprep.subr.bf16.mxu0 0
    %6286 = vmatpush1.bf16.msra.mxu0 %v5592
    %6287 = vmatprep.subr.bf16.mxu0 0
    %6288 = vmatpush1.bf16.msra.mxu0 %v5587
    %6289 = vmatprep.subr.bf16.mxu0 0
    %6290 = vmatpush1.bf16.msra.mxu0 %v5582
    %6291 = vmatprep.subr.bf16.mxu0 0
    %6292 = vmatpush1.bf16.msra.mxu0 %v5577
    %6293 = vmatprep.subr.bf16.mxu0 0
    %6294 = vmatpush1.bf16.msra.mxu0 %v5572
    %6295 = vmatprep.subr.bf16.mxu0 0
    %6296 = vmatpush1.bf16.msra.mxu0 %v5567
    %6297 = vmatprep.subr.bf16.mxu0 0
    %6298 = vmatpush2.bf16.msra.mxu0 0
    %6299 = vmatprep.subr.bf16.mxu0 0
    %6300 = vmatpush2.bf16.msra.mxu0 0
    %6301 = vmatprep.subr.bf16.mxu0 0
    %6302 = vmatpush2.bf16.msra.mxu0 0
    %6303 = vmatprep.subr.bf16.mxu0 0
    %6304 = vmatpush2.bf16.msra.mxu0 0
    %6305 = vmatprep.subr.bf16.mxu0 0
    %6306 = vmatpush2.bf16.msra.mxu0 0
    %6307 = vmatprep.subr.bf16.mxu0 0
    %6308 = vmatpush2.bf16.msra.mxu0 0
    %6309 = vmatprep.subr.bf16.mxu0 0
    %6310 = vmatpush2.bf16.msra.mxu0 0
    %6311 = vmatprep.subr.bf16.mxu0 0
    %6312 = vmatpush2.bf16.msra.mxu0 0
    %6313 = vmatprep.mubr.bf16.mxu0 0
    %6314 = vmatmul.mubr.bf16.gmra.mxu0 %v4702
    %v6315 = vpop.f32.mrf.mxu0
    %v6316 = vadd.f32 %v6260, %v6315
    %v6317 = vpop.f32.mrf.mxu0
    %v6318 = vpop.f32.mrf.mxu0
    %v6319 = vadd.f32 %v6263, %v6318
    %v6320 = vpop.f32.mrf.mxu0
    %6321 = vmatprep.mubr.bf16.mxu0 0
    %6322 = vmatmul.mubr.bf16.gmra.mxu0 %v4747
    %v6323 = vpop.f32.mrf.mxu0
    %v6324 = vadd.f32 %v6268, %v6323
    %v6325 = vpop.f32.mrf.mxu0
    %v6326 = vpop.f32.mrf.mxu0
    %v6327 = vadd.f32 %v6271, %v6326
    %v6328 = vpop.f32.mrf.mxu0
    %6329 = vmatprep.mubr.bf16.mxu0 0
    %6330 = vmatmul.mubr.bf16.gmra.mxu0 %v4746
    %v6331 = vpop.f32.mrf.mxu0
    %v6332 = vadd.f32 %v6276, %v6331
    %v6333 = vpop.f32.mrf.mxu0
    %v6334 = vpop.f32.mrf.mxu0
    %v6335 = vpop.f32.mrf.mxu0
    %6336 = vdwg.mxu0
    %v6337 = vld [vmem:[#allocation2 + $0x28] sm:$0xfe]
    %v6338 = vld [vmem:[#allocation2 + $0x30] sm:$0xfe]
    %v6339 = vld [vmem:[#allocation2 + $0x38] sm:$0xfe]
    %v6340 = vld [vmem:[#allocation2 + $0x40] sm:$0xfe]
    %v6341 = vld [vmem:[#allocation2 + $0x48] sm:$0xfe]
    %v6342 = vld [vmem:[#allocation2 + $0x50] sm:$0xff]
    %v6343 = vld [vmem:[#allocation2 + $0x58] sm:$0xff]
    %v6344 = vld [vmem:[#allocation2 + $0x60] sm:$0xff]
    %v6345 = vld [vmem:[#allocation2 + $0x68] sm:$0xff]
    %v6346 = vld [vmem:[#allocation2 + $0x70] sm:$0xff]
    %v6347 = vld [vmem:[#allocation2 + $0x78] sm:$0xff]
    %v6348 = vld [vmem:[#allocation2 + $0x80] sm:$0xff]
    %v6349 = vld [vmem:[#allocation2 + $0x88] sm:$0xff]
    %v6350 = vld [vmem:[#allocation2 + $0x90] sm:$0xff]
    %v6351 = vld [vmem:[#allocation2 + $0x98] sm:$0xff]
    %v6352 = vld [vmem:[#allocation2 + $0xa0] sm:$0xff]
    %v6353 = vld [vmem:[#allocation2 + $0xa8] sm:$0xff]
    %v6354 = vld [vmem:[#allocation2 + $0xb0] sm:$0xff]
    %v6355 = vld [vmem:[#allocation2 + $0xb8] sm:$0xff]
    %v6356 = vld [vmem:[#allocation2 + $0xc0] sm:$0xff]
    %v6357 = vld [vmem:[#allocation2 + $0xc8] sm:$0xff]
    %v6358 = vld [vmem:[#allocation2 + $0xd0] sm:$0xff]
    %v6359 = vld [vmem:[#allocation2 + $0xd8] sm:$0xff]
    %v6360 = vld [vmem:[#allocation2 + $0xe0] sm:$0xff]
    %v6361 = vld [vmem:[#allocation2 + $0xe8] sm:$0xff]
    %v6362 = vld [vmem:[#allocation2 + $0xf0] sm:$0x1]
    %v6363 = vld [vmem:[#allocation2 + $0xf8] sm:$0x1]
    %v6364 = vld [vmem:[#allocation2 + $0x100] sm:$0x1]
    %v6365 = vld [vmem:[#allocation2 + $0x108] sm:$0x1]
    %v6366 = vld [vmem:[#allocation2 + $0x110] sm:$0x1]
    %v6367 = vpack.c.bf16 %v6342, %v6337
    %v6368 = vpack.c.bf16 %v6343, %v6338
    %v6369 = vpack.c.bf16 %v6344, %v6339
    %v6370 = vpack.c.bf16 %v6345, %v6340
    %v6371 = vpack.c.bf16 %v6346, %v6341
    %v6372 = vpack.c.bf16 %v6352, %v6347
    %v6373 = vpack.c.bf16 %v6353, %v6348
    %v6374 = vpack.c.bf16 %v6354, %v6349
    %v6375 = vpack.c.bf16 %v6355, %v6350
    %v6376 = vpack.c.bf16 %v6356, %v6351
    %v6377 = vpack.c.bf16 %v6362, %v6357
    %v6378 = vpack.c.bf16 %v6363, %v6358
    %v6379 = vpack.c.bf16 %v6364, %v6359
    %v6380 = vpack.c.bf16 %v6365, %v6360
    %v6381 = vpack.c.bf16 %v6366, %v6361
    %s6382 = scalar_lea.vmem [#allocation4], 3200
    %v6383 = vld [vmem:[%s6382] sm:$0xff]
    %v6384 = vld [vmem:[%s6382 + $0x8] sm:$0xff]
    %v6385 = vld [vmem:[%s6382 + $0x10] sm:$0xf]
    %v6386 = vld [vmem:[%s6382 + $0x14] sm:$0xff]
    %v6387 = vld [vmem:[%s6382 + $0x1c] sm:$0xff]
    %v6388 = vld [vmem:[%s6382 + $0x24] sm:$0xf]
    %v6389 = vld [vmem:[%s6382 + $0x28] sm:$0xff]
    %v6390 = vld [vmem:[%s6382 + $0x30] sm:$0xff]
    %v6391 = vld [vmem:[%s6382 + $0x38] sm:$0xf]
    %v6392 = vld [vmem:[%s6382 + $0x3c] sm:$0xff]
    %v6393 = vld [vmem:[%s6382 + $0x44] sm:$0xff]
    %v6394 = vld [vmem:[%s6382 + $0x4c] sm:$0xf]
    %v6395 = vld [vmem:[%s6382 + $0x50] sm:$0xff]
    %v6396 = vld [vmem:[%s6382 + $0x58] sm:$0xff]
    %v6397 = vld [vmem:[%s6382 + $0x60] sm:$0xf]
    %v6398 = vld [vmem:[%s6382 + $0x64] sm:$0xff]
    %v6399 = vld [vmem:[%s6382 + $0x6c] sm:$0xff]
    %v6400 = vld [vmem:[%s6382 + $0x74] sm:$0xf]
    %v6401 = vld [vmem:[%s6382 + $0x78] sm:$0xff]
    %v6402 = vld [vmem:[%s6382 + $0x80] sm:$0xff]
    %v6403 = vld [vmem:[%s6382 + $0x88] sm:$0xf]
    %v6404 = vld [vmem:[%s6382 + $0x8c] sm:$0xff]
    %v6405 = vld [vmem:[%s6382 + $0x94] sm:$0xff]
    %v6406 = vld [vmem:[%s6382 + $0x9c] sm:$0xf]
    %v6407 = vld [vmem:[%s6382 + $0xa0] sm:$0xff]
    %v6408 = vld [vmem:[%s6382 + $0xa8] sm:$0xff]
    %v6409 = vld [vmem:[%s6382 + $0xb0] sm:$0xf]
    %v6410 = vld [vmem:[%s6382 + $0xb4] sm:$0xff]
    %v6411 = vld [vmem:[%s6382 + $0xbc] sm:$0xff]
    %v6412 = vld [vmem:[%s6382 + $0xc4] sm:$0xf]
    %v6413 = vld [vmem:[%s6382 + $0xc8] sm:$0xff]
    %v6414 = vld [vmem:[%s6382 + $0xd0] sm:$0xff]
    %v6415 = vld [vmem:[%s6382 + $0xd8] sm:$0xf]
    %v6416 = vld [vmem:[%s6382 + $0xdc] sm:$0xff]
    %v6417 = vld [vmem:[%s6382 + $0xe4] sm:$0xff]
    %v6418 = vld [vmem:[%s6382 + $0xec] sm:$0xf]
    %v6419 = vld [vmem:[%s6382 + $0xf0] sm:$0xff]
    %v6420 = vld [vmem:[%s6382 + $0xf8] sm:$0xff]
    %v6421 = vld [vmem:[%s6382 + $0x100] sm:$0xf]
    %v6422 = vld [vmem:[%s6382 + $0x104] sm:$0xff]
    %v6423 = vld [vmem:[%s6382 + $0x10c] sm:$0xff]
    %v6424 = vld [vmem:[%s6382 + $0x114] sm:$0xf]
    %v6425 = vld [vmem:[%s6382 + $0x118] sm:$0xff]
    %v6426 = vld [vmem:[%s6382 + $0x120] sm:$0xff]
    %v6427 = vld [vmem:[%s6382 + $0x128] sm:$0xf]
    %v6428 = vld [vmem:[%s6382 + $0x12c] sm:$0xff]
    %v6429 = vld [vmem:[%s6382 + $0x134] sm:$0xff]
    %v6430 = vld [vmem:[%s6382 + $0x13c] sm:$0xf]
    %v6431 = vld [vmem:[%s6382 + $0x140] sm:$0xff]
    %v6432 = vld [vmem:[%s6382 + $0x148] sm:$0xff]
    %v6433 = vld [vmem:[%s6382 + $0x150] sm:$0xf]
    %v6434 = vld [vmem:[%s6382 + $0x154] sm:$0xff]
    %v6435 = vld [vmem:[%s6382 + $0x15c] sm:$0xff]
    %v6436 = vld [vmem:[%s6382 + $0x164] sm:$0xf]
    %v6437 = vld [vmem:[%s6382 + $0x168] sm:$0xff]
    %v6438 = vld [vmem:[%s6382 + $0x170] sm:$0xff]
    %v6439 = vld [vmem:[%s6382 + $0x178] sm:$0xf]
    %v6440 = vld [vmem:[%s6382 + $0x17c] sm:$0xff]
    %v6441 = vld [vmem:[%s6382 + $0x184] sm:$0xff]
    %v6442 = vld [vmem:[%s6382 + $0x18c] sm:$0xf]
    %v6443 = vld [vmem:[%s6382 + $0x190] sm:$0xff]
    %v6444 = vld [vmem:[%s6382 + $0x198] sm:$0xff]
    %v6445 = vld [vmem:[%s6382 + $0x1a0] sm:$0xf]
    %v6446 = vld [vmem:[%s6382 + $0x1a4] sm:$0xff]
    %v6447 = vld [vmem:[%s6382 + $0x1ac] sm:$0xff]
    %v6448 = vld [vmem:[%s6382 + $0x1b4] sm:$0xf]
    %v6449 = vld [vmem:[%s6382 + $0x1b8] sm:$0xff]
    %v6450 = vld [vmem:[%s6382 + $0x1c0] sm:$0xff]
    %v6451 = vld [vmem:[%s6382 + $0x1c8] sm:$0xf]
    %v6452 = vld [vmem:[%s6382 + $0x1cc] sm:$0xff]
    %v6453 = vld [vmem:[%s6382 + $0x1d4] sm:$0xff]
    %v6454 = vld [vmem:[%s6382 + $0x1dc] sm:$0xf]
    %v6455 = vld [vmem:[%s6382 + $0x1e0] sm:$0xff]
    %v6456 = vld [vmem:[%s6382 + $0x1e8] sm:$0xff]
    %v6457 = vld [vmem:[%s6382 + $0x1f0] sm:$0xf]
    %v6458 = vld [vmem:[%s6382 + $0x1f4] sm:$0xff]
    %v6459 = vld [vmem:[%s6382 + $0x1fc] sm:$0xff]
    %v6460 = vld [vmem:[%s6382 + $0x204] sm:$0xf]
    %v6461 = vld [vmem:[%s6382 + $0x208] sm:$0xff]
    %v6462 = vld [vmem:[%s6382 + $0x210] sm:$0xff]
    %v6463 = vld [vmem:[%s6382 + $0x218] sm:$0xf]
    %v6464 = vld [vmem:[%s6382 + $0x21c] sm:$0xff]
    %v6465 = vld [vmem:[%s6382 + $0x224] sm:$0xff]
    %v6466 = vld [vmem:[%s6382 + $0x22c] sm:$0xf]
    %v6467 = vld [vmem:[%s6382 + $0x230] sm:$0xff]
    %v6468 = vld [vmem:[%s6382 + $0x238] sm:$0xff]
    %v6469 = vld [vmem:[%s6382 + $0x240] sm:$0xf]
    %v6470 = vld [vmem:[%s6382 + $0x244] sm:$0xff]
    %v6471 = vld [vmem:[%s6382 + $0x24c] sm:$0xff]
    %v6472 = vld [vmem:[%s6382 + $0x254] sm:$0xf]
    %v6473 = vld [vmem:[%s6382 + $0x258] sm:$0xff]
    %v6474 = vld [vmem:[%s6382 + $0x260] sm:$0xff]
    %v6475 = vld [vmem:[%s6382 + $0x268] sm:$0xf]
    %v6476 = vld [vmem:[%s6382 + $0x26c] sm:$0xff]
    %v6477 = vld [vmem:[%s6382 + $0x274] sm:$0xff]
    %v6478 = vld [vmem:[%s6382 + $0x27c] sm:$0xf]
    %v6479 = vld [vmem:[%s6382 + $0x280] sm:$0xff]
    %v6480 = vld [vmem:[%s6382 + $0x288] sm:$0xff]
    %v6481 = vld [vmem:[%s6382 + $0x290] sm:$0xf]
    %v6482 = vld [vmem:[%s6382 + $0x294] sm:$0xff]
    %v6483 = vld [vmem:[%s6382 + $0x29c] sm:$0xff]
    %v6484 = vld [vmem:[%s6382 + $0x2a4] sm:$0xf]
    %v6485 = vld [vmem:[%s6382 + $0x2a8] sm:$0xff]
    %v6486 = vld [vmem:[%s6382 + $0x2b0] sm:$0xff]
    %v6487 = vld [vmem:[%s6382 + $0x2b8] sm:$0xf]
    %v6488 = vld [vmem:[%s6382 + $0x2bc] sm:$0xff]
    %v6489 = vld [vmem:[%s6382 + $0x2c4] sm:$0xff]
    %v6490 = vld [vmem:[%s6382 + $0x2cc] sm:$0xf]
    %v6491 = vld [vmem:[%s6382 + $0x2d0] sm:$0xff]
    %v6492 = vld [vmem:[%s6382 + $0x2d8] sm:$0xff]
    %v6493 = vld [vmem:[%s6382 + $0x2e0] sm:$0xf]
    %v6494 = vld [vmem:[%s6382 + $0x2e4] sm:$0xff]
    %v6495 = vld [vmem:[%s6382 + $0x2ec] sm:$0xff]
    %v6496 = vld [vmem:[%s6382 + $0x2f4] sm:$0xf]
    %v6497 = vld [vmem:[%s6382 + $0x2f8] sm:$0xff]
    %v6498 = vld [vmem:[%s6382 + $0x300] sm:$0xff]
    %v6499 = vld [vmem:[%s6382 + $0x308] sm:$0xf]
    %v6500 = vld [vmem:[%s6382 + $0x30c] sm:$0xff]
    %v6501 = vld [vmem:[%s6382 + $0x314] sm:$0xff]
    %v6502 = vld [vmem:[%s6382 + $0x31c] sm:$0xf]
    %v6503 = vld [vmem:[%s6382 + $0x320] sm:$0xff]
    %v6504 = vld [vmem:[%s6382 + $0x328] sm:$0xff]
    %v6505 = vld [vmem:[%s6382 + $0x330] sm:$0xf]
    %v6506 = vld [vmem:[%s6382 + $0x334] sm:$0xff]
    %v6507 = vld [vmem:[%s6382 + $0x33c] sm:$0xff]
    %v6508 = vld [vmem:[%s6382 + $0x344] sm:$0xf]
    %v6509 = vld [vmem:[%s6382 + $0x348] sm:$0xff]
    %v6510 = vld [vmem:[%s6382 + $0x350] sm:$0xff]
    %v6511 = vld [vmem:[%s6382 + $0x358] sm:$0xf]
    %v6512 = vld [vmem:[%s6382 + $0x35c] sm:$0xff]
    %v6513 = vld [vmem:[%s6382 + $0x364] sm:$0xff]
    %v6514 = vld [vmem:[%s6382 + $0x36c] sm:$0xf]
    %v6515 = vld [vmem:[%s6382 + $0x370] sm:$0xff]
    %v6516 = vld [vmem:[%s6382 + $0x378] sm:$0xff]
    %v6517 = vld [vmem:[%s6382 + $0x380] sm:$0xf]
    %v6518 = vld [vmem:[%s6382 + $0x384] sm:$0xff]
    %v6519 = vld [vmem:[%s6382 + $0x38c] sm:$0xff]
    %v6520 = vld [vmem:[%s6382 + $0x394] sm:$0xf]
    %v6521 = vld [vmem:[%s6382 + $0x398] sm:$0xff]
    %v6522 = vld [vmem:[%s6382 + $0x3a0] sm:$0xff]
    %v6523 = vld [vmem:[%s6382 + $0x3a8] sm:$0xf]
    %v6524 = vld [vmem:[%s6382 + $0x3ac] sm:$0xff]
    %v6525 = vld [vmem:[%s6382 + $0x3b4] sm:$0xff]
    %v6526 = vld [vmem:[%s6382 + $0x3bc] sm:$0xf]
    %v6527 = vld [vmem:[%s6382 + $0x3c0] sm:$0xff]
    %v6528 = vld [vmem:[%s6382 + $0x3c8] sm:$0xff]
    %v6529 = vld [vmem:[%s6382 + $0x3d0] sm:$0xf]
    %v6530 = vld [vmem:[%s6382 + $0x3d4] sm:$0xff]
    %v6531 = vld [vmem:[%s6382 + $0x3dc] sm:$0xff]
    %v6532 = vld [vmem:[%s6382 + $0x3e4] sm:$0xf]
    %v6533 = vld [vmem:[%s6382 + $0x3e8] sm:$0xff]
    %v6534 = vld [vmem:[%s6382 + $0x3f0] sm:$0xff]
    %v6535 = vld [vmem:[%s6382 + $0x3f8] sm:$0xf]
    %v6536 = vld [vmem:[%s6382 + $0x3fc] sm:$0xff]
    %v6537 = vld [vmem:[%s6382 + $0x404] sm:$0xff]
    %v6538 = vld [vmem:[%s6382 + $0x40c] sm:$0xf]
    %v6539 = vld [vmem:[%s6382 + $0x410] sm:$0xff]
    %v6540 = vld [vmem:[%s6382 + $0x418] sm:$0xff]
    %v6541 = vld [vmem:[%s6382 + $0x420] sm:$0xf]
    %v6542 = vld [vmem:[%s6382 + $0x424] sm:$0xff]
    %v6543 = vld [vmem:[%s6382 + $0x42c] sm:$0xff]
    %v6544 = vld [vmem:[%s6382 + $0x434] sm:$0xf]
    %v6545 = vld [vmem:[%s6382 + $0x438] sm:$0xff]
    %v6546 = vld [vmem:[%s6382 + $0x440] sm:$0xff]
    %v6547 = vld [vmem:[%s6382 + $0x448] sm:$0xf]
    %v6548 = vld [vmem:[%s6382 + $0x44c] sm:$0xff]
    %v6549 = vld [vmem:[%s6382 + $0x454] sm:$0xff]
    %v6550 = vld [vmem:[%s6382 + $0x45c] sm:$0xf]
    %v6551 = vld [vmem:[%s6382 + $0x460] sm:$0xff]
    %v6552 = vld [vmem:[%s6382 + $0x468] sm:$0xff]
    %v6553 = vld [vmem:[%s6382 + $0x470] sm:$0xf]
    %v6554 = vld [vmem:[%s6382 + $0x474] sm:$0xff]
    %v6555 = vld [vmem:[%s6382 + $0x47c] sm:$0xff]
    %v6556 = vld [vmem:[%s6382 + $0x484] sm:$0xf]
    %v6557 = vld [vmem:[%s6382 + $0x488] sm:$0xff]
    %v6558 = vld [vmem:[%s6382 + $0x490] sm:$0xff]
    %v6559 = vld [vmem:[%s6382 + $0x498] sm:$0xf]
    %v6560 = vld [vmem:[%s6382 + $0x49c] sm:$0xff]
    %v6561 = vld [vmem:[%s6382 + $0x4a4] sm:$0xff]
    %v6562 = vld [vmem:[%s6382 + $0x4ac] sm:$0xf]
    %v6563 = vld [vmem:[%s6382 + $0x4b0] sm:$0xff]
    %v6564 = vld [vmem:[%s6382 + $0x4b8] sm:$0xff]
    %v6565 = vld [vmem:[%s6382 + $0x4c0] sm:$0xf]
    %v6566 = vld [vmem:[%s6382 + $0x4c4] sm:$0xff]
    %v6567 = vld [vmem:[%s6382 + $0x4cc] sm:$0xff]
    %v6568 = vld [vmem:[%s6382 + $0x4d4] sm:$0xf]
    %v6569 = vld [vmem:[%s6382 + $0x4d8] sm:$0xff]
    %v6570 = vld [vmem:[%s6382 + $0x4e0] sm:$0xff]
    %v6571 = vld [vmem:[%s6382 + $0x4e8] sm:$0xf]
    %v6572 = vld [vmem:[%s6382 + $0x4ec] sm:$0xff]
    %v6573 = vld [vmem:[%s6382 + $0x4f4] sm:$0xff]
    %v6574 = vld [vmem:[%s6382 + $0x4fc] sm:$0xf]
    %v6575 = vld [vmem:[%s6382 + $0x500] sm:$0xff]
    %v6576 = vld [vmem:[%s6382 + $0x508] sm:$0xff]
    %v6577 = vld [vmem:[%s6382 + $0x510] sm:$0xf]
    %v6578 = vld [vmem:[%s6382 + $0x514] sm:$0xff]
    %v6579 = vld [vmem:[%s6382 + $0x51c] sm:$0xff]
    %v6580 = vld [vmem:[%s6382 + $0x524] sm:$0xf]
    %v6581 = vld [vmem:[%s6382 + $0x528] sm:$0xff]
    %v6582 = vld [vmem:[%s6382 + $0x530] sm:$0xff]
    %v6583 = vld [vmem:[%s6382 + $0x538] sm:$0xf]
    %v6584 = vld [vmem:[%s6382 + $0x53c] sm:$0xff]
    %v6585 = vld [vmem:[%s6382 + $0x544] sm:$0xff]
    %v6586 = vld [vmem:[%s6382 + $0x54c] sm:$0xf]
    %v6587 = vld [vmem:[%s6382 + $0x550] sm:$0xff]
    %v6588 = vld [vmem:[%s6382 + $0x558] sm:$0xff]
    %v6589 = vld [vmem:[%s6382 + $0x560] sm:$0xf]
    %v6590 = vld [vmem:[%s6382 + $0x564] sm:$0xff]
    %v6591 = vld [vmem:[%s6382 + $0x56c] sm:$0xff]
    %v6592 = vld [vmem:[%s6382 + $0x574] sm:$0xf]
    %v6593 = vld [vmem:[%s6382 + $0x578] sm:$0xff]
    %v6594 = vld [vmem:[%s6382 + $0x580] sm:$0xff]
    %v6595 = vld [vmem:[%s6382 + $0x588] sm:$0xf]
    %v6596 = vld [vmem:[%s6382 + $0x58c] sm:$0xff]
    %v6597 = vld [vmem:[%s6382 + $0x594] sm:$0xff]
    %v6598 = vld [vmem:[%s6382 + $0x59c] sm:$0xf]
    %v6599 = vld [vmem:[%s6382 + $0x5a0] sm:$0xff]
    %v6600 = vld [vmem:[%s6382 + $0x5a8] sm:$0xff]
    %v6601 = vld [vmem:[%s6382 + $0x5b0] sm:$0xf]
    %v6602 = vld [vmem:[%s6382 + $0x5b4] sm:$0xff]
    %v6603 = vld [vmem:[%s6382 + $0x5bc] sm:$0xff]
    %v6604 = vld [vmem:[%s6382 + $0x5c4] sm:$0xf]
    %v6605 = vld [vmem:[%s6382 + $0x5c8] sm:$0xff]
    %v6606 = vld [vmem:[%s6382 + $0x5d0] sm:$0xff]
    %v6607 = vld [vmem:[%s6382 + $0x5d8] sm:$0xf]
    %v6608 = vld [vmem:[%s6382 + $0x5dc] sm:$0xff]
    %v6609 = vld [vmem:[%s6382 + $0x5e4] sm:$0xff]
    %v6610 = vld [vmem:[%s6382 + $0x5ec] sm:$0xf]
    %v6611 = vld [vmem:[%s6382 + $0x5f0] sm:$0xff]
    %v6612 = vld [vmem:[%s6382 + $0x5f8] sm:$0xff]
    %v6613 = vld [vmem:[%s6382 + $0x600] sm:$0xf]
    %v6614 = vld [vmem:[%s6382 + $0x604] sm:$0xff]
    %v6615 = vld [vmem:[%s6382 + $0x60c] sm:$0xff]
    %v6616 = vld [vmem:[%s6382 + $0x614] sm:$0xf]
    %v6617 = vld [vmem:[%s6382 + $0x618] sm:$0xff]
    %v6618 = vld [vmem:[%s6382 + $0x620] sm:$0xff]
    %v6619 = vld [vmem:[%s6382 + $0x628] sm:$0xf]
    %v6620 = vld [vmem:[%s6382 + $0x62c] sm:$0xff]
    %v6621 = vld [vmem:[%s6382 + $0x634] sm:$0xff]
    %v6622 = vld [vmem:[%s6382 + $0x63c] sm:$0xf]
    %vm6623 = vsmask.f32 7424
    %v6625 = vshrl.u32 %v6367, 16
    %v6627 = vshll.u32 %v6367, 16
    %v6629 = vrot.slane %v6627, 1
    %v6630 = vor.u32 %v6625, %v6629
    %v6632 = vshll.u32 %v6372, 16
    %v6634 = vrot.slane %v6632, 1
    %v6635 = vsel %vm6623, %v6630, %v6634
    %v6637 = vshrl.u32 %v6368, 16
    %v6639 = vshll.u32 %v6368, 16
    %v6641 = vrot.slane %v6639, 1
    %v6642 = vor.u32 %v6637, %v6641
    %v6644 = vshll.u32 %v6373, 16
    %v6646 = vrot.slane %v6644, 1
    %v6647 = vsel %vm6623, %v6642, %v6646
    %v6649 = vshrl.u32 %v6369, 16
    %v6651 = vshll.u32 %v6369, 16
    %v6653 = vrot.slane %v6651, 1
    %v6654 = vor.u32 %v6649, %v6653
    %v6656 = vshll.u32 %v6374, 16
    %v6658 = vrot.slane %v6656, 1
    %v6659 = vsel %vm6623, %v6654, %v6658
    %v6661 = vshrl.u32 %v6370, 16
    %v6663 = vshll.u32 %v6370, 16
    %v6665 = vrot.slane %v6663, 1
    %v6666 = vor.u32 %v6661, %v6665
    %v6668 = vshll.u32 %v6375, 16
    %v6670 = vrot.slane %v6668, 1
    %v6671 = vsel %vm6623, %v6666, %v6670
    %v6673 = vshrl.u32 %v6371, 16
    %v6675 = vshll.u32 %v6371, 16
    %v6677 = vrot.slane %v6675, 1
    %v6678 = vor.u32 %v6673, %v6677
    %v6680 = vshll.u32 %v6376, 16
    %v6682 = vrot.slane %v6680, 1
    %v6683 = vsel %vm6623, %v6678, %v6682
    %v6684 = vshrl.u32 %v6372, 16
    %v6686 = vor.u32 %v6684, %v6634
    %v6688 = vshll.u32 %v6377, 16
    %v6690 = vrot.slane %v6688, 1
    %v6691 = vsel %vm6623, %v6686, %v6690
    %v6692 = vshrl.u32 %v6373, 16
    %v6694 = vor.u32 %v6692, %v6646
    %v6696 = vshll.u32 %v6378, 16
    %v6698 = vrot.slane %v6696, 1
    %v6699 = vsel %vm6623, %v6694, %v6698
    %v6700 = vshrl.u32 %v6374, 16
    %v6702 = vor.u32 %v6700, %v6658
    %v6704 = vshll.u32 %v6379, 16
    %v6706 = vrot.slane %v6704, 1
    %v6707 = vsel %vm6623, %v6702, %v6706
    %v6708 = vshrl.u32 %v6375, 16
    %v6710 = vor.u32 %v6708, %v6670
    %v6712 = vshll.u32 %v6380, 16
    %v6714 = vrot.slane %v6712, 1
    %v6715 = vsel %vm6623, %v6710, %v6714
    %v6716 = vshrl.u32 %v6376, 16
    %v6718 = vor.u32 %v6716, %v6682
    %v6720 = vshll.u32 %v6381, 16
    %v6722 = vrot.slane %v6720, 1
    %v6723 = vsel %vm6623, %v6718, %v6722
    %v6724 = vshrl.u32 %v6377, 16
    %v6726 = vor.u32 %v6724, %v6690
    %v6727 = vshrl.u32 %v6378, 16
    %v6729 = vor.u32 %v6727, %v6698
    %v6730 = vshrl.u32 %v6379, 16
    %v6732 = vor.u32 %v6730, %v6706
    %v6733 = vshrl.u32 %v6380, 16
    %v6735 = vor.u32 %v6733, %v6714
    %v6736 = vshrl.u32 %v6381, 16
    %v6738 = vor.u32 %v6736, %v6722
    %v6994 = vunpack.c.l.b16 %v6383
    %v6995 = vunpack.c.h.b16 %v6383
    %v6996 = vunpack.c.l.b16 %v6384
    %v6997 = vunpack.c.h.b16 %v6384
    %v6998 = vunpack.c.l.b16 %v6385
    %v6999 = vunpack.c.l.b16 %v6386
    %v7000 = vunpack.c.h.b16 %v6386
    %v7001 = vunpack.c.l.b16 %v6387
    %v7002 = vunpack.c.h.b16 %v6387
    %v7003 = vunpack.c.l.b16 %v6388
    %v7004 = vunpack.c.l.b16 %v6389
    %v7005 = vunpack.c.h.b16 %v6389
    %v7006 = vunpack.c.l.b16 %v6390
    %v7007 = vunpack.c.h.b16 %v6390
    %v7008 = vunpack.c.l.b16 %v6391
    %v7009 = vunpack.c.l.b16 %v6392
    %v7010 = vunpack.c.h.b16 %v6392
    %v7011 = vunpack.c.l.b16 %v6393
    %v7012 = vunpack.c.h.b16 %v6393
    %v7013 = vunpack.c.l.b16 %v6394
    %v7014 = vunpack.c.l.b16 %v6395
    %v7015 = vunpack.c.h.b16 %v6395
    %v7016 = vunpack.c.l.b16 %v6396
    %v7017 = vunpack.c.h.b16 %v6396
    %v7018 = vunpack.c.l.b16 %v6397
    %v7019 = vunpack.c.l.b16 %v6398
    %v7020 = vunpack.c.h.b16 %v6398
    %v7021 = vunpack.c.l.b16 %v6399
    %v7022 = vunpack.c.h.b16 %v6399
    %v7023 = vunpack.c.l.b16 %v6400
    %v7024 = vunpack.c.l.b16 %v6401
    %v7025 = vunpack.c.h.b16 %v6401
    %v7026 = vunpack.c.l.b16 %v6402
    %v7027 = vunpack.c.h.b16 %v6402
    %v7028 = vunpack.c.l.b16 %v6403
    %v7029 = vunpack.c.l.b16 %v6404
    %v7030 = vunpack.c.h.b16 %v6404
    %v7031 = vunpack.c.l.b16 %v6405
    %v7032 = vunpack.c.h.b16 %v6405
    %v7033 = vunpack.c.l.b16 %v6406
    %v7034 = vunpack.c.l.b16 %v6407
    %v7035 = vunpack.c.h.b16 %v6407
    %v7036 = vunpack.c.l.b16 %v6408
    %v7037 = vunpack.c.h.b16 %v6408
    %v7038 = vunpack.c.l.b16 %v6409
    %v7039 = vunpack.c.l.b16 %v6410
    %v7040 = vunpack.c.h.b16 %v6410
    %v7041 = vunpack.c.l.b16 %v6411
    %v7042 = vunpack.c.h.b16 %v6411
    %v7043 = vunpack.c.l.b16 %v6412
    %v7044 = vunpack.c.l.b16 %v6413
    %v7045 = vunpack.c.h.b16 %v6413
    %v7046 = vunpack.c.l.b16 %v6414
    %v7047 = vunpack.c.h.b16 %v6414
    %v7048 = vunpack.c.l.b16 %v6415
    %v7049 = vunpack.c.l.b16 %v6416
    %v7050 = vunpack.c.h.b16 %v6416
    %v7051 = vunpack.c.l.b16 %v6417
    %v7052 = vunpack.c.h.b16 %v6417
    %v7053 = vunpack.c.l.b16 %v6418
    %v7054 = vunpack.c.l.b16 %v6419
    %v7055 = vunpack.c.h.b16 %v6419
    %v7056 = vunpack.c.l.b16 %v6420
    %v7057 = vunpack.c.h.b16 %v6420
    %v7058 = vunpack.c.l.b16 %v6421
    %v7059 = vunpack.c.l.b16 %v6422
    %v7060 = vunpack.c.h.b16 %v6422
    %v7061 = vunpack.c.l.b16 %v6423
    %v7062 = vunpack.c.h.b16 %v6423
    %v7063 = vunpack.c.l.b16 %v6424
    %v7064 = vunpack.c.l.b16 %v6425
    %v7065 = vunpack.c.h.b16 %v6425
    %v7066 = vunpack.c.l.b16 %v6426
    %v7067 = vunpack.c.h.b16 %v6426
    %v7068 = vunpack.c.l.b16 %v6427
    %v7069 = vunpack.c.l.b16 %v6428
    %v7070 = vunpack.c.h.b16 %v6428
    %v7071 = vunpack.c.l.b16 %v6429
    %v7072 = vunpack.c.h.b16 %v6429
    %v7073 = vunpack.c.l.b16 %v6430
    %v7074 = vunpack.c.l.b16 %v6431
    %v7075 = vunpack.c.h.b16 %v6431
    %v7076 = vunpack.c.l.b16 %v6432
    %v7077 = vunpack.c.h.b16 %v6432
    %v7078 = vunpack.c.l.b16 %v6433
    %v7079 = vunpack.c.l.b16 %v6434
    %v7080 = vunpack.c.h.b16 %v6434
    %v7081 = vunpack.c.l.b16 %v6435
    %v7082 = vunpack.c.h.b16 %v6435
    %v7083 = vunpack.c.l.b16 %v6436
    %v7084 = vunpack.c.l.b16 %v6437
    %v7085 = vunpack.c.h.b16 %v6437
    %v7086 = vunpack.c.l.b16 %v6438
    %v7087 = vunpack.c.h.b16 %v6438
    %v7088 = vunpack.c.l.b16 %v6439
    %v7089 = vunpack.c.l.b16 %v6440
    %v7090 = vunpack.c.h.b16 %v6440
    %v7091 = vunpack.c.l.b16 %v6441
    %v7092 = vunpack.c.h.b16 %v6441
    %v7093 = vunpack.c.l.b16 %v6442
    %v7094 = vunpack.c.l.b16 %v6443
    %v7095 = vunpack.c.h.b16 %v6443
    %v7096 = vunpack.c.l.b16 %v6444
    %v7097 = vunpack.c.h.b16 %v6444
    %v7098 = vunpack.c.l.b16 %v6445
    %v7099 = vunpack.c.l.b16 %v6446
    %v7100 = vunpack.c.h.b16 %v6446
    %v7101 = vunpack.c.l.b16 %v6447
    %v7102 = vunpack.c.h.b16 %v6447
    %v7103 = vunpack.c.l.b16 %v6448
    %v7104 = vunpack.c.l.b16 %v6449
    %v7105 = vunpack.c.h.b16 %v6449
    %v7106 = vunpack.c.l.b16 %v6450
    %v7107 = vunpack.c.h.b16 %v6450
    %v7108 = vunpack.c.l.b16 %v6451
    %v7109 = vunpack.c.l.b16 %v6452
    %v7110 = vunpack.c.h.b16 %v6452
    %v7111 = vunpack.c.l.b16 %v6453
    %v7112 = vunpack.c.h.b16 %v6453
    %v7113 = vunpack.c.l.b16 %v6454
    %v7114 = vunpack.c.l.b16 %v6455
    %v7115 = vunpack.c.h.b16 %v6455
    %v7116 = vunpack.c.l.b16 %v6456
    %v7117 = vunpack.c.h.b16 %v6456
    %v7118 = vunpack.c.l.b16 %v6457
    %v7119 = vunpack.c.l.b16 %v6458
    %v7120 = vunpack.c.h.b16 %v6458
    %v7121 = vunpack.c.l.b16 %v6459
    %v7122 = vunpack.c.h.b16 %v6459
    %v7123 = vunpack.c.l.b16 %v6460
    %v7124 = vunpack.c.l.b16 %v6461
    %v7125 = vunpack.c.h.b16 %v6461
    %v7126 = vunpack.c.l.b16 %v6462
    %v7127 = vunpack.c.h.b16 %v6462
    %v7128 = vunpack.c.l.b16 %v6463
    %v7129 = vunpack.c.l.b16 %v6464
    %v7130 = vunpack.c.h.b16 %v6464
    %v7131 = vunpack.c.l.b16 %v6465
    %v7132 = vunpack.c.h.b16 %v6465
    %v7133 = vunpack.c.l.b16 %v6466
    %v7134 = vunpack.c.l.b16 %v6467
    %v7135 = vunpack.c.h.b16 %v6467
    %v7136 = vunpack.c.l.b16 %v6468
    %v7137 = vunpack.c.h.b16 %v6468
    %v7138 = vunpack.c.l.b16 %v6469
    %v7139 = vunpack.c.l.b16 %v6470
    %v7140 = vunpack.c.h.b16 %v6470
    %v7141 = vunpack.c.l.b16 %v6471
    %v7142 = vunpack.c.h.b16 %v6471
    %v7143 = vunpack.c.l.b16 %v6472
    %v7144 = vunpack.c.l.b16 %v6473
    %v7145 = vunpack.c.h.b16 %v6473
    %v7146 = vunpack.c.l.b16 %v6474
    %v7147 = vunpack.c.h.b16 %v6474
    %v7148 = vunpack.c.l.b16 %v6475
    %v7149 = vunpack.c.l.b16 %v6476
    %v7150 = vunpack.c.h.b16 %v6476
    %v7151 = vunpack.c.l.b16 %v6477
    %v7152 = vunpack.c.h.b16 %v6477
    %v7153 = vunpack.c.l.b16 %v6478
    %v7154 = vunpack.c.l.b16 %v6479
    %v7155 = vunpack.c.h.b16 %v6479
    %v7156 = vunpack.c.l.b16 %v6480
    %v7157 = vunpack.c.h.b16 %v6480
    %v7158 = vunpack.c.l.b16 %v6481
    %v7159 = vunpack.c.l.b16 %v6482
    %v7160 = vunpack.c.h.b16 %v6482
    %v7161 = vunpack.c.l.b16 %v6483
    %v7162 = vunpack.c.h.b16 %v6483
    %v7163 = vunpack.c.l.b16 %v6484
    %v7164 = vunpack.c.l.b16 %v6485
    %v7165 = vunpack.c.h.b16 %v6485
    %v7166 = vunpack.c.l.b16 %v6486
    %v7167 = vunpack.c.h.b16 %v6486
    %v7168 = vunpack.c.l.b16 %v6487
    %v7169 = vunpack.c.l.b16 %v6488
    %v7170 = vunpack.c.h.b16 %v6488
    %v7171 = vunpack.c.l.b16 %v6489
    %v7172 = vunpack.c.h.b16 %v6489
    %v7173 = vunpack.c.l.b16 %v6490
    %v7174 = vunpack.c.l.b16 %v6491
    %v7175 = vunpack.c.h.b16 %v6491
    %v7176 = vunpack.c.l.b16 %v6492
    %v7177 = vunpack.c.h.b16 %v6492
    %v7178 = vunpack.c.l.b16 %v6493
    %v7179 = vunpack.c.l.b16 %v6494
    %v7180 = vunpack.c.h.b16 %v6494
    %v7181 = vunpack.c.l.b16 %v6495
    %v7182 = vunpack.c.h.b16 %v6495
    %v7183 = vunpack.c.l.b16 %v6496
    %v7184 = vunpack.c.l.b16 %v6497
    %v7185 = vunpack.c.h.b16 %v6497
    %v7186 = vunpack.c.l.b16 %v6498
    %v7187 = vunpack.c.h.b16 %v6498
    %v7188 = vunpack.c.l.b16 %v6499
    %v7189 = vunpack.c.l.b16 %v6500
    %v7190 = vunpack.c.h.b16 %v6500
    %v7191 = vunpack.c.l.b16 %v6501
    %v7192 = vunpack.c.h.b16 %v6501
    %v7193 = vunpack.c.l.b16 %v6502
    %v7194 = vunpack.c.l.b16 %v6503
    %v7195 = vunpack.c.h.b16 %v6503
    %v7196 = vunpack.c.l.b16 %v6504
    %v7197 = vunpack.c.h.b16 %v6504
    %v7198 = vunpack.c.l.b16 %v6505
    %v7199 = vunpack.c.l.b16 %v6506
    %v7200 = vunpack.c.h.b16 %v6506
    %v7201 = vunpack.c.l.b16 %v6507
    %v7202 = vunpack.c.h.b16 %v6507
    %v7203 = vunpack.c.l.b16 %v6508
    %v7204 = vunpack.c.l.b16 %v6509
    %v7205 = vunpack.c.h.b16 %v6509
    %v7206 = vunpack.c.l.b16 %v6510
    %v7207 = vunpack.c.h.b16 %v6510
    %v7208 = vunpack.c.l.b16 %v6511
    %v7209 = vunpack.c.l.b16 %v6512
    %v7210 = vunpack.c.h.b16 %v6512
    %v7211 = vunpack.c.l.b16 %v6513
    %v7212 = vunpack.c.h.b16 %v6513
    %v7213 = vunpack.c.l.b16 %v6514
    %v7214 = vunpack.c.l.b16 %v6515
    %v7215 = vunpack.c.h.b16 %v6515
    %v7216 = vunpack.c.l.b16 %v6516
    %v7217 = vunpack.c.h.b16 %v6516
    %v7218 = vunpack.c.l.b16 %v6517
    %v7219 = vunpack.c.l.b16 %v6518
    %v7220 = vunpack.c.h.b16 %v6518
    %v7221 = vunpack.c.l.b16 %v6519
    %v7222 = vunpack.c.h.b16 %v6519
    %v7223 = vunpack.c.l.b16 %v6520
    %v7224 = vunpack.c.l.b16 %v6521
    %v7225 = vunpack.c.h.b16 %v6521
    %v7226 = vunpack.c.l.b16 %v6522
    %v7227 = vunpack.c.h.b16 %v6522
    %v7228 = vunpack.c.l.b16 %v6523
    %v7229 = vunpack.c.l.b16 %v6524
    %v7230 = vunpack.c.h.b16 %v6524
    %v7231 = vunpack.c.l.b16 %v6525
    %v7232 = vunpack.c.h.b16 %v6525
    %v7233 = vunpack.c.l.b16 %v6526
    %v7234 = vunpack.c.l.b16 %v6527
    %v7235 = vunpack.c.h.b16 %v6527
    %v7236 = vunpack.c.l.b16 %v6528
    %v7237 = vunpack.c.h.b16 %v6528
    %v7238 = vunpack.c.l.b16 %v6529
    %v7239 = vunpack.c.l.b16 %v6530
    %v7240 = vunpack.c.h.b16 %v6530
    %v7241 = vunpack.c.l.b16 %v6531
    %v7242 = vunpack.c.h.b16 %v6531
    %v7243 = vunpack.c.l.b16 %v6532
    %v7244 = vunpack.c.l.b16 %v6533
    %v7245 = vunpack.c.h.b16 %v6533
    %v7246 = vunpack.c.l.b16 %v6534
    %v7247 = vunpack.c.h.b16 %v6534
    %v7248 = vunpack.c.l.b16 %v6535
    %v7249 = vunpack.c.l.b16 %v6536
    %v7250 = vunpack.c.h.b16 %v6536
    %v7251 = vunpack.c.l.b16 %v6537
    %v7252 = vunpack.c.h.b16 %v6537
    %v7253 = vunpack.c.l.b16 %v6538
    %v7254 = vunpack.c.l.b16 %v6539
    %v7255 = vunpack.c.h.b16 %v6539
    %v7256 = vunpack.c.l.b16 %v6540
    %v7257 = vunpack.c.h.b16 %v6540
    %v7258 = vunpack.c.l.b16 %v6541
    %v7259 = vunpack.c.l.b16 %v6542
    %v7260 = vunpack.c.h.b16 %v6542
    %v7261 = vunpack.c.l.b16 %v6543
    %v7262 = vunpack.c.h.b16 %v6543
    %v7263 = vunpack.c.l.b16 %v6544
    %v7264 = vunpack.c.l.b16 %v6545
    %v7265 = vunpack.c.h.b16 %v6545
    %v7266 = vunpack.c.l.b16 %v6546
    %v7267 = vunpack.c.h.b16 %v6546
    %v7268 = vunpack.c.l.b16 %v6547
    %v7269 = vunpack.c.l.b16 %v6548
    %v7270 = vunpack.c.h.b16 %v6548
    %v7271 = vunpack.c.l.b16 %v6549
    %v7272 = vunpack.c.h.b16 %v6549
    %v7273 = vunpack.c.l.b16 %v6550
    %v7274 = vunpack.c.l.b16 %v6551
    %v7275 = vunpack.c.h.b16 %v6551
    %v7276 = vunpack.c.l.b16 %v6552
    %v7277 = vunpack.c.h.b16 %v6552
    %v7278 = vunpack.c.l.b16 %v6553
    %v7279 = vunpack.c.l.b16 %v6554
    %v7280 = vunpack.c.h.b16 %v6554
    %v7281 = vunpack.c.l.b16 %v6555
    %v7282 = vunpack.c.h.b16 %v6555
    %v7283 = vunpack.c.l.b16 %v6556
    %v7284 = vunpack.c.l.b16 %v6557
    %v7285 = vunpack.c.h.b16 %v6557
    %v7286 = vunpack.c.l.b16 %v6558
    %v7287 = vunpack.c.h.b16 %v6558
    %v7288 = vunpack.c.l.b16 %v6559
    %v7289 = vunpack.c.l.b16 %v6560
    %v7290 = vunpack.c.h.b16 %v6560
    %v7291 = vunpack.c.l.b16 %v6561
    %v7292 = vunpack.c.h.b16 %v6561
    %v7293 = vunpack.c.l.b16 %v6562
    %v7294 = vunpack.c.l.b16 %v6563
    %v7295 = vunpack.c.h.b16 %v6563
    %v7296 = vunpack.c.l.b16 %v6564
    %v7297 = vunpack.c.h.b16 %v6564
    %v7298 = vunpack.c.l.b16 %v6565
    %v7299 = vunpack.c.l.b16 %v6566
    %v7300 = vunpack.c.h.b16 %v6566
    %v7301 = vunpack.c.l.b16 %v6567
    %v7302 = vunpack.c.h.b16 %v6567
    %v7303 = vunpack.c.l.b16 %v6568
    %v7304 = vunpack.c.l.b16 %v6569
    %v7305 = vunpack.c.h.b16 %v6569
    %v7306 = vunpack.c.l.b16 %v6570
    %v7307 = vunpack.c.h.b16 %v6570
    %v7308 = vunpack.c.l.b16 %v6571
    %v7309 = vunpack.c.l.b16 %v6572
    %v7310 = vunpack.c.h.b16 %v6572
    %v7311 = vunpack.c.l.b16 %v6573
    %v7312 = vunpack.c.h.b16 %v6573
    %v7313 = vunpack.c.l.b16 %v6574
    %v7314 = vunpack.c.l.b16 %v6575
    %v7315 = vunpack.c.h.b16 %v6575
    %v7316 = vunpack.c.l.b16 %v6576
    %v7317 = vunpack.c.h.b16 %v6576
    %v7318 = vunpack.c.l.b16 %v6577
    %v7319 = vunpack.c.l.b16 %v6578
    %v7320 = vunpack.c.h.b16 %v6578
    %v7321 = vunpack.c.l.b16 %v6579
    %v7322 = vunpack.c.h.b16 %v6579
    %v7323 = vunpack.c.l.b16 %v6580
    %v7324 = vunpack.c.l.b16 %v6581
    %v7325 = vunpack.c.h.b16 %v6581
    %v7326 = vunpack.c.l.b16 %v6582
    %v7327 = vunpack.c.h.b16 %v6582
    %v7328 = vunpack.c.l.b16 %v6583
    %v7329 = vunpack.c.l.b16 %v6584
    %v7330 = vunpack.c.h.b16 %v6584
    %v7331 = vunpack.c.l.b16 %v6585
    %v7332 = vunpack.c.h.b16 %v6585
    %v7333 = vunpack.c.l.b16 %v6586
    %v7334 = vunpack.c.l.b16 %v6587
    %v7335 = vunpack.c.h.b16 %v6587
    %v7336 = vunpack.c.l.b16 %v6588
    %v7337 = vunpack.c.h.b16 %v6588
    %v7338 = vunpack.c.l.b16 %v6589
    %v7339 = vunpack.c.l.b16 %v6590
    %v7340 = vunpack.c.h.b16 %v6590
    %v7341 = vunpack.c.l.b16 %v6591
    %v7342 = vunpack.c.h.b16 %v6591
    %v7343 = vunpack.c.l.b16 %v6592
    %v7344 = vunpack.c.l.b16 %v6593
    %v7345 = vunpack.c.h.b16 %v6593
    %v7346 = vunpack.c.l.b16 %v6594
    %v7347 = vunpack.c.h.b16 %v6594
    %v7348 = vunpack.c.l.b16 %v6595
    %v7349 = vunpack.c.l.b16 %v6596
    %v7350 = vunpack.c.h.b16 %v6596
    %v7351 = vunpack.c.l.b16 %v6597
    %v7352 = vunpack.c.h.b16 %v6597
    %v7353 = vunpack.c.l.b16 %v6598
    %v7354 = vunpack.c.l.b16 %v6599
    %v7355 = vunpack.c.h.b16 %v6599
    %v7356 = vunpack.c.l.b16 %v6600
    %v7357 = vunpack.c.h.b16 %v6600
    %v7358 = vunpack.c.l.b16 %v6601
    %v7359 = vunpack.c.l.b16 %v6602
    %v7360 = vunpack.c.h.b16 %v6602
    %v7361 = vunpack.c.l.b16 %v6603
    %v7362 = vunpack.c.h.b16 %v6603
    %v7363 = vunpack.c.l.b16 %v6604
    %v7364 = vunpack.c.l.b16 %v6605
    %v7365 = vunpack.c.h.b16 %v6605
    %v7366 = vunpack.c.l.b16 %v6606
    %v7367 = vunpack.c.h.b16 %v6606
    %v7368 = vunpack.c.l.b16 %v6607
    %v7369 = vunpack.c.l.b16 %v6608
    %v7370 = vunpack.c.h.b16 %v6608
    %v7371 = vunpack.c.l.b16 %v6609
    %v7372 = vunpack.c.h.b16 %v6609
    %v7373 = vunpack.c.l.b16 %v6610
    %v7374 = vunpack.c.l.b16 %v6611
    %v7375 = vunpack.c.h.b16 %v6611
    %v7376 = vunpack.c.l.b16 %v6612
    %v7377 = vunpack.c.h.b16 %v6612
    %v7378 = vunpack.c.l.b16 %v6613
    %v7379 = vunpack.c.l.b16 %v6614
    %v7380 = vunpack.c.h.b16 %v6614
    %v7381 = vunpack.c.l.b16 %v6615
    %v7382 = vunpack.c.h.b16 %v6615
    %v7383 = vunpack.c.l.b16 %v6616
    %v7384 = vunpack.c.l.b16 %v6617
    %v7385 = vunpack.c.h.b16 %v6617
    %v7386 = vunpack.c.l.b16 %v6618
    %v7387 = vunpack.c.h.b16 %v6618
    %v7388 = vunpack.c.l.b16 %v6619
    %v7389 = vunpack.c.l.b16 %v6620
    %v7390 = vunpack.c.h.b16 %v6620
    %v7391 = vunpack.c.l.b16 %v6621
    %v7392 = vunpack.c.h.b16 %v6621
    %v7393 = vunpack.c.l.b16 %v6622
    %v7394 = vpack.c.b16 %v6999, %v6994
    %v7395 = vpack.c.b16 %v7000, %v6995
    %v7396 = vpack.c.b16 %v7001, %v6996
    %v7397 = vpack.c.b16 %v7002, %v6997
    %v7398 = vpack.c.b16 %v7003, %v6998
    %v7399 = vpack.c.b16 %v7009, %v7004
    %v7400 = vpack.c.b16 %v7010, %v7005
    %v7401 = vpack.c.b16 %v7011, %v7006
    %v7402 = vpack.c.b16 %v7012, %v7007
    %v7403 = vpack.c.b16 %v7013, %v7008
    %v7404 = vpack.c.b16 %v7019, %v7014
    %v7405 = vpack.c.b16 %v7020, %v7015
    %v7406 = vpack.c.b16 %v7021, %v7016
    %v7407 = vpack.c.b16 %v7022, %v7017
    %v7408 = vpack.c.b16 %v7023, %v7018
    %v7409 = vpack.c.b16 %v7029, %v7024
    %v7410 = vpack.c.b16 %v7030, %v7025
    %v7411 = vpack.c.b16 %v7031, %v7026
    %v7412 = vpack.c.b16 %v7032, %v7027
    %v7413 = vpack.c.b16 %v7033, %v7028
    %v7414 = vpack.c.b16 %v7039, %v7034
    %v7415 = vpack.c.b16 %v7040, %v7035
    %v7416 = vpack.c.b16 %v7041, %v7036
    %v7417 = vpack.c.b16 %v7042, %v7037
    %v7418 = vpack.c.b16 %v7043, %v7038
    %v7419 = vpack.c.b16 %v7049, %v7044
    %v7420 = vpack.c.b16 %v7050, %v7045
    %v7421 = vpack.c.b16 %v7051, %v7046
    %v7422 = vpack.c.b16 %v7052, %v7047
    %v7423 = vpack.c.b16 %v7053, %v7048
    %v7424 = vpack.c.b16 %v7059, %v7054
    %v7425 = vpack.c.b16 %v7060, %v7055
    %v7426 = vpack.c.b16 %v7061, %v7056
    %v7427 = vpack.c.b16 %v7062, %v7057
    %v7428 = vpack.c.b16 %v7063, %v7058
    %v7429 = vpack.c.b16 %v7069, %v7064
    %v7430 = vpack.c.b16 %v7070, %v7065
    %v7431 = vpack.c.b16 %v7071, %v7066
    %v7432 = vpack.c.b16 %v7072, %v7067
    %v7433 = vpack.c.b16 %v7073, %v7068
    %v7434 = vpack.c.b16 %v7079, %v7074
    %v7435 = vpack.c.b16 %v7080, %v7075
    %v7436 = vpack.c.b16 %v7081, %v7076
    %v7437 = vpack.c.b16 %v7082, %v7077
    %v7438 = vpack.c.b16 %v7083, %v7078
    %v7439 = vpack.c.b16 %v7089, %v7084
    %v7440 = vpack.c.b16 %v7090, %v7085
    %v7441 = vpack.c.b16 %v7091, %v7086
    %v7442 = vpack.c.b16 %v7092, %v7087
    %v7443 = vpack.c.b16 %v7093, %v7088
    %v7444 = vpack.c.b16 %v7099, %v7094
    %v7445 = vpack.c.b16 %v7100, %v7095
    %v7446 = vpack.c.b16 %v7101, %v7096
    %v7447 = vpack.c.b16 %v7102, %v7097
    %v7448 = vpack.c.b16 %v7103, %v7098
    %v7449 = vpack.c.b16 %v7109, %v7104
    %v7450 = vpack.c.b16 %v7110, %v7105
    %v7451 = vpack.c.b16 %v7111, %v7106
    %v7452 = vpack.c.b16 %v7112, %v7107
    %v7453 = vpack.c.b16 %v7113, %v7108
    %v7454 = vpack.c.b16 %v7119, %v7114
    %v7455 = vpack.c.b16 %v7120, %v7115
    %v7456 = vpack.c.b16 %v7121, %v7116
    %v7457 = vpack.c.b16 %v7122, %v7117
    %v7458 = vpack.c.b16 %v7123, %v7118
    %v7459 = vpack.c.b16 %v7129, %v7124
    %v7460 = vpack.c.b16 %v7130, %v7125
    %v7461 = vpack.c.b16 %v7131, %v7126
    %v7462 = vpack.c.b16 %v7132, %v7127
    %v7463 = vpack.c.b16 %v7133, %v7128
    %v7464 = vpack.c.b16 %v7139, %v7134
    %v7465 = vpack.c.b16 %v7140, %v7135
    %v7466 = vpack.c.b16 %v7141, %v7136
    %v7467 = vpack.c.b16 %v7142, %v7137
    %v7468 = vpack.c.b16 %v7143, %v7138
    %v7469 = vpack.c.b16 %v7149, %v7144
    %v7470 = vpack.c.b16 %v7150, %v7145
    %v7471 = vpack.c.b16 %v7151, %v7146
    %v7472 = vpack.c.b16 %v7152, %v7147
    %v7473 = vpack.c.b16 %v7153, %v7148
    %v7474 = vpack.c.b16 %v7159, %v7154
    %v7475 = vpack.c.b16 %v7160, %v7155
    %v7476 = vpack.c.b16 %v7161, %v7156
    %v7477 = vpack.c.b16 %v7162, %v7157
    %v7478 = vpack.c.b16 %v7163, %v7158
    %v7479 = vpack.c.b16 %v7169, %v7164
    %v7480 = vpack.c.b16 %v7170, %v7165
    %v7481 = vpack.c.b16 %v7171, %v7166
    %v7482 = vpack.c.b16 %v7172, %v7167
    %v7483 = vpack.c.b16 %v7173, %v7168
    %v7484 = vpack.c.b16 %v7179, %v7174
    %v7485 = vpack.c.b16 %v7180, %v7175
    %v7486 = vpack.c.b16 %v7181, %v7176
    %v7487 = vpack.c.b16 %v7182, %v7177
    %v7488 = vpack.c.b16 %v7183, %v7178
    %v7489 = vpack.c.b16 %v7189, %v7184
    %v7490 = vpack.c.b16 %v7190, %v7185
    %v7491 = vpack.c.b16 %v7191, %v7186
    %v7492 = vpack.c.b16 %v7192, %v7187
    %v7493 = vpack.c.b16 %v7193, %v7188
    %v7494 = vpack.c.b16 %v7199, %v7194
    %v7495 = vpack.c.b16 %v7200, %v7195
    %v7496 = vpack.c.b16 %v7201, %v7196
    %v7497 = vpack.c.b16 %v7202, %v7197
    %v7498 = vpack.c.b16 %v7203, %v7198
    %v7499 = vpack.c.b16 %v7209, %v7204
    %v7500 = vpack.c.b16 %v7210, %v7205
    %v7501 = vpack.c.b16 %v7211, %v7206
    %v7502 = vpack.c.b16 %v7212, %v7207
    %v7503 = vpack.c.b16 %v7213, %v7208
    %v7504 = vpack.c.b16 %v7219, %v7214
    %v7505 = vpack.c.b16 %v7220, %v7215
    %v7506 = vpack.c.b16 %v7221, %v7216
    %v7507 = vpack.c.b16 %v7222, %v7217
    %v7508 = vpack.c.b16 %v7223, %v7218
    %v7509 = vpack.c.b16 %v7229, %v7224
    %v7510 = vpack.c.b16 %v7230, %v7225
    %v7511 = vpack.c.b16 %v7231, %v7226
    %v7512 = vpack.c.b16 %v7232, %v7227
    %v7513 = vpack.c.b16 %v7233, %v7228
    %v7514 = vpack.c.b16 %v7239, %v7234
    %v7515 = vpack.c.b16 %v7240, %v7235
    %v7516 = vpack.c.b16 %v7241, %v7236
    %v7517 = vpack.c.b16 %v7242, %v7237
    %v7518 = vpack.c.b16 %v7243, %v7238
    %v7519 = vpack.c.b16 %v7249, %v7244
    %v7520 = vpack.c.b16 %v7250, %v7245
    %v7521 = vpack.c.b16 %v7251, %v7246
    %v7522 = vpack.c.b16 %v7252, %v7247
    %v7523 = vpack.c.b16 %v7253, %v7248
    %v7524 = vpack.c.b16 %v7259, %v7254
    %v7525 = vpack.c.b16 %v7260, %v7255
    %v7526 = vpack.c.b16 %v7261, %v7256
    %v7527 = vpack.c.b16 %v7262, %v7257
    %v7528 = vpack.c.b16 %v7263, %v7258
    %v7529 = vpack.c.b16 %v7269, %v7264
    %v7530 = vpack.c.b16 %v7270, %v7265
    %v7531 = vpack.c.b16 %v7271, %v7266
    %v7532 = vpack.c.b16 %v7272, %v7267
    %v7533 = vpack.c.b16 %v7273, %v7268
    %v7534 = vpack.c.b16 %v7279, %v7274
    %v7535 = vpack.c.b16 %v7280, %v7275
    %v7536 = vpack.c.b16 %v7281, %v7276
    %v7537 = vpack.c.b16 %v7282, %v7277
    %v7538 = vpack.c.b16 %v7283, %v7278
    %v7539 = vpack.c.b16 %v7289, %v7284
    %v7540 = vpack.c.b16 %v7290, %v7285
    %v7541 = vpack.c.b16 %v7291, %v7286
    %v7542 = vpack.c.b16 %v7292, %v7287
    %v7543 = vpack.c.b16 %v7293, %v7288
    %v7544 = vpack.c.b16 %v7299, %v7294
    %v7545 = vpack.c.b16 %v7300, %v7295
    %v7546 = vpack.c.b16 %v7301, %v7296
    %v7547 = vpack.c.b16 %v7302, %v7297
    %v7548 = vpack.c.b16 %v7303, %v7298
    %v7549 = vpack.c.b16 %v7309, %v7304
    %v7550 = vpack.c.b16 %v7310, %v7305
    %v7551 = vpack.c.b16 %v7311, %v7306
    %v7552 = vpack.c.b16 %v7312, %v7307
    %v7553 = vpack.c.b16 %v7313, %v7308
    %v7554 = vpack.c.b16 %v7319, %v7314
    %v7555 = vpack.c.b16 %v7320, %v7315
    %v7556 = vpack.c.b16 %v7321, %v7316
    %v7557 = vpack.c.b16 %v7322, %v7317
    %v7558 = vpack.c.b16 %v7323, %v7318
    %v7559 = vpack.c.b16 %v7329, %v7324
    %v7560 = vpack.c.b16 %v7330, %v7325
    %v7561 = vpack.c.b16 %v7331, %v7326
    %v7562 = vpack.c.b16 %v7332, %v7327
    %v7563 = vpack.c.b16 %v7333, %v7328
    %v7564 = vpack.c.b16 %v7339, %v7334
    %v7565 = vpack.c.b16 %v7340, %v7335
    %v7566 = vpack.c.b16 %v7341, %v7336
    %v7567 = vpack.c.b16 %v7342, %v7337
    %v7568 = vpack.c.b16 %v7343, %v7338
    %v7569 = vpack.c.b16 %v7349, %v7344
    %v7570 = vpack.c.b16 %v7350, %v7345
    %v7571 = vpack.c.b16 %v7351, %v7346
    %v7572 = vpack.c.b16 %v7352, %v7347
    %v7573 = vpack.c.b16 %v7353, %v7348
    %v7574 = vpack.c.b16 %v7359, %v7354
    %v7575 = vpack.c.b16 %v7360, %v7355
    %v7576 = vpack.c.b16 %v7361, %v7356
    %v7577 = vpack.c.b16 %v7362, %v7357
    %v7578 = vpack.c.b16 %v7363, %v7358
    %v7579 = vpack.c.b16 %v7369, %v7364
    %v7580 = vpack.c.b16 %v7370, %v7365
    %v7581 = vpack.c.b16 %v7371, %v7366
    %v7582 = vpack.c.b16 %v7372, %v7367
    %v7583 = vpack.c.b16 %v7373, %v7368
    %v7584 = vpack.c.b16 %v7379, %v7374
    %v7585 = vpack.c.b16 %v7380, %v7375
    %v7586 = vpack.c.b16 %v7381, %v7376
    %v7587 = vpack.c.b16 %v7382, %v7377
    %v7588 = vpack.c.b16 %v7383, %v7378
    %v7589 = vpack.c.b16 %v7389, %v7384
    %v7590 = vpack.c.b16 %v7390, %v7385
    %v7591 = vpack.c.b16 %v7391, %v7386
    %v7592 = vpack.c.b16 %v7392, %v7387
    %v7593 = vpack.c.b16 %v7393, %v7388
    %7794 = vmatprep.subr.bf16.mxu0 %v7430
    %7795 = vmatpush1.bf16.msra.mxu0 %v7429
    %7796 = vmatprep.subr.bf16.mxu0 %v7425
    %7797 = vmatpush1.bf16.msra.mxu0 %v7424
    %7798 = vmatprep.subr.bf16.mxu0 %v7420
    %7799 = vmatpush1.bf16.msra.mxu0 %v7419
    %7800 = vmatprep.subr.bf16.mxu0 %v7415
    %7801 = vmatpush1.bf16.msra.mxu0 %v7414
    %7802 = vmatprep.subr.bf16.mxu0 %v7410
    %7803 = vmatpush1.bf16.msra.mxu0 %v7409
    %7804 = vmatprep.subr.bf16.mxu0 %v7405
    %7805 = vmatpush1.bf16.msra.mxu0 %v7404
    %7806 = vmatprep.subr.bf16.mxu0 %v7400
    %7807 = vmatpush1.bf16.msra.mxu0 %v7399
    %7808 = vmatprep.subr.bf16.mxu0 %v7395
    %7809 = vmatpush1.bf16.msra.mxu0 %v7394
    %7810 = vmatprep.subr.bf16.mxu0 %v7470
    %7811 = vmatpush2.bf16.msra.mxu0 %v7469
    %7812 = vmatprep.subr.bf16.mxu0 %v7465
    %7813 = vmatpush2.bf16.msra.mxu0 %v7464
    %7814 = vmatprep.subr.bf16.mxu0 %v7460
    %7815 = vmatpush2.bf16.msra.mxu0 %v7459
    %7816 = vmatprep.subr.bf16.mxu0 %v7455
    %7817 = vmatpush2.bf16.msra.mxu0 %v7454
    %7818 = vmatprep.subr.bf16.mxu0 %v7450
    %7819 = vmatpush2.bf16.msra.mxu0 %v7449
    %7820 = vmatprep.subr.bf16.mxu0 %v7445
    %7821 = vmatpush2.bf16.msra.mxu0 %v7444
    %7822 = vmatprep.subr.bf16.mxu0 %v7440
    %7823 = vmatpush2.bf16.msra.mxu0 %v7439
    %7824 = vmatprep.subr.bf16.mxu0 %v7435
    %7825 = vmatpush2.bf16.msra.mxu0 %v7434
    %7826 = vmatprep.mubr.bf16.mxu0 %v6647
    %7827 = vmatmul.mubr.bf16.gmra.mxu0 %v6635
    %v7828 = vpop.f32.mrf.mxu0
    %v7829 = vadd.f32 0.0, %v7828
    %v7830 = vpop.f32.mrf.mxu0
    %v7831 = vadd.f32 0.0, %v7830
    %v7832 = vpop.f32.mrf.mxu0
    %v7833 = vadd.f32 0.0, %v7832
    %v7834 = vpop.f32.mrf.mxu0
    %v7835 = vadd.f32 0.0, %v7834
    %7836 = vmatprep.mubr.bf16.mxu0 %v6699
    %7837 = vmatmul.mubr.bf16.gmra.mxu0 %v6691
    %v7838 = vpop.f32.mrf.mxu0
    %v7839 = vadd.f32 0.0, %v7838
    %v7840 = vpop.f32.mrf.mxu0
    %v7841 = vadd.f32 0.0, %v7840
    %v7842 = vpop.f32.mrf.mxu0
    %v7843 = vadd.f32 0.0, %v7842
    %v7844 = vpop.f32.mrf.mxu0
    %v7845 = vadd.f32 0.0, %v7844
    %7846 = vmatprep.mubr.bf16.mxu0 %v6729
    %7847 = vmatmul.mubr.bf16.gmra.mxu0 %v6726
    %v7848 = vpop.f32.mrf.mxu0
    %v7849 = vadd.f32 0.0, %v7848
    %v7850 = vpop.f32.mrf.mxu0
    %v7851 = vadd.f32 0.0, %v7850
    %v7852 = vpop.f32.mrf.mxu0
    %v7853 = vpop.f32.mrf.mxu0
    %7854 = vdwg.mxu0
    %7855 = vmatprep.subr.bf16.mxu0 %v7510
    %7856 = vmatpush1.bf16.msra.mxu0 %v7509
    %7857 = vmatprep.subr.bf16.mxu0 %v7505
    %7858 = vmatpush1.bf16.msra.mxu0 %v7504
    %7859 = vmatprep.subr.bf16.mxu0 %v7500
    %7860 = vmatpush1.bf16.msra.mxu0 %v7499
    %7861 = vmatprep.subr.bf16.mxu0 %v7495
    %7862 = vmatpush1.bf16.msra.mxu0 %v7494
    %7863 = vmatprep.subr.bf16.mxu0 %v7490
    %7864 = vmatpush1.bf16.msra.mxu0 %v7489
    %7865 = vmatprep.subr.bf16.mxu0 %v7485
    %7866 = vmatpush1.bf16.msra.mxu0 %v7484
    %7867 = vmatprep.subr.bf16.mxu0 %v7480
    %7868 = vmatpush1.bf16.msra.mxu0 %v7479
    %7869 = vmatprep.subr.bf16.mxu0 %v7475
    %7870 = vmatpush1.bf16.msra.mxu0 %v7474
    %7871 = vmatprep.subr.bf16.mxu0 %v7550
    %7872 = vmatpush2.bf16.msra.mxu0 %v7549
    %7873 = vmatprep.subr.bf16.mxu0 %v7545
    %7874 = vmatpush2.bf16.msra.mxu0 %v7544
    %7875 = vmatprep.subr.bf16.mxu0 %v7540
    %7876 = vmatpush2.bf16.msra.mxu0 %v7539
    %7877 = vmatprep.subr.bf16.mxu0 %v7535
    %7878 = vmatpush2.bf16.msra.mxu0 %v7534
    %7879 = vmatprep.subr.bf16.mxu0 %v7530
    %7880 = vmatpush2.bf16.msra.mxu0 %v7529
    %7881 = vmatprep.subr.bf16.mxu0 %v7525
    %7882 = vmatpush2.bf16.msra.mxu0 %v7524
    %7883 = vmatprep.subr.bf16.mxu0 %v7520
    %7884 = vmatpush2.bf16.msra.mxu0 %v7519
    %7885 = vmatprep.subr.bf16.mxu0 %v7515
    %7886 = vmatpush2.bf16.msra.mxu0 %v7514
    %7887 = vmatprep.mubr.bf16.mxu0 %v6671
    %7888 = vmatmul.mubr.bf16.gmra.mxu0 %v6659
    %v7889 = vpop.f32.mrf.mxu0
    %v7890 = vadd.f32 %v7829, %v7889
    %v7891 = vpop.f32.mrf.mxu0
    %v7892 = vadd.f32 %v7831, %v7891
    %v7893 = vpop.f32.mrf.mxu0
    %v7894 = vadd.f32 %v7833, %v7893
    %v7895 = vpop.f32.mrf.mxu0
    %v7896 = vadd.f32 %v7835, %v7895
    %7897 = vmatprep.mubr.bf16.mxu0 %v6715
    %7898 = vmatmul.mubr.bf16.gmra.mxu0 %v6707
    %v7899 = vpop.f32.mrf.mxu0
    %v7900 = vadd.f32 %v7839, %v7899
    %v7901 = vpop.f32.mrf.mxu0
    %v7902 = vadd.f32 %v7841, %v7901
    %v7903 = vpop.f32.mrf.mxu0
    %v7904 = vadd.f32 %v7843, %v7903
    %v7905 = vpop.f32.mrf.mxu0
    %v7906 = vadd.f32 %v7845, %v7905
    %7907 = vmatprep.mubr.bf16.mxu0 %v6735
    %7908 = vmatmul.mubr.bf16.gmra.mxu0 %v6732
    %v7909 = vpop.f32.mrf.mxu0
    %v7910 = vadd.f32 %v7849, %v7909
    %v7911 = vpop.f32.mrf.mxu0
    %v7912 = vadd.f32 %v7851, %v7911
    %v7913 = vpop.f32.mrf.mxu0
    %v7914 = vpop.f32.mrf.mxu0
    %7915 = vdwg.mxu0
    %7916 = vmatprep.subr.bf16.mxu0 %v7590
    %7917 = vmatpush1.bf16.msra.mxu0 %v7589
    %7918 = vmatprep.subr.bf16.mxu0 %v7585
    %7919 = vmatpush1.bf16.msra.mxu0 %v7584
    %7920 = vmatprep.subr.bf16.mxu0 %v7580
    %7921 = vmatpush1.bf16.msra.mxu0 %v7579
    %7922 = vmatprep.subr.bf16.mxu0 %v7575
    %7923 = vmatpush1.bf16.msra.mxu0 %v7574
    %7924 = vmatprep.subr.bf16.mxu0 %v7570
    %7925 = vmatpush1.bf16.msra.mxu0 %v7569
    %7926 = vmatprep.subr.bf16.mxu0 %v7565
    %7927 = vmatpush1.bf16.msra.mxu0 %v7564
    %7928 = vmatprep.subr.bf16.mxu0 %v7560
    %7929 = vmatpush1.bf16.msra.mxu0 %v7559
    %7930 = vmatprep.subr.bf16.mxu0 %v7555
    %7931 = vmatpush1.bf16.msra.mxu0 %v7554
    %7932 = vmatprep.subr.bf16.mxu0 0
    %7933 = vmatpush2.bf16.msra.mxu0 0
    %7934 = vmatprep.subr.bf16.mxu0 0
    %7935 = vmatpush2.bf16.msra.mxu0 0
    %7936 = vmatprep.subr.bf16.mxu0 0
    %7937 = vmatpush2.bf16.msra.mxu0 0
    %7938 = vmatprep.subr.bf16.mxu0 0
    %7939 = vmatpush2.bf16.msra.mxu0 0
    %7940 = vmatprep.subr.bf16.mxu0 0
    %7941 = vmatpush2.bf16.msra.mxu0 0
    %7942 = vmatprep.subr.bf16.mxu0 0
    %7943 = vmatpush2.bf16.msra.mxu0 0
    %7944 = vmatprep.subr.bf16.mxu0 0
    %7945 = vmatpush2.bf16.msra.mxu0 0
    %7946 = vmatprep.subr.bf16.mxu0 0
    %7947 = vmatpush2.bf16.msra.mxu0 0
    %7948 = vmatprep.mubr.bf16.mxu0 0
    %7949 = vmatmul.mubr.bf16.gmra.mxu0 %v6683
    %v7950 = vpop.f32.mrf.mxu0
    %v7951 = vadd.f32 %v7890, %v7950
    %v7952 = vpop.f32.mrf.mxu0
    %v7953 = vadd.f32 %v7892, %v7952
    %v7954 = vpop.f32.mrf.mxu0
    %v7955 = vadd.f32 %v7894, %v7954
    %v7956 = vpop.f32.mrf.mxu0
    %v7957 = vadd.f32 %v7896, %v7956
    %7958 = vmatprep.mubr.bf16.mxu0 0
    %7959 = vmatmul.mubr.bf16.gmra.mxu0 %v6723
    %v7960 = vpop.f32.mrf.mxu0
    %v7961 = vadd.f32 %v7900, %v7960
    %v7962 = vpop.f32.mrf.mxu0
    %v7963 = vadd.f32 %v7902, %v7962
    %v7964 = vpop.f32.mrf.mxu0
    %v7965 = vadd.f32 %v7904, %v7964
    %v7966 = vpop.f32.mrf.mxu0
    %v7967 = vadd.f32 %v7906, %v7966
    %7968 = vmatprep.mubr.bf16.mxu0 0
    %7969 = vmatmul.mubr.bf16.gmra.mxu0 %v6738
    %v7970 = vpop.f32.mrf.mxu0
    %v7971 = vadd.f32 %v7910, %v7970
    %v7972 = vpop.f32.mrf.mxu0
    %v7973 = vadd.f32 %v7912, %v7972
    %v7974 = vpop.f32.mrf.mxu0
    %v7975 = vpop.f32.mrf.mxu0
    %7976 = vdwg.mxu0
    %7977 = vmatprep.subr.bf16.mxu0 %v7432
    %7978 = vmatpush1.bf16.msra.mxu0 %v7431
    %7979 = vmatprep.subr.bf16.mxu0 %v7427
    %7980 = vmatpush1.bf16.msra.mxu0 %v7426
    %7981 = vmatprep.subr.bf16.mxu0 %v7422
    %7982 = vmatpush1.bf16.msra.mxu0 %v7421
    %7983 = vmatprep.subr.bf16.mxu0 %v7417
    %7984 = vmatpush1.bf16.msra.mxu0 %v7416
    %7985 = vmatprep.subr.bf16.mxu0 %v7412
    %7986 = vmatpush1.bf16.msra.mxu0 %v7411
    %7987 = vmatprep.subr.bf16.mxu0 %v7407
    %7988 = vmatpush1.bf16.msra.mxu0 %v7406
    %7989 = vmatprep.subr.bf16.mxu0 %v7402
    %7990 = vmatpush1.bf16.msra.mxu0 %v7401
    %7991 = vmatprep.subr.bf16.mxu0 %v7397
    %7992 = vmatpush1.bf16.msra.mxu0 %v7396
    %7993 = vmatprep.subr.bf16.mxu0 %v7472
    %7994 = vmatpush2.bf16.msra.mxu0 %v7471
    %7995 = vmatprep.subr.bf16.mxu0 %v7467
    %7996 = vmatpush2.bf16.msra.mxu0 %v7466
    %7997 = vmatprep.subr.bf16.mxu0 %v7462
    %7998 = vmatpush2.bf16.msra.mxu0 %v7461
    %7999 = vmatprep.subr.bf16.mxu0 %v7457
    %8000 = vmatpush2.bf16.msra.mxu0 %v7456
    %8001 = vmatprep.subr.bf16.mxu0 %v7452
    %8002 = vmatpush2.bf16.msra.mxu0 %v7451
    %8003 = vmatprep.subr.bf16.mxu0 %v7447
    %8004 = vmatpush2.bf16.msra.mxu0 %v7446
    %8005 = vmatprep.subr.bf16.mxu0 %v7442
    %8006 = vmatpush2.bf16.msra.mxu0 %v7441
    %8007 = vmatprep.subr.bf16.mxu0 %v7437
    %8008 = vmatpush2.bf16.msra.mxu0 %v7436
    %8009 = vmatprep.mubr.bf16.mxu0 %v6647
    %8010 = vmatmul.mubr.bf16.gmra.mxu0 %v6635
    %v8011 = vpop.f32.mrf.mxu0
    %v8012 = vadd.f32 0.0, %v8011
    %v8013 = vpop.f32.mrf.mxu0
    %v8014 = vadd.f32 0.0, %v8013
    %v8015 = vpop.f32.mrf.mxu0
    %v8016 = vadd.f32 0.0, %v8015
    %v8017 = vpop.f32.mrf.mxu0
    %v8018 = vadd.f32 0.0, %v8017
    %8019 = vmatprep.mubr.bf16.mxu0 %v6699
    %8020 = vmatmul.mubr.bf16.gmra.mxu0 %v6691
    %v8021 = vpop.f32.mrf.mxu0
    %v8022 = vadd.f32 0.0, %v8021
    %v8023 = vpop.f32.mrf.mxu0
    %v8024 = vadd.f32 0.0, %v8023
    %v8025 = vpop.f32.mrf.mxu0
    %v8026 = vadd.f32 0.0, %v8025
    %v8027 = vpop.f32.mrf.mxu0
    %v8028 = vadd.f32 0.0, %v8027
    %8029 = vmatprep.mubr.bf16.mxu0 %v6729
    %8030 = vmatmul.mubr.bf16.gmra.mxu0 %v6726
    %v8031 = vpop.f32.mrf.mxu0
    %v8032 = vadd.f32 0.0, %v8031
    %v8033 = vpop.f32.mrf.mxu0
    %v8034 = vadd.f32 0.0, %v8033
    %v8035 = vpop.f32.mrf.mxu0
    %v8036 = vpop.f32.mrf.mxu0
    %8037 = vdwg.mxu0
    %8038 = vmatprep.subr.bf16.mxu0 %v7512
    %8039 = vmatpush1.bf16.msra.mxu0 %v7511
    %8040 = vmatprep.subr.bf16.mxu0 %v7507
    %8041 = vmatpush1.bf16.msra.mxu0 %v7506
    %8042 = vmatprep.subr.bf16.mxu0 %v7502
    %8043 = vmatpush1.bf16.msra.mxu0 %v7501
    %8044 = vmatprep.subr.bf16.mxu0 %v7497
    %8045 = vmatpush1.bf16.msra.mxu0 %v7496
    %8046 = vmatprep.subr.bf16.mxu0 %v7492
    %8047 = vmatpush1.bf16.msra.mxu0 %v7491
    %8048 = vmatprep.subr.bf16.mxu0 %v7487
    %8049 = vmatpush1.bf16.msra.mxu0 %v7486
    %8050 = vmatprep.subr.bf16.mxu0 %v7482
    %8051 = vmatpush1.bf16.msra.mxu0 %v7481
    %8052 = vmatprep.subr.bf16.mxu0 %v7477
    %8053 = vmatpush1.bf16.msra.mxu0 %v7476
    %8054 = vmatprep.subr.bf16.mxu0 %v7552
    %8055 = vmatpush2.bf16.msra.mxu0 %v7551
    %8056 = vmatprep.subr.bf16.mxu0 %v7547
    %8057 = vmatpush2.bf16.msra.mxu0 %v7546
    %8058 = vmatprep.subr.bf16.mxu0 %v7542
    %8059 = vmatpush2.bf16.msra.mxu0 %v7541
    %8060 = vmatprep.subr.bf16.mxu0 %v7537
    %8061 = vmatpush2.bf16.msra.mxu0 %v7536
    %8062 = vmatprep.subr.bf16.mxu0 %v7532
    %8063 = vmatpush2.bf16.msra.mxu0 %v7531
    %8064 = vmatprep.subr.bf16.mxu0 %v7527
    %8065 = vmatpush2.bf16.msra.mxu0 %v7526
    %8066 = vmatprep.subr.bf16.mxu0 %v7522
    %8067 = vmatpush2.bf16.msra.mxu0 %v7521
    %8068 = vmatprep.subr.bf16.mxu0 %v7517
    %8069 = vmatpush2.bf16.msra.mxu0 %v7516
    %8070 = vmatprep.mubr.bf16.mxu0 %v6671
    %8071 = vmatmul.mubr.bf16.gmra.mxu0 %v6659
    %v8072 = vpop.f32.mrf.mxu0
    %v8073 = vadd.f32 %v8012, %v8072
    %v8074 = vpop.f32.mrf.mxu0
    %v8075 = vadd.f32 %v8014, %v8074
    %v8076 = vpop.f32.mrf.mxu0
    %v8077 = vadd.f32 %v8016, %v8076
    %v8078 = vpop.f32.mrf.mxu0
    %v8079 = vadd.f32 %v8018, %v8078
    %8080 = vmatprep.mubr.bf16.mxu0 %v6715
    %8081 = vmatmul.mubr.bf16.gmra.mxu0 %v6707
    %v8082 = vpop.f32.mrf.mxu0
    %v8083 = vadd.f32 %v8022, %v8082
    %v8084 = vpop.f32.mrf.mxu0
    %v8085 = vadd.f32 %v8024, %v8084
    %v8086 = vpop.f32.mrf.mxu0
    %v8087 = vadd.f32 %v8026, %v8086
    %v8088 = vpop.f32.mrf.mxu0
    %v8089 = vadd.f32 %v8028, %v8088
    %8090 = vmatprep.mubr.bf16.mxu0 %v6735
    %8091 = vmatmul.mubr.bf16.gmra.mxu0 %v6732
    %v8092 = vpop.f32.mrf.mxu0
    %v8093 = vadd.f32 %v8032, %v8092
    %v8094 = vpop.f32.mrf.mxu0
    %v8095 = vadd.f32 %v8034, %v8094
    %v8096 = vpop.f32.mrf.mxu0
    %v8097 = vpop.f32.mrf.mxu0
    %8098 = vdwg.mxu0
    %8099 = vmatprep.subr.bf16.mxu0 %v7592
    %8100 = vmatpush1.bf16.msra.mxu0 %v7591
    %8101 = vmatprep.subr.bf16.mxu0 %v7587
    %8102 = vmatpush1.bf16.msra.mxu0 %v7586
    %8103 = vmatprep.subr.bf16.mxu0 %v7582
    %8104 = vmatpush1.bf16.msra.mxu0 %v7581
    %8105 = vmatprep.subr.bf16.mxu0 %v7577
    %8106 = vmatpush1.bf16.msra.mxu0 %v7576
    %8107 = vmatprep.subr.bf16.mxu0 %v7572
    %8108 = vmatpush1.bf16.msra.mxu0 %v7571
    %8109 = vmatprep.subr.bf16.mxu0 %v7567
    %8110 = vmatpush1.bf16.msra.mxu0 %v7566
    %8111 = vmatprep.subr.bf16.mxu0 %v7562
    %8112 = vmatpush1.bf16.msra.mxu0 %v7561
    %8113 = vmatprep.subr.bf16.mxu0 %v7557
    %8114 = vmatpush1.bf16.msra.mxu0 %v7556
    %8115 = vmatprep.subr.bf16.mxu0 0
    %8116 = vmatpush2.bf16.msra.mxu0 0
    %8117 = vmatprep.subr.bf16.mxu0 0
    %8118 = vmatpush2.bf16.msra.mxu0 0
    %8119 = vmatprep.subr.bf16.mxu0 0
    %8120 = vmatpush2.bf16.msra.mxu0 0
    %8121 = vmatprep.subr.bf16.mxu0 0
    %8122 = vmatpush2.bf16.msra.mxu0 0
    %8123 = vmatprep.subr.bf16.mxu0 0
    %8124 = vmatpush2.bf16.msra.mxu0 0
    %8125 = vmatprep.subr.bf16.mxu0 0
    %8126 = vmatpush2.bf16.msra.mxu0 0
    %8127 = vmatprep.subr.bf16.mxu0 0
    %8128 = vmatpush2.bf16.msra.mxu0 0
    %8129 = vmatprep.subr.bf16.mxu0 0
    %8130 = vmatpush2.bf16.msra.mxu0 0
    %8131 = vmatprep.mubr.bf16.mxu0 0
    %8132 = vmatmul.mubr.bf16.gmra.mxu0 %v6683
    %v8133 = vpop.f32.mrf.mxu0
    %v8134 = vadd.f32 %v8073, %v8133
    %v8135 = vpop.f32.mrf.mxu0
    %v8136 = vadd.f32 %v8075, %v8135
    %v8137 = vpop.f32.mrf.mxu0
    %v8138 = vadd.f32 %v8077, %v8137
    %v8139 = vpop.f32.mrf.mxu0
    %v8140 = vadd.f32 %v8079, %v8139
    %8141 = vmatprep.mubr.bf16.mxu0 0
    %8142 = vmatmul.mubr.bf16.gmra.mxu0 %v6723
    %v8143 = vpop.f32.mrf.mxu0
    %v8144 = vadd.f32 %v8083, %v8143
    %v8145 = vpop.f32.mrf.mxu0
    %v8146 = vadd.f32 %v8085, %v8145
    %v8147 = vpop.f32.mrf.mxu0
    %v8148 = vadd.f32 %v8087, %v8147
    %v8149 = vpop.f32.mrf.mxu0
    %v8150 = vadd.f32 %v8089, %v8149
    %8151 = vmatprep.mubr.bf16.mxu0 0
    %8152 = vmatmul.mubr.bf16.gmra.mxu0 %v6738
    %v8153 = vpop.f32.mrf.mxu0
    %v8154 = vadd.f32 %v8093, %v8153
    %v8155 = vpop.f32.mrf.mxu0
    %v8156 = vadd.f32 %v8095, %v8155
    %v8157 = vpop.f32.mrf.mxu0
    %v8158 = vpop.f32.mrf.mxu0
    %8159 = vdwg.mxu0
    %8160 = vmatprep.subr.bf16.mxu0 0
    %8161 = vmatpush1.bf16.msra.mxu0 %v7433
    %8162 = vmatprep.subr.bf16.mxu0 0
    %8163 = vmatpush1.bf16.msra.mxu0 %v7428
    %8164 = vmatprep.subr.bf16.mxu0 0
    %8165 = vmatpush1.bf16.msra.mxu0 %v7423
    %8166 = vmatprep.subr.bf16.mxu0 0
    %8167 = vmatpush1.bf16.msra.mxu0 %v7418
    %8168 = vmatprep.subr.bf16.mxu0 0
    %8169 = vmatpush1.bf16.msra.mxu0 %v7413
    %8170 = vmatprep.subr.bf16.mxu0 0
    %8171 = vmatpush1.bf16.msra.mxu0 %v7408
    %8172 = vmatprep.subr.bf16.mxu0 0
    %8173 = vmatpush1.bf16.msra.mxu0 %v7403
    %8174 = vmatprep.subr.bf16.mxu0 0
    %8175 = vmatpush1.bf16.msra.mxu0 %v7398
    %8176 = vmatprep.subr.bf16.mxu0 0
    %8177 = vmatpush2.bf16.msra.mxu0 %v7473
    %8178 = vmatprep.subr.bf16.mxu0 0
    %8179 = vmatpush2.bf16.msra.mxu0 %v7468
    %8180 = vmatprep.subr.bf16.mxu0 0
    %8181 = vmatpush2.bf16.msra.mxu0 %v7463
    %8182 = vmatprep.subr.bf16.mxu0 0
    %8183 = vmatpush2.bf16.msra.mxu0 %v7458
    %8184 = vmatprep.subr.bf16.mxu0 0
    %8185 = vmatpush2.bf16.msra.mxu0 %v7453
    %8186 = vmatprep.subr.bf16.mxu0 0
    %8187 = vmatpush2.bf16.msra.mxu0 %v7448
    %8188 = vmatprep.subr.bf16.mxu0 0
    %8189 = vmatpush2.bf16.msra.mxu0 %v7443
    %8190 = vmatprep.subr.bf16.mxu0 0
    %8191 = vmatpush2.bf16.msra.mxu0 %v7438
    %8192 = vmatprep.mubr.bf16.mxu0 %v6647
    %8193 = vmatmul.mubr.bf16.gmra.mxu0 %v6635
    %v8194 = vpop.f32.mrf.mxu0
    %v8195 = vadd.f32 0.0, %v8194
    %v8196 = vpop.f32.mrf.mxu0
    %v8197 = vpop.f32.mrf.mxu0
    %v8198 = vadd.f32 0.0, %v8197
    %v8199 = vpop.f32.mrf.mxu0
    %8200 = vmatprep.mubr.bf16.mxu0 %v6699
    %8201 = vmatmul.mubr.bf16.gmra.mxu0 %v6691
    %v8202 = vpop.f32.mrf.mxu0
    %v8203 = vadd.f32 0.0, %v8202
    %v8204 = vpop.f32.mrf.mxu0
    %v8205 = vpop.f32.mrf.mxu0
    %v8206 = vadd.f32 0.0, %v8205
    %v8207 = vpop.f32.mrf.mxu0
    %8208 = vmatprep.mubr.bf16.mxu0 %v6729
    %8209 = vmatmul.mubr.bf16.gmra.mxu0 %v6726
    %v8210 = vpop.f32.mrf.mxu0
    %v8211 = vadd.f32 0.0, %v8210
    %v8212 = vpop.f32.mrf.mxu0
    %v8213 = vpop.f32.mrf.mxu0
    %v8214 = vpop.f32.mrf.mxu0
    %8215 = vdwg.mxu0
    %8216 = vmatprep.subr.bf16.mxu0 0
    %8217 = vmatpush1.bf16.msra.mxu0 %v7513
    %8218 = vmatprep.subr.bf16.mxu0 0
    %8219 = vmatpush1.bf16.msra.mxu0 %v7508
    %8220 = vmatprep.subr.bf16.mxu0 0
    %8221 = vmatpush1.bf16.msra.mxu0 %v7503
    %8222 = vmatprep.subr.bf16.mxu0 0
    %8223 = vmatpush1.bf16.msra.mxu0 %v7498
    %8224 = vmatprep.subr.bf16.mxu0 0
    %8225 = vmatpush1.bf16.msra.mxu0 %v7493
    %8226 = vmatprep.subr.bf16.mxu0 0
    %8227 = vmatpush1.bf16.msra.mxu0 %v7488
    %8228 = vmatprep.subr.bf16.mxu0 0
    %8229 = vmatpush1.bf16.msra.mxu0 %v7483
    %8230 = vmatprep.subr.bf16.mxu0 0
    %8231 = vmatpush1.bf16.msra.mxu0 %v7478
    %8232 = vmatprep.subr.bf16.mxu0 0
    %8233 = vmatpush2.bf16.msra.mxu0 %v7553
    %8234 = vmatprep.subr.bf16.mxu0 0
    %8235 = vmatpush2.bf16.msra.mxu0 %v7548
    %8236 = vmatprep.subr.bf16.mxu0 0
    %8237 = vmatpush2.bf16.msra.mxu0 %v7543
    %8238 = vmatprep.subr.bf16.mxu0 0
    %8239 = vmatpush2.bf16.msra.mxu0 %v7538
    %8240 = vmatprep.subr.bf16.mxu0 0
    %8241 = vmatpush2.bf16.msra.mxu0 %v7533
    %8242 = vmatprep.subr.bf16.mxu0 0
    %8243 = vmatpush2.bf16.msra.mxu0 %v7528
    %8244 = vmatprep.subr.bf16.mxu0 0
    %8245 = vmatpush2.bf16.msra.mxu0 %v7523
    %8246 = vmatprep.subr.bf16.mxu0 0
    %8247 = vmatpush2.bf16.msra.mxu0 %v7518
    %8248 = vmatprep.mubr.bf16.mxu0 %v6671
    %8249 = vmatmul.mubr.bf16.gmra.mxu0 %v6659
    %v8250 = vpop.f32.mrf.mxu0
    %v8251 = vadd.f32 %v8195, %v8250
    %v8252 = vpop.f32.mrf.mxu0
    %v8253 = vpop.f32.mrf.mxu0
    %v8254 = vadd.f32 %v8198, %v8253
    %v8255 = vpop.f32.mrf.mxu0
    %8256 = vmatprep.mubr.bf16.mxu0 %v6715
    %8257 = vmatmul.mubr.bf16.gmra.mxu0 %v6707
    %v8258 = vpop.f32.mrf.mxu0
    %v8259 = vadd.f32 %v8203, %v8258
    %v8260 = vpop.f32.mrf.mxu0
    %v8261 = vpop.f32.mrf.mxu0
    %v8262 = vadd.f32 %v8206, %v8261
    %v8263 = vpop.f32.mrf.mxu0
    %8264 = vmatprep.mubr.bf16.mxu0 %v6735
    %8265 = vmatmul.mubr.bf16.gmra.mxu0 %v6732
    %v8266 = vpop.f32.mrf.mxu0
    %v8267 = vadd.f32 %v8211, %v8266
    %v8268 = vpop.f32.mrf.mxu0
    %v8269 = vpop.f32.mrf.mxu0
    %v8270 = vpop.f32.mrf.mxu0
    %8271 = vdwg.mxu0
    %8272 = vmatprep.subr.bf16.mxu0 0
    %8273 = vmatpush1.bf16.msra.mxu0 %v7593
    %8274 = vmatprep.subr.bf16.mxu0 0
    %8275 = vmatpush1.bf16.msra.mxu0 %v7588
    %8276 = vmatprep.subr.bf16.mxu0 0
    %8277 = vmatpush1.bf16.msra.mxu0 %v7583
    %8278 = vmatprep.subr.bf16.mxu0 0
    %8279 = vmatpush1.bf16.msra.mxu0 %v7578
    %8280 = vmatprep.subr.bf16.mxu0 0
    %8281 = vmatpush1.bf16.msra.mxu0 %v7573
    %8282 = vmatprep.subr.bf16.mxu0 0
    %8283 = vmatpush1.bf16.msra.mxu0 %v7568
    %8284 = vmatprep.subr.bf16.mxu0 0
    %8285 = vmatpush1.bf16.msra.mxu0 %v7563
    %8286 = vmatprep.subr.bf16.mxu0 0
    %8287 = vmatpush1.bf16.msra.mxu0 %v7558
    %8288 = vmatprep.subr.bf16.mxu0 0
    %8289 = vmatpush2.bf16.msra.mxu0 0
    %8290 = vmatprep.subr.bf16.mxu0 0
    %8291 = vmatpush2.bf16.msra.mxu0 0
    %8292 = vmatprep.subr.bf16.mxu0 0
    %8293 = vmatpush2.bf16.msra.mxu0 0
    %8294 = vmatprep.subr.bf16.mxu0 0
    %8295 = vmatpush2.bf16.msra.mxu0 0
    %8296 = vmatprep.subr.bf16.mxu0 0
    %8297 = vmatpush2.bf16.msra.mxu0 0
    %8298 = vmatprep.subr.bf16.mxu0 0
    %8299 = vmatpush2.bf16.msra.mxu0 0
    %8300 = vmatprep.subr.bf16.mxu0 0
    %8301 = vmatpush2.bf16.msra.mxu0 0
    %8302 = vmatprep.subr.bf16.mxu0 0
    %8303 = vmatpush2.bf16.msra.mxu0 0
    %8304 = vmatprep.mubr.bf16.mxu0 0
    %8305 = vmatmul.mubr.bf16.gmra.mxu0 %v6683
    %v8306 = vpop.f32.mrf.mxu0
    %v8307 = vadd.f32 %v8251, %v8306
    %v8308 = vpop.f32.mrf.mxu0
    %v8309 = vpop.f32.mrf.mxu0
    %v8310 = vadd.f32 %v8254, %v8309
    %v8311 = vpop.f32.mrf.mxu0
    %8312 = vmatprep.mubr.bf16.mxu0 0
    %8313 = vmatmul.mubr.bf16.gmra.mxu0 %v6723
    %v8314 = vpop.f32.mrf.mxu0
    %v8315 = vadd.f32 %v8259, %v8314
    %v8316 = vpop.f32.mrf.mxu0
    %v8317 = vpop.f32.mrf.mxu0
    %v8318 = vadd.f32 %v8262, %v8317
    %v8319 = vpop.f32.mrf.mxu0
    %8320 = vmatprep.mubr.bf16.mxu0 0
    %8321 = vmatmul.mubr.bf16.gmra.mxu0 %v6738
    %v8322 = vpop.f32.mrf.mxu0
    %v8323 = vadd.f32 %v8267, %v8322
    %v8324 = vpop.f32.mrf.mxu0
    %v8325 = vpop.f32.mrf.mxu0
    %v8326 = vpop.f32.mrf.mxu0
    %8327 = vdwg.mxu0
    %v8328 = vadd.f32 %v5960, %v7951
    %v8329 = vadd.f32 %v5962, %v7953
    %v8330 = vadd.f32 %v6143, %v8134
    %v8331 = vadd.f32 %v6145, %v8136
    %v8332 = vadd.f32 %v6316, %v8307
    %v8333 = vadd.f32 %v5964, %v7955
    %v8334 = vadd.f32 %v5966, %v7957
    %v8335 = vadd.f32 %v6147, %v8138
    %v8336 = vadd.f32 %v6149, %v8140
    %v8337 = vadd.f32 %v6319, %v8310
    %v8338 = vadd.f32 %v5970, %v7961
    %v8339 = vadd.f32 %v5972, %v7963
    %v8340 = vadd.f32 %v6153, %v8144
    %v8341 = vadd.f32 %v6155, %v8146
    %v8342 = vadd.f32 %v6324, %v8315
    %v8343 = vadd.f32 %v5974, %v7965
    %v8344 = vadd.f32 %v5976, %v7967
    %v8345 = vadd.f32 %v6157, %v8148
    %v8346 = vadd.f32 %v6159, %v8150
    %v8347 = vadd.f32 %v6327, %v8318
    %v8348 = vadd.f32 %v5980, %v7971
    %v8349 = vadd.f32 %v5982, %v7973
    %v8350 = vadd.f32 %v6163, %v8154
    %v8351 = vadd.f32 %v6165, %v8156
    %v8352 = vadd.f32 %v6332, %v8323
    %s8353 = scalar_lea.vmem [#allocation9], 5
    %v8354 = vld [vmem:[%s8353] sm:$0x1f]
    %v8356 = vlaneseq
    %v8357 = vshrl.u32 %v8356, 7
    %v8358 = vsub.s32 0, %v8357
    %v8359 = vrot.slane %v8354, %v8358
    %v8360 = vlaneseq
    %v8361 = vshrl.u32 %v8360, 7
    %v8362 = vsub.s32 1, %v8361
    %v8363 = vrot.slane %v8354, %v8362
    %v8364 = vlaneseq
    %v8365 = vshrl.u32 %v8364, 7
    %v8366 = vsub.s32 2, %v8365
    %v8367 = vrot.slane %v8354, %v8366
    %v8368 = vlaneseq
    %v8369 = vshrl.u32 %v8368, 7
    %v8370 = vsub.s32 3, %v8369
    %v8371 = vrot.slane %v8354, %v8370
    %v8372 = vlaneseq
    %v8373 = vshrl.u32 %v8372, 7
    %v8374 = vsub.s32 4, %v8373
    %v8375 = vrot.slane %v8354, %v8374
    %v8381 = vadd.f32 %v8328, %v8359
    %v8382 = vadd.f32 %v8329, %v8363
    %v8383 = vadd.f32 %v8330, %v8367
    %v8384 = vadd.f32 %v8331, %v8371
    %v8385 = vadd.f32 %v8332, %v8375
    %v8386 = vadd.f32 %v8333, %v8359
    %v8387 = vadd.f32 %v8334, %v8363
    %v8388 = vadd.f32 %v8335, %v8367
    %v8389 = vadd.f32 %v8336, %v8371
    %v8390 = vadd.f32 %v8337, %v8375
    %v8391 = vadd.f32 %v8338, %v8359
    %v8392 = vadd.f32 %v8339, %v8363
    %v8393 = vadd.f32 %v8340, %v8367
    %v8394 = vadd.f32 %v8341, %v8371
    %v8395 = vadd.f32 %v8342, %v8375
    %v8396 = vadd.f32 %v8343, %v8359
    %v8397 = vadd.f32 %v8344, %v8363
    %v8398 = vadd.f32 %v8345, %v8367
    %v8399 = vadd.f32 %v8346, %v8371
    %v8400 = vadd.f32 %v8347, %v8375
    %v8401 = vadd.f32 %v8348, %v8359
    %v8402 = vadd.f32 %v8349, %v8363
    %v8403 = vadd.f32 %v8350, %v8367
    %v8404 = vadd.f32 %v8351, %v8371
    %v8405 = vadd.f32 %v8352, %v8375
    %v8406 = vmax.f32 %v8381, 0.0
    %v8407 = vmax.f32 %v8382, 0.0
    %v8408 = vmax.f32 %v8383, 0.0
    %v8409 = vmax.f32 %v8384, 0.0
    %v8410 = vmax.f32 %v8385, 0.0
    %v8411 = vmax.f32 %v8386, 0.0
    %v8412 = vmax.f32 %v8387, 0.0
    %v8413 = vmax.f32 %v8388, 0.0
    %v8414 = vmax.f32 %v8389, 0.0
    %v8415 = vmax.f32 %v8390, 0.0
    %v8416 = vmax.f32 %v8391, 0.0
    %v8417 = vmax.f32 %v8392, 0.0
    %v8418 = vmax.f32 %v8393, 0.0
    %v8419 = vmax.f32 %v8394, 0.0
    %v8420 = vmax.f32 %v8395, 0.0
    %v8421 = vmax.f32 %v8396, 0.0
    %v8422 = vmax.f32 %v8397, 0.0
    %v8423 = vmax.f32 %v8398, 0.0
    %v8424 = vmax.f32 %v8399, 0.0
    %v8425 = vmax.f32 %v8400, 0.0
    %v8426 = vmax.f32 %v8401, 0.0
    %v8427 = vmax.f32 %v8402, 0.0
    %v8428 = vmax.f32 %v8403, 0.0
    %v8429 = vmax.f32 %v8404, 0.0
    %v8430 = vmax.f32 %v8405, 0.0
    %v8431 = vld [vmem:[#allocation14] sm:$0xff]
    %v8432 = vld [vmem:[#allocation14 + $0x8] sm:$0xff]
    %v8433 = vld [vmem:[#allocation14 + $0x10] sm:$0xff]
    %v8434 = vld [vmem:[#allocation14 + $0x18] sm:$0xff]
    %v8435 = vld [vmem:[#allocation14 + $0x20] sm:$0xff]
    %v8436 = vld [vmem:[#allocation14 + $0x28] sm:$0xff]
    %v8437 = vld [vmem:[#allocation14 + $0x30] sm:$0xff]
    %v8438 = vld [vmem:[#allocation14 + $0x38] sm:$0xff]
    %v8439 = vld [vmem:[#allocation14 + $0x40] sm:$0xff]
    %v8440 = vld [vmem:[#allocation14 + $0x48] sm:$0xff]
    %v8441 = vld [vmem:[#allocation14 + $0x50] sm:$0xff]
    %v8442 = vld [vmem:[#allocation14 + $0x58] sm:$0xff]
    %v8443 = vld [vmem:[#allocation14 + $0x60] sm:$0xff]
    %v8444 = vld [vmem:[#allocation14 + $0x68] sm:$0xff]
    %v8445 = vld [vmem:[#allocation14 + $0x70] sm:$0xff]
    %v8446 = vld [vmem:[#allocation14 + $0x78] sm:$0xff]
    %v8447 = vld [vmem:[#allocation14 + $0x80] sm:$0xff]
    %v8448 = vld [vmem:[#allocation14 + $0x88] sm:$0xff]
    %v8449 = vld [vmem:[#allocation14 + $0x90] sm:$0xff]
    %v8450 = vld [vmem:[#allocation14 + $0x98] sm:$0xff]
    %v8451 = vld [vmem:[#allocation14 + $0xa0] sm:$0xff]
    %v8452 = vld [vmem:[#allocation14 + $0xa8] sm:$0xff]
    %v8453 = vld [vmem:[#allocation14 + $0xb0] sm:$0xff]
    %v8454 = vld [vmem:[#allocation14 + $0xb8] sm:$0xff]
    %v8455 = vld [vmem:[#allocation14 + $0xc0] sm:$0xff]
    %v8456 = vmul.f32 %v8406, %v8431
    %v8457 = vmul.f32 %v8407, %v8432
    %v8458 = vmul.f32 %v8408, %v8433
    %v8459 = vmul.f32 %v8409, %v8434
    %v8460 = vmul.f32 %v8410, %v8435
    %v8461 = vmul.f32 %v8411, %v8436
    %v8462 = vmul.f32 %v8412, %v8437
    %v8463 = vmul.f32 %v8413, %v8438
    %v8464 = vmul.f32 %v8414, %v8439
    %v8465 = vmul.f32 %v8415, %v8440
    %v8466 = vmul.f32 %v8416, %v8441
    %v8467 = vmul.f32 %v8417, %v8442
    %v8468 = vmul.f32 %v8418, %v8443
    %v8469 = vmul.f32 %v8419, %v8444
    %v8470 = vmul.f32 %v8420, %v8445
    %v8471 = vmul.f32 %v8421, %v8446
    %v8472 = vmul.f32 %v8422, %v8447
    %v8473 = vmul.f32 %v8423, %v8448
    %v8474 = vmul.f32 %v8424, %v8449
    %v8475 = vmul.f32 %v8425, %v8450
    %v8476 = vmul.f32 %v8426, %v8451
    %v8477 = vmul.f32 %v8427, %v8452
    %v8478 = vmul.f32 %v8428, %v8453
    %v8479 = vmul.f32 %v8429, %v8454
    %v8480 = vmul.f32 %v8430, %v8455
    %v8481 = vadd.f32 %v8456, %v8461
    %v8482 = vadd.f32 %v8481, %v8466
    %v8483 = vadd.f32 %v8482, %v8471
    %v8484 = vadd.f32 %v8483, %v8476
    %v8485 = vrot.slane %v8484, 4
    %v8486 = vadd.f32 %v8484, %v8485
    %v8487 = vrot.slane %v8486, 2
    %v8488 = vadd.f32 %v8486, %v8487
    %v8489 = vrot.slane %v8488, 1
    %v8490 = vadd.f32 %v8488, %v8489
    %v8491 = vadd.f32 %v8457, %v8462
    %v8492 = vadd.f32 %v8491, %v8467
    %v8493 = vadd.f32 %v8492, %v8472
    %v8494 = vadd.f32 %v8493, %v8477
    %v8495 = vrot.slane %v8494, 4
    %v8496 = vadd.f32 %v8494, %v8495
    %v8497 = vrot.slane %v8496, 2
    %v8498 = vadd.f32 %v8496, %v8497
    %v8499 = vrot.slane %v8498, 1
    %v8500 = vadd.f32 %v8498, %v8499
    %v8501 = vadd.f32 %v8458, %v8463
    %v8502 = vadd.f32 %v8501, %v8468
    %v8503 = vadd.f32 %v8502, %v8473
    %v8504 = vadd.f32 %v8503, %v8478
    %v8505 = vrot.slane %v8504, 4
    %v8506 = vadd.f32 %v8504, %v8505
    %v8507 = vrot.slane %v8506, 2
    %v8508 = vadd.f32 %v8506, %v8507
    %v8509 = vrot.slane %v8508, 1
    %v8510 = vadd.f32 %v8508, %v8509
    %v8511 = vadd.f32 %v8459, %v8464
    %v8512 = vadd.f32 %v8511, %v8469
    %v8513 = vadd.f32 %v8512, %v8474
    %v8514 = vadd.f32 %v8513, %v8479
    %v8515 = vrot.slane %v8514, 4
    %v8516 = vadd.f32 %v8514, %v8515
    %v8517 = vrot.slane %v8516, 2
    %v8518 = vadd.f32 %v8516, %v8517
    %v8519 = vrot.slane %v8518, 1
    %v8520 = vadd.f32 %v8518, %v8519
    %v8521 = vadd.f32 %v8460, %v8465
    %v8522 = vadd.f32 %v8521, %v8470
    %v8523 = vadd.f32 %v8522, %v8475
    %v8524 = vadd.f32 %v8523, %v8480
    %v8525 = vrot.slane %v8524, 4
    %v8526 = vadd.f32 %v8524, %v8525
    %v8527 = vrot.slane %v8526, 2
    %v8528 = vadd.f32 %v8526, %v8527
    %v8529 = vrot.slane %v8528, 1
    %v8530 = vadd.f32 %v8528, %v8529
    %v8531 = vmul.f32 %v8456, %v8456
    %v8532 = vmul.f32 %v8457, %v8457
    %v8533 = vmul.f32 %v8458, %v8458
    %v8534 = vmul.f32 %v8459, %v8459
    %v8535 = vmul.f32 %v8460, %v8460
    %v8536 = vmul.f32 %v8461, %v8461
    %v8537 = vmul.f32 %v8462, %v8462
    %v8538 = vmul.f32 %v8463, %v8463
    %v8539 = vmul.f32 %v8464, %v8464
    %v8540 = vmul.f32 %v8465, %v8465
    %v8541 = vmul.f32 %v8466, %v8466
    %v8542 = vmul.f32 %v8467, %v8467
    %v8543 = vmul.f32 %v8468, %v8468
    %v8544 = vmul.f32 %v8469, %v8469
    %v8545 = vmul.f32 %v8470, %v8470
    %v8546 = vmul.f32 %v8471, %v8471
    %v8547 = vmul.f32 %v8472, %v8472
    %v8548 = vmul.f32 %v8473, %v8473
    %v8549 = vmul.f32 %v8474, %v8474
    %v8550 = vmul.f32 %v8475, %v8475
    %v8551 = vmul.f32 %v8476, %v8476
    %v8552 = vmul.f32 %v8477, %v8477
    %v8553 = vmul.f32 %v8478, %v8478
    %v8554 = vmul.f32 %v8479, %v8479
    %v8555 = vmul.f32 %v8480, %v8480
    %v8556 = vadd.f32 %v8531, %v8536
    %v8557 = vadd.f32 %v8556, %v8541
    %v8558 = vadd.f32 %v8557, %v8546
    %v8559 = vadd.f32 %v8558, %v8551
    %v8560 = vrot.slane %v8559, 4
    %v8561 = vadd.f32 %v8559, %v8560
    %v8562 = vrot.slane %v8561, 2
    %v8563 = vadd.f32 %v8561, %v8562
    %v8564 = vrot.slane %v8563, 1
    %v8565 = vadd.f32 %v8563, %v8564
    %v8566 = vadd.f32 %v8532, %v8537
    %v8567 = vadd.f32 %v8566, %v8542
    %v8568 = vadd.f32 %v8567, %v8547
    %v8569 = vadd.f32 %v8568, %v8552
    %v8570 = vrot.slane %v8569, 4
    %v8571 = vadd.f32 %v8569, %v8570
    %v8572 = vrot.slane %v8571, 2
    %v8573 = vadd.f32 %v8571, %v8572
    %v8574 = vrot.slane %v8573, 1
    %v8575 = vadd.f32 %v8573, %v8574
    %v8576 = vadd.f32 %v8533, %v8538
    %v8577 = vadd.f32 %v8576, %v8543
    %v8578 = vadd.f32 %v8577, %v8548
    %v8579 = vadd.f32 %v8578, %v8553
    %v8580 = vrot.slane %v8579, 4
    %v8581 = vadd.f32 %v8579, %v8580
    %v8582 = vrot.slane %v8581, 2
    %v8583 = vadd.f32 %v8581, %v8582
    %v8584 = vrot.slane %v8583, 1
    %v8585 = vadd.f32 %v8583, %v8584
    %v8586 = vadd.f32 %v8534, %v8539
    %v8587 = vadd.f32 %v8586, %v8544
    %v8588 = vadd.f32 %v8587, %v8549
    %v8589 = vadd.f32 %v8588, %v8554
    %v8590 = vrot.slane %v8589, 4
    %v8591 = vadd.f32 %v8589, %v8590
    %v8592 = vrot.slane %v8591, 2
    %v8593 = vadd.f32 %v8591, %v8592
    %v8594 = vrot.slane %v8593, 1
    %v8595 = vadd.f32 %v8593, %v8594
    %v8596 = vadd.f32 %v8535, %v8540
    %v8597 = vadd.f32 %v8596, %v8545
    %v8598 = vadd.f32 %v8597, %v8550
    %v8599 = vadd.f32 %v8598, %v8555
    %v8600 = vrot.slane %v8599, 4
    %v8601 = vadd.f32 %v8599, %v8600
    %v8602 = vrot.slane %v8601, 2
    %v8603 = vadd.f32 %v8601, %v8602
    %v8604 = vrot.slane %v8603, 1
    %v8605 = vadd.f32 %v8603, %v8604
    %v8606 = vsel %vm1782, %v8490, %v8565
    %v8607 = vsel %vm1782, %v8500, %v8575
    %v8608 = vsel %vm1782, %v8510, %v8585
    %v8609 = vsel %vm1782, %v8520, %v8595
    %v8610 = vsel %vm1782, %v8530, %v8605
    %v8611 = vld [vmem:[%s7] sm:$0xff]
    %v8612 = vld [vmem:[%s7 + $0x8] sm:$0xff]
    %v8613 = vld [vmem:[%s7 + $0x10] sm:$0xff]
    %v8614 = vld [vmem:[%s7 + $0x18] sm:$0xff]
    %v8615 = vld [vmem:[%s7 + $0x20] sm:$0xff]
    %v8616 = vld [vmem:[%s7 + $0x28] sm:$0xff]
    %v8617 = vld [vmem:[%s7 + $0x30] sm:$0xff]
    %v8618 = vld [vmem:[%s7 + $0x38] sm:$0xff]
    %v8619 = vld [vmem:[%s7 + $0x40] sm:$0xff]
    %v8620 = vld [vmem:[%s7 + $0x48] sm:$0xff]
    %v8621 = vld [vmem:[%s7 + $0x50] sm:$0xff]
    %v8622 = vld [vmem:[%s7 + $0x58] sm:$0xff]
    %v8623 = vld [vmem:[%s7 + $0x60] sm:$0xff]
    %v8624 = vld [vmem:[%s7 + $0x68] sm:$0xff]
    %v8625 = vld [vmem:[%s7 + $0x70] sm:$0xff]
    %v8626 = vld [vmem:[%s7 + $0x78] sm:$0xff]
    %v8627 = vld [vmem:[%s7 + $0x80] sm:$0xff]
    %v8628 = vld [vmem:[%s7 + $0x88] sm:$0xff]
    %v8629 = vld [vmem:[%s7 + $0x90] sm:$0xff]
    %v8630 = vld [vmem:[%s7 + $0x98] sm:$0xff]
    %v8631 = vld [vmem:[%s7 + $0xa0] sm:$0xff]
    %v8632 = vld [vmem:[%s7 + $0xa8] sm:$0xff]
    %v8633 = vld [vmem:[%s7 + $0xb0] sm:$0xff]
    %v8634 = vld [vmem:[%s7 + $0xb8] sm:$0xff]
    %v8635 = vld [vmem:[%s7 + $0xc0] sm:$0xff]
    %v8636 = vld [vmem:[%s7 + $0xc8] sm:$0xff]
    %v8637 = vld [vmem:[%s7 + $0xd0] sm:$0xff]
    %v8638 = vld [vmem:[%s7 + $0xd8] sm:$0xff]
    %v8639 = vld [vmem:[%s7 + $0xe0] sm:$0xff]
    %v8640 = vld [vmem:[%s7 + $0xe8] sm:$0xff]
    %v8641 = vld [vmem:[%s7 + $0xf0] sm:$0xff]
    %v8642 = vld [vmem:[%s7 + $0xf8] sm:$0xff]
    %v8643 = vld [vmem:[%s7 + $0x100] sm:$0xff]
    %v8644 = vld [vmem:[%s7 + $0x108] sm:$0xff]
    %v8645 = vld [vmem:[%s7 + $0x110] sm:$0xff]
    %v8646 = vld [vmem:[%s7 + $0x118] sm:$0xff]
    %v8647 = vld [vmem:[%s7 + $0x120] sm:$0xff]
    %v8648 = vld [vmem:[%s7 + $0x128] sm:$0xff]
    %v8649 = vld [vmem:[%s7 + $0x130] sm:$0xff]
    %v8650 = vld [vmem:[%s7 + $0x138] sm:$0xff]
    %v8651 = vld [vmem:[%s7 + $0x140] sm:$0xff]
    %v8652 = vld [vmem:[%s7 + $0x148] sm:$0xff]
    %v8653 = vld [vmem:[%s7 + $0x150] sm:$0xff]
    %v8654 = vld [vmem:[%s7 + $0x158] sm:$0xff]
    %v8655 = vld [vmem:[%s7 + $0x160] sm:$0xff]
    %v8656 = vld [vmem:[%s7 + $0x168] sm:$0xff]
    %v8657 = vld [vmem:[%s7 + $0x170] sm:$0xff]
    %v8658 = vld [vmem:[%s7 + $0x178] sm:$0xff]
    %v8659 = vld [vmem:[%s7 + $0x180] sm:$0xff]
    %v8660 = vld [vmem:[%s7 + $0x188] sm:$0xff]
    %v8661 = vld [vmem:[%s7 + $0x190] sm:$0xff]
    %v8662 = vld [vmem:[%s7 + $0x198] sm:$0xff]
    %v8663 = vld [vmem:[%s7 + $0x1a0] sm:$0xff]
    %v8664 = vld [vmem:[%s7 + $0x1a8] sm:$0xff]
    %v8665 = vld [vmem:[%s7 + $0x1b0] sm:$0xff]
    %v8666 = vld [vmem:[%s7 + $0x1b8] sm:$0xff]
    %v8667 = vld [vmem:[%s7 + $0x1c0] sm:$0xff]
    %v8668 = vld [vmem:[%s7 + $0x1c8] sm:$0xff]
    %v8669 = vld [vmem:[%s7 + $0x1d0] sm:$0xff]
    %v8670 = vld [vmem:[%s7 + $0x1d8] sm:$0xff]
    %v8671 = vld [vmem:[%s7 + $0x1e0] sm:$0xff]
    %v8672 = vld [vmem:[%s7 + $0x1e8] sm:$0xff]
    %v8673 = vld [vmem:[%s7 + $0x1f0] sm:$0xff]
    %v8674 = vld [vmem:[%s7 + $0x1f8] sm:$0xff]
    %v8675 = vld [vmem:[%s7 + $0x200] sm:$0xff]
    %v8676 = vld [vmem:[%s7 + $0x208] sm:$0xff]
    %v8677 = vld [vmem:[%s7 + $0x210] sm:$0xff]
    %v8678 = vld [vmem:[%s7 + $0x218] sm:$0xff]
    %v8679 = vld [vmem:[%s7 + $0x220] sm:$0xff]
    %v8680 = vld [vmem:[%s7 + $0x228] sm:$0xff]
    %v8681 = vld [vmem:[%s7 + $0x230] sm:$0xff]
    %v8682 = vld [vmem:[%s7 + $0x238] sm:$0xff]
    %v8683 = vld [vmem:[%s7 + $0x240] sm:$0xff]
    %v8684 = vld [vmem:[%s7 + $0x248] sm:$0xff]
    %v8685 = vld [vmem:[%s7 + $0x250] sm:$0xff]
    %v8686 = vld [vmem:[%s7 + $0x258] sm:$0xff]
    %v8687 = vld [vmem:[%s7 + $0x260] sm:$0xff]
    %v8688 = vld [vmem:[%s7 + $0x268] sm:$0xff]
    %v8689 = vld [vmem:[%s7 + $0x270] sm:$0xff]
    %v8690 = vld [vmem:[%s7 + $0x278] sm:$0xff]
    %8691 = vmatprep.subr.mxu0 0.0
    %8692 = vmatpush1.msra.mxu0 %v8626
    %8693 = vmatprep.subr.mxu0 0.0
    %8694 = vmatpush1.msra.mxu0 %v8625
    %8695 = vmatprep.subr.mxu0 0.0
    %8696 = vmatpush1.msra.mxu0 %v8624
    %8697 = vmatprep.subr.mxu0 0.0
    %8698 = vmatpush1.msra.mxu0 %v8623
    %8699 = vmatprep.subr.mxu0 0.0
    %8700 = vmatpush1.msra.mxu0 %v8622
    %8701 = vmatprep.subr.mxu0 0.0
    %8702 = vmatpush1.msra.mxu0 %v8621
    %8703 = vmatprep.subr.mxu0 0.0
    %8704 = vmatpush1.msra.mxu0 %v8620
    %8705 = vmatprep.subr.mxu0 0.0
    %8706 = vmatpush1.msra.mxu0 %v8619
    %8707 = vmatprep.subr.mxu0 0.0
    %8708 = vmatpush1.msra.mxu0 %v8618
    %8709 = vmatprep.subr.mxu0 0.0
    %8710 = vmatpush1.msra.mxu0 %v8617
    %8711 = vmatprep.subr.mxu0 0.0
    %8712 = vmatpush1.msra.mxu0 %v8616
    %8713 = vmatprep.subr.mxu0 0.0
    %8714 = vmatpush1.msra.mxu0 %v8615
    %8715 = vmatprep.subr.mxu0 0.0
    %8716 = vmatpush1.msra.mxu0 %v8614
    %8717 = vmatprep.subr.mxu0 0.0
    %8718 = vmatpush1.msra.mxu0 %v8613
    %8719 = vmatprep.subr.mxu0 0.0
    %8720 = vmatpush1.msra.mxu0 %v8612
    %8721 = vmatprep.subr.mxu0 0.0
    %8722 = vmatpush1.msra.mxu0 %v8611
    %8723 = vmatprep.subr.mxu0 0.0
    %8724 = vmatpush2.msra.mxu0 %v8642
    %8725 = vmatprep.subr.mxu0 0.0
    %8726 = vmatpush2.msra.mxu0 %v8641
    %8727 = vmatprep.subr.mxu0 0.0
    %8728 = vmatpush2.msra.mxu0 %v8640
    %8729 = vmatprep.subr.mxu0 0.0
    %8730 = vmatpush2.msra.mxu0 %v8639
    %8731 = vmatprep.subr.mxu0 0.0
    %8732 = vmatpush2.msra.mxu0 %v8638
    %8733 = vmatprep.subr.mxu0 0.0
    %8734 = vmatpush2.msra.mxu0 %v8637
    %8735 = vmatprep.subr.mxu0 0.0
    %8736 = vmatpush2.msra.mxu0 %v8636
    %8737 = vmatprep.subr.mxu0 0.0
    %8738 = vmatpush2.msra.mxu0 %v8635
    %8739 = vmatprep.subr.mxu0 0.0
    %8740 = vmatpush2.msra.mxu0 %v8634
    %8741 = vmatprep.subr.mxu0 0.0
    %8742 = vmatpush2.msra.mxu0 %v8633
    %8743 = vmatprep.subr.mxu0 0.0
    %8744 = vmatpush2.msra.mxu0 %v8632
    %8745 = vmatprep.subr.mxu0 0.0
    %8746 = vmatpush2.msra.mxu0 %v8631
    %8747 = vmatprep.subr.mxu0 0.0
    %8748 = vmatpush2.msra.mxu0 %v8630
    %8749 = vmatprep.subr.mxu0 0.0
    %8750 = vmatpush2.msra.mxu0 %v8629
    %8751 = vmatprep.subr.mxu0 0.0
    %8752 = vmatpush2.msra.mxu0 %v8628
    %8753 = vmatprep.subr.mxu0 0.0
    %8754 = vmatpush2.msra.mxu0 %v8627
    %8755 = vmatprep.mubr.f32.mxu0 %v8607
    %8756 = vmatmul.mubr.f32.gmra.mxu0 %v8606
    %v8757 = vpop.f32.mrf.mxu0
    %v8758 = vadd.f32 0.0, %v8757
    %v8759 = vpop.f32.mrf.mxu0
    %8760 = vdwg.mxu0
    %8761 = vmatprep.subr.mxu0 0.0
    %8762 = vmatpush1.msra.mxu0 %v8658
    %8763 = vmatprep.subr.mxu0 0.0
    %8764 = vmatpush1.msra.mxu0 %v8657
    %8765 = vmatprep.subr.mxu0 0.0
    %8766 = vmatpush1.msra.mxu0 %v8656
    %8767 = vmatprep.subr.mxu0 0.0
    %8768 = vmatpush1.msra.mxu0 %v8655
    %8769 = vmatprep.subr.mxu0 0.0
    %8770 = vmatpush1.msra.mxu0 %v8654
    %8771 = vmatprep.subr.mxu0 0.0
    %8772 = vmatpush1.msra.mxu0 %v8653
    %8773 = vmatprep.subr.mxu0 0.0
    %8774 = vmatpush1.msra.mxu0 %v8652
    %8775 = vmatprep.subr.mxu0 0.0
    %8776 = vmatpush1.msra.mxu0 %v8651
    %8777 = vmatprep.subr.mxu0 0.0
    %8778 = vmatpush1.msra.mxu0 %v8650
    %8779 = vmatprep.subr.mxu0 0.0
    %8780 = vmatpush1.msra.mxu0 %v8649
    %8781 = vmatprep.subr.mxu0 0.0
    %8782 = vmatpush1.msra.mxu0 %v8648
    %8783 = vmatprep.subr.mxu0 0.0
    %8784 = vmatpush1.msra.mxu0 %v8647
    %8785 = vmatprep.subr.mxu0 0.0
    %8786 = vmatpush1.msra.mxu0 %v8646
    %8787 = vmatprep.subr.mxu0 0.0
    %8788 = vmatpush1.msra.mxu0 %v8645
    %8789 = vmatprep.subr.mxu0 0.0
    %8790 = vmatpush1.msra.mxu0 %v8644
    %8791 = vmatprep.subr.mxu0 0.0
    %8792 = vmatpush1.msra.mxu0 %v8643
    %8793 = vmatprep.subr.mxu0 0.0
    %8794 = vmatpush2.msra.mxu0 %v8674
    %8795 = vmatprep.subr.mxu0 0.0
    %8796 = vmatpush2.msra.mxu0 %v8673
    %8797 = vmatprep.subr.mxu0 0.0
    %8798 = vmatpush2.msra.mxu0 %v8672
    %8799 = vmatprep.subr.mxu0 0.0
    %8800 = vmatpush2.msra.mxu0 %v8671
    %8801 = vmatprep.subr.mxu0 0.0
    %8802 = vmatpush2.msra.mxu0 %v8670
    %8803 = vmatprep.subr.mxu0 0.0
    %8804 = vmatpush2.msra.mxu0 %v8669
    %8805 = vmatprep.subr.mxu0 0.0
    %8806 = vmatpush2.msra.mxu0 %v8668
    %8807 = vmatprep.subr.mxu0 0.0
    %8808 = vmatpush2.msra.mxu0 %v8667
    %8809 = vmatprep.subr.mxu0 0.0
    %8810 = vmatpush2.msra.mxu0 %v8666
    %8811 = vmatprep.subr.mxu0 0.0
    %8812 = vmatpush2.msra.mxu0 %v8665
    %8813 = vmatprep.subr.mxu0 0.0
    %8814 = vmatpush2.msra.mxu0 %v8664
    %8815 = vmatprep.subr.mxu0 0.0
    %8816 = vmatpush2.msra.mxu0 %v8663
    %8817 = vmatprep.subr.mxu0 0.0
    %8818 = vmatpush2.msra.mxu0 %v8662
    %8819 = vmatprep.subr.mxu0 0.0
    %8820 = vmatpush2.msra.mxu0 %v8661
    %8821 = vmatprep.subr.mxu0 0.0
    %8822 = vmatpush2.msra.mxu0 %v8660
    %8823 = vmatprep.subr.mxu0 0.0
    %8824 = vmatpush2.msra.mxu0 %v8659
    %8825 = vmatprep.mubr.f32.mxu0 %v8609
    %8826 = vmatmul.mubr.f32.gmra.mxu0 %v8608
    %v8827 = vpop.f32.mrf.mxu0
    %v8828 = vadd.f32 %v8758, %v8827
    %v8829 = vpop.f32.mrf.mxu0
    %8830 = vdwg.mxu0
    %8831 = vmatprep.subr.mxu0 0.0
    %8832 = vmatpush1.msra.mxu0 %v8690
    %8833 = vmatprep.subr.mxu0 0.0
    %8834 = vmatpush1.msra.mxu0 %v8689
    %8835 = vmatprep.subr.mxu0 0.0
    %8836 = vmatpush1.msra.mxu0 %v8688
    %8837 = vmatprep.subr.mxu0 0.0
    %8838 = vmatpush1.msra.mxu0 %v8687
    %8839 = vmatprep.subr.mxu0 0.0
    %8840 = vmatpush1.msra.mxu0 %v8686
    %8841 = vmatprep.subr.mxu0 0.0
    %8842 = vmatpush1.msra.mxu0 %v8685
    %8843 = vmatprep.subr.mxu0 0.0
    %8844 = vmatpush1.msra.mxu0 %v8684
    %8845 = vmatprep.subr.mxu0 0.0
    %8846 = vmatpush1.msra.mxu0 %v8683
    %8847 = vmatprep.subr.mxu0 0.0
    %8848 = vmatpush1.msra.mxu0 %v8682
    %8849 = vmatprep.subr.mxu0 0.0
    %8850 = vmatpush1.msra.mxu0 %v8681
    %8851 = vmatprep.subr.mxu0 0.0
    %8852 = vmatpush1.msra.mxu0 %v8680
    %8853 = vmatprep.subr.mxu0 0.0
    %8854 = vmatpush1.msra.mxu0 %v8679
    %8855 = vmatprep.subr.mxu0 0.0
    %8856 = vmatpush1.msra.mxu0 %v8678
    %8857 = vmatprep.subr.mxu0 0.0
    %8858 = vmatpush1.msra.mxu0 %v8677
    %8859 = vmatprep.subr.mxu0 0.0
    %8860 = vmatpush1.msra.mxu0 %v8676
    %8861 = vmatprep.subr.mxu0 0.0
    %8862 = vmatpush1.msra.mxu0 %v8675
    %8863 = vmatprep.subr.mxu0 0.0
    %8864 = vmatpush2.msra.mxu0 0.0
    %8865 = vmatprep.subr.mxu0 0.0
    %8866 = vmatpush2.msra.mxu0 0.0
    %8867 = vmatprep.subr.mxu0 0.0
    %8868 = vmatpush2.msra.mxu0 0.0
    %8869 = vmatprep.subr.mxu0 0.0
    %8870 = vmatpush2.msra.mxu0 0.0
    %8871 = vmatprep.subr.mxu0 0.0
    %8872 = vmatpush2.msra.mxu0 0.0
    %8873 = vmatprep.subr.mxu0 0.0
    %8874 = vmatpush2.msra.mxu0 0.0
    %8875 = vmatprep.subr.mxu0 0.0
    %8876 = vmatpush2.msra.mxu0 0.0
    %8877 = vmatprep.subr.mxu0 0.0
    %8878 = vmatpush2.msra.mxu0 0.0
    %8879 = vmatprep.subr.mxu0 0.0
    %8880 = vmatpush2.msra.mxu0 0.0
    %8881 = vmatprep.subr.mxu0 0.0
    %8882 = vmatpush2.msra.mxu0 0.0
    %8883 = vmatprep.subr.mxu0 0.0
    %8884 = vmatpush2.msra.mxu0 0.0
    %8885 = vmatprep.subr.mxu0 0.0
    %8886 = vmatpush2.msra.mxu0 0.0
    %8887 = vmatprep.subr.mxu0 0.0
    %8888 = vmatpush2.msra.mxu0 0.0
    %8889 = vmatprep.subr.mxu0 0.0
    %8890 = vmatpush2.msra.mxu0 0.0
    %8891 = vmatprep.subr.mxu0 0.0
    %8892 = vmatpush2.msra.mxu0 0.0
    %8893 = vmatprep.subr.mxu0 0.0
    %8894 = vmatpush2.msra.mxu0 0.0
    %8895 = vmatprep.mubr.f32.mxu0 0.0
    %8896 = vmatmul.mubr.f32.gmra.mxu0 %v8610
    %v8897 = vpop.f32.mrf.mxu0
    %v8898 = vadd.f32 %v8828, %v8897
    %v8899 = vpop.f32.mrf.mxu0
    %8900 = vdwg.mxu0
    %v8901 = vmul.f32 %v8898, 0.001953125
    %v8902 = vmul.f32 %v8901, %v8901
    %v8904 = vrot.slane %v8902, 7
    %v8906 = vsub.f32 %v8901, %v8904
    %v8907 = vmax.f32 %v8906, 0.0
    %s8908 = scalar_lea.vmem [#allocation11], 1
    %v8909 = vld [vmem:[%s8908] sm:$0x1]
    %v8910 = vadd.f32 %v8907, 1e-05
    %v8911 = vrsqrt.pop %v8910
    %v8914 = vunpack.c.l.s4 1966171168
    %v8915 = vunpack.c.0.s8 %v8914
    %v8916 = vlaneseq
    %v8917 = vshrl.u32 %v8916, 7
    %v8918 = vsub.s32 %v8915, %v8917
    %v8919 = vrot.slane %v8911, %v8918
    %v8920 = vcombine.high %v8919, %v8919
    %v8922 = vunpack.c.l.s4 1966171168
    %v8923 = vunpack.c.0.s8 %v8922
    %v8924 = vlaneseq
    %v8925 = vshrl.u32 %v8924, 7
    %v8926 = vsub.s32 %v8923, %v8925
    %v8927 = vrot.slane %v8920, %v8926
    %v8929 = vmul.f32 %v8909, %v8927
    %s8930 = scalar_lea.vmem [#allocation12], 1
    %v8931 = vld [vmem:[%s8930] sm:$0x1]
    %v8932 = vmul.f32 %v8901, %v8929
    %v8933 = vsub.f32 %v8931, %v8932
    %v8935 = vlaneseq
    %v8936 = vshrl.u32 %v8935, 7
    %v8937 = vsub.s32 0, %v8936
    %v8938 = vrot.slane %v8933, %v8937
    %v8940 = vsel %vm1782, %v8929, %v8938
    %v8941 = vld [vmem:[#allocation15] sm:$0xff]
    %v8942 = vld [vmem:[#allocation15 + $0x8] sm:$0xff]
    %v8943 = vld [vmem:[#allocation15 + $0x10] sm:$0xff]
    %v8944 = vld [vmem:[#allocation15 + $0x18] sm:$0xff]
    %v8945 = vld [vmem:[#allocation15 + $0x20] sm:$0xff]
    %v8946 = vld [vmem:[#allocation15 + $0x28] sm:$0xff]
    %v8947 = vld [vmem:[#allocation15 + $0x30] sm:$0xff]
    %v8948 = vld [vmem:[#allocation15 + $0x38] sm:$0xff]
    %v8949 = vld [vmem:[#allocation15 + $0x40] sm:$0xff]
    %v8950 = vld [vmem:[#allocation15 + $0x48] sm:$0xff]
    %v8951 = vld [vmem:[#allocation15 + $0x50] sm:$0xff]
    %v8952 = vld [vmem:[#allocation15 + $0x58] sm:$0xff]
    %v8953 = vld [vmem:[#allocation15 + $0x60] sm:$0xff]
    %v8954 = vld [vmem:[#allocation15 + $0x68] sm:$0xff]
    %v8955 = vld [vmem:[#allocation15 + $0x70] sm:$0xff]
    %v8956 = vld [vmem:[#allocation15 + $0x78] sm:$0xff]
    %v8957 = vld [vmem:[#allocation15 + $0x80] sm:$0xff]
    %v8958 = vld [vmem:[#allocation15 + $0x88] sm:$0xff]
    %v8959 = vld [vmem:[#allocation15 + $0x90] sm:$0xff]
    %v8960 = vld [vmem:[#allocation15 + $0x98] sm:$0xff]
    %v8962 = vsel %vm2136, %v8940, 0
    %8964 = vmatprep.subr.mxu0 0.0
    %8965 = vmatpush1.msra.mxu0 0.0
    %8966 = vmatprep.subr.mxu0 0.0
    %8967 = vmatpush1.msra.mxu0 0.0
    %8968 = vmatprep.subr.mxu0 0.0
    %8969 = vmatpush1.msra.mxu0 0.0
    %8970 = vmatprep.subr.mxu0 0.0
    %8971 = vmatpush1.msra.mxu0 0.0
    %8972 = vmatprep.subr.mxu0 0.0
    %8973 = vmatpush1.msra.mxu0 0.0
    %8974 = vmatprep.subr.mxu0 0.0
    %8975 = vmatpush1.msra.mxu0 0.0
    %8976 = vmatprep.subr.mxu0 0.0
    %8977 = vmatpush1.msra.mxu0 0.0
    %8978 = vmatprep.subr.mxu0 0.0
    %8979 = vmatpush1.msra.mxu0 0.0
    %8980 = vmatprep.subr.mxu0 0.0
    %8981 = vmatpush1.msra.mxu0 0.0
    %8982 = vmatprep.subr.mxu0 0.0
    %8983 = vmatpush1.msra.mxu0 0.0
    %8984 = vmatprep.subr.mxu0 0.0
    %8985 = vmatpush1.msra.mxu0 0.0
    %8986 = vmatprep.subr.mxu0 0.0
    %8987 = vmatpush1.msra.mxu0 0.0
    %8988 = vmatprep.subr.mxu0 %v8957
    %8989 = vmatpush1.msra.mxu0 %v8956
    %8990 = vmatprep.subr.mxu0 %v8952
    %8991 = vmatpush1.msra.mxu0 %v8951
    %8992 = vmatprep.subr.mxu0 %v8947
    %8993 = vmatpush1.msra.mxu0 %v8946
    %8994 = vmatprep.subr.mxu0 %v8942
    %8995 = vmatpush1.msra.mxu0 %v8941
    %8996 = vmatprep.subr.mxu0 0.0
    %8997 = vmatpush2.msra.mxu0 0.0
    %8998 = vmatprep.subr.mxu0 0.0
    %8999 = vmatpush2.msra.mxu0 0.0
    %9000 = vmatprep.subr.mxu0 0.0
    %9001 = vmatpush2.msra.mxu0 0.0
    %9002 = vmatprep.subr.mxu0 0.0
    %9003 = vmatpush2.msra.mxu0 0.0
    %9004 = vmatprep.subr.mxu0 0.0
    %9005 = vmatpush2.msra.mxu0 0.0
    %9006 = vmatprep.subr.mxu0 0.0
    %9007 = vmatpush2.msra.mxu0 0.0
    %9008 = vmatprep.subr.mxu0 0.0
    %9009 = vmatpush2.msra.mxu0 0.0
    %9010 = vmatprep.subr.mxu0 0.0
    %9011 = vmatpush2.msra.mxu0 0.0
    %9012 = vmatprep.subr.mxu0 0.0
    %9013 = vmatpush2.msra.mxu0 0.0
    %9014 = vmatprep.subr.mxu0 0.0
    %9015 = vmatpush2.msra.mxu0 0.0
    %9016 = vmatprep.subr.mxu0 0.0
    %9017 = vmatpush2.msra.mxu0 0.0
    %9018 = vmatprep.subr.mxu0 0.0
    %9019 = vmatpush2.msra.mxu0 0.0
    %9020 = vmatprep.subr.mxu0 0.0
    %9021 = vmatpush2.msra.mxu0 0.0
    %9022 = vmatprep.subr.mxu0 0.0
    %9023 = vmatpush2.msra.mxu0 0.0
    %9024 = vmatprep.subr.mxu0 0.0
    %9025 = vmatpush2.msra.mxu0 0.0
    %9026 = vmatprep.subr.mxu0 0.0
    %9027 = vmatpush2.msra.mxu0 0.0
    %9028 = vmatprep.mubr.f32.mxu0 0.0
    %9029 = vmatmul.mubr.f32.gmra.mxu0 %v8962
    %v9030 = vpop.f32.mrf.mxu0
    %v9031 = vadd.f32 0.0, %v9030
    %v9032 = vpop.f32.mrf.mxu0
    %v9033 = vadd.f32 0.0, %v9032
    %9034 = vdwg.mxu0
    %9035 = vmatprep.subr.mxu0 0.0
    %9036 = vmatpush1.msra.mxu0 0.0
    %9037 = vmatprep.subr.mxu0 0.0
    %9038 = vmatpush1.msra.mxu0 0.0
    %9039 = vmatprep.subr.mxu0 0.0
    %9040 = vmatpush1.msra.mxu0 0.0
    %9041 = vmatprep.subr.mxu0 0.0
    %9042 = vmatpush1.msra.mxu0 0.0
    %9043 = vmatprep.subr.mxu0 0.0
    %9044 = vmatpush1.msra.mxu0 0.0
    %9045 = vmatprep.subr.mxu0 0.0
    %9046 = vmatpush1.msra.mxu0 0.0
    %9047 = vmatprep.subr.mxu0 0.0
    %9048 = vmatpush1.msra.mxu0 0.0
    %9049 = vmatprep.subr.mxu0 0.0
    %9050 = vmatpush1.msra.mxu0 0.0
    %9051 = vmatprep.subr.mxu0 0.0
    %9052 = vmatpush1.msra.mxu0 0.0
    %9053 = vmatprep.subr.mxu0 0.0
    %9054 = vmatpush1.msra.mxu0 0.0
    %9055 = vmatprep.subr.mxu0 0.0
    %9056 = vmatpush1.msra.mxu0 0.0
    %9057 = vmatprep.subr.mxu0 0.0
    %9058 = vmatpush1.msra.mxu0 0.0
    %9059 = vmatprep.subr.mxu0 %v8959
    %9060 = vmatpush1.msra.mxu0 %v8958
    %9061 = vmatprep.subr.mxu0 %v8954
    %9062 = vmatpush1.msra.mxu0 %v8953
    %9063 = vmatprep.subr.mxu0 %v8949
    %9064 = vmatpush1.msra.mxu0 %v8948
    %9065 = vmatprep.subr.mxu0 %v8944
    %9066 = vmatpush1.msra.mxu0 %v8943
    %9067 = vmatprep.subr.mxu0 0.0
    %9068 = vmatpush2.msra.mxu0 0.0
    %9069 = vmatprep.subr.mxu0 0.0
    %9070 = vmatpush2.msra.mxu0 0.0
    %9071 = vmatprep.subr.mxu0 0.0
    %9072 = vmatpush2.msra.mxu0 0.0
    %9073 = vmatprep.subr.mxu0 0.0
    %9074 = vmatpush2.msra.mxu0 0.0
    %9075 = vmatprep.subr.mxu0 0.0
    %9076 = vmatpush2.msra.mxu0 0.0
    %9077 = vmatprep.subr.mxu0 0.0
    %9078 = vmatpush2.msra.mxu0 0.0
    %9079 = vmatprep.subr.mxu0 0.0
    %9080 = vmatpush2.msra.mxu0 0.0
    %9081 = vmatprep.subr.mxu0 0.0
    %9082 = vmatpush2.msra.mxu0 0.0
    %9083 = vmatprep.subr.mxu0 0.0
    %9084 = vmatpush2.msra.mxu0 0.0
    %9085 = vmatprep.subr.mxu0 0.0
    %9086 = vmatpush2.msra.mxu0 0.0
    %9087 = vmatprep.subr.mxu0 0.0
    %9088 = vmatpush2.msra.mxu0 0.0
    %9089 = vmatprep.subr.mxu0 0.0
    %9090 = vmatpush2.msra.mxu0 0.0
    %9091 = vmatprep.subr.mxu0 0.0
    %9092 = vmatpush2.msra.mxu0 0.0
    %9093 = vmatprep.subr.mxu0 0.0
    %9094 = vmatpush2.msra.mxu0 0.0
    %9095 = vmatprep.subr.mxu0 0.0
    %9096 = vmatpush2.msra.mxu0 0.0
    %9097 = vmatprep.subr.mxu0 0.0
    %9098 = vmatpush2.msra.mxu0 0.0
    %9099 = vmatprep.mubr.f32.mxu0 0.0
    %9100 = vmatmul.mubr.f32.gmra.mxu0 %v8962
    %v9101 = vpop.f32.mrf.mxu0
    %v9102 = vadd.f32 0.0, %v9101
    %v9103 = vpop.f32.mrf.mxu0
    %v9104 = vadd.f32 0.0, %v9103
    %9105 = vdwg.mxu0
    %9106 = vmatprep.subr.mxu0 0.0
    %9107 = vmatpush1.msra.mxu0 0.0
    %9108 = vmatprep.subr.mxu0 0.0
    %9109 = vmatpush1.msra.mxu0 0.0
    %9110 = vmatprep.subr.mxu0 0.0
    %9111 = vmatpush1.msra.mxu0 0.0
    %9112 = vmatprep.subr.mxu0 0.0
    %9113 = vmatpush1.msra.mxu0 0.0
    %9114 = vmatprep.subr.mxu0 0.0
    %9115 = vmatpush1.msra.mxu0 0.0
    %9116 = vmatprep.subr.mxu0 0.0
    %9117 = vmatpush1.msra.mxu0 0.0
    %9118 = vmatprep.subr.mxu0 0.0
    %9119 = vmatpush1.msra.mxu0 0.0
    %9120 = vmatprep.subr.mxu0 0.0
    %9121 = vmatpush1.msra.mxu0 0.0
    %9122 = vmatprep.subr.mxu0 0.0
    %9123 = vmatpush1.msra.mxu0 0.0
    %9124 = vmatprep.subr.mxu0 0.0
    %9125 = vmatpush1.msra.mxu0 0.0
    %9126 = vmatprep.subr.mxu0 0.0
    %9127 = vmatpush1.msra.mxu0 0.0
    %9128 = vmatprep.subr.mxu0 0.0
    %9129 = vmatpush1.msra.mxu0 0.0
    %9130 = vmatprep.subr.mxu0 0.0
    %9131 = vmatpush1.msra.mxu0 %v8960
    %9132 = vmatprep.subr.mxu0 0.0
    %9133 = vmatpush1.msra.mxu0 %v8955
    %9134 = vmatprep.subr.mxu0 0.0
    %9135 = vmatpush1.msra.mxu0 %v8950
    %9136 = vmatprep.subr.mxu0 0.0
    %9137 = vmatpush1.msra.mxu0 %v8945
    %9138 = vmatprep.subr.mxu0 0.0
    %9139 = vmatpush2.msra.mxu0 0.0
    %9140 = vmatprep.subr.mxu0 0.0
    %9141 = vmatpush2.msra.mxu0 0.0
    %9142 = vmatprep.subr.mxu0 0.0
    %9143 = vmatpush2.msra.mxu0 0.0
    %9144 = vmatprep.subr.mxu0 0.0
    %9145 = vmatpush2.msra.mxu0 0.0
    %9146 = vmatprep.subr.mxu0 0.0
    %9147 = vmatpush2.msra.mxu0 0.0
    %9148 = vmatprep.subr.mxu0 0.0
    %9149 = vmatpush2.msra.mxu0 0.0
    %9150 = vmatprep.subr.mxu0 0.0
    %9151 = vmatpush2.msra.mxu0 0.0
    %9152 = vmatprep.subr.mxu0 0.0
    %9153 = vmatpush2.msra.mxu0 0.0
    %9154 = vmatprep.subr.mxu0 0.0
    %9155 = vmatpush2.msra.mxu0 0.0
    %9156 = vmatprep.subr.mxu0 0.0
    %9157 = vmatpush2.msra.mxu0 0.0
    %9158 = vmatprep.subr.mxu0 0.0
    %9159 = vmatpush2.msra.mxu0 0.0
    %9160 = vmatprep.subr.mxu0 0.0
    %9161 = vmatpush2.msra.mxu0 0.0
    %9162 = vmatprep.subr.mxu0 0.0
    %9163 = vmatpush2.msra.mxu0 0.0
    %9164 = vmatprep.subr.mxu0 0.0
    %9165 = vmatpush2.msra.mxu0 0.0
    %9166 = vmatprep.subr.mxu0 0.0
    %9167 = vmatpush2.msra.mxu0 0.0
    %9168 = vmatprep.subr.mxu0 0.0
    %9169 = vmatpush2.msra.mxu0 0.0
    %9170 = vmatprep.mubr.f32.mxu0 0.0
    %9171 = vmatmul.mubr.f32.gmra.mxu0 %v8962
    %v9172 = vpop.f32.mrf.mxu0
    %v9173 = vadd.f32 0.0, %v9172
    %v9174 = vpop.f32.mrf.mxu0
    %9175 = vdwg.mxu0
    %v9176 = vlaneseq
    %v9177 = vshrl.u32 %v9176, 7
    %v9178 = vsub.s32 0, %v9177
    %v9179 = vrot.slane %v9031, %v9178
    %v9180 = vlaneseq
    %v9181 = vshrl.u32 %v9180, 7
    %v9182 = vsub.s32 0, %v9181
    %v9183 = vrot.slane %v9033, %v9182
    %v9184 = vlaneseq
    %v9185 = vshrl.u32 %v9184, 7
    %v9186 = vsub.s32 0, %v9185
    %v9187 = vrot.slane %v9102, %v9186
    %v9188 = vlaneseq
    %v9189 = vshrl.u32 %v9188, 7
    %v9190 = vsub.s32 0, %v9189
    %v9191 = vrot.slane %v9104, %v9190
    %v9192 = vlaneseq
    %v9193 = vshrl.u32 %v9192, 7
    %v9194 = vsub.s32 0, %v9193
    %v9195 = vrot.slane %v9173, %v9194
    %v9196 = vmul.f32 %v8456, %v9179
    %v9197 = vmul.f32 %v8457, %v9183
    %v9198 = vmul.f32 %v8458, %v9187
    %v9199 = vmul.f32 %v8459, %v9191
    %v9200 = vmul.f32 %v8460, %v9195
    %v9201 = vmul.f32 %v8461, %v9179
    %v9202 = vmul.f32 %v8462, %v9183
    %v9203 = vmul.f32 %v8463, %v9187
    %v9204 = vmul.f32 %v8464, %v9191
    %v9205 = vmul.f32 %v8465, %v9195
    %v9206 = vmul.f32 %v8466, %v9179
    %v9207 = vmul.f32 %v8467, %v9183
    %v9208 = vmul.f32 %v8468, %v9187
    %v9209 = vmul.f32 %v8469, %v9191
    %v9210 = vmul.f32 %v8470, %v9195
    %v9211 = vmul.f32 %v8471, %v9179
    %v9212 = vmul.f32 %v8472, %v9183
    %v9213 = vmul.f32 %v8473, %v9187
    %v9214 = vmul.f32 %v8474, %v9191
    %v9215 = vmul.f32 %v8475, %v9195
    %v9216 = vmul.f32 %v8476, %v9179
    %v9217 = vmul.f32 %v8477, %v9183
    %v9218 = vmul.f32 %v8478, %v9187
    %v9219 = vmul.f32 %v8479, %v9191
    %v9220 = vmul.f32 %v8480, %v9195
    %v9221 = vlaneseq
    %v9222 = vshrl.u32 %v9221, 7
    %v9223 = vsub.s32 1, %v9222
    %v9224 = vrot.slane %v9031, %v9223
    %v9225 = vlaneseq
    %v9226 = vshrl.u32 %v9225, 7
    %v9227 = vsub.s32 1, %v9226
    %v9228 = vrot.slane %v9033, %v9227
    %v9229 = vlaneseq
    %v9230 = vshrl.u32 %v9229, 7
    %v9231 = vsub.s32 1, %v9230
    %v9232 = vrot.slane %v9102, %v9231
    %v9233 = vlaneseq
    %v9234 = vshrl.u32 %v9233, 7
    %v9235 = vsub.s32 1, %v9234
    %v9236 = vrot.slane %v9104, %v9235
    %v9237 = vlaneseq
    %v9238 = vshrl.u32 %v9237, 7
    %v9239 = vsub.s32 1, %v9238
    %v9240 = vrot.slane %v9173, %v9239
    %v9241 = vmul.f32 %v9224, %v8431
    %v9242 = vmul.f32 %v9228, %v8432
    %v9243 = vmul.f32 %v9232, %v8433
    %v9244 = vmul.f32 %v9236, %v8434
    %v9245 = vmul.f32 %v9240, %v8435
    %v9246 = vmul.f32 %v9224, %v8436
    %v9247 = vmul.f32 %v9228, %v8437
    %v9248 = vmul.f32 %v9232, %v8438
    %v9249 = vmul.f32 %v9236, %v8439
    %v9250 = vmul.f32 %v9240, %v8440
    %v9251 = vmul.f32 %v9224, %v8441
    %v9252 = vmul.f32 %v9228, %v8442
    %v9253 = vmul.f32 %v9232, %v8443
    %v9254 = vmul.f32 %v9236, %v8444
    %v9255 = vmul.f32 %v9240, %v8445
    %v9256 = vmul.f32 %v9224, %v8446
    %v9257 = vmul.f32 %v9228, %v8447
    %v9258 = vmul.f32 %v9232, %v8448
    %v9259 = vmul.f32 %v9236, %v8449
    %v9260 = vmul.f32 %v9240, %v8450
    %v9261 = vmul.f32 %v9224, %v8451
    %v9262 = vmul.f32 %v9228, %v8452
    %v9263 = vmul.f32 %v9232, %v8453
    %v9264 = vmul.f32 %v9236, %v8454
    %v9265 = vmul.f32 %v9240, %v8455
    %v9266 = vadd.f32 %v9196, %v9241
    %v9267 = vadd.f32 %v9197, %v9242
    %v9268 = vadd.f32 %v9198, %v9243
    %v9269 = vadd.f32 %v9199, %v9244
    %v9270 = vadd.f32 %v9200, %v9245
    %v9271 = vadd.f32 %v9201, %v9246
    %v9272 = vadd.f32 %v9202, %v9247
    %v9273 = vadd.f32 %v9203, %v9248
    %v9274 = vadd.f32 %v9204, %v9249
    %v9275 = vadd.f32 %v9205, %v9250
    %v9276 = vadd.f32 %v9206, %v9251
    %v9277 = vadd.f32 %v9207, %v9252
    %v9278 = vadd.f32 %v9208, %v9253
    %v9279 = vadd.f32 %v9209, %v9254
    %v9280 = vadd.f32 %v9210, %v9255
    %v9281 = vadd.f32 %v9211, %v9256
    %v9282 = vadd.f32 %v9212, %v9257
    %v9283 = vadd.f32 %v9213, %v9258
    %v9284 = vadd.f32 %v9214, %v9259
    %v9285 = vadd.f32 %v9215, %v9260
    %v9286 = vadd.f32 %v9216, %v9261
    %v9287 = vadd.f32 %v9217, %v9262
    %v9288 = vadd.f32 %v9218, %v9263
    %v9289 = vadd.f32 %v9219, %v9264
    %v9290 = vadd.f32 %v9220, %v9265
    %9291 = vst [vmem:[#allocation3 + $0x28] sm:$0xff] %v9266
    %9292 = vst [vmem:[#allocation3 + $0x30] sm:$0xff] %v9267
    %9293 = vst [vmem:[#allocation3 + $0x38] sm:$0xff] %v9268
    %9294 = vst [vmem:[#allocation3 + $0x40] sm:$0xff] %v9269
    %9295 = vst [vmem:[#allocation3 + $0x48] sm:$0xff] %v9270
    %9296 = vst [vmem:[#allocation3 + $0x50] sm:$0xff] %v9271
    %9297 = vst [vmem:[#allocation3 + $0x58] sm:$0xff] %v9272
    %9298 = vst [vmem:[#allocation3 + $0x60] sm:$0xff] %v9273
    %9299 = vst [vmem:[#allocation3 + $0x68] sm:$0xff] %v9274
    %9300 = vst [vmem:[#allocation3 + $0x70] sm:$0xff] %v9275
    %9301 = vst [vmem:[#allocation3 + $0x78] sm:$0xff] %v9276
    %9302 = vst [vmem:[#allocation3 + $0x80] sm:$0xff] %v9277
    %9303 = vst [vmem:[#allocation3 + $0x88] sm:$0xff] %v9278
    %9304 = vst [vmem:[#allocation3 + $0x90] sm:$0xff] %v9279
    %9305 = vst [vmem:[#allocation3 + $0x98] sm:$0xff] %v9280
    %9306 = vst [vmem:[#allocation3 + $0xa0] sm:$0xff] %v9281
    %9307 = vst [vmem:[#allocation3 + $0xa8] sm:$0xff] %v9282
    %9308 = vst [vmem:[#allocation3 + $0xb0] sm:$0xff] %v9283
    %9309 = vst [vmem:[#allocation3 + $0xb8] sm:$0xff] %v9284
    %9310 = vst [vmem:[#allocation3 + $0xc0] sm:$0xff] %v9285
    %9311 = vst [vmem:[#allocation3 + $0xc8] sm:$0xff] %v9286
    %9312 = vst [vmem:[#allocation3 + $0xd0] sm:$0xff] %v9287
    %9313 = vst [vmem:[#allocation3 + $0xd8] sm:$0xff] %v9288
    %9314 = vst [vmem:[#allocation3 + $0xe0] sm:$0xff] %v9289
    %9315 = vst [vmem:[#allocation3 + $0xe8] sm:$0xff] %v9290
    %v9316 = vld [vmem:[#allocation3 + $0x28] sm:$0xfe]
    %v9317 = vld [vmem:[#allocation3 + $0x30] sm:$0xfe]
    %v9318 = vld [vmem:[#allocation3 + $0x38] sm:$0xfe]
    %v9319 = vld [vmem:[#allocation3 + $0x40] sm:$0xfe]
    %v9320 = vld [vmem:[#allocation3 + $0x48] sm:$0xfe]
    %v9321 = vld [vmem:[#allocation3 + $0x50] sm:$0xff]
    %v9322 = vld [vmem:[#allocation3 + $0x58] sm:$0xff]
    %v9323 = vld [vmem:[#allocation3 + $0x60] sm:$0xff]
    %v9324 = vld [vmem:[#allocation3 + $0x68] sm:$0xff]
    %v9325 = vld [vmem:[#allocation3 + $0x70] sm:$0xff]
    %v9326 = vld [vmem:[#allocation3 + $0x78] sm:$0x1]
    %v9327 = vld [vmem:[#allocation3 + $0x80] sm:$0x1]
    %v9328 = vld [vmem:[#allocation3 + $0x88] sm:$0x1]
    %v9329 = vld [vmem:[#allocation3 + $0x90] sm:$0x1]
    %v9330 = vld [vmem:[#allocation3 + $0x98] sm:$0x1]
    %vm9331 = vcmask 1047553
    %v9332 = vsel %vm9331, %v9316, -inf
    %v9333 = vmax.f32 %v9332, %v9321
    %v9334 = vsel %vm1782, %v9326, -inf
    %v9335 = vmax.f32 %v9333, %v9334
    %v9336 = vrot.slane %v9335, 4
    %v9337 = vmax.f32 %v9335, %v9336
    %v9338 = vrot.slane %v9337, 2
    %v9339 = vmax.f32 %v9337, %v9338
    %v9340 = vrot.slane %v9339, 1
    %v9341 = vmax.f32 %v9339, %v9340
    %v9342 = vsel %vm9331, %v9317, -inf
    %v9343 = vmax.f32 %v9342, %v9322
    %v9344 = vsel %vm1782, %v9327, -inf
    %v9345 = vmax.f32 %v9343, %v9344
    %v9346 = vrot.slane %v9345, 4
    %v9347 = vmax.f32 %v9345, %v9346
    %v9348 = vrot.slane %v9347, 2
    %v9349 = vmax.f32 %v9347, %v9348
    %v9350 = vrot.slane %v9349, 1
    %v9351 = vmax.f32 %v9349, %v9350
    %v9352 = vsel %vm9331, %v9318, -inf
    %v9353 = vmax.f32 %v9352, %v9323
    %v9354 = vsel %vm1782, %v9328, -inf
    %v9355 = vmax.f32 %v9353, %v9354
    %v9356 = vrot.slane %v9355, 4
    %v9357 = vmax.f32 %v9355, %v9356
    %v9358 = vrot.slane %v9357, 2
    %v9359 = vmax.f32 %v9357, %v9358
    %v9360 = vrot.slane %v9359, 1
    %v9361 = vmax.f32 %v9359, %v9360
    %v9362 = vsel %vm9331, %v9319, -inf
    %v9363 = vmax.f32 %v9362, %v9324
    %v9364 = vsel %vm1782, %v9329, -inf
    %v9365 = vmax.f32 %v9363, %v9364
    %v9366 = vrot.slane %v9365, 4
    %v9367 = vmax.f32 %v9365, %v9366
    %v9368 = vrot.slane %v9367, 2
    %v9369 = vmax.f32 %v9367, %v9368
    %v9370 = vrot.slane %v9369, 1
    %v9371 = vmax.f32 %v9369, %v9370
    %v9372 = vsel %vm9331, %v9320, -inf
    %v9373 = vmax.f32 %v9372, %v9325
    %v9374 = vsel %vm1782, %v9330, -inf
    %v9375 = vmax.f32 %v9373, %v9374
    %v9376 = vrot.slane %v9375, 4
    %v9377 = vmax.f32 %v9375, %v9376
    %v9378 = vrot.slane %v9377, 2
    %v9379 = vmax.f32 %v9377, %v9378
    %v9380 = vrot.slane %v9379, 1
    %v9381 = vmax.f32 %v9379, %v9380
    %v9382 = vld [vmem:[#allocation3 + $0x78] sm:$0xe0]
    %v9383 = vld [vmem:[#allocation3 + $0x80] sm:$0xe0]
    %v9384 = vld [vmem:[#allocation3 + $0x88] sm:$0xe0]
    %v9385 = vld [vmem:[#allocation3 + $0x90] sm:$0xe0]
    %v9386 = vld [vmem:[#allocation3 + $0x98] sm:$0xe0]
    %v9387 = vld [vmem:[#allocation3 + $0xa0] sm:$0xff]
    %v9388 = vld [vmem:[#allocation3 + $0xa8] sm:$0xff]
    %v9389 = vld [vmem:[#allocation3 + $0xb0] sm:$0xff]
    %v9390 = vld [vmem:[#allocation3 + $0xb8] sm:$0xff]
    %v9391 = vld [vmem:[#allocation3 + $0xc0] sm:$0xff]
    %v9392 = vld [vmem:[#allocation3 + $0xc8] sm:$0x1f]
    %v9393 = vld [vmem:[#allocation3 + $0xd0] sm:$0x1f]
    %v9394 = vld [vmem:[#allocation3 + $0xd8] sm:$0x1f]
    %v9395 = vld [vmem:[#allocation3 + $0xe0] sm:$0x1f]
    %v9396 = vld [vmem:[#allocation3 + $0xe8] sm:$0x1f]
    %vm9397 = vcmask 1047557
    %v9398 = vsel %vm9397, %v9382, -inf
    %v9399 = vmax.f32 %v9398, %v9387
    %vm9400 = vcmask 1044480
    %v9401 = vsel %vm9400, %v9392, -inf
    %v9402 = vmax.f32 %v9399, %v9401
    %v9403 = vrot.slane %v9402, 4
    %v9404 = vmax.f32 %v9402, %v9403
    %v9405 = vrot.slane %v9404, 2
    %v9406 = vmax.f32 %v9404, %v9405
    %v9407 = vrot.slane %v9406, 1
    %v9408 = vmax.f32 %v9406, %v9407
    %v9409 = vsel %vm9397, %v9383, -inf
    %v9410 = vmax.f32 %v9409, %v9388
    %v9411 = vsel %vm9400, %v9393, -inf
    %v9412 = vmax.f32 %v9410, %v9411
    %v9413 = vrot.slane %v9412, 4
    %v9414 = vmax.f32 %v9412, %v9413
    %v9415 = vrot.slane %v9414, 2
    %v9416 = vmax.f32 %v9414, %v9415
    %v9417 = vrot.slane %v9416, 1
    %v9418 = vmax.f32 %v9416, %v9417
    %v9419 = vsel %vm9397, %v9384, -inf
    %v9420 = vmax.f32 %v9419, %v9389
    %v9421 = vsel %vm9400, %v9394, -inf
    %v9422 = vmax.f32 %v9420, %v9421
    %v9423 = vrot.slane %v9422, 4
    %v9424 = vmax.f32 %v9422, %v9423
    %v9425 = vrot.slane %v9424, 2
    %v9426 = vmax.f32 %v9424, %v9425
    %v9427 = vrot.slane %v9426, 1
    %v9428 = vmax.f32 %v9426, %v9427
    %v9429 = vsel %vm9397, %v9385, -inf
    %v9430 = vmax.f32 %v9429, %v9390
    %v9431 = vsel %vm9400, %v9395, -inf
    %v9432 = vmax.f32 %v9430, %v9431
    %v9433 = vrot.slane %v9432, 4
    %v9434 = vmax.f32 %v9432, %v9433
    %v9435 = vrot.slane %v9434, 2
    %v9436 = vmax.f32 %v9434, %v9435
    %v9437 = vrot.slane %v9436, 1
    %v9438 = vmax.f32 %v9436, %v9437
    %v9439 = vsel %vm9397, %v9386, -inf
    %v9440 = vmax.f32 %v9439, %v9391
    %v9441 = vsel %vm9400, %v9396, -inf
    %v9442 = vmax.f32 %v9440, %v9441
    %v9443 = vrot.slane %v9442, 4
    %v9444 = vmax.f32 %v9442, %v9443
    %v9445 = vrot.slane %v9444, 2
    %v9446 = vmax.f32 %v9444, %v9445
    %v9447 = vrot.slane %v9446, 1
    %v9448 = vmax.f32 %v9446, %v9447
    %v9449 = vsel %vm1782, %v9341, %v9408
    %v9450 = vsel %vm1782, %v9351, %v9418
    %v9451 = vsel %vm1782, %v9361, %v9428
    %v9452 = vsel %vm1782, %v9371, %v9438
    %v9453 = vsel %vm1782, %v9381, %v9448
    %v9454 = vld [vmem:[#allocation17] sm:$0x1f]
    %v9456 = vlaneseq
    %v9457 = vshrl.u32 %v9456, 7
    %v9458 = vsub.s32 0, %v9457
    %v9459 = vrot.slane %v9454, %v9458
    %v9460 = vlaneseq
    %v9461 = vshrl.u32 %v9460, 7
    %v9462 = vsub.s32 1, %v9461
    %v9463 = vrot.slane %v9454, %v9462
    %v9464 = vlaneseq
    %v9465 = vshrl.u32 %v9464, 7
    %v9466 = vsub.s32 2, %v9465
    %v9467 = vrot.slane %v9454, %v9466
    %v9468 = vlaneseq
    %v9469 = vshrl.u32 %v9468, 7
    %v9470 = vsub.s32 3, %v9469
    %v9471 = vrot.slane %v9454, %v9470
    %v9472 = vlaneseq
    %v9473 = vshrl.u32 %v9472, 7
    %v9474 = vsub.s32 4, %v9473
    %v9475 = vrot.slane %v9454, %v9474
    %v9481 = vadd.f32 %v9449, %v9459
    %v9482 = vadd.f32 %v9450, %v9463
    %v9483 = vadd.f32 %v9451, %v9467
    %v9484 = vadd.f32 %v9452, %v9471
    %v9485 = vadd.f32 %v9453, %v9475
    %9486 = vrot.lane.b32.xlu0 %v9481, 32
    %v9487 = vpop.permute.xlu0 %9486
    %9488 = vrot.lane.b32.xlu0 %v9482, 32
    %v9489 = vpop.permute.xlu0 %9488
    %9490 = vrot.lane.b32.xlu0 %v9483, 32
    %v9491 = vpop.permute.xlu0 %9490
    %9492 = vrot.lane.b32.xlu0 %v9484, 32
    %v9493 = vpop.permute.xlu0 %9492
    %9494 = vrot.lane.b32.xlu0 %v9485, 32
    %v9495 = vpop.permute.xlu0 %9494
    %v9496 = vlaneseq
    %v9497 = vand.u32 %v9496, 127
    %vm9498 = vcmp.lt.s32.totalorder %v9497, 32
    %v9499 = vsel %vm9498, %v9493, %v9495
    %v9500 = vsel %vm9498, %v9491, %v9493
    %v9501 = vsel %vm9498, %v9489, %v9491
    %v9502 = vsel %vm9498, %v9487, %v9489
    %v9503 = vsel %vm9498, %v9495, %v9487
    %v9504 = vmax.f32 %v9481, %v9503
    %v9505 = vmax.f32 %v9482, %v9502
    %v9506 = vmax.f32 %v9483, %v9501
    %v9507 = vmax.f32 %v9484, %v9500
    %v9508 = vmax.f32 %v9485, %v9499
    %9509 = vrot.lane.b32.xlu0 %v9504, 64
    %v9510 = vpop.permute.xlu0 %9509
    %9511 = vrot.lane.b32.xlu0 %v9505, 64
    %v9512 = vpop.permute.xlu0 %9511
    %9513 = vrot.lane.b32.xlu0 %v9506, 64
    %v9514 = vpop.permute.xlu0 %9513
    %9515 = vrot.lane.b32.xlu0 %v9507, 64
    %v9516 = vpop.permute.xlu0 %9515
    %9517 = vrot.lane.b32.xlu0 %v9508, 64
    %v9518 = vpop.permute.xlu0 %9517
    %vm9519 = vcmp.lt.s32.totalorder %v9497, 64
    %v9520 = vsel %vm9519, %v9516, %v9518
    %v9521 = vsel %vm9519, %v9514, %v9516
    %v9522 = vsel %vm9519, %v9512, %v9514
    %v9523 = vsel %vm9519, %v9510, %v9512
    %v9524 = vsel %vm9519, %v9518, %v9510
    %v9525 = vmax.f32 %v9504, %v9524
    %v9526 = vmax.f32 %v9505, %v9523
    %v9527 = vmax.f32 %v9506, %v9522
    %v9528 = vmax.f32 %v9507, %v9521
    %v9529 = vmax.f32 %v9508, %v9520
    %v9530 = vmax.f32 %v9525, %v9529
    %v9531 = vmax.f32 %v9526, %v9525
    %v9532 = vmax.f32 %v9528, %v9527
    %v9533 = vmax.f32 %v9529, %v9528
    %v9534 = vmax.f32 %v9530, %v9532
    %v9535 = vmax.f32 %v9531, %v9533
    %v9536 = vmax.f32 %v9534, %v9535
    %v9537 = vld [vmem:[%s10] sm:$0xff]
    %v9538 = vld [vmem:[%s10 + $0x8] sm:$0xff]
    %v9539 = vld [vmem:[%s10 + $0x10] sm:$0xff]
    %v9540 = vld [vmem:[%s10 + $0x18] sm:$0xff]
    %v9541 = vld [vmem:[#allocation18] sm:$0x1]
    %v9543 = vlaneseq
    %v9544 = vshrl.u32 %v9543, 7
    %v9545 = vsub.s32 0, %v9544
    %v9546 = vrot.slane %v9541, %v9545
    %v9549 = vsel %vm2136, %v9536, 0
    %9551 = vmatprep.subr.mxu0 0.0
    %9552 = vmatpush1.msra.mxu0 0.0
    %9553 = vmatprep.subr.mxu0 0.0
    %9554 = vmatpush1.msra.mxu0 0.0
    %9555 = vmatprep.subr.mxu0 0.0
    %9556 = vmatpush1.msra.mxu0 0.0
    %9557 = vmatprep.subr.mxu0 0.0
    %9558 = vmatpush1.msra.mxu0 0.0
    %9559 = vmatprep.subr.mxu0 0.0
    %9560 = vmatpush1.msra.mxu0 0.0
    %9561 = vmatprep.subr.mxu0 0.0
    %9562 = vmatpush1.msra.mxu0 0.0
    %9563 = vmatprep.subr.mxu0 0.0
    %9564 = vmatpush1.msra.mxu0 0.0
    %9565 = vmatprep.subr.mxu0 0.0
    %9566 = vmatpush1.msra.mxu0 0.0
    %9567 = vmatprep.subr.mxu0 0.0
    %9568 = vmatpush1.msra.mxu0 0.0
    %9569 = vmatprep.subr.mxu0 0.0
    %9570 = vmatpush1.msra.mxu0 0.0
    %9571 = vmatprep.subr.mxu0 0.0
    %9572 = vmatpush1.msra.mxu0 0.0
    %9573 = vmatprep.subr.mxu0 0.0
    %9574 = vmatpush1.msra.mxu0 0.0
    %9575 = vmatprep.subr.mxu0 0.0
    %9576 = vmatpush1.msra.mxu0 %v9540
    %9577 = vmatprep.subr.mxu0 0.0
    %9578 = vmatpush1.msra.mxu0 %v9539
    %9579 = vmatprep.subr.mxu0 0.0
    %9580 = vmatpush1.msra.mxu0 %v9538
    %9581 = vmatprep.subr.mxu0 0.0
    %9582 = vmatpush1.msra.mxu0 %v9537
    %9583 = vmatprep.subr.mxu0 0.0
    %9584 = vmatpush2.msra.mxu0 0.0
    %9585 = vmatprep.subr.mxu0 0.0
    %9586 = vmatpush2.msra.mxu0 0.0
    %9587 = vmatprep.subr.mxu0 0.0
    %9588 = vmatpush2.msra.mxu0 0.0
    %9589 = vmatprep.subr.mxu0 0.0
    %9590 = vmatpush2.msra.mxu0 0.0
    %9591 = vmatprep.subr.mxu0 0.0
    %9592 = vmatpush2.msra.mxu0 0.0
    %9593 = vmatprep.subr.mxu0 0.0
    %9594 = vmatpush2.msra.mxu0 0.0
    %9595 = vmatprep.subr.mxu0 0.0
    %9596 = vmatpush2.msra.mxu0 0.0
    %9597 = vmatprep.subr.mxu0 0.0
    %9598 = vmatpush2.msra.mxu0 0.0
    %9599 = vmatprep.subr.mxu0 0.0
    %9600 = vmatpush2.msra.mxu0 0.0
    %9601 = vmatprep.subr.mxu0 0.0
    %9602 = vmatpush2.msra.mxu0 0.0
    %9603 = vmatprep.subr.mxu0 0.0
    %9604 = vmatpush2.msra.mxu0 0.0
    %9605 = vmatprep.subr.mxu0 0.0
    %9606 = vmatpush2.msra.mxu0 0.0
    %9607 = vmatprep.subr.mxu0 0.0
    %9608 = vmatpush2.msra.mxu0 0.0
    %9609 = vmatprep.subr.mxu0 0.0
    %9610 = vmatpush2.msra.mxu0 0.0
    %9611 = vmatprep.subr.mxu0 0.0
    %9612 = vmatpush2.msra.mxu0 0.0
    %9613 = vmatprep.subr.mxu0 0.0
    %9614 = vmatpush2.msra.mxu0 0.0
    %9615 = vmatprep.mubr.f32.mxu0 0.0
    %9616 = vmatmul.mubr.f32.gmra.mxu0 %v9549
    %v9617 = vpop.f32.mrf.mxu0
    %v9618 = vadd.f32 %v9546, %v9617
    %v9619 = vpop.f32.mrf.mxu0
    %9620 = vdwg.mxu0
    %vm9621 = vcmask 74752
    %9622 = vst.msk [vmem:[#allocation20] sm:$0x3] %vm9621, %v9618
    // Predicated region
    $region82: #{dcnet_apply.1} parent=1 // pred_check
      _
    $region83: #{dcnet_apply.1} parent=1 // pred_check_branch
      %9624 = sbr.rel (0) target = $region85
    $region84: #{dcnet_apply.1} parent=1 // pred_region
      %s9626 = ssub.s32 32, 32
      %9627 = vsyncadd [#allocation8], %s9626
      %s9629 = sshll.u32 [#allocation20], 4
      %s9630 = int_to_ptr.vmem [resolvable:$true] %s9629
      %9632 = dma.vmem_to_hbm [thread:$0]  %s9630, 32, %s12, [#allocation8]
    $region85: #{dcnet_apply.1} parent=1 // pred_fallthru
      _
    // Predicated region
    $region86: #{dcnet_apply.1} parent=1 // pred_check
      _
    $region87: #{dcnet_apply.1} parent=1 // pred_check_branch
      %9634 = sbr.rel (0) target = $region89
    $region88: #{dcnet_apply.1} parent=1 // pred_region
      %9635 = dma.done [#allocation8], 32
    $region89: #{dcnet_apply.1} parent=1 // pred_fallthru
      _
    %9636 = vsyncpa [#allocation7], 1
    %9637 = vsyncpa [#allocation10], 1
    %9638 = vsyncpa [#allocation13], 1
    %9639 = vsyncpa [#allocation16], 1
    %9640 = vsyncpa [#allocation19], 1
    %9641 = vsyncpa [#allocation8], 1
  %9642 = vsyncmov [#allocation5]
  %s9643 = vpop.sfrf %9642
  %p9644 = scmp.eq.s32.totalorder %s9643, 0
  %p9645 = pneg %p9644
  %9647 = shalt.err (%p9645)

</llo_original>
